<compile_context>
chip_gen: v5e
topology: v5e:2x2
jax: 0.10.0
libtpu: 0.0.40
codegen_flags: <defaults>
</compile_context>

<pallas_src>
import functools

import jax
import jax.numpy as jnp
from jax.experimental import pallas as pl
from jax.experimental.pallas import tpu as pltpu


_COMPILER_PARAMS = pltpu.CompilerParams(
    dimension_semantics=("parallel",),       # batch axis -> both TCs on v7x
    vmem_limit_bytes=32 * 1024 * 1024,       # explicit budget; tiles are KB-scale
)


# ----------------------------------------------------------------------------
# Kernels
# ----------------------------------------------------------------------------
def _block_kernel(x_ref, w1_ref, b1_ref, w2_ref, b2_ref, o_ref, *, h, w, cin, c):
    """Fused encoder Block: [conv3x3 s2 + BN + ReLU] -> [conv3x3 s1 + BN + ReLU].

    x_ref : (1, 4, h+1, w+1, cin) bf16  even/odd phases of the padded input
    w1_ref: (9*cin, c) bf16             im2col weight, (kh, kw, ci) row-major
    b1_ref: (1, c) f32                  folded BN bias
    w2_ref: (9*c, c) bf16
    b2_ref: (1, c) f32
    o_ref : (1, h*w, c) bf16
    """
    m = h * w

    # --- conv1: stride 2, only the decimated output positions are computed ---
    pieces = []
    for kh in range(3):
        for kw in range(3):
            p = 2 * (kh & 1) + (kw & 1)              # phase of the padded input
            dh, dw = kh >> 1, kw >> 1                # offset inside that phase
            sl = x_ref[0, p, dh:dh + h, dw:dw + w, :]
            pieces.append(sl.astype(jnp.float32).reshape(m, cin))
    patch = jnp.concatenate(pieces, axis=-1)                          # (m, 9*cin) f32
    acc = jnp.dot(patch.astype(jnp.bfloat16), w1_ref[...],
                  preferred_element_type=jnp.float32)
    acc = jnp.maximum(acc + b1_ref[...], 0.0)                         # f32 epilogue
    mid = acc.reshape(h, w, c)                                        # stays in VMEM

    # --- zero-pad the VMEM-resident intermediate (conv2 has padding=1) ---
    zc = jnp.zeros((h, 1, c), jnp.float32)
    zr = jnp.zeros((1, w + 2, c), jnp.float32)
    midp = jnp.concatenate([zc, mid, zc], axis=1)
    midp = jnp.concatenate([zr, midp, zr], axis=0)                    # (h+2, w+2, c)

    # --- conv2: stride 1, single im2col matmul ---
    pieces2 = [midp[kh:kh + h, kw:kw + w, :].reshape(m, c)
               for kh in range(3) for kw in range(3)]
    patch2 = jnp.concatenate(pieces2, axis=-1)                        # (m, 9*c) f32
    acc2 = jnp.dot(patch2.astype(jnp.bfloat16), w2_ref[...],
                   preferred_element_type=jnp.float32)
    acc2 = jnp.maximum(acc2 + b2_ref[...], 0.0)
    o_ref[0] = acc2.astype(o_ref.dtype)


def _convt_kernel(x_ref, w_ref, b_ref, o_ref, *, h, w, cin, cout):
    """ConvTranspose2d(k=3, s=2, p=1, op=1) + BN + ReLU, sub-pixel form.

    x_ref: (1, 1, h+1, w+1, cin) bf16  input zero-padded by 1 on bottom/right
    w_ref: (4*cin, 4*cout) bf16        rows = input tap (dh, dw), t = 2*dh + dw
                                       cols = output phase q = 2*a + b
    b_ref: (1, 4*cout) f32
    o_ref: (1, h*w, 4*cout) bf16       column q*cout + co = out pixel (2i+a, 2j+b)
    """
    m = h * w
    pieces = [x_ref[0, 0, dh:dh + h, dw:dw + w, :].astype(jnp.float32).reshape(m, cin)
              for dh in (0, 1) for dw in (0, 1)]
    patch = jnp.concatenate(pieces, axis=-1)                          # (m, 4*cin) f32
    acc = jnp.dot(patch.astype(jnp.bfloat16), w_ref[...],
                  preferred_element_type=jnp.float32)
    acc = jnp.maximum(acc + b_ref[...], 0.0)
    o_ref[0] = acc.astype(o_ref.dtype)


def _classifier_kernel(x_ref, w_ref, b_ref, o_ref):
    """1x1 conv, computed transposed so the store is lane-dense and already NCHW.

    x_ref: (1, M, cin) bf16 ; w_ref: (3, cin) bf16 ; b_ref: (3, 1) f32
    o_ref: (1, 3, M) f32
    """
    acc = jax.lax.dot_general(
        w_ref[...], x_ref[0],
        dimension_numbers=(((1,), (1,)), ((), ())),
        preferred_element_type=jnp.float32)                           # (3, M)
    o_ref[0] = acc + b_ref[...]


# ----------------------------------------------------------------------------
# Layer wrappers
# ----------------------------------------------------------------------------
def encoder_block(x, blk):
    """x: (N, H, W, Cin) bf16 -> (N, H/2, W/2, C) bf16."""
    N, H, W, Cin = x.shape
    C = blk["b1"].shape[-1]
    h, w = H // 2, W // 2
    xp = jnp.pad(x, ((0, 0), (1, 1), (1, 1), (0, 0)))
    # 4 even/odd phases of the padded input, phase index = 2*a + b
    xph = jnp.stack([xp[:, a::2, b::2, :] for a in (0, 1) for b in (0, 1)], axis=1)
    kern = functools.partial(_block_kernel, h=h, w=w, cin=Cin, c=C)
    out = pl.pallas_call(
        kern,
        out_shape=jax.ShapeDtypeStruct((N, h * w, C), jnp.bfloat16),
        grid=(N,),
        in_specs=[
            pl.BlockSpec((1, 4, h + 1, w + 1, Cin), lambda n: (n, 0, 0, 0, 0)),
            pl.BlockSpec((9 * Cin, C), lambda n: (0, 0)),
            pl.BlockSpec((1, C), lambda n: (0, 0)),
            pl.BlockSpec((9 * C, C), lambda n: (0, 0)),
            pl.BlockSpec((1, C), lambda n: (0, 0)),
        ],
        out_specs=pl.BlockSpec((1, h * w, C), lambda n: (n, 0, 0)),
        compiler_params=_COMPILER_PARAMS,
    )(xph, blk["W1"], blk["b1"], blk["W2"], blk["b2"])
    return out.reshape(N, h, w, C)


def convt_layer(x, dec):
    """x: (N, H, W, Cin) bf16 -> (N, 2H, 2W, Cout) bf16."""
    N, H, W, Cin = x.shape
    Cout = dec["b"].shape[-1] // 4
    xp = jnp.pad(x, ((0, 0), (0, 1), (0, 1), (0, 0)))[:, None]        # (N,1,H+1,W+1,Cin)
    kern = functools.partial(_convt_kernel, h=H, w=W, cin=Cin, cout=Cout)
    out = pl.pallas_call(
        kern,
        out_shape=jax.ShapeDtypeStruct((N, H * W, 4 * Cout), jnp.bfloat16),
        grid=(N,),
        in_specs=[
            pl.BlockSpec((1, 1, H + 1, W + 1, Cin), lambda n: (n, 0, 0, 0, 0)),
            pl.BlockSpec((4 * Cin, 4 * Cout), lambda n: (0, 0)),
            pl.BlockSpec((1, 4 * Cout), lambda n: (0, 0)),
        ],
        out_specs=pl.BlockSpec((1, H * W, 4 * Cout), lambda n: (n, 0, 0)),
        compiler_params=_COMPILER_PARAMS,
    )(xp, dec["W"], dec["b"])
    # sub-pixel interleave (tiny XLA reshape/transpose): (N, H*W, 4C) -> (N, 2H, 2W, C)
    y = out.reshape(N, H, W, 2, 2, Cout)
    return jnp.transpose(y, (0, 1, 3, 2, 4, 5)).reshape(N, 2 * H, 2 * W, Cout)


def classifier(x, wc_t, bc):
    """x: (N, H, W, Cin) bf16 -> (N, 3, H, W) f32 (already NCHW)."""
    N, H, W, Cin = x.shape
    M = H * W
    xf = x.reshape(N, M, Cin)
    out = pl.pallas_call(
        _classifier_kernel,
        out_shape=jax.ShapeDtypeStruct((N, 3, M), jnp.float32),
        grid=(N,),
        in_specs=[
            pl.BlockSpec((1, M, Cin), lambda n: (n, 0, 0)),
            pl.BlockSpec((3, Cin), lambda n: (0, 0)),
            pl.BlockSpec((3, 1), lambda n: (0, 0)),
        ],
        out_specs=pl.BlockSpec((1, 3, M), lambda n: (n, 0, 0)),
        compiler_params=_COMPILER_PARAMS,
    )(xf, wc_t, bc)
    return out.reshape(N, 3, H, W)


# ----------------------------------------------------------------------------
# Parameters: synthetic torch-layout init + one-time preparation (BN folding,
# im2col / sub-pixel weight layouts, bf16 casts) hoisted out of the forward.
# ----------------------------------------------------------------------------
def _fold_bn(w_kkio, conv_bias, bn, eps=1e-5):
    gamma, beta, mean, var = bn
    scale = gamma * jax.lax.rsqrt(var + eps)
    return w_kkio * scale, (conv_bias - mean) * scale + beta


def _subpixel_convt_weight(w):
    """Torch ConvT weight (Cin, Cout, 3, 3) -> (4*Cin, 4*Cout) sub-pixel block weight.

    out[2i+a, 2j+b] = sum_t x_pad[i+dh, j+dw] @ block[t=2*dh+dw][q=2*a+b]
    (x is zero-padded by one row/column at the bottom/right).
    """
    cin, cout = w.shape[0], w.shape[1]
    z = jnp.zeros((cin, cout), w.dtype)
    rows = [
        jnp.concatenate([w[:, :, 1, 1], w[:, :, 1, 2], w[:, :, 2, 1], w[:, :, 2, 2]], axis=1),  # tap (0,0)
        jnp.concatenate([z,             w[:, :, 1, 0], z,             w[:, :, 2, 0]], axis=1),  # tap (0,1)
        jnp.concatenate([z,             z,             w[:, :, 0, 1], w[:, :, 0, 2]], axis=1),  # tap (1,0)
        jnp.concatenate([z,             z,             z,             w[:, :, 0, 0]], axis=1),  # tap (1,1)
    ]
    return jnp.concatenate(rows, axis=0)


def _bn_params(key, c):
    k1, k2, k3, k4 = jax.random.split(key, 4)
    gamma = 1.0 + 0.1 * jax.random.normal(k1, (c,), jnp.float32)
    beta = 0.1 * jax.random.normal(k2, (c,), jnp.float32)
    mean = 0.1 * jax.random.normal(k3, (c,), jnp.float32)
    var = jax.random.uniform(k4, (c,), jnp.float32, 0.5, 1.5)
    return gamma, beta, mean, var


def init_raw_params(key):
    """Synthetic parameters in PyTorch layouts (eval-mode BN stats)."""
    keys = iter(jax.random.split(key, 64))
    nk = lambda: next(keys)
    raw = {"blocks": [], "downs": []}
    c = 3
    for layer in [16, 32, 64, 128]:                     # Block(c, layer, stride=2)
        raw["blocks"].append(dict(
            w1=0.05 * jax.random.normal(nk(), (layer, c, 3, 3), jnp.float32),      # OIHW
            bn1=_bn_params(nk(), layer),
            w2=0.05 * jax.random.normal(nk(), (layer, layer, 3, 3), jnp.float32),
            bn2=_bn_params(nk(), layer)))
        c = layer
    for layer in [128, 64, 32, 16]:                     # DownBlock(c, layer, stride=2)
        raw["downs"].append(dict(
            wt=0.05 * jax.random.normal(nk(), (c, layer, 3, 3), jnp.float32),      # (Cin,Cout,k,k)
            bt=0.05 * jax.random.normal(nk(), (layer,), jnp.float32),
            bn=_bn_params(nk(), layer)))
        c = layer
    raw["wc"] = 0.05 * jax.random.normal(nk(), (3, c, 1, 1), jnp.float32)
    raw["bc"] = 0.05 * jax.random.normal(nk(), (3,), jnp.float32)
    return raw


def prepare_params(raw):
    """Run once outside jit: fold BN, build im2col / sub-pixel weights, cast bf16."""
    prep = {"blocks": [], "downs": []}
    for blk in raw["blocks"]:
        w1 = jnp.transpose(blk["w1"], (2, 3, 1, 0))                  # (3,3,Cin,C)
        w2 = jnp.transpose(blk["w2"], (2, 3, 1, 0))
        cin, c = w1.shape[2], w1.shape[3]
        w1, b1 = _fold_bn(w1, jnp.zeros((c,), jnp.float32), blk["bn1"])
        w2, b2 = _fold_bn(w2, jnp.zeros((c,), jnp.float32), blk["bn2"])
        prep["blocks"].append(dict(
            W1=w1.reshape(9 * cin, c).astype(jnp.bfloat16), b1=b1.reshape(1, c),
            W2=w2.reshape(9 * c, c).astype(jnp.bfloat16),   b2=b2.reshape(1, c)))
    for d in raw["downs"]:
        gamma, beta, mean, var = d["bn"]
        scale = gamma * jax.lax.rsqrt(var + 1e-5)
        cout = d["wt"].shape[1]
        wtf = d["wt"] * scale[None, :, None, None]
        bf = (d["bt"] - mean) * scale + beta
        prep["downs"].append(dict(
            W=_subpixel_convt_weight(wtf).astype(jnp.bfloat16),      # (4Cin, 4Cout)
            b=jnp.tile(bf, 4).reshape(1, 4 * cout)))
    prep["wc_t"] = raw["wc"][:, :, 0, 0].astype(jnp.bfloat16)        # (3, 16)
    prep["bc"] = raw["bc"].reshape(3, 1)
    return prep


# ----------------------------------------------------------------------------
# Forward
# ----------------------------------------------------------------------------
def detector_forward(x_nchw, params):
    x = jnp.transpose(x_nchw, (0, 2, 3, 1)).astype(jnp.bfloat16)     # NCHW -> NHWC bf16
    for blk in params["blocks"]:      # 4x fused encoder Blocks (stride 2 each)
        x = encoder_block(x, blk)
    for dec in params["downs"]:       # 4x sub-pixel ConvTranspose layers
        x = convt_layer(x, dec)
    return classifier(x, params["wc_t"], params["bc"])               # (N, 3, H, W) f32


if __name__ == "__main__":
    key = jax.random.PRNGKey(0)
    kx, kp = jax.random.split(key)
    x = jax.random.normal(kx, (2, 3, 16, 16), jnp.float32)           # NCHW like PyTorch
    params = prepare_params(init_raw_params(kp))

    fwd = jax.jit(detector_forward)
    out = fwd(x, params)
    jax.block_until_ready(out)
    assert out.shape == (2, 3, 16, 16), out.shape
    assert out.dtype == jnp.float32
    print("KERNEL_OK")
</pallas_src>

<mosaic_0001>
module attributes {stable_mosaic.version = 11 : i64} {
  func.func @_block_kernel(%arg0: i32, %arg1: memref<1x4x9x9x3xbf16, #tpu.memory_space<vmem>>, %arg2: memref<27x16xbf16, #tpu.memory_space<vmem>>, %arg3: memref<1x16xf32, #tpu.memory_space<vmem>>, %arg4: memref<144x16xbf16, #tpu.memory_space<vmem>>, %arg5: memref<1x16xf32, #tpu.memory_space<vmem>>, %arg6: memref<1x64x16xbf16, #tpu.memory_space<vmem>>) attributes {dimension_semantics = [#tpu.dimension_semantics<parallel>], iteration_bounds = array<i64: 2>, scalar_prefetch = 0 : i64, scratch_operands = 0 : i64, tpu.core_type = #tpu.core_type<tc>, window_params = [{transform_indices = @transform_0, window_bounds = array<i64: 1, 4, 9, 9, 3>}, {pipeline_mode = #tpu.pipeline_mode<synchronous>, transform_indices = @transform_1, window_bounds = array<i64: 27, 16>}, {pipeline_mode = #tpu.pipeline_mode<synchronous>, transform_indices = @transform_2, window_bounds = array<i64: 1, 16>}, {pipeline_mode = #tpu.pipeline_mode<synchronous>, transform_indices = @transform_3, window_bounds = array<i64: 144, 16>}, {pipeline_mode = #tpu.pipeline_mode<synchronous>, transform_indices = @transform_4, window_bounds = array<i64: 1, 16>}, {transform_indices = @transform_5, window_bounds = array<i64: 1, 64, 16>}]} {
    %c0 = arith.constant 0 : index
    %c0_0 = arith.constant 0 : index
    %c0_1 = arith.constant 0 : index
    %c0_2 = arith.constant 0 : index
    %c0_3 = arith.constant 0 : index
    %0 = vector.load %arg1[%c0, %c0_0, %c0_1, %c0_2, %c0_3] : memref<1x4x9x9x3xbf16, #tpu.memory_space<vmem>>, vector<1x1x8x8x3xbf16>
    %1 = vector.shape_cast %0 : vector<1x1x8x8x3xbf16> to vector<8x8x3xbf16>
    %2 = arith.extf %1 : vector<8x8x3xbf16> to vector<8x8x3xf32>
    %3 = vector.shape_cast %2 : vector<8x8x3xf32> to vector<64x3xf32>
    %c0_4 = arith.constant 0 : index
    %c1 = arith.constant 1 : index
    %c0_5 = arith.constant 0 : index
    %c0_6 = arith.constant 0 : index
    %c0_7 = arith.constant 0 : index
    %4 = vector.load %arg1[%c0_4, %c1, %c0_5, %c0_6, %c0_7] : memref<1x4x9x9x3xbf16, #tpu.memory_space<vmem>>, vector<1x1x8x8x3xbf16>
    %5 = vector.shape_cast %4 : vector<1x1x8x8x3xbf16> to vector<8x8x3xbf16>
    %6 = arith.extf %5 : vector<8x8x3xbf16> to vector<8x8x3xf32>
    %7 = vector.shape_cast %6 : vector<8x8x3xf32> to vector<64x3xf32>
    %c0_8 = arith.constant 0 : index
    %c0_9 = arith.constant 0 : index
    %c0_10 = arith.constant 0 : index
    %c1_11 = arith.constant 1 : index
    %c0_12 = arith.constant 0 : index
    %8 = vector.load %arg1[%c0_8, %c0_9, %c0_10, %c1_11, %c0_12] : memref<1x4x9x9x3xbf16, #tpu.memory_space<vmem>>, vector<1x1x8x8x3xbf16>
    %9 = vector.shape_cast %8 : vector<1x1x8x8x3xbf16> to vector<8x8x3xbf16>
    %10 = arith.extf %9 : vector<8x8x3xbf16> to vector<8x8x3xf32>
    %11 = vector.shape_cast %10 : vector<8x8x3xf32> to vector<64x3xf32>
    %c0_13 = arith.constant 0 : index
    %c2 = arith.constant 2 : index
    %c0_14 = arith.constant 0 : index
    %c0_15 = arith.constant 0 : index
    %c0_16 = arith.constant 0 : index
    %12 = vector.load %arg1[%c0_13, %c2, %c0_14, %c0_15, %c0_16] : memref<1x4x9x9x3xbf16, #tpu.memory_space<vmem>>, vector<1x1x8x8x3xbf16>
    %13 = vector.shape_cast %12 : vector<1x1x8x8x3xbf16> to vector<8x8x3xbf16>
    %14 = arith.extf %13 : vector<8x8x3xbf16> to vector<8x8x3xf32>
    %15 = vector.shape_cast %14 : vector<8x8x3xf32> to vector<64x3xf32>
    %c0_17 = arith.constant 0 : index
    %c3 = arith.constant 3 : index
    %c0_18 = arith.constant 0 : index
    %c0_19 = arith.constant 0 : index
    %c0_20 = arith.constant 0 : index
    %16 = vector.load %arg1[%c0_17, %c3, %c0_18, %c0_19, %c0_20] : memref<1x4x9x9x3xbf16, #tpu.memory_space<vmem>>, vector<1x1x8x8x3xbf16>
    %17 = vector.shape_cast %16 : vector<1x1x8x8x3xbf16> to vector<8x8x3xbf16>
    %18 = arith.extf %17 : vector<8x8x3xbf16> to vector<8x8x3xf32>
    %19 = vector.shape_cast %18 : vector<8x8x3xf32> to vector<64x3xf32>
    %c0_21 = arith.constant 0 : index
    %c2_22 = arith.constant 2 : index
    %c0_23 = arith.constant 0 : index
    %c1_24 = arith.constant 1 : index
    %c0_25 = arith.constant 0 : index
    %20 = vector.load %arg1[%c0_21, %c2_22, %c0_23, %c1_24, %c0_25] : memref<1x4x9x9x3xbf16, #tpu.memory_space<vmem>>, vector<1x1x8x8x3xbf16>
    %21 = vector.shape_cast %20 : vector<1x1x8x8x3xbf16> to vector<8x8x3xbf16>
    %22 = arith.extf %21 : vector<8x8x3xbf16> to vector<8x8x3xf32>
    %23 = vector.shape_cast %22 : vector<8x8x3xf32> to vector<64x3xf32>
    %c0_26 = arith.constant 0 : index
    %c0_27 = arith.constant 0 : index
    %c1_28 = arith.constant 1 : index
    %c0_29 = arith.constant 0 : index
    %c0_30 = arith.constant 0 : index
    %24 = vector.load %arg1[%c0_26, %c0_27, %c1_28, %c0_29, %c0_30] : memref<1x4x9x9x3xbf16, #tpu.memory_space<vmem>>, vector<1x1x8x8x3xbf16>
    %25 = vector.shape_cast %24 : vector<1x1x8x8x3xbf16> to vector<8x8x3xbf16>
    %26 = arith.extf %25 : vector<8x8x3xbf16> to vector<8x8x3xf32>
    %27 = vector.shape_cast %26 : vector<8x8x3xf32> to vector<64x3xf32>
    %c0_31 = arith.constant 0 : index
    %c1_32 = arith.constant 1 : index
    %c1_33 = arith.constant 1 : index
    %c0_34 = arith.constant 0 : index
    %c0_35 = arith.constant 0 : index
    %28 = vector.load %arg1[%c0_31, %c1_32, %c1_33, %c0_34, %c0_35] : memref<1x4x9x9x3xbf16, #tpu.memory_space<vmem>>, vector<1x1x8x8x3xbf16>
    %29 = vector.shape_cast %28 : vector<1x1x8x8x3xbf16> to vector<8x8x3xbf16>
    %30 = arith.extf %29 : vector<8x8x3xbf16> to vector<8x8x3xf32>
    %31 = vector.shape_cast %30 : vector<8x8x3xf32> to vector<64x3xf32>
    %c0_36 = arith.constant 0 : index
    %c0_37 = arith.constant 0 : index
    %c1_38 = arith.constant 1 : index
    %c1_39 = arith.constant 1 : index
    %c0_40 = arith.constant 0 : index
    %32 = vector.load %arg1[%c0_36, %c0_37, %c1_38, %c1_39, %c0_40] : memref<1x4x9x9x3xbf16, #tpu.memory_space<vmem>>, vector<1x1x8x8x3xbf16>
    %33 = vector.shape_cast %32 : vector<1x1x8x8x3xbf16> to vector<8x8x3xbf16>
    %34 = arith.extf %33 : vector<8x8x3xbf16> to vector<8x8x3xf32>
    %35 = vector.shape_cast %34 : vector<8x8x3xf32> to vector<64x3xf32>
    %36 = tpu.concatenate %3, %7, %11, %15, %19, %23, %27, %31, %35 in 1 : vector<64x3xf32>, vector<64x3xf32>, vector<64x3xf32>, vector<64x3xf32>, vector<64x3xf32>, vector<64x3xf32>, vector<64x3xf32>, vector<64x3xf32>, vector<64x3xf32> -> vector<64x27xf32>
    %37 = arith.truncf %36 : vector<64x27xf32> to vector<64x27xbf16>
    %c0_41 = arith.constant 0 : index
    %c0_42 = arith.constant 0 : index
    %38 = vector.load %arg2[%c0_41, %c0_42] : memref<27x16xbf16, #tpu.memory_space<vmem>>, vector<27x16xbf16>
    %cst = arith.constant dense<0.000000e+00> : vector<64x16xf32>
    %39 = tpu.matmul %37, %38, %cst {dimension_numbers = #tpu.dot_dimension_numbers<[1], [0], [0], [1], [0, 0, 1, 1], [], []>} : vector<64x27xbf16>, vector<27x16xbf16>, vector<64x16xf32> -> vector<64x16xf32>
    %c0_43 = arith.constant 0 : index
    %c0_44 = arith.constant 0 : index
    %40 = vector.load %arg3[%c0_43, %c0_44] : memref<1x16xf32, #tpu.memory_space<vmem>>, vector<1x16xf32>
    %41 = vector.broadcast %40 : vector<1x16xf32> to vector<64x16xf32>
    %42 = arith.addf %39, %41 : vector<64x16xf32>
    %cst_45 = arith.constant 0.000000e+00 : f32
    %43 = vector.broadcast %cst_45 : f32 to vector<64x16xf32>
    %44 = arith.maximumf %42, %43 : vector<64x16xf32>
    %45 = vector.shape_cast %44 : vector<64x16xf32> to vector<8x8x16xf32>
    %cst_46 = arith.constant 0.000000e+00 : f32
    %46 = vector.broadcast %cst_46 : f32 to vector<8x1x16xf32>
    %cst_47 = arith.constant 0.000000e+00 : f32
    %47 = vector.broadcast %cst_47 : f32 to vector<1x10x16xf32>
    %48 = tpu.concatenate %46, %45, %46 in 1 : vector<8x1x16xf32>, vector<8x8x16xf32>, vector<8x1x16xf32> -> vector<8x10x16xf32>
    %49 = tpu.concatenate %47, %48, %47 in 0 : vector<1x10x16xf32>, vector<8x10x16xf32>, vector<1x10x16xf32> -> vector<10x10x16xf32>
    %50 = vector.extract_strided_slice %49 {offsets = [0, 0, 0], sizes = [8, 8, 16], strides = [1, 1, 1]} : vector<10x10x16xf32> to vector<8x8x16xf32>
    %51 = vector.shape_cast %50 : vector<8x8x16xf32> to vector<64x16xf32>
    %52 = vector.extract_strided_slice %49 {offsets = [0, 1, 0], sizes = [8, 8, 16], strides = [1, 1, 1]} : vector<10x10x16xf32> to vector<8x8x16xf32>
    %53 = vector.shape_cast %52 : vector<8x8x16xf32> to vector<64x16xf32>
    %54 = vector.extract_strided_slice %49 {offsets = [0, 2, 0], sizes = [8, 8, 16], strides = [1, 1, 1]} : vector<10x10x16xf32> to vector<8x8x16xf32>
    %55 = vector.shape_cast %54 : vector<8x8x16xf32> to vector<64x16xf32>
    %56 = vector.extract_strided_slice %49 {offsets = [1, 0, 0], sizes = [8, 8, 16], strides = [1, 1, 1]} : vector<10x10x16xf32> to vector<8x8x16xf32>
    %57 = vector.shape_cast %56 : vector<8x8x16xf32> to vector<64x16xf32>
    %58 = vector.extract_strided_slice %49 {offsets = [1, 1, 0], sizes = [8, 8, 16], strides = [1, 1, 1]} : vector<10x10x16xf32> to vector<8x8x16xf32>
    %59 = vector.shape_cast %58 : vector<8x8x16xf32> to vector<64x16xf32>
    %60 = vector.extract_strided_slice %49 {offsets = [1, 2, 0], sizes = [8, 8, 16], strides = [1, 1, 1]} : vector<10x10x16xf32> to vector<8x8x16xf32>
    %61 = vector.shape_cast %60 : vector<8x8x16xf32> to vector<64x16xf32>
    %62 = vector.extract_strided_slice %49 {offsets = [2, 0, 0], sizes = [8, 8, 16], strides = [1, 1, 1]} : vector<10x10x16xf32> to vector<8x8x16xf32>
    %63 = vector.shape_cast %62 : vector<8x8x16xf32> to vector<64x16xf32>
    %64 = vector.extract_strided_slice %49 {offsets = [2, 1, 0], sizes = [8, 8, 16], strides = [1, 1, 1]} : vector<10x10x16xf32> to vector<8x8x16xf32>
    %65 = vector.shape_cast %64 : vector<8x8x16xf32> to vector<64x16xf32>
    %66 = vector.extract_strided_slice %49 {offsets = [2, 2, 0], sizes = [8, 8, 16], strides = [1, 1, 1]} : vector<10x10x16xf32> to vector<8x8x16xf32>
    %67 = vector.shape_cast %66 : vector<8x8x16xf32> to vector<64x16xf32>
    %68 = tpu.concatenate %51, %53, %55, %57, %59, %61, %63, %65, %67 in 1 : vector<64x16xf32>, vector<64x16xf32>, vector<64x16xf32>, vector<64x16xf32>, vector<64x16xf32>, vector<64x16xf32>, vector<64x16xf32>, vector<64x16xf32>, vector<64x16xf32> -> vector<64x144xf32>
    %69 = arith.truncf %68 : vector<64x144xf32> to vector<64x144xbf16>
    %c0_48 = arith.constant 0 : index
    %c0_49 = arith.constant 0 : index
    %70 = vector.load %arg4[%c0_48, %c0_49] : memref<144x16xbf16, #tpu.memory_space<vmem>>, vector<144x16xbf16>
    %cst_50 = arith.constant dense<0.000000e+00> : vector<64x16xf32>
    %71 = tpu.matmul %69, %70, %cst_50 {dimension_numbers = #tpu.dot_dimension_numbers<[1], [0], [0], [1], [0, 0, 1, 1], [], []>} : vector<64x144xbf16>, vector<144x16xbf16>, vector<64x16xf32> -> vector<64x16xf32>
    %c0_51 = arith.constant 0 : index
    %c0_52 = arith.constant 0 : index
    %72 = vector.load %arg5[%c0_51, %c0_52] : memref<1x16xf32, #tpu.memory_space<vmem>>, vector<1x16xf32>
    %73 = vector.broadcast %72 : vector<1x16xf32> to vector<64x16xf32>
    %74 = arith.addf %71, %73 : vector<64x16xf32>
    %cst_53 = arith.constant 0.000000e+00 : f32
    %75 = vector.broadcast %cst_53 : f32 to vector<64x16xf32>
    %76 = arith.maximumf %74, %75 : vector<64x16xf32>
    %77 = arith.truncf %76 : vector<64x16xf32> to vector<64x16xbf16>
    %c0_54 = arith.constant 0 : index
    %c0_55 = arith.constant 0 : index
    %c0_56 = arith.constant 0 : index
    %78 = vector.load %arg6[%c0_54, %c0_55, %c0_56] : memref<1x64x16xbf16, #tpu.memory_space<vmem>>, vector<1x64x16xbf16>
    %79 = vector.shape_cast %78 : vector<1x64x16xbf16> to vector<64x16xbf16>
    %80 = vector.shape_cast %77 : vector<64x16xbf16> to vector<1x64x16xbf16>
    tpu.vector_store %arg6[%c0_54, %c0_55, %c0_56], %80 {strides = array<i32>} : memref<1x64x16xbf16, #tpu.memory_space<vmem>>, vector<1x64x16xbf16>,
    return
  }
  func.func @transform_0(%arg0: i32) -> (i32, i32, i32, i32, i32) {
    %c0_i32 = arith.constant 0 : i32
    %c0_i32_0 = arith.constant 0 : i32
    %c0_i32_1 = arith.constant 0 : i32
    %c0_i32_2 = arith.constant 0 : i32
    %c0_i32_3 = arith.constant 0 : i32
    return %arg0, %c0_i32, %c0_i32_0, %c0_i32_1, %c0_i32_2 : i32, i32, i32, i32, i32
  }
  func.func @transform_1(%arg0: i32) -> (i32, i32) {
    %c0_i32 = arith.constant 0 : i32
    %c0_i32_0 = arith.constant 0 : i32
    %c0_i32_1 = arith.constant 0 : i32
    return %c0_i32, %c0_i32_0 : i32, i32
  }
  func.func @transform_2(%arg0: i32) -> (i32, i32) {
    %c0_i32 = arith.constant 0 : i32
    %c0_i32_0 = arith.constant 0 : i32
    %c0_i32_1 = arith.constant 0 : i32
    return %c0_i32, %c0_i32_0 : i32, i32
  }
  func.func @transform_3(%arg0: i32) -> (i32, i32) {
    %c0_i32 = arith.constant 0 : i32
    %c0_i32_0 = arith.constant 0 : i32
    %c0_i32_1 = arith.constant 0 : i32
    return %c0_i32, %c0_i32_0 : i32, i32
  }
  func.func @transform_4(%arg0: i32) -> (i32, i32) {
    %c0_i32 = arith.constant 0 : i32
    %c0_i32_0 = arith.constant 0 : i32
    %c0_i32_1 = arith.constant 0 : i32
    return %c0_i32, %c0_i32_0 : i32, i32
  }
  func.func @transform_5(%arg0: i32) -> (i32, i32, i32) {
    %c0_i32 = arith.constant 0 : i32
    %c0_i32_0 = arith.constant 0 : i32
    %c0_i32_1 = arith.constant 0 : i32
    return %arg0, %c0_i32, %c0_i32_0 : i32, i32, i32
  }
}

module attributes {stable_mosaic.version = 11 : i64} {
  func.func @_block_kernel(%arg0: i32, %arg1: memref<1x4x5x5x16xbf16, #tpu.memory_space<vmem>>, %arg2: memref<144x32xbf16, #tpu.memory_space<vmem>>, %arg3: memref<1x32xf32, #tpu.memory_space<vmem>>, %arg4: memref<288x32xbf16, #tpu.memory_space<vmem>>, %arg5: memref<1x32xf32, #tpu.memory_space<vmem>>, %arg6: memref<1x16x32xbf16, #tpu.memory_space<vmem>>) attributes {dimension_semantics = [#tpu.dimension_semantics<parallel>], iteration_bounds = array<i64: 2>, scalar_prefetch = 0 : i64, scratch_operands = 0 : i64, tpu.core_type = #tpu.core_type<tc>, window_params = [{transform_indices = @transform_0, window_bounds = array<i64: 1, 4, 5, 5, 16>}, {pipeline_mode = #tpu.pipeline_mode<synchronous>, transform_indices = @transform_1, window_bounds = array<i64: 144, 32>}, {pipeline_mode = #tpu.pipeline_mode<synchronous>, transform_indices = @transform_2, window_bounds = array<i64: 1, 32>}, {pipeline_mode = #tpu.pipeline_mode<synchronous>, transform_indices = @transform_3, window_bounds = array<i64: 288, 32>}, {pipeline_mode = #tpu.pipeline_mode<synchronous>, transform_indices = @transform_4, window_bounds = array<i64: 1, 32>}, {transform_indices = @transform_5, window_bounds = array<i64: 1, 16, 32>}]} {
    %c0 = arith.constant 0 : index
    %c0_0 = arith.constant 0 : index
    %c0_1 = arith.constant 0 : index
    %c0_2 = arith.constant 0 : index
    %c0_3 = arith.constant 0 : index
    %0 = vector.load %arg1[%c0, %c0_0, %c0_1, %c0_2, %c0_3] : memref<1x4x5x5x16xbf16, #tpu.memory_space<vmem>>, vector<1x1x4x4x16xbf16>
    %1 = vector.shape_cast %0 : vector<1x1x4x4x16xbf16> to vector<4x4x16xbf16>
    %2 = arith.extf %1 : vector<4x4x16xbf16> to vector<4x4x16xf32>
    %3 = vector.shape_cast %2 : vector<4x4x16xf32> to vector<16x16xf32>
    %c0_4 = arith.constant 0 : index
    %c1 = arith.constant 1 : index
    %c0_5 = arith.constant 0 : index
    %c0_6 = arith.constant 0 : index
    %c0_7 = arith.constant 0 : index
    %4 = vector.load %arg1[%c0_4, %c1, %c0_5, %c0_6, %c0_7] : memref<1x4x5x5x16xbf16, #tpu.memory_space<vmem>>, vector<1x1x4x4x16xbf16>
    %5 = vector.shape_cast %4 : vector<1x1x4x4x16xbf16> to vector<4x4x16xbf16>
    %6 = arith.extf %5 : vector<4x4x16xbf16> to vector<4x4x16xf32>
    %7 = vector.shape_cast %6 : vector<4x4x16xf32> to vector<16x16xf32>
    %c0_8 = arith.constant 0 : index
    %c0_9 = arith.constant 0 : index
    %c0_10 = arith.constant 0 : index
    %c1_11 = arith.constant 1 : index
    %c0_12 = arith.constant 0 : index
    %8 = vector.load %arg1[%c0_8, %c0_9, %c0_10, %c1_11, %c0_12] : memref<1x4x5x5x16xbf16, #tpu.memory_space<vmem>>, vector<1x1x4x4x16xbf16>
    %9 = vector.shape_cast %8 : vector<1x1x4x4x16xbf16> to vector<4x4x16xbf16>
    %10 = arith.extf %9 : vector<4x4x16xbf16> to vector<4x4x16xf32>
    %11 = vector.shape_cast %10 : vector<4x4x16xf32> to vector<16x16xf32>
    %c0_13 = arith.constant 0 : index
    %c2 = arith.constant 2 : index
    %c0_14 = arith.constant 0 : index
    %c0_15 = arith.constant 0 : index
    %c0_16 = arith.constant 0 : index
    %12 = vector.load %arg1[%c0_13, %c2, %c0_14, %c0_15, %c0_16] : memref<1x4x5x5x16xbf16, #tpu.memory_space<vmem>>, vector<1x1x4x4x16xbf16>
    %13 = vector.shape_cast %12 : vector<1x1x4x4x16xbf16> to vector<4x4x16xbf16>
    %14 = arith.extf %13 : vector<4x4x16xbf16> to vector<4x4x16xf32>
    %15 = vector.shape_cast %14 : vector<4x4x16xf32> to vector<16x16xf32>
    %c0_17 = arith.constant 0 : index
    %c3 = arith.constant 3 : index
    %c0_18 = arith.constant 0 : index
    %c0_19 = arith.constant 0 : index
    %c0_20 = arith.constant 0 : index
    %16 = vector.load %arg1[%c0_17, %c3, %c0_18, %c0_19, %c0_20] : memref<1x4x5x5x16xbf16, #tpu.memory_space<vmem>>, vector<1x1x4x4x16xbf16>
    %17 = vector.shape_cast %16 : vector<1x1x4x4x16xbf16> to vector<4x4x16xbf16>
    %18 = arith.extf %17 : vector<4x4x16xbf16> to vector<4x4x16xf32>
    %19 = vector.shape_cast %18 : vector<4x4x16xf32> to vector<16x16xf32>
    %c0_21 = arith.constant 0 : index
    %c2_22 = arith.constant 2 : index
    %c0_23 = arith.constant 0 : index
    %c1_24 = arith.constant 1 : index
    %c0_25 = arith.constant 0 : index
    %20 = vector.load %arg1[%c0_21, %c2_22, %c0_23, %c1_24, %c0_25] : memref<1x4x5x5x16xbf16, #tpu.memory_space<vmem>>, vector<1x1x4x4x16xbf16>
    %21 = vector.shape_cast %20 : vector<1x1x4x4x16xbf16> to vector<4x4x16xbf16>
    %22 = arith.extf %21 : vector<4x4x16xbf16> to vector<4x4x16xf32>
    %23 = vector.shape_cast %22 : vector<4x4x16xf32> to vector<16x16xf32>
    %c0_26 = arith.constant 0 : index
    %c0_27 = arith.constant 0 : index
    %c1_28 = arith.constant 1 : index
    %c0_29 = arith.constant 0 : index
    %c0_30 = arith.constant 0 : index
    %24 = vector.load %arg1[%c0_26, %c0_27, %c1_28, %c0_29, %c0_30] : memref<1x4x5x5x16xbf16, #tpu.memory_space<vmem>>, vector<1x1x4x4x16xbf16>
    %25 = vector.shape_cast %24 : vector<1x1x4x4x16xbf16> to vector<4x4x16xbf16>
    %26 = arith.extf %25 : vector<4x4x16xbf16> to vector<4x4x16xf32>
    %27 = vector.shape_cast %26 : vector<4x4x16xf32> to vector<16x16xf32>
    %c0_31 = arith.constant 0 : index
    %c1_32 = arith.constant 1 : index
    %c1_33 = arith.constant 1 : index
    %c0_34 = arith.constant 0 : index
    %c0_35 = arith.constant 0 : index
    %28 = vector.load %arg1[%c0_31, %c1_32, %c1_33, %c0_34, %c0_35] : memref<1x4x5x5x16xbf16, #tpu.memory_space<vmem>>, vector<1x1x4x4x16xbf16>
    %29 = vector.shape_cast %28 : vector<1x1x4x4x16xbf16> to vector<4x4x16xbf16>
    %30 = arith.extf %29 : vector<4x4x16xbf16> to vector<4x4x16xf32>
    %31 = vector.shape_cast %30 : vector<4x4x16xf32> to vector<16x16xf32>
    %c0_36 = arith.constant 0 : index
    %c0_37 = arith.constant 0 : index
    %c1_38 = arith.constant 1 : index
    %c1_39 = arith.constant 1 : index
    %c0_40 = arith.constant 0 : index
    %32 = vector.load %arg1[%c0_36, %c0_37, %c1_38, %c1_39, %c0_40] : memref<1x4x5x5x16xbf16, #tpu.memory_space<vmem>>, vector<1x1x4x4x16xbf16>
    %33 = vector.shape_cast %32 : vector<1x1x4x4x16xbf16> to vector<4x4x16xbf16>
    %34 = arith.extf %33 : vector<4x4x16xbf16> to vector<4x4x16xf32>
    %35 = vector.shape_cast %34 : vector<4x4x16xf32> to vector<16x16xf32>
    %36 = tpu.concatenate %3, %7, %11, %15, %19, %23, %27, %31, %35 in 1 : vector<16x16xf32>, vector<16x16xf32>, vector<16x16xf32>, vector<16x16xf32>, vector<16x16xf32>, vector<16x16xf32>, vector<16x16xf32>, vector<16x16xf32>, vector<16x16xf32> -> vector<16x144xf32>
    %37 = arith.truncf %36 : vector<16x144xf32> to vector<16x144xbf16>
    %c0_41 = arith.constant 0 : index
    %c0_42 = arith.constant 0 : index
    %38 = vector.load %arg2[%c0_41, %c0_42] : memref<144x32xbf16, #tpu.memory_space<vmem>>, vector<144x32xbf16>
    %cst = arith.constant dense<0.000000e+00> : vector<16x32xf32>
    %39 = tpu.matmul %37, %38, %cst {dimension_numbers = #tpu.dot_dimension_numbers<[1], [0], [0], [1], [0, 0, 1, 1], [], []>} : vector<16x144xbf16>, vector<144x32xbf16>, vector<16x32xf32> -> vector<16x32xf32>
    %c0_43 = arith.constant 0 : index
    %c0_44 = arith.constant 0 : index
    %40 = vector.load %arg3[%c0_43, %c0_44] : memref<1x32xf32, #tpu.memory_space<vmem>>, vector<1x32xf32>
    %41 = vector.broadcast %40 : vector<1x32xf32> to vector<16x32xf32>
    %42 = arith.addf %39, %41 : vector<16x32xf32>
    %cst_45 = arith.constant 0.000000e+00 : f32
    %43 = vector.broadcast %cst_45 : f32 to vector<16x32xf32>
    %44 = arith.maximumf %42, %43 : vector<16x32xf32>
    %45 = vector.shape_cast %44 : vector<16x32xf32> to vector<4x4x32xf32>
    %cst_46 = arith.constant 0.000000e+00 : f32
    %46 = vector.broadcast %cst_46 : f32 to vector<4x1x32xf32>
    %cst_47 = arith.constant 0.000000e+00 : f32
    %47 = vector.broadcast %cst_47 : f32 to vector<1x6x32xf32>
    %48 = tpu.concatenate %46, %45, %46 in 1 : vector<4x1x32xf32>, vector<4x4x32xf32>, vector<4x1x32xf32> -> vector<4x6x32xf32>
    %49 = tpu.concatenate %47, %48, %47 in 0 : vector<1x6x32xf32>, vector<4x6x32xf32>, vector<1x6x32xf32> -> vector<6x6x32xf32>
    %50 = vector.extract_strided_slice %49 {offsets = [0, 0, 0], sizes = [4, 4, 32], strides = [1, 1, 1]} : vector<6x6x32xf32> to vector<4x4x32xf32>
    %51 = vector.shape_cast %50 : vector<4x4x32xf32> to vector<16x32xf32>
    %52 = vector.extract_strided_slice %49 {offsets = [0, 1, 0], sizes = [4, 4, 32], strides = [1, 1, 1]} : vector<6x6x32xf32> to vector<4x4x32xf32>
    %53 = vector.shape_cast %52 : vector<4x4x32xf32> to vector<16x32xf32>
    %54 = vector.extract_strided_slice %49 {offsets = [0, 2, 0], sizes = [4, 4, 32], strides = [1, 1, 1]} : vector<6x6x32xf32> to vector<4x4x32xf32>
    %55 = vector.shape_cast %54 : vector<4x4x32xf32> to vector<16x32xf32>
    %56 = vector.extract_strided_slice %49 {offsets = [1, 0, 0], sizes = [4, 4, 32], strides = [1, 1, 1]} : vector<6x6x32xf32> to vector<4x4x32xf32>
    %57 = vector.shape_cast %56 : vector<4x4x32xf32> to vector<16x32xf32>
    %58 = vector.extract_strided_slice %49 {offsets = [1, 1, 0], sizes = [4, 4, 32], strides = [1, 1, 1]} : vector<6x6x32xf32> to vector<4x4x32xf32>
    %59 = vector.shape_cast %58 : vector<4x4x32xf32> to vector<16x32xf32>
    %60 = vector.extract_strided_slice %49 {offsets = [1, 2, 0], sizes = [4, 4, 32], strides = [1, 1, 1]} : vector<6x6x32xf32> to vector<4x4x32xf32>
    %61 = vector.shape_cast %60 : vector<4x4x32xf32> to vector<16x32xf32>
    %62 = vector.extract_strided_slice %49 {offsets = [2, 0, 0], sizes = [4, 4, 32], strides = [1, 1, 1]} : vector<6x6x32xf32> to vector<4x4x32xf32>
    %63 = vector.shape_cast %62 : vector<4x4x32xf32> to vector<16x32xf32>
    %64 = vector.extract_strided_slice %49 {offsets = [2, 1, 0], sizes = [4, 4, 32], strides = [1, 1, 1]} : vector<6x6x32xf32> to vector<4x4x32xf32>
    %65 = vector.shape_cast %64 : vector<4x4x32xf32> to vector<16x32xf32>
    %66 = vector.extract_strided_slice %49 {offsets = [2, 2, 0], sizes = [4, 4, 32], strides = [1, 1, 1]} : vector<6x6x32xf32> to vector<4x4x32xf32>
    %67 = vector.shape_cast %66 : vector<4x4x32xf32> to vector<16x32xf32>
    %68 = tpu.concatenate %51, %53, %55, %57, %59, %61, %63, %65, %67 in 1 : vector<16x32xf32>, vector<16x32xf32>, vector<16x32xf32>, vector<16x32xf32>, vector<16x32xf32>, vector<16x32xf32>, vector<16x32xf32>, vector<16x32xf32>, vector<16x32xf32> -> vector<16x288xf32>
    %69 = arith.truncf %68 : vector<16x288xf32> to vector<16x288xbf16>
    %c0_48 = arith.constant 0 : index
    %c0_49 = arith.constant 0 : index
    %70 = vector.load %arg4[%c0_48, %c0_49] : memref<288x32xbf16, #tpu.memory_space<vmem>>, vector<288x32xbf16>
    %cst_50 = arith.constant dense<0.000000e+00> : vector<16x32xf32>
    %71 = tpu.matmul %69, %70, %cst_50 {dimension_numbers = #tpu.dot_dimension_numbers<[1], [0], [0], [1], [0, 0, 1, 1], [], []>} : vector<16x288xbf16>, vector<288x32xbf16>, vector<16x32xf32> -> vector<16x32xf32>
    %c0_51 = arith.constant 0 : index
    %c0_52 = arith.constant 0 : index
    %72 = vector.load %arg5[%c0_51, %c0_52] : memref<1x32xf32, #tpu.memory_space<vmem>>, vector<1x32xf32>
    %73 = vector.broadcast %72 : vector<1x32xf32> to vector<16x32xf32>
    %74 = arith.addf %71, %73 : vector<16x32xf32>
    %cst_53 = arith.constant 0.000000e+00 : f32
    %75 = vector.broadcast %cst_53 : f32 to vector<16x32xf32>
    %76 = arith.maximumf %74, %75 : vector<16x32xf32>
    %77 = arith.truncf %76 : vector<16x32xf32> to vector<16x32xbf16>
    %c0_54 = arith.constant 0 : index
    %c0_55 = arith.constant 0 : index
    %c0_56 = arith.constant 0 : index
    %78 = vector.load %arg6[%c0_54, %c0_55, %c0_56] : memref<1x16x32xbf16, #tpu.memory_space<vmem>>, vector<1x16x32xbf16>
    %79 = vector.shape_cast %78 : vector<1x16x32xbf16> to vector<16x32xbf16>
    %80 = vector.shape_cast %77 : vector<16x32xbf16> to vector<1x16x32xbf16>
    tpu.vector_store %arg6[%c0_54, %c0_55, %c0_56], %80 {strides = array<i32>} : memref<1x16x32xbf16, #tpu.memory_space<vmem>>, vector<1x16x32xbf16>,
    return
  }
  func.func @transform_0(%arg0: i32) -> (i32, i32, i32, i32, i32) {
    %c0_i32 = arith.constant 0 : i32
    %c0_i32_0 = arith.constant 0 : i32
    %c0_i32_1 = arith.constant 0 : i32
    %c0_i32_2 = arith.constant 0 : i32
    %c0_i32_3 = arith.constant 0 : i32
    return %arg0, %c0_i32, %c0_i32_0, %c0_i32_1, %c0_i32_2 : i32, i32, i32, i32, i32
  }
  func.func @transform_1(%arg0: i32) -> (i32, i32) {
    %c0_i32 = arith.constant 0 : i32
    %c0_i32_0 = arith.constant 0 : i32
    %c0_i32_1 = arith.constant 0 : i32
    return %c0_i32, %c0_i32_0 : i32, i32
  }
  func.func @transform_2(%arg0: i32) -> (i32, i32) {
    %c0_i32 = arith.constant 0 : i32
    %c0_i32_0 = arith.constant 0 : i32
    %c0_i32_1 = arith.constant 0 : i32
    return %c0_i32, %c0_i32_0 : i32, i32
  }
  func.func @transform_3(%arg0: i32) -> (i32, i32) {
    %c0_i32 = arith.constant 0 : i32
    %c0_i32_0 = arith.constant 0 : i32
    %c0_i32_1 = arith.constant 0 : i32
    return %c0_i32, %c0_i32_0 : i32, i32
  }
  func.func @transform_4(%arg0: i32) -> (i32, i32) {
    %c0_i32 = arith.constant 0 : i32
    %c0_i32_0 = arith.constant 0 : i32
    %c0_i32_1 = arith.constant 0 : i32
    return %c0_i32, %c0_i32_0 : i32, i32
  }
  func.func @transform_5(%arg0: i32) -> (i32, i32, i32) {
    %c0_i32 = arith.constant 0 : i32
    %c0_i32_0 = arith.constant 0 : i32
    %c0_i32_1 = arith.constant 0 : i32
    return %arg0, %c0_i32, %c0_i32_0 : i32, i32, i32
  }
}

module attributes {stable_mosaic.version = 11 : i64} {
  func.func @_block_kernel(%arg0: i32, %arg1: memref<1x4x3x3x32xbf16, #tpu.memory_space<vmem>>, %arg2: memref<288x64xbf16, #tpu.memory_space<vmem>>, %arg3: memref<1x64xf32, #tpu.memory_space<vmem>>, %arg4: memref<576x64xbf16, #tpu.memory_space<vmem>>, %arg5: memref<1x64xf32, #tpu.memory_space<vmem>>, %arg6: memref<1x4x64xbf16, #tpu.memory_space<vmem>>) attributes {dimension_semantics = [#tpu.dimension_semantics<parallel>], iteration_bounds = array<i64: 2>, scalar_prefetch = 0 : i64, scratch_operands = 0 : i64, tpu.core_type = #tpu.core_type<tc>, window_params = [{transform_indices = @transform_0, window_bounds = array<i64: 1, 4, 3, 3, 32>}, {pipeline_mode = #tpu.pipeline_mode<synchronous>, transform_indices = @transform_1, window_bounds = array<i64: 288, 64>}, {pipeline_mode = #tpu.pipeline_mode<synchronous>, transform_indices = @transform_2, window_bounds = array<i64: 1, 64>}, {pipeline_mode = #tpu.pipeline_mode<synchronous>, transform_indices = @transform_3, window_bounds = array<i64: 576, 64>}, {pipeline_mode = #tpu.pipeline_mode<synchronous>, transform_indices = @transform_4, window_bounds = array<i64: 1, 64>}, {transform_indices = @transform_5, window_bounds = array<i64: 1, 4, 64>}]} {
    %c0 = arith.constant 0 : index
    %c0_0 = arith.constant 0 : index
    %c0_1 = arith.constant 0 : index
    %c0_2 = arith.constant 0 : index
    %c0_3 = arith.constant 0 : index
    %0 = vector.load %arg1[%c0, %c0_0, %c0_1, %c0_2, %c0_3] : memref<1x4x3x3x32xbf16, #tpu.memory_space<vmem>>, vector<1x1x2x2x32xbf16>
    %1 = vector.shape_cast %0 : vector<1x1x2x2x32xbf16> to vector<2x2x32xbf16>
    %2 = arith.extf %1 : vector<2x2x32xbf16> to vector<2x2x32xf32>
    %3 = vector.shape_cast %2 : vector<2x2x32xf32> to vector<4x32xf32>
    %c0_4 = arith.constant 0 : index
    %c1 = arith.constant 1 : index
    %c0_5 = arith.constant 0 : index
    %c0_6 = arith.constant 0 : index
    %c0_7 = arith.constant 0 : index
    %4 = vector.load %arg1[%c0_4, %c1, %c0_5, %c0_6, %c0_7] : memref<1x4x3x3x32xbf16, #tpu.memory_space<vmem>>, vector<1x1x2x2x32xbf16>
    %5 = vector.shape_cast %4 : vector<1x1x2x2x32xbf16> to vector<2x2x32xbf16>
    %6 = arith.extf %5 : vector<2x2x32xbf16> to vector<2x2x32xf32>
    %7 = vector.shape_cast %6 : vector<2x2x32xf32> to vector<4x32xf32>
    %c0_8 = arith.constant 0 : index
    %c0_9 = arith.constant 0 : index
    %c0_10 = arith.constant 0 : index
    %c1_11 = arith.constant 1 : index
    %c0_12 = arith.constant 0 : index
    %8 = vector.load %arg1[%c0_8, %c0_9, %c0_10, %c1_11, %c0_12] : memref<1x4x3x3x32xbf16, #tpu.memory_space<vmem>>, vector<1x1x2x2x32xbf16>
    %9 = vector.shape_cast %8 : vector<1x1x2x2x32xbf16> to vector<2x2x32xbf16>
    %10 = arith.extf %9 : vector<2x2x32xbf16> to vector<2x2x32xf32>
    %11 = vector.shape_cast %10 : vector<2x2x32xf32> to vector<4x32xf32>
    %c0_13 = arith.constant 0 : index
    %c2 = arith.constant 2 : index
    %c0_14 = arith.constant 0 : index
    %c0_15 = arith.constant 0 : index
    %c0_16 = arith.constant 0 : index
    %12 = vector.load %arg1[%c0_13, %c2, %c0_14, %c0_15, %c0_16] : memref<1x4x3x3x32xbf16, #tpu.memory_space<vmem>>, vector<1x1x2x2x32xbf16>
    %13 = vector.shape_cast %12 : vector<1x1x2x2x32xbf16> to vector<2x2x32xbf16>
    %14 = arith.extf %13 : vector<2x2x32xbf16> to vector<2x2x32xf32>
    %15 = vector.shape_cast %14 : vector<2x2x32xf32> to vector<4x32xf32>
    %c0_17 = arith.constant 0 : index
    %c3 = arith.constant 3 : index
    %c0_18 = arith.constant 0 : index
    %c0_19 = arith.constant 0 : index
    %c0_20 = arith.constant 0 : index
    %16 = vector.load %arg1[%c0_17, %c3, %c0_18, %c0_19, %c0_20] : memref<1x4x3x3x32xbf16, #tpu.memory_space<vmem>>, vector<1x1x2x2x32xbf16>
    %17 = vector.shape_cast %16 : vector<1x1x2x2x32xbf16> to vector<2x2x32xbf16>
    %18 = arith.extf %17 : vector<2x2x32xbf16> to vector<2x2x32xf32>
    %19 = vector.shape_cast %18 : vector<2x2x32xf32> to vector<4x32xf32>
    %c0_21 = arith.constant 0 : index
    %c2_22 = arith.constant 2 : index
    %c0_23 = arith.constant 0 : index
    %c1_24 = arith.constant 1 : index
    %c0_25 = arith.constant 0 : index
    %20 = vector.load %arg1[%c0_21, %c2_22, %c0_23, %c1_24, %c0_25] : memref<1x4x3x3x32xbf16, #tpu.memory_space<vmem>>, vector<1x1x2x2x32xbf16>
    %21 = vector.shape_cast %20 : vector<1x1x2x2x32xbf16> to vector<2x2x32xbf16>
    %22 = arith.extf %21 : vector<2x2x32xbf16> to vector<2x2x32xf32>
    %23 = vector.shape_cast %22 : vector<2x2x32xf32> to vector<4x32xf32>
    %c0_26 = arith.constant 0 : index
    %c0_27 = arith.constant 0 : index
    %c1_28 = arith.constant 1 : index
    %c0_29 = arith.constant 0 : index
    %c0_30 = arith.constant 0 : index
    %24 = vector.load %arg1[%c0_26, %c0_27, %c1_28, %c0_29, %c0_30] : memref<1x4x3x3x32xbf16, #tpu.memory_space<vmem>>, vector<1x1x2x2x32xbf16>
    %25 = vector.shape_cast %24 : vector<1x1x2x2x32xbf16> to vector<2x2x32xbf16>
    %26 = arith.extf %25 : vector<2x2x32xbf16> to vector<2x2x32xf32>
    %27 = vector.shape_cast %26 : vector<2x2x32xf32> to vector<4x32xf32>
    %c0_31 = arith.constant 0 : index
    %c1_32 = arith.constant 1 : index
    %c1_33 = arith.constant 1 : index
    %c0_34 = arith.constant 0 : index
    %c0_35 = arith.constant 0 : index
    %28 = vector.load %arg1[%c0_31, %c1_32, %c1_33, %c0_34, %c0_35] : memref<1x4x3x3x32xbf16, #tpu.memory_space<vmem>>, vector<1x1x2x2x32xbf16>
    %29 = vector.shape_cast %28 : vector<1x1x2x2x32xbf16> to vector<2x2x32xbf16>
    %30 = arith.extf %29 : vector<2x2x32xbf16> to vector<2x2x32xf32>
    %31 = vector.shape_cast %30 : vector<2x2x32xf32> to vector<4x32xf32>
    %c0_36 = arith.constant 0 : index
    %c0_37 = arith.constant 0 : index
    %c1_38 = arith.constant 1 : index
    %c1_39 = arith.constant 1 : index
    %c0_40 = arith.constant 0 : index
    %32 = vector.load %arg1[%c0_36, %c0_37, %c1_38, %c1_39, %c0_40] : memref<1x4x3x3x32xbf16, #tpu.memory_space<vmem>>, vector<1x1x2x2x32xbf16>
    %33 = vector.shape_cast %32 : vector<1x1x2x2x32xbf16> to vector<2x2x32xbf16>
    %34 = arith.extf %33 : vector<2x2x32xbf16> to vector<2x2x32xf32>
    %35 = vector.shape_cast %34 : vector<2x2x32xf32> to vector<4x32xf32>
    %36 = tpu.concatenate %3, %7, %11, %15, %19, %23, %27, %31, %35 in 1 : vector<4x32xf32>, vector<4x32xf32>, vector<4x32xf32>, vector<4x32xf32>, vector<4x32xf32>, vector<4x32xf32>, vector<4x32xf32>, vector<4x32xf32>, vector<4x32xf32> -> vector<4x288xf32>
    %37 = arith.truncf %36 : vector<4x288xf32> to vector<4x288xbf16>
    %c0_41 = arith.constant 0 : index
    %c0_42 = arith.constant 0 : index
    %38 = vector.load %arg2[%c0_41, %c0_42] : memref<288x64xbf16, #tpu.memory_space<vmem>>, vector<288x64xbf16>
    %cst = arith.constant dense<0.000000e+00> : vector<4x64xf32>
    %39 = tpu.matmul %37, %38, %cst {dimension_numbers = #tpu.dot_dimension_numbers<[1], [0], [0], [1], [0, 0, 1, 1], [], []>} : vector<4x288xbf16>, vector<288x64xbf16>, vector<4x64xf32> -> vector<4x64xf32>
    %c0_43 = arith.constant 0 : index
    %c0_44 = arith.constant 0 : index
    %40 = vector.load %arg3[%c0_43, %c0_44] : memref<1x64xf32, #tpu.memory_space<vmem>>, vector<1x64xf32>
    %41 = vector.broadcast %40 : vector<1x64xf32> to vector<4x64xf32>
    %42 = arith.addf %39, %41 : vector<4x64xf32>
    %cst_45 = arith.constant 0.000000e+00 : f32
    %43 = vector.broadcast %cst_45 : f32 to vector<4x64xf32>
    %44 = arith.maximumf %42, %43 : vector<4x64xf32>
    %45 = vector.shape_cast %44 : vector<4x64xf32> to vector<2x2x64xf32>
    %cst_46 = arith.constant 0.000000e+00 : f32
    %46 = vector.broadcast %cst_46 : f32 to vector<2x1x64xf32>
    %cst_47 = arith.constant 0.000000e+00 : f32
    %47 = vector.broadcast %cst_47 : f32 to vector<1x4x64xf32>
    %48 = tpu.concatenate %46, %45, %46 in 1 : vector<2x1x64xf32>, vector<2x2x64xf32>, vector<2x1x64xf32> -> vector<2x4x64xf32>
    %49 = tpu.concatenate %47, %48, %47 in 0 : vector<1x4x64xf32>, vector<2x4x64xf32>, vector<1x4x64xf32> -> vector<4x4x64xf32>
    %50 = vector.extract_strided_slice %49 {offsets = [0, 0, 0], sizes = [2, 2, 64], strides = [1, 1, 1]} : vector<4x4x64xf32> to vector<2x2x64xf32>
    %51 = vector.shape_cast %50 : vector<2x2x64xf32> to vector<4x64xf32>
    %52 = vector.extract_strided_slice %49 {offsets = [0, 1, 0], sizes = [2, 2, 64], strides = [1, 1, 1]} : vector<4x4x64xf32> to vector<2x2x64xf32>
    %53 = vector.shape_cast %52 : vector<2x2x64xf32> to vector<4x64xf32>
    %54 = vector.extract_strided_slice %49 {offsets = [0, 2, 0], sizes = [2, 2, 64], strides = [1, 1, 1]} : vector<4x4x64xf32> to vector<2x2x64xf32>
    %55 = vector.shape_cast %54 : vector<2x2x64xf32> to vector<4x64xf32>
    %56 = vector.extract_strided_slice %49 {offsets = [1, 0, 0], sizes = [2, 2, 64], strides = [1, 1, 1]} : vector<4x4x64xf32> to vector<2x2x64xf32>
    %57 = vector.shape_cast %56 : vector<2x2x64xf32> to vector<4x64xf32>
    %58 = vector.extract_strided_slice %49 {offsets = [1, 1, 0], sizes = [2, 2, 64], strides = [1, 1, 1]} : vector<4x4x64xf32> to vector<2x2x64xf32>
    %59 = vector.shape_cast %58 : vector<2x2x64xf32> to vector<4x64xf32>
    %60 = vector.extract_strided_slice %49 {offsets = [1, 2, 0], sizes = [2, 2, 64], strides = [1, 1, 1]} : vector<4x4x64xf32> to vector<2x2x64xf32>
    %61 = vector.shape_cast %60 : vector<2x2x64xf32> to vector<4x64xf32>
    %62 = vector.extract_strided_slice %49 {offsets = [2, 0, 0], sizes = [2, 2, 64], strides = [1, 1, 1]} : vector<4x4x64xf32> to vector<2x2x64xf32>
    %63 = vector.shape_cast %62 : vector<2x2x64xf32> to vector<4x64xf32>
    %64 = vector.extract_strided_slice %49 {offsets = [2, 1, 0], sizes = [2, 2, 64], strides = [1, 1, 1]} : vector<4x4x64xf32> to vector<2x2x64xf32>
    %65 = vector.shape_cast %64 : vector<2x2x64xf32> to vector<4x64xf32>
    %66 = vector.extract_strided_slice %49 {offsets = [2, 2, 0], sizes = [2, 2, 64], strides = [1, 1, 1]} : vector<4x4x64xf32> to vector<2x2x64xf32>
    %67 = vector.shape_cast %66 : vector<2x2x64xf32> to vector<4x64xf32>
    %68 = tpu.concatenate %51, %53, %55, %57, %59, %61, %63, %65, %67 in 1 : vector<4x64xf32>, vector<4x64xf32>, vector<4x64xf32>, vector<4x64xf32>, vector<4x64xf32>, vector<4x64xf32>, vector<4x64xf32>, vector<4x64xf32>, vector<4x64xf32> -> vector<4x576xf32>
    %69 = arith.truncf %68 : vector<4x576xf32> to vector<4x576xbf16>
    %c0_48 = arith.constant 0 : index
    %c0_49 = arith.constant 0 : index
    %70 = vector.load %arg4[%c0_48, %c0_49] : memref<576x64xbf16, #tpu.memory_space<vmem>>, vector<576x64xbf16>
    %cst_50 = arith.constant dense<0.000000e+00> : vector<4x64xf32>
    %71 = tpu.matmul %69, %70, %cst_50 {dimension_numbers = #tpu.dot_dimension_numbers<[1], [0], [0], [1], [0, 0, 1, 1], [], []>} : vector<4x576xbf16>, vector<576x64xbf16>, vector<4x64xf32> -> vector<4x64xf32>
    %c0_51 = arith.constant 0 : index
    %c0_52 = arith.constant 0 : index
    %72 = vector.load %arg5[%c0_51, %c0_52] : memref<1x64xf32, #tpu.memory_space<vmem>>, vector<1x64xf32>
    %73 = vector.broadcast %72 : vector<1x64xf32> to vector<4x64xf32>
    %74 = arith.addf %71, %73 : vector<4x64xf32>
    %cst_53 = arith.constant 0.000000e+00 : f32
    %75 = vector.broadcast %cst_53 : f32 to vector<4x64xf32>
    %76 = arith.maximumf %74, %75 : vector<4x64xf32>
    %77 = arith.truncf %76 : vector<4x64xf32> to vector<4x64xbf16>
    %c0_54 = arith.constant 0 : index
    %c0_55 = arith.constant 0 : index
    %c0_56 = arith.constant 0 : index
    %78 = vector.load %arg6[%c0_54, %c0_55, %c0_56] : memref<1x4x64xbf16, #tpu.memory_space<vmem>>, vector<1x4x64xbf16>
    %79 = vector.shape_cast %78 : vector<1x4x64xbf16> to vector<4x64xbf16>
    %80 = vector.shape_cast %77 : vector<4x64xbf16> to vector<1x4x64xbf16>
    tpu.vector_store %arg6[%c0_54, %c0_55, %c0_56], %80 {strides = array<i32>} : memref<1x4x64xbf16, #tpu.memory_space<vmem>>, vector<1x4x64xbf16>,
    return
  }
  func.func @transform_0(%arg0: i32) -> (i32, i32, i32, i32, i32) {
    %c0_i32 = arith.constant 0 : i32
    %c0_i32_0 = arith.constant 0 : i32
    %c0_i32_1 = arith.constant 0 : i32
    %c0_i32_2 = arith.constant 0 : i32
    %c0_i32_3 = arith.constant 0 : i32
    return %arg0, %c0_i32, %c0_i32_0, %c0_i32_1, %c0_i32_2 : i32, i32, i32, i32, i32
  }
  func.func @transform_1(%arg0: i32) -> (i32, i32) {
    %c0_i32 = arith.constant 0 : i32
    %c0_i32_0 = arith.constant 0 : i32
    %c0_i32_1 = arith.constant 0 : i32
    return %c0_i32, %c0_i32_0 : i32, i32
  }
  func.func @transform_2(%arg0: i32) -> (i32, i32) {
    %c0_i32 = arith.constant 0 : i32
    %c0_i32_0 = arith.constant 0 : i32
    %c0_i32_1 = arith.constant 0 : i32
    return %c0_i32, %c0_i32_0 : i32, i32
  }
  func.func @transform_3(%arg0: i32) -> (i32, i32) {
    %c0_i32 = arith.constant 0 : i32
    %c0_i32_0 = arith.constant 0 : i32
    %c0_i32_1 = arith.constant 0 : i32
    return %c0_i32, %c0_i32_0 : i32, i32
  }
  func.func @transform_4(%arg0: i32) -> (i32, i32) {
    %c0_i32 = arith.constant 0 : i32
    %c0_i32_0 = arith.constant 0 : i32
    %c0_i32_1 = arith.constant 0 : i32
    return %c0_i32, %c0_i32_0 : i32, i32
  }
  func.func @transform_5(%arg0: i32) -> (i32, i32, i32) {
    %c0_i32 = arith.constant 0 : i32
    %c0_i32_0 = arith.constant 0 : i32
    %c0_i32_1 = arith.constant 0 : i32
    return %arg0, %c0_i32, %c0_i32_0 : i32, i32, i32
  }
}

module attributes {stable_mosaic.version = 11 : i64} {
  func.func @_block_kernel(%arg0: i32, %arg1: memref<1x4x2x2x64xbf16, #tpu.memory_space<vmem>>, %arg2: memref<576x128xbf16, #tpu.memory_space<vmem>>, %arg3: memref<1x128xf32, #tpu.memory_space<vmem>>, %arg4: memref<1152x128xbf16, #tpu.memory_space<vmem>>, %arg5: memref<1x128xf32, #tpu.memory_space<vmem>>, %arg6: memref<1x1x128xbf16, #tpu.memory_space<vmem>>) attributes {dimension_semantics = [#tpu.dimension_semantics<parallel>], iteration_bounds = array<i64: 2>, scalar_prefetch = 0 : i64, scratch_operands = 0 : i64, tpu.core_type = #tpu.core_type<tc>, window_params = [{transform_indices = @transform_0, window_bounds = array<i64: 1, 4, 2, 2, 64>}, {pipeline_mode = #tpu.pipeline_mode<synchronous>, transform_indices = @transform_1, window_bounds = array<i64: 576, 128>}, {pipeline_mode = #tpu.pipeline_mode<synchronous>, transform_indices = @transform_2, window_bounds = array<i64: 1, 128>}, {pipeline_mode = #tpu.pipeline_mode<synchronous>, transform_indices = @transform_3, window_bounds = array<i64: 1152, 128>}, {pipeline_mode = #tpu.pipeline_mode<synchronous>, transform_indices = @transform_4, window_bounds = array<i64: 1, 128>}, {transform_indices = @transform_5, window_bounds = array<i64: 1, 1, 128>}]} {
    %c0 = arith.constant 0 : index
    %c0_0 = arith.constant 0 : index
    %c0_1 = arith.constant 0 : index
    %c0_2 = arith.constant 0 : index
    %c0_3 = arith.constant 0 : index
    %0 = vector.load %arg1[%c0, %c0_0, %c0_1, %c0_2, %c0_3] : memref<1x4x2x2x64xbf16, #tpu.memory_space<vmem>>, vector<1x1x1x1x64xbf16>
    %1 = vector.shape_cast %0 : vector<1x1x1x1x64xbf16> to vector<1x1x64xbf16>
    %2 = arith.extf %1 : vector<1x1x64xbf16> to vector<1x1x64xf32>
    %3 = vector.shape_cast %2 : vector<1x1x64xf32> to vector<1x64xf32>
    %c0_4 = arith.constant 0 : index
    %c1 = arith.constant 1 : index
    %c0_5 = arith.constant 0 : index
    %c0_6 = arith.constant 0 : index
    %c0_7 = arith.constant 0 : index
    %4 = vector.load %arg1[%c0_4, %c1, %c0_5, %c0_6, %c0_7] : memref<1x4x2x2x64xbf16, #tpu.memory_space<vmem>>, vector<1x1x1x1x64xbf16>
    %5 = vector.shape_cast %4 : vector<1x1x1x1x64xbf16> to vector<1x1x64xbf16>
    %6 = arith.extf %5 : vector<1x1x64xbf16> to vector<1x1x64xf32>
    %7 = vector.shape_cast %6 : vector<1x1x64xf32> to vector<1x64xf32>
    %c0_8 = arith.constant 0 : index
    %c0_9 = arith.constant 0 : index
    %c0_10 = arith.constant 0 : index
    %c1_11 = arith.constant 1 : index
    %c0_12 = arith.constant 0 : index
    %8 = vector.load %arg1[%c0_8, %c0_9, %c0_10, %c1_11, %c0_12] : memref<1x4x2x2x64xbf16, #tpu.memory_space<vmem>>, vector<1x1x1x1x64xbf16>
    %9 = vector.shape_cast %8 : vector<1x1x1x1x64xbf16> to vector<1x1x64xbf16>
    %10 = arith.extf %9 : vector<1x1x64xbf16> to vector<1x1x64xf32>
    %11 = vector.shape_cast %10 : vector<1x1x64xf32> to vector<1x64xf32>
    %c0_13 = arith.constant 0 : index
    %c2 = arith.constant 2 : index
    %c0_14 = arith.constant 0 : index
    %c0_15 = arith.constant 0 : index
    %c0_16 = arith.constant 0 : index
    %12 = vector.load %arg1[%c0_13, %c2, %c0_14, %c0_15, %c0_16] : memref<1x4x2x2x64xbf16, #tpu.memory_space<vmem>>, vector<1x1x1x1x64xbf16>
    %13 = vector.shape_cast %12 : vector<1x1x1x1x64xbf16> to vector<1x1x64xbf16>
    %14 = arith.extf %13 : vector<1x1x64xbf16> to vector<1x1x64xf32>
    %15 = vector.shape_cast %14 : vector<1x1x64xf32> to vector<1x64xf32>
    %c0_17 = arith.constant 0 : index
    %c3 = arith.constant 3 : index
    %c0_18 = arith.constant 0 : index
    %c0_19 = arith.constant 0 : index
    %c0_20 = arith.constant 0 : index
    %16 = vector.load %arg1[%c0_17, %c3, %c0_18, %c0_19, %c0_20] : memref<1x4x2x2x64xbf16, #tpu.memory_space<vmem>>, vector<1x1x1x1x64xbf16>
    %17 = vector.shape_cast %16 : vector<1x1x1x1x64xbf16> to vector<1x1x64xbf16>
    %18 = arith.extf %17 : vector<1x1x64xbf16> to vector<1x1x64xf32>
    %19 = vector.shape_cast %18 : vector<1x1x64xf32> to vector<1x64xf32>
    %c0_21 = arith.constant 0 : index
    %c2_22 = arith.constant 2 : index
    %c0_23 = arith.constant 0 : index
    %c1_24 = arith.constant 1 : index
    %c0_25 = arith.constant 0 : index
    %20 = vector.load %arg1[%c0_21, %c2_22, %c0_23, %c1_24, %c0_25] : memref<1x4x2x2x64xbf16, #tpu.memory_space<vmem>>, vector<1x1x1x1x64xbf16>
    %21 = vector.shape_cast %20 : vector<1x1x1x1x64xbf16> to vector<1x1x64xbf16>
    %22 = arith.extf %21 : vector<1x1x64xbf16> to vector<1x1x64xf32>
    %23 = vector.shape_cast %22 : vector<1x1x64xf32> to vector<1x64xf32>
    %c0_26 = arith.constant 0 : index
    %c0_27 = arith.constant 0 : index
    %c1_28 = arith.constant 1 : index
    %c0_29 = arith.constant 0 : index
    %c0_30 = arith.constant 0 : index
    %24 = vector.load %arg1[%c0_26, %c0_27, %c1_28, %c0_29, %c0_30] : memref<1x4x2x2x64xbf16, #tpu.memory_space<vmem>>, vector<1x1x1x1x64xbf16>
    %25 = vector.shape_cast %24 : vector<1x1x1x1x64xbf16> to vector<1x1x64xbf16>
    %26 = arith.extf %25 : vector<1x1x64xbf16> to vector<1x1x64xf32>
    %27 = vector.shape_cast %26 : vector<1x1x64xf32> to vector<1x64xf32>
    %c0_31 = arith.constant 0 : index
    %c1_32 = arith.constant 1 : index
    %c1_33 = arith.constant 1 : index
    %c0_34 = arith.constant 0 : index
    %c0_35 = arith.constant 0 : index
    %28 = vector.load %arg1[%c0_31, %c1_32, %c1_33, %c0_34, %c0_35] : memref<1x4x2x2x64xbf16, #tpu.memory_space<vmem>>, vector<1x1x1x1x64xbf16>
    %29 = vector.shape_cast %28 : vector<1x1x1x1x64xbf16> to vector<1x1x64xbf16>
    %30 = arith.extf %29 : vector<1x1x64xbf16> to vector<1x1x64xf32>
    %31 = vector.shape_cast %30 : vector<1x1x64xf32> to vector<1x64xf32>
    %c0_36 = arith.constant 0 : index
    %c0_37 = arith.constant 0 : index
    %c1_38 = arith.constant 1 : index
    %c1_39 = arith.constant 1 : index
    %c0_40 = arith.constant 0 : index
    %32 = vector.load %arg1[%c0_36, %c0_37, %c1_38, %c1_39, %c0_40] : memref<1x4x2x2x64xbf16, #tpu.memory_space<vmem>>, vector<1x1x1x1x64xbf16>
    %33 = vector.shape_cast %32 : vector<1x1x1x1x64xbf16> to vector<1x1x64xbf16>
    %34 = arith.extf %33 : vector<1x1x64xbf16> to vector<1x1x64xf32>
    %35 = vector.shape_cast %34 : vector<1x1x64xf32> to vector<1x64xf32>
    %36 = tpu.concatenate %3, %7, %11, %15, %19, %23, %27, %31, %35 in 1 : vector<1x64xf32>, vector<1x64xf32>, vector<1x64xf32>, vector<1x64xf32>, vector<1x64xf32>, vector<1x64xf32>, vector<1x64xf32>, vector<1x64xf32>, vector<1x64xf32> -> vector<1x576xf32>
    %37 = arith.truncf %36 : vector<1x576xf32> to vector<1x576xbf16>
    %c0_41 = arith.constant 0 : index
    %c0_42 = arith.constant 0 : index
    %38 = vector.load %arg2[%c0_41, %c0_42] : memref<576x128xbf16, #tpu.memory_space<vmem>>, vector<576x128xbf16>
    %cst = arith.constant dense<0.000000e+00> : vector<1x128xf32>
    %39 = tpu.matmul %37, %38, %cst {dimension_numbers = #tpu.dot_dimension_numbers<[1], [0], [0], [1], [0, 0, 1, 1], [], []>} : vector<1x576xbf16>, vector<576x128xbf16>, vector<1x128xf32> -> vector<1x128xf32>
    %c0_43 = arith.constant 0 : index
    %c0_44 = arith.constant 0 : index
    %40 = vector.load %arg3[%c0_43, %c0_44] : memref<1x128xf32, #tpu.memory_space<vmem>>, vector<1x128xf32>
    %41 = arith.addf %39, %40 : vector<1x128xf32>
    %cst_45 = arith.constant 0.000000e+00 : f32
    %42 = vector.broadcast %cst_45 : f32 to vector<1x128xf32>
    %43 = arith.maximumf %41, %42 : vector<1x128xf32>
    %44 = vector.shape_cast %43 : vector<1x128xf32> to vector<1x1x128xf32>
    %cst_46 = arith.constant 0.000000e+00 : f32
    %45 = vector.broadcast %cst_46 : f32 to vector<1x1x128xf32>
    %cst_47 = arith.constant 0.000000e+00 : f32
    %46 = vector.broadcast %cst_47 : f32 to vector<1x3x128xf32>
    %47 = tpu.concatenate %45, %44, %45 in 1 : vector<1x1x128xf32>, vector<1x1x128xf32>, vector<1x1x128xf32> -> vector<1x3x128xf32>
    %48 = tpu.concatenate %46, %47, %46 in 0 : vector<1x3x128xf32>, vector<1x3x128xf32>, vector<1x3x128xf32> -> vector<3x3x128xf32>
    %49 = vector.extract_strided_slice %48 {offsets = [0, 0, 0], sizes = [1, 1, 128], strides = [1, 1, 1]} : vector<3x3x128xf32> to vector<1x1x128xf32>
    %50 = vector.shape_cast %49 : vector<1x1x128xf32> to vector<1x128xf32>
    %51 = vector.extract_strided_slice %48 {offsets = [0, 1, 0], sizes = [1, 1, 128], strides = [1, 1, 1]} : vector<3x3x128xf32> to vector<1x1x128xf32>
    %52 = vector.shape_cast %51 : vector<1x1x128xf32> to vector<1x128xf32>
    %53 = vector.extract_strided_slice %48 {offsets = [0, 2, 0], sizes = [1, 1, 128], strides = [1, 1, 1]} : vector<3x3x128xf32> to vector<1x1x128xf32>
    %54 = vector.shape_cast %53 : vector<1x1x128xf32> to vector<1x128xf32>
    %55 = vector.extract_strided_slice %48 {offsets = [1, 0, 0], sizes = [1, 1, 128], strides = [1, 1, 1]} : vector<3x3x128xf32> to vector<1x1x128xf32>
    %56 = vector.shape_cast %55 : vector<1x1x128xf32> to vector<1x128xf32>
    %57 = vector.extract_strided_slice %48 {offsets = [1, 1, 0], sizes = [1, 1, 128], strides = [1, 1, 1]} : vector<3x3x128xf32> to vector<1x1x128xf32>
    %58 = vector.shape_cast %57 : vector<1x1x128xf32> to vector<1x128xf32>
    %59 = vector.extract_strided_slice %48 {offsets = [1, 2, 0], sizes = [1, 1, 128], strides = [1, 1, 1]} : vector<3x3x128xf32> to vector<1x1x128xf32>
    %60 = vector.shape_cast %59 : vector<1x1x128xf32> to vector<1x128xf32>
    %61 = vector.extract_strided_slice %48 {offsets = [2, 0, 0], sizes = [1, 1, 128], strides = [1, 1, 1]} : vector<3x3x128xf32> to vector<1x1x128xf32>
    %62 = vector.shape_cast %61 : vector<1x1x128xf32> to vector<1x128xf32>
    %63 = vector.extract_strided_slice %48 {offsets = [2, 1, 0], sizes = [1, 1, 128], strides = [1, 1, 1]} : vector<3x3x128xf32> to vector<1x1x128xf32>
    %64 = vector.shape_cast %63 : vector<1x1x128xf32> to vector<1x128xf32>
    %65 = vector.extract_strided_slice %48 {offsets = [2, 2, 0], sizes = [1, 1, 128], strides = [1, 1, 1]} : vector<3x3x128xf32> to vector<1x1x128xf32>
    %66 = vector.shape_cast %65 : vector<1x1x128xf32> to vector<1x128xf32>
    %67 = tpu.concatenate %50, %52, %54, %56, %58, %60, %62, %64, %66 in 1 : vector<1x128xf32>, vector<1x128xf32>, vector<1x128xf32>, vector<1x128xf32>, vector<1x128xf32>, vector<1x128xf32>, vector<1x128xf32>, vector<1x128xf32>, vector<1x128xf32> -> vector<1x1152xf32>
    %68 = arith.truncf %67 : vector<1x1152xf32> to vector<1x1152xbf16>
    %c0_48 = arith.constant 0 : index
    %c0_49 = arith.constant 0 : index
    %69 = vector.load %arg4[%c0_48, %c0_49] : memref<1152x128xbf16, #tpu.memory_space<vmem>>, vector<1152x128xbf16>
    %cst_50 = arith.constant dense<0.000000e+00> : vector<1x128xf32>
    %70 = tpu.matmul %68, %69, %cst_50 {dimension_numbers = #tpu.dot_dimension_numbers<[1], [0], [0], [1], [0, 0, 1, 1], [], []>} : vector<1x1152xbf16>, vector<1152x128xbf16>, vector<1x128xf32> -> vector<1x128xf32>
    %c0_51 = arith.constant 0 : index
    %c0_52 = arith.constant 0 : index
    %71 = vector.load %arg5[%c0_51, %c0_52] : memref<1x128xf32, #tpu.memory_space<vmem>>, vector<1x128xf32>
    %72 = arith.addf %70, %71 : vector<1x128xf32>
    %cst_53 = arith.constant 0.000000e+00 : f32
    %73 = vector.broadcast %cst_53 : f32 to vector<1x128xf32>
    %74 = arith.maximumf %72, %73 : vector<1x128xf32>
    %75 = arith.truncf %74 : vector<1x128xf32> to vector<1x128xbf16>
    %c0_54 = arith.constant 0 : index
    %c0_55 = arith.constant 0 : index
    %c0_56 = arith.constant 0 : index
    %76 = vector.load %arg6[%c0_54, %c0_55, %c0_56] : memref<1x1x128xbf16, #tpu.memory_space<vmem>>, vector<1x1x128xbf16>
    %77 = vector.shape_cast %76 : vector<1x1x128xbf16> to vector<1x128xbf16>
    %78 = vector.shape_cast %75 : vector<1x128xbf16> to vector<1x1x128xbf16>
    tpu.vector_store %arg6[%c0_54, %c0_55, %c0_56], %78 {strides = array<i32>} : memref<1x1x128xbf16, #tpu.memory_space<vmem>>, vector<1x1x128xbf16>,
    return
  }
  func.func @transform_0(%arg0: i32) -> (i32, i32, i32, i32, i32) {
    %c0_i32 = arith.constant 0 : i32
    %c0_i32_0 = arith.constant 0 : i32
    %c0_i32_1 = arith.constant 0 : i32
    %c0_i32_2 = arith.constant 0 : i32
    %c0_i32_3 = arith.constant 0 : i32
    return %arg0, %c0_i32, %c0_i32_0, %c0_i32_1, %c0_i32_2 : i32, i32, i32, i32, i32
  }
  func.func @transform_1(%arg0: i32) -> (i32, i32) {
    %c0_i32 = arith.constant 0 : i32
    %c0_i32_0 = arith.constant 0 : i32
    %c0_i32_1 = arith.constant 0 : i32
    return %c0_i32, %c0_i32_0 : i32, i32
  }
  func.func @transform_2(%arg0: i32) -> (i32, i32) {
    %c0_i32 = arith.constant 0 : i32
    %c0_i32_0 = arith.constant 0 : i32
    %c0_i32_1 = arith.constant 0 : i32
    return %c0_i32, %c0_i32_0 : i32, i32
  }
  func.func @transform_3(%arg0: i32) -> (i32, i32) {
    %c0_i32 = arith.constant 0 : i32
    %c0_i32_0 = arith.constant 0 : i32
    %c0_i32_1 = arith.constant 0 : i32
    return %c0_i32, %c0_i32_0 : i32, i32
  }
  func.func @transform_4(%arg0: i32) -> (i32, i32) {
    %c0_i32 = arith.constant 0 : i32
    %c0_i32_0 = arith.constant 0 : i32
    %c0_i32_1 = arith.constant 0 : i32
    return %c0_i32, %c0_i32_0 : i32, i32
  }
  func.func @transform_5(%arg0: i32) -> (i32, i32, i32) {
    %c0_i32 = arith.constant 0 : i32
    %c0_i32_0 = arith.constant 0 : i32
    %c0_i32_1 = arith.constant 0 : i32
    return %arg0, %c0_i32, %c0_i32_0 : i32, i32, i32
  }
}

module attributes {stable_mosaic.version = 11 : i64} {
  func.func @_convt_kernel(%arg0: i32, %arg1: memref<1x1x2x2x128xbf16, #tpu.memory_space<vmem>>, %arg2: memref<512x512xbf16, #tpu.memory_space<vmem>>, %arg3: memref<1x512xf32, #tpu.memory_space<vmem>>, %arg4: memref<1x1x512xbf16, #tpu.memory_space<vmem>>) attributes {dimension_semantics = [#tpu.dimension_semantics<parallel>], iteration_bounds = array<i64: 2>, scalar_prefetch = 0 : i64, scratch_operands = 0 : i64, tpu.core_type = #tpu.core_type<tc>, window_params = [{transform_indices = @transform_0, window_bounds = array<i64: 1, 1, 2, 2, 128>}, {pipeline_mode = #tpu.pipeline_mode<synchronous>, transform_indices = @transform_1, window_bounds = array<i64: 512, 512>}, {pipeline_mode = #tpu.pipeline_mode<synchronous>, transform_indices = @transform_2, window_bounds = array<i64: 1, 512>}, {transform_indices = @transform_3, window_bounds = array<i64: 1, 1, 512>}]} {
    %c0 = arith.constant 0 : index
    %c0_0 = arith.constant 0 : index
    %c0_1 = arith.constant 0 : index
    %c0_2 = arith.constant 0 : index
    %c0_3 = arith.constant 0 : index
    %0 = vector.load %arg1[%c0, %c0_0, %c0_1, %c0_2, %c0_3] : memref<1x1x2x2x128xbf16, #tpu.memory_space<vmem>>, vector<1x1x1x1x128xbf16>
    %1 = vector.shape_cast %0 : vector<1x1x1x1x128xbf16> to vector<1x1x128xbf16>
    %2 = arith.extf %1 : vector<1x1x128xbf16> to vector<1x1x128xf32>
    %3 = vector.shape_cast %2 : vector<1x1x128xf32> to vector<1x128xf32>
    %c0_4 = arith.constant 0 : index
    %c0_5 = arith.constant 0 : index
    %c0_6 = arith.constant 0 : index
    %c1 = arith.constant 1 : index
    %c0_7 = arith.constant 0 : index
    %4 = vector.load %arg1[%c0_4, %c0_5, %c0_6, %c1, %c0_7] : memref<1x1x2x2x128xbf16, #tpu.memory_space<vmem>>, vector<1x1x1x1x128xbf16>
    %5 = vector.shape_cast %4 : vector<1x1x1x1x128xbf16> to vector<1x1x128xbf16>
    %6 = arith.extf %5 : vector<1x1x128xbf16> to vector<1x1x128xf32>
    %7 = vector.shape_cast %6 : vector<1x1x128xf32> to vector<1x128xf32>
    %c0_8 = arith.constant 0 : index
    %c0_9 = arith.constant 0 : index
    %c1_10 = arith.constant 1 : index
    %c0_11 = arith.constant 0 : index
    %c0_12 = arith.constant 0 : index
    %8 = vector.load %arg1[%c0_8, %c0_9, %c1_10, %c0_11, %c0_12] : memref<1x1x2x2x128xbf16, #tpu.memory_space<vmem>>, vector<1x1x1x1x128xbf16>
    %9 = vector.shape_cast %8 : vector<1x1x1x1x128xbf16> to vector<1x1x128xbf16>
    %10 = arith.extf %9 : vector<1x1x128xbf16> to vector<1x1x128xf32>
    %11 = vector.shape_cast %10 : vector<1x1x128xf32> to vector<1x128xf32>
    %c0_13 = arith.constant 0 : index
    %c0_14 = arith.constant 0 : index
    %c1_15 = arith.constant 1 : index
    %c1_16 = arith.constant 1 : index
    %c0_17 = arith.constant 0 : index
    %12 = vector.load %arg1[%c0_13, %c0_14, %c1_15, %c1_16, %c0_17] : memref<1x1x2x2x128xbf16, #tpu.memory_space<vmem>>, vector<1x1x1x1x128xbf16>
    %13 = vector.shape_cast %12 : vector<1x1x1x1x128xbf16> to vector<1x1x128xbf16>
    %14 = arith.extf %13 : vector<1x1x128xbf16> to vector<1x1x128xf32>
    %15 = vector.shape_cast %14 : vector<1x1x128xf32> to vector<1x128xf32>
    %16 = tpu.concatenate %3, %7, %11, %15 in 1 : vector<1x128xf32>, vector<1x128xf32>, vector<1x128xf32>, vector<1x128xf32> -> vector<1x512xf32>
    %17 = arith.truncf %16 : vector<1x512xf32> to vector<1x512xbf16>
    %c0_18 = arith.constant 0 : index
    %c0_19 = arith.constant 0 : index
    %18 = vector.load %arg2[%c0_18, %c0_19] : memref<512x512xbf16, #tpu.memory_space<vmem>>, vector<512x512xbf16>
    %cst = arith.constant dense<0.000000e+00> : vector<1x512xf32>
    %19 = tpu.matmul %17, %18, %cst {dimension_numbers = #tpu.dot_dimension_numbers<[1], [0], [0], [1], [0, 0, 1, 1], [], []>} : vector<1x512xbf16>, vector<512x512xbf16>, vector<1x512xf32> -> vector<1x512xf32>
    %c0_20 = arith.constant 0 : index
    %c0_21 = arith.constant 0 : index
    %20 = vector.load %arg3[%c0_20, %c0_21] : memref<1x512xf32, #tpu.memory_space<vmem>>, vector<1x512xf32>
    %21 = arith.addf %19, %20 : vector<1x512xf32>
    %cst_22 = arith.constant 0.000000e+00 : f32
    %22 = vector.broadcast %cst_22 : f32 to vector<1x512xf32>
    %23 = arith.maximumf %21, %22 : vector<1x512xf32>
    %24 = arith.truncf %23 : vector<1x512xf32> to vector<1x512xbf16>
    %c0_23 = arith.constant 0 : index
    %c0_24 = arith.constant 0 : index
    %c0_25 = arith.constant 0 : index
    %25 = vector.load %arg4[%c0_23, %c0_24, %c0_25] : memref<1x1x512xbf16, #tpu.memory_space<vmem>>, vector<1x1x512xbf16>
    %26 = vector.shape_cast %25 : vector<1x1x512xbf16> to vector<1x512xbf16>
    %27 = vector.shape_cast %24 : vector<1x512xbf16> to vector<1x1x512xbf16>
    tpu.vector_store %arg4[%c0_23, %c0_24, %c0_25], %27 {strides = array<i32>} : memref<1x1x512xbf16, #tpu.memory_space<vmem>>, vector<1x1x512xbf16>,
    return
  }
  func.func @transform_0(%arg0: i32) -> (i32, i32, i32, i32, i32) {
    %c0_i32 = arith.constant 0 : i32
    %c0_i32_0 = arith.constant 0 : i32
    %c0_i32_1 = arith.constant 0 : i32
    %c0_i32_2 = arith.constant 0 : i32
    %c0_i32_3 = arith.constant 0 : i32
    return %arg0, %c0_i32, %c0_i32_0, %c0_i32_1, %c0_i32_2 : i32, i32, i32, i32, i32
  }
  func.func @transform_1(%arg0: i32) -> (i32, i32) {
    %c0_i32 = arith.constant 0 : i32
    %c0_i32_0 = arith.constant 0 : i32
    %c0_i32_1 = arith.constant 0 : i32
    return %c0_i32, %c0_i32_0 : i32, i32
  }
  func.func @transform_2(%arg0: i32) -> (i32, i32) {
    %c0_i32 = arith.constant 0 : i32
    %c0_i32_0 = arith.constant 0 : i32
    %c0_i32_1 = arith.constant 0 : i32
    return %c0_i32, %c0_i32_0 : i32, i32
  }
  func.func @transform_3(%arg0: i32) -> (i32, i32, i32) {
    %c0_i32 = arith.constant 0 : i32
    %c0_i32_0 = arith.constant 0 : i32
    %c0_i32_1 = arith.constant 0 : i32
    return %arg0, %c0_i32, %c0_i32_0 : i32, i32, i32
  }
}

module attributes {stable_mosaic.version = 11 : i64} {
  func.func @_convt_kernel(%arg0: i32, %arg1: memref<1x1x3x3x128xbf16, #tpu.memory_space<vmem>>, %arg2: memref<512x256xbf16, #tpu.memory_space<vmem>>, %arg3: memref<1x256xf32, #tpu.memory_space<vmem>>, %arg4: memref<1x4x256xbf16, #tpu.memory_space<vmem>>) attributes {dimension_semantics = [#tpu.dimension_semantics<parallel>], iteration_bounds = array<i64: 2>, scalar_prefetch = 0 : i64, scratch_operands = 0 : i64, tpu.core_type = #tpu.core_type<tc>, window_params = [{transform_indices = @transform_0, window_bounds = array<i64: 1, 1, 3, 3, 128>}, {pipeline_mode = #tpu.pipeline_mode<synchronous>, transform_indices = @transform_1, window_bounds = array<i64: 512, 256>}, {pipeline_mode = #tpu.pipeline_mode<synchronous>, transform_indices = @transform_2, window_bounds = array<i64: 1, 256>}, {transform_indices = @transform_3, window_bounds = array<i64: 1, 4, 256>}]} {
    %c0 = arith.constant 0 : index
    %c0_0 = arith.constant 0 : index
    %c0_1 = arith.constant 0 : index
    %c0_2 = arith.constant 0 : index
    %c0_3 = arith.constant 0 : index
    %0 = vector.load %arg1[%c0, %c0_0, %c0_1, %c0_2, %c0_3] : memref<1x1x3x3x128xbf16, #tpu.memory_space<vmem>>, vector<1x1x2x2x128xbf16>
    %1 = vector.shape_cast %0 : vector<1x1x2x2x128xbf16> to vector<2x2x128xbf16>
    %2 = arith.extf %1 : vector<2x2x128xbf16> to vector<2x2x128xf32>
    %3 = vector.shape_cast %2 : vector<2x2x128xf32> to vector<4x128xf32>
    %c0_4 = arith.constant 0 : index
    %c0_5 = arith.constant 0 : index
    %c0_6 = arith.constant 0 : index
    %c1 = arith.constant 1 : index
    %c0_7 = arith.constant 0 : index
    %4 = vector.load %arg1[%c0_4, %c0_5, %c0_6, %c1, %c0_7] : memref<1x1x3x3x128xbf16, #tpu.memory_space<vmem>>, vector<1x1x2x2x128xbf16>
    %5 = vector.shape_cast %4 : vector<1x1x2x2x128xbf16> to vector<2x2x128xbf16>
    %6 = arith.extf %5 : vector<2x2x128xbf16> to vector<2x2x128xf32>
    %7 = vector.shape_cast %6 : vector<2x2x128xf32> to vector<4x128xf32>
    %c0_8 = arith.constant 0 : index
    %c0_9 = arith.constant 0 : index
    %c1_10 = arith.constant 1 : index
    %c0_11 = arith.constant 0 : index
    %c0_12 = arith.constant 0 : index
    %8 = vector.load %arg1[%c0_8, %c0_9, %c1_10, %c0_11, %c0_12] : memref<1x1x3x3x128xbf16, #tpu.memory_space<vmem>>, vector<1x1x2x2x128xbf16>
    %9 = vector.shape_cast %8 : vector<1x1x2x2x128xbf16> to vector<2x2x128xbf16>
    %10 = arith.extf %9 : vector<2x2x128xbf16> to vector<2x2x128xf32>
    %11 = vector.shape_cast %10 : vector<2x2x128xf32> to vector<4x128xf32>
    %c0_13 = arith.constant 0 : index
    %c0_14 = arith.constant 0 : index
    %c1_15 = arith.constant 1 : index
    %c1_16 = arith.constant 1 : index
    %c0_17 = arith.constant 0 : index
    %12 = vector.load %arg1[%c0_13, %c0_14, %c1_15, %c1_16, %c0_17] : memref<1x1x3x3x128xbf16, #tpu.memory_space<vmem>>, vector<1x1x2x2x128xbf16>
    %13 = vector.shape_cast %12 : vector<1x1x2x2x128xbf16> to vector<2x2x128xbf16>
    %14 = arith.extf %13 : vector<2x2x128xbf16> to vector<2x2x128xf32>
    %15 = vector.shape_cast %14 : vector<2x2x128xf32> to vector<4x128xf32>
    %16 = tpu.concatenate %3, %7, %11, %15 in 1 : vector<4x128xf32>, vector<4x128xf32>, vector<4x128xf32>, vector<4x128xf32> -> vector<4x512xf32>
    %17 = arith.truncf %16 : vector<4x512xf32> to vector<4x512xbf16>
    %c0_18 = arith.constant 0 : index
    %c0_19 = arith.constant 0 : index
    %18 = vector.load %arg2[%c0_18, %c0_19] : memref<512x256xbf16, #tpu.memory_space<vmem>>, vector<512x256xbf16>
    %cst = arith.constant dense<0.000000e+00> : vector<4x256xf32>
    %19 = tpu.matmul %17, %18, %cst {dimension_numbers = #tpu.dot_dimension_numbers<[1], [0], [0], [1], [0, 0, 1, 1], [], []>} : vector<4x512xbf16>, vector<512x256xbf16>, vector<4x256xf32> -> vector<4x256xf32>
    %c0_20 = arith.constant 0 : index
    %c0_21 = arith.constant 0 : index
    %20 = vector.load %arg3[%c0_20, %c0_21] : memref<1x256xf32, #tpu.memory_space<vmem>>, vector<1x256xf32>
    %21 = vector.broadcast %20 : vector<1x256xf32> to vector<4x256xf32>
    %22 = arith.addf %19, %21 : vector<4x256xf32>
    %cst_22 = arith.constant 0.000000e+00 : f32
    %23 = vector.broadcast %cst_22 : f32 to vector<4x256xf32>
    %24 = arith.maximumf %22, %23 : vector<4x256xf32>
    %25 = arith.truncf %24 : vector<4x256xf32> to vector<4x256xbf16>
    %c0_23 = arith.constant 0 : index
    %c0_24 = arith.constant 0 : index
    %c0_25 = arith.constant 0 : index
    %26 = vector.load %arg4[%c0_23, %c0_24, %c0_25] : memref<1x4x256xbf16, #tpu.memory_space<vmem>>, vector<1x4x256xbf16>
    %27 = vector.shape_cast %26 : vector<1x4x256xbf16> to vector<4x256xbf16>
    %28 = vector.shape_cast %25 : vector<4x256xbf16> to vector<1x4x256xbf16>
    tpu.vector_store %arg4[%c0_23, %c0_24, %c0_25], %28 {strides = array<i32>} : memref<1x4x256xbf16, #tpu.memory_space<vmem>>, vector<1x4x256xbf16>,
    return
  }
  func.func @transform_0(%arg0: i32) -> (i32, i32, i32, i32, i32) {
    %c0_i32 = arith.constant 0 : i32
    %c0_i32_0 = arith.constant 0 : i32
    %c0_i32_1 = arith.constant 0 : i32
    %c0_i32_2 = arith.constant 0 : i32
    %c0_i32_3 = arith.constant 0 : i32
    return %arg0, %c0_i32, %c0_i32_0, %c0_i32_1, %c0_i32_2 : i32, i32, i32, i32, i32
  }
  func.func @transform_1(%arg0: i32) -> (i32, i32) {
    %c0_i32 = arith.constant 0 : i32
    %c0_i32_0 = arith.constant 0 : i32
    %c0_i32_1 = arith.constant 0 : i32
    return %c0_i32, %c0_i32_0 : i32, i32
  }
  func.func @transform_2(%arg0: i32) -> (i32, i32) {
    %c0_i32 = arith.constant 0 : i32
    %c0_i32_0 = arith.constant 0 : i32
    %c0_i32_1 = arith.constant 0 : i32
    return %c0_i32, %c0_i32_0 : i32, i32
  }
  func.func @transform_3(%arg0: i32) -> (i32, i32, i32) {
    %c0_i32 = arith.constant 0 : i32
    %c0_i32_0 = arith.constant 0 : i32
    %c0_i32_1 = arith.constant 0 : i32
    return %arg0, %c0_i32, %c0_i32_0 : i32, i32, i32
  }
}

module attributes {stable_mosaic.version = 11 : i64} {
  func.func @_convt_kernel(%arg0: i32, %arg1: memref<1x1x5x5x64xbf16, #tpu.memory_space<vmem>>, %arg2: memref<256x128xbf16, #tpu.memory_space<vmem>>, %arg3: memref<1x128xf32, #tpu.memory_space<vmem>>, %arg4: memref<1x16x128xbf16, #tpu.memory_space<vmem>>) attributes {dimension_semantics = [#tpu.dimension_semantics<parallel>], iteration_bounds = array<i64: 2>, scalar_prefetch = 0 : i64, scratch_operands = 0 : i64, tpu.core_type = #tpu.core_type<tc>, window_params = [{transform_indices = @transform_0, window_bounds = array<i64: 1, 1, 5, 5, 64>}, {pipeline_mode = #tpu.pipeline_mode<synchronous>, transform_indices = @transform_1, window_bounds = array<i64: 256, 128>}, {pipeline_mode = #tpu.pipeline_mode<synchronous>, transform_indices = @transform_2, window_bounds = array<i64: 1, 128>}, {transform_indices = @transform_3, window_bounds = array<i64: 1, 16, 128>}]} {
    %c0 = arith.constant 0 : index
    %c0_0 = arith.constant 0 : index
    %c0_1 = arith.constant 0 : index
    %c0_2 = arith.constant 0 : index
    %c0_3 = arith.constant 0 : index
    %0 = vector.load %arg1[%c0, %c0_0, %c0_1, %c0_2, %c0_3] : memref<1x1x5x5x64xbf16, #tpu.memory_space<vmem>>, vector<1x1x4x4x64xbf16>
    %1 = vector.shape_cast %0 : vector<1x1x4x4x64xbf16> to vector<4x4x64xbf16>
    %2 = arith.extf %1 : vector<4x4x64xbf16> to vector<4x4x64xf32>
    %3 = vector.shape_cast %2 : vector<4x4x64xf32> to vector<16x64xf32>
    %c0_4 = arith.constant 0 : index
    %c0_5 = arith.constant 0 : index
    %c0_6 = arith.constant 0 : index
    %c1 = arith.constant 1 : index
    %c0_7 = arith.constant 0 : index
    %4 = vector.load %arg1[%c0_4, %c0_5, %c0_6, %c1, %c0_7] : memref<1x1x5x5x64xbf16, #tpu.memory_space<vmem>>, vector<1x1x4x4x64xbf16>
    %5 = vector.shape_cast %4 : vector<1x1x4x4x64xbf16> to vector<4x4x64xbf16>
    %6 = arith.extf %5 : vector<4x4x64xbf16> to vector<4x4x64xf32>
    %7 = vector.shape_cast %6 : vector<4x4x64xf32> to vector<16x64xf32>
    %c0_8 = arith.constant 0 : index
    %c0_9 = arith.constant 0 : index
    %c1_10 = arith.constant 1 : index
    %c0_11 = arith.constant 0 : index
    %c0_12 = arith.constant 0 : index
    %8 = vector.load %arg1[%c0_8, %c0_9, %c1_10, %c0_11, %c0_12] : memref<1x1x5x5x64xbf16, #tpu.memory_space<vmem>>, vector<1x1x4x4x64xbf16>
    %9 = vector.shape_cast %8 : vector<1x1x4x4x64xbf16> to vector<4x4x64xbf16>
    %10 = arith.extf %9 : vector<4x4x64xbf16> to vector<4x4x64xf32>
    %11 = vector.shape_cast %10 : vector<4x4x64xf32> to vector<16x64xf32>
    %c0_13 = arith.constant 0 : index
    %c0_14 = arith.constant 0 : index
    %c1_15 = arith.constant 1 : index
    %c1_16 = arith.constant 1 : index
    %c0_17 = arith.constant 0 : index
    %12 = vector.load %arg1[%c0_13, %c0_14, %c1_15, %c1_16, %c0_17] : memref<1x1x5x5x64xbf16, #tpu.memory_space<vmem>>, vector<1x1x4x4x64xbf16>
    %13 = vector.shape_cast %12 : vector<1x1x4x4x64xbf16> to vector<4x4x64xbf16>
    %14 = arith.extf %13 : vector<4x4x64xbf16> to vector<4x4x64xf32>
    %15 = vector.shape_cast %14 : vector<4x4x64xf32> to vector<16x64xf32>
    %16 = tpu.concatenate %3, %7, %11, %15 in 1 : vector<16x64xf32>, vector<16x64xf32>, vector<16x64xf32>, vector<16x64xf32> -> vector<16x256xf32>
    %17 = arith.truncf %16 : vector<16x256xf32> to vector<16x256xbf16>
    %c0_18 = arith.constant 0 : index
    %c0_19 = arith.constant 0 : index
    %18 = vector.load %arg2[%c0_18, %c0_19] : memref<256x128xbf16, #tpu.memory_space<vmem>>, vector<256x128xbf16>
    %cst = arith.constant dense<0.000000e+00> : vector<16x128xf32>
    %19 = tpu.matmul %17, %18, %cst {dimension_numbers = #tpu.dot_dimension_numbers<[1], [0], [0], [1], [0, 0, 1, 1], [], []>} : vector<16x256xbf16>, vector<256x128xbf16>, vector<16x128xf32> -> vector<16x128xf32>
    %c0_20 = arith.constant 0 : index
    %c0_21 = arith.constant 0 : index
    %20 = vector.load %arg3[%c0_20, %c0_21] : memref<1x128xf32, #tpu.memory_space<vmem>>, vector<1x128xf32>
    %21 = vector.broadcast %20 : vector<1x128xf32> to vector<16x128xf32>
    %22 = arith.addf %19, %21 : vector<16x128xf32>
    %cst_22 = arith.constant 0.000000e+00 : f32
    %23 = vector.broadcast %cst_22 : f32 to vector<16x128xf32>
    %24 = arith.maximumf %22, %23 : vector<16x128xf32>
    %25 = arith.truncf %24 : vector<16x128xf32> to vector<16x128xbf16>
    %c0_23 = arith.constant 0 : index
    %c0_24 = arith.constant 0 : index
    %c0_25 = arith.constant 0 : index
    %26 = vector.load %arg4[%c0_23, %c0_24, %c0_25] : memref<1x16x128xbf16, #tpu.memory_space<vmem>>, vector<1x16x128xbf16>
    %27 = vector.shape_cast %26 : vector<1x16x128xbf16> to vector<16x128xbf16>
    %28 = vector.shape_cast %25 : vector<16x128xbf16> to vector<1x16x128xbf16>
    tpu.vector_store %arg4[%c0_23, %c0_24, %c0_25], %28 {strides = array<i32>} : memref<1x16x128xbf16, #tpu.memory_space<vmem>>, vector<1x16x128xbf16>,
    return
  }
  func.func @transform_0(%arg0: i32) -> (i32, i32, i32, i32, i32) {
    %c0_i32 = arith.constant 0 : i32
    %c0_i32_0 = arith.constant 0 : i32
    %c0_i32_1 = arith.constant 0 : i32
    %c0_i32_2 = arith.constant 0 : i32
    %c0_i32_3 = arith.constant 0 : i32
    return %arg0, %c0_i32, %c0_i32_0, %c0_i32_1, %c0_i32_2 : i32, i32, i32, i32, i32
  }
  func.func @transform_1(%arg0: i32) -> (i32, i32) {
    %c0_i32 = arith.constant 0 : i32
    %c0_i32_0 = arith.constant 0 : i32
    %c0_i32_1 = arith.constant 0 : i32
    return %c0_i32, %c0_i32_0 : i32, i32
  }
  func.func @transform_2(%arg0: i32) -> (i32, i32) {
    %c0_i32 = arith.constant 0 : i32
    %c0_i32_0 = arith.constant 0 : i32
    %c0_i32_1 = arith.constant 0 : i32
    return %c0_i32, %c0_i32_0 : i32, i32
  }
  func.func @transform_3(%arg0: i32) -> (i32, i32, i32) {
    %c0_i32 = arith.constant 0 : i32
    %c0_i32_0 = arith.constant 0 : i32
    %c0_i32_1 = arith.constant 0 : i32
    return %arg0, %c0_i32, %c0_i32_0 : i32, i32, i32
  }
}

module attributes {stable_mosaic.version = 11 : i64} {
  func.func @_convt_kernel(%arg0: i32, %arg1: memref<1x1x9x9x32xbf16, #tpu.memory_space<vmem>>, %arg2: memref<128x64xbf16, #tpu.memory_space<vmem>>, %arg3: memref<1x64xf32, #tpu.memory_space<vmem>>, %arg4: memref<1x64x64xbf16, #tpu.memory_space<vmem>>) attributes {dimension_semantics = [#tpu.dimension_semantics<parallel>], iteration_bounds = array<i64: 2>, scalar_prefetch = 0 : i64, scratch_operands = 0 : i64, tpu.core_type = #tpu.core_type<tc>, window_params = [{transform_indices = @transform_0, window_bounds = array<i64: 1, 1, 9, 9, 32>}, {pipeline_mode = #tpu.pipeline_mode<synchronous>, transform_indices = @transform_1, window_bounds = array<i64: 128, 64>}, {pipeline_mode = #tpu.pipeline_mode<synchronous>, transform_indices = @transform_2, window_bounds = array<i64: 1, 64>}, {transform_indices = @transform_3, window_bounds = array<i64: 1, 64, 64>}]} {
    %c0 = arith.constant 0 : index
    %c0_0 = arith.constant 0 : index
    %c0_1 = arith.constant 0 : index
    %c0_2 = arith.constant 0 : index
    %c0_3 = arith.constant 0 : index
    %0 = vector.load %arg1[%c0, %c0_0, %c0_1, %c0_2, %c0_3] : memref<1x1x9x9x32xbf16, #tpu.memory_space<vmem>>, vector<1x1x8x8x32xbf16>
    %1 = vector.shape_cast %0 : vector<1x1x8x8x32xbf16> to vector<8x8x32xbf16>
    %2 = arith.extf %1 : vector<8x8x32xbf16> to vector<8x8x32xf32>
    %3 = vector.shape_cast %2 : vector<8x8x32xf32> to vector<64x32xf32>
    %c0_4 = arith.constant 0 : index
    %c0_5 = arith.constant 0 : index
    %c0_6 = arith.constant 0 : index
    %c1 = arith.constant 1 : index
    %c0_7 = arith.constant 0 : index
    %4 = vector.load %arg1[%c0_4, %c0_5, %c0_6, %c1, %c0_7] : memref<1x1x9x9x32xbf16, #tpu.memory_space<vmem>>, vector<1x1x8x8x32xbf16>
    %5 = vector.shape_cast %4 : vector<1x1x8x8x32xbf16> to vector<8x8x32xbf16>
    %6 = arith.extf %5 : vector<8x8x32xbf16> to vector<8x8x32xf32>
    %7 = vector.shape_cast %6 : vector<8x8x32xf32> to vector<64x32xf32>
    %c0_8 = arith.constant 0 : index
    %c0_9 = arith.constant 0 : index
    %c1_10 = arith.constant 1 : index
    %c0_11 = arith.constant 0 : index
    %c0_12 = arith.constant 0 : index
    %8 = vector.load %arg1[%c0_8, %c0_9, %c1_10, %c0_11, %c0_12] : memref<1x1x9x9x32xbf16, #tpu.memory_space<vmem>>, vector<1x1x8x8x32xbf16>
    %9 = vector.shape_cast %8 : vector<1x1x8x8x32xbf16> to vector<8x8x32xbf16>
    %10 = arith.extf %9 : vector<8x8x32xbf16> to vector<8x8x32xf32>
    %11 = vector.shape_cast %10 : vector<8x8x32xf32> to vector<64x32xf32>
    %c0_13 = arith.constant 0 : index
    %c0_14 = arith.constant 0 : index
    %c1_15 = arith.constant 1 : index
    %c1_16 = arith.constant 1 : index
    %c0_17 = arith.constant 0 : index
    %12 = vector.load %arg1[%c0_13, %c0_14, %c1_15, %c1_16, %c0_17] : memref<1x1x9x9x32xbf16, #tpu.memory_space<vmem>>, vector<1x1x8x8x32xbf16>
    %13 = vector.shape_cast %12 : vector<1x1x8x8x32xbf16> to vector<8x8x32xbf16>
    %14 = arith.extf %13 : vector<8x8x32xbf16> to vector<8x8x32xf32>
    %15 = vector.shape_cast %14 : vector<8x8x32xf32> to vector<64x32xf32>
    %16 = tpu.concatenate %3, %7, %11, %15 in 1 : vector<64x32xf32>, vector<64x32xf32>, vector<64x32xf32>, vector<64x32xf32> -> vector<64x128xf32>
    %17 = arith.truncf %16 : vector<64x128xf32> to vector<64x128xbf16>
    %c0_18 = arith.constant 0 : index
    %c0_19 = arith.constant 0 : index
    %18 = vector.load %arg2[%c0_18, %c0_19] : memref<128x64xbf16, #tpu.memory_space<vmem>>, vector<128x64xbf16>
    %cst = arith.constant dense<0.000000e+00> : vector<64x64xf32>
    %19 = tpu.matmul %17, %18, %cst {dimension_numbers = #tpu.dot_dimension_numbers<[1], [0], [0], [1], [0, 0, 1, 1], [], []>} : vector<64x128xbf16>, vector<128x64xbf16>, vector<64x64xf32> -> vector<64x64xf32>
    %c0_20 = arith.constant 0 : index
    %c0_21 = arith.constant 0 : index
    %20 = vector.load %arg3[%c0_20, %c0_21] : memref<1x64xf32, #tpu.memory_space<vmem>>, vector<1x64xf32>
    %21 = vector.broadcast %20 : vector<1x64xf32> to vector<64x64xf32>
    %22 = arith.addf %19, %21 : vector<64x64xf32>
    %cst_22 = arith.constant 0.000000e+00 : f32
    %23 = vector.broadcast %cst_22 : f32 to vector<64x64xf32>
    %24 = arith.maximumf %22, %23 : vector<64x64xf32>
    %25 = arith.truncf %24 : vector<64x64xf32> to vector<64x64xbf16>
    %c0_23 = arith.constant 0 : index
    %c0_24 = arith.constant 0 : index
    %c0_25 = arith.constant 0 : index
    %26 = vector.load %arg4[%c0_23, %c0_24, %c0_25] : memref<1x64x64xbf16, #tpu.memory_space<vmem>>, vector<1x64x64xbf16>
    %27 = vector.shape_cast %26 : vector<1x64x64xbf16> to vector<64x64xbf16>
    %28 = vector.shape_cast %25 : vector<64x64xbf16> to vector<1x64x64xbf16>
    tpu.vector_store %arg4[%c0_23, %c0_24, %c0_25], %28 {strides = array<i32>} : memref<1x64x64xbf16, #tpu.memory_space<vmem>>, vector<1x64x64xbf16>,
    return
  }
  func.func @transform_0(%arg0: i32) -> (i32, i32, i32, i32, i32) {
    %c0_i32 = arith.constant 0 : i32
    %c0_i32_0 = arith.constant 0 : i32
    %c0_i32_1 = arith.constant 0 : i32
    %c0_i32_2 = arith.constant 0 : i32
    %c0_i32_3 = arith.constant 0 : i32
    return %arg0, %c0_i32, %c0_i32_0, %c0_i32_1, %c0_i32_2 : i32, i32, i32, i32, i32
  }
  func.func @transform_1(%arg0: i32) -> (i32, i32) {
    %c0_i32 = arith.constant 0 : i32
    %c0_i32_0 = arith.constant 0 : i32
    %c0_i32_1 = arith.constant 0 : i32
    return %c0_i32, %c0_i32_0 : i32, i32
  }
  func.func @transform_2(%arg0: i32) -> (i32, i32) {
    %c0_i32 = arith.constant 0 : i32
    %c0_i32_0 = arith.constant 0 : i32
    %c0_i32_1 = arith.constant 0 : i32
    return %c0_i32, %c0_i32_0 : i32, i32
  }
  func.func @transform_3(%arg0: i32) -> (i32, i32, i32) {
    %c0_i32 = arith.constant 0 : i32
    %c0_i32_0 = arith.constant 0 : i32
    %c0_i32_1 = arith.constant 0 : i32
    return %arg0, %c0_i32, %c0_i32_0 : i32, i32, i32
  }
}

module attributes {stable_mosaic.version = 11 : i64} {
  func.func @_classifier_kernel(%arg0: i32, %arg1: memref<1x256x16xbf16, #tpu.memory_space<vmem>>, %arg2: memref<3x16xbf16, #tpu.memory_space<vmem>>, %arg3: memref<3x1xf32, #tpu.memory_space<vmem>>, %arg4: memref<1x3x256xf32, #tpu.memory_space<vmem>>) attributes {dimension_semantics = [#tpu.dimension_semantics<parallel>], iteration_bounds = array<i64: 2>, scalar_prefetch = 0 : i64, scratch_operands = 0 : i64, tpu.core_type = #tpu.core_type<tc>, window_params = [{transform_indices = @transform_0, window_bounds = array<i64: 1, 256, 16>}, {pipeline_mode = #tpu.pipeline_mode<synchronous>, transform_indices = @transform_1, window_bounds = array<i64: 3, 16>}, {pipeline_mode = #tpu.pipeline_mode<synchronous>, transform_indices = @transform_2, window_bounds = array<i64: 3, 1>}, {transform_indices = @transform_3, window_bounds = array<i64: 1, 3, 256>}]} {
    %c0 = arith.constant 0 : index
    %c0_0 = arith.constant 0 : index
    %0 = vector.load %arg2[%c0, %c0_0] : memref<3x16xbf16, #tpu.memory_space<vmem>>, vector<3x16xbf16>
    %c0_1 = arith.constant 0 : index
    %c0_2 = arith.constant 0 : index
    %c0_3 = arith.constant 0 : index
    %1 = vector.load %arg1[%c0_1, %c0_2, %c0_3] : memref<1x256x16xbf16, #tpu.memory_space<vmem>>, vector<1x256x16xbf16>
    %2 = vector.shape_cast %1 : vector<1x256x16xbf16> to vector<256x16xbf16>
    %cst = arith.constant dense<0.000000e+00> : vector<3x256xf32>
    %3 = tpu.matmul %0, %2, %cst {dimension_numbers = #tpu.dot_dimension_numbers<[1], [1], [0], [0], [0, 0, 1, 0], [], []>} : vector<3x16xbf16>, vector<256x16xbf16>, vector<3x256xf32> -> vector<3x256xf32>
    %c0_4 = arith.constant 0 : index
    %c0_5 = arith.constant 0 : index
    %4 = vector.load %arg3[%c0_4, %c0_5] : memref<3x1xf32, #tpu.memory_space<vmem>>, vector<3x1xf32>
    %5 = vector.broadcast %4 : vector<3x1xf32> to vector<3x256xf32>
    %6 = arith.addf %3, %5 : vector<3x256xf32>
    %c0_6 = arith.constant 0 : index
    %c0_7 = arith.constant 0 : index
    %c0_8 = arith.constant 0 : index
    %7 = vector.load %arg4[%c0_6, %c0_7, %c0_8] : memref<1x3x256xf32, #tpu.memory_space<vmem>>, vector<1x3x256xf32>
    %8 = vector.shape_cast %7 : vector<1x3x256xf32> to vector<3x256xf32>
    %9 = vector.shape_cast %6 : vector<3x256xf32> to vector<1x3x256xf32>
    tpu.vector_store %arg4[%c0_6, %c0_7, %c0_8], %9 {strides = array<i32>} : memref<1x3x256xf32, #tpu.memory_space<vmem>>, vector<1x3x256xf32>,
    return
  }
  func.func @transform_0(%arg0: i32) -> (i32, i32, i32) {
    %c0_i32 = arith.constant 0 : i32
    %c0_i32_0 = arith.constant 0 : i32
    %c0_i32_1 = arith.constant 0 : i32
    return %arg0, %c0_i32, %c0_i32_0 : i32, i32, i32
  }
  func.func @transform_1(%arg0: i32) -> (i32, i32) {
    %c0_i32 = arith.constant 0 : i32
    %c0_i32_0 = arith.constant 0 : i32
    %c0_i32_1 = arith.constant 0 : i32
    return %c0_i32, %c0_i32_0 : i32, i32
  }
  func.func @transform_2(%arg0: i32) -> (i32, i32) {
    %c0_i32 = arith.constant 0 : i32
    %c0_i32_0 = arith.constant 0 : i32
    %c0_i32_1 = arith.constant 0 : i32
    return %c0_i32, %c0_i32_0 : i32, i32
  }
  func.func @transform_3(%arg0: i32) -> (i32, i32, i32) {
    %c0_i32 = arith.constant 0 : i32
    %c0_i32_0 = arith.constant 0 : i32
    %c0_i32_1 = arith.constant 0 : i32
    return %arg0, %c0_i32, %c0_i32_0 : i32, i32, i32
  }
}

</mosaic_0001>

<llo_original>
// kernel: detector_forward.9
$region0: #{detector_forward.9}
  #allocation0 [shape = 'u32[]', space=smem, size = 0x4, offset = 0x4, fixed_abs, tag = 'smem constant byte address 0x4 - core index']
  #allocation1 [shape = 'u32[72,128]{1,0:T(1,128)}', space=vmem, size = 0x9000, scoped, tag = 'internal scratch']
  %s0 = inlined_call_operand.vmem [shape: bf16[2,4,9,9,3], index: 0, kind: input, shape index: {}]
  %s1 = inlined_call_operand.vmem [shape: bf16[27,16], index: 1, kind: input, shape index: {}]
  %s2 = inlined_call_operand.vmem [shape: f32[1,16], index: 2, kind: input, shape index: {}]
  %s3 = inlined_call_operand.vmem [shape: bf16[144,16], index: 3, kind: input, shape index: {}]
  %s4 = inlined_call_operand.vmem [shape: f32[1,16], index: 4, kind: input, shape index: {}]
  %s5 = inlined_call_operand.vmem [shape: bf16[2,64,16], index: 5, kind: output, shape index: {}]
  %s6 = sld [smem:[#allocation0]]
  $region53: #{detector_forward.9} parent=0
    _
  %s8 = ssub.s32 1, %s6
  %s9 = scalar_select 0, %s8, %s6
  loop: start=0, step=1, limit=4
  $region2: #{detector_forward.9} parent=0 // loop_pre_header
    _
  $region3: #{detector_forward.9} parent=0 // loop_header
    %s11 = sphi 0, %s15
    %p12 = scmp.ge.s32.totalorder %s11, 4
    %s21 = sphi 0, %s23
    %s24 = sphi 0, %s21
    %s25 = sphi 0, %s24
    %s41 = sphi 0, %s25
    %s45 = sphi 0, %s45
    %s47 = sphi 0, %s45
    %s48 = sphi 0, %s47
    %s62 = sphi 0, %s48
    %s66 = sphi 0, %s66
    %s68 = sphi 0, %s66
    %s69 = sphi 0, %s68
    %s83 = sphi 0, %s69
    %s87 = sphi 0, %s87
    %s89 = sphi 0, %s87
    %s90 = sphi 0, %s89
    %s104 = sphi 0, %s90
    %s108 = sphi 0, %s108
    %s110 = sphi 0, %s108
    %s111 = sphi 0, %s110
    %s125 = sphi 0, %s111
    %s131 = sphi 0, %s133
    %s134 = sphi 0, %s131
    %s135 = sphi 0, %s134
    %s151 = sphi 0, %s135
  $region4: #{detector_forward.9} parent=0 // loop_header_branch
    %14 = sbr.rel (%p12) target = $region8
  $region5: #{detector_forward.9} parent=0 // loop_body
    %s16 = ssub.s32 %s11, 1
    %s17 = ssub.s32 %s11, 2
    %s18 = sadd.s32 %s11, 1
    %s19 = ssub.s32 %s11, %s18
    %p20 = scmp.eq.s32.totalorder %s19, 0
    %s22 = sadd.s32 %s21, 1
    %s23 = scalar_select %p20, %s21, %s22
    %p26 = pneg %p20
    %p27 = scmp.eq.s32.totalorder %s11, 1
    %p28 = por %p26, %p27
    %p29 = scmp.ne.s32.totalorder %s21, %s24
    %p30 = scmp.eq.s32.totalorder %s11, 0
    %p31 = por %p29, %p30
    %p32 = scmp.ne.s32.totalorder %s21, %s24
    %p33 = scmp.eq.s32.totalorder %s16, 1
    %p34 = por %p32, %p33
    %p35 = scmp.ne.s32.totalorder %s24, %s25
    %p36 = scmp.eq.s32.totalorder %s16, 0
    %p37 = por %p35, %p36
    %p38 = scmp.ne.s32.totalorder %s24, %s25
    %p39 = scmp.eq.s32.totalorder %s17, 1
    %p40 = por %p38, %p39
    %p42 = scmp.ne.s32.totalorder %s25, %s41
    %p43 = scmp.eq.s32.totalorder %s17, 0
    %p44 = por %p42, %p43
    %s46 = sadd.s32 %s45, 1
    %p49 = scmp.eq.s32.totalorder %s11, 1
    %p50 = scmp.ne.s32.totalorder %s45, %s47
    %p51 = scmp.eq.s32.totalorder %s11, 0
    %p52 = por %p50, %p51
    %p53 = scmp.ne.s32.totalorder %s45, %s47
    %p54 = scmp.eq.s32.totalorder %s16, 1
    %p55 = por %p53, %p54
    %p56 = scmp.ne.s32.totalorder %s47, %s48
    %p57 = scmp.eq.s32.totalorder %s16, 0
    %p58 = por %p56, %p57
    %p59 = scmp.ne.s32.totalorder %s47, %s48
    %p60 = scmp.eq.s32.totalorder %s17, 1
    %p61 = por %p59, %p60
    %p63 = scmp.ne.s32.totalorder %s48, %s62
    %p64 = scmp.eq.s32.totalorder %s17, 0
    %p65 = por %p63, %p64
    %s67 = sadd.s32 %s66, 1
    %p70 = scmp.eq.s32.totalorder %s11, 1
    %p71 = scmp.ne.s32.totalorder %s66, %s68
    %p72 = scmp.eq.s32.totalorder %s11, 0
    %p73 = por %p71, %p72
    %p74 = scmp.ne.s32.totalorder %s66, %s68
    %p75 = scmp.eq.s32.totalorder %s16, 1
    %p76 = por %p74, %p75
    %p77 = scmp.ne.s32.totalorder %s68, %s69
    %p78 = scmp.eq.s32.totalorder %s16, 0
    %p79 = por %p77, %p78
    %p80 = scmp.ne.s32.totalorder %s68, %s69
    %p81 = scmp.eq.s32.totalorder %s17, 1
    %p82 = por %p80, %p81
    %p84 = scmp.ne.s32.totalorder %s69, %s83
    %p85 = scmp.eq.s32.totalorder %s17, 0
    %p86 = por %p84, %p85
    %s88 = sadd.s32 %s87, 1
    %p91 = scmp.eq.s32.totalorder %s11, 1
    %p92 = scmp.ne.s32.totalorder %s87, %s89
    %p93 = scmp.eq.s32.totalorder %s11, 0
    %p94 = por %p92, %p93
    %p95 = scmp.ne.s32.totalorder %s87, %s89
    %p96 = scmp.eq.s32.totalorder %s16, 1
    %p97 = por %p95, %p96
    %p98 = scmp.ne.s32.totalorder %s89, %s90
    %p99 = scmp.eq.s32.totalorder %s16, 0
    %p100 = por %p98, %p99
    %p101 = scmp.ne.s32.totalorder %s89, %s90
    %p102 = scmp.eq.s32.totalorder %s17, 1
    %p103 = por %p101, %p102
    %p105 = scmp.ne.s32.totalorder %s90, %s104
    %p106 = scmp.eq.s32.totalorder %s17, 0
    %p107 = por %p105, %p106
    %s109 = sadd.s32 %s108, 1
    %p112 = scmp.eq.s32.totalorder %s11, 1
    %p113 = scmp.ne.s32.totalorder %s108, %s110
    %p114 = scmp.eq.s32.totalorder %s11, 0
    %p115 = por %p113, %p114
    %p116 = scmp.ne.s32.totalorder %s108, %s110
    %p117 = scmp.eq.s32.totalorder %s16, 1
    %p118 = por %p116, %p117
    %p119 = scmp.ne.s32.totalorder %s110, %s111
    %p120 = scmp.eq.s32.totalorder %s16, 0
    %p121 = por %p119, %p120
    %p122 = scmp.ne.s32.totalorder %s110, %s111
    %p123 = scmp.eq.s32.totalorder %s17, 1
    %p124 = por %p122, %p123
    %p126 = scmp.ne.s32.totalorder %s111, %s125
    %p127 = scmp.eq.s32.totalorder %s17, 0
    %p128 = por %p126, %p127
    %s129 = ssub.s32 %s11, %s18
    %p130 = scmp.eq.s32.totalorder %s129, 0
    %s132 = sadd.s32 %s131, 1
    %s133 = scalar_select %p130, %s131, %s132
    %p136 = pneg %p130
    %p137 = scmp.eq.s32.totalorder %s11, 1
    %p138 = por %p136, %p137
    %p139 = scmp.ne.s32.totalorder %s131, %s134
    %p140 = scmp.eq.s32.totalorder %s11, 0
    %p141 = por %p139, %p140
    %p142 = scmp.ne.s32.totalorder %s131, %s134
    %p143 = scmp.eq.s32.totalorder %s16, 1
    %p144 = por %p142, %p143
    %p145 = scmp.ne.s32.totalorder %s134, %s135
    %p146 = scmp.eq.s32.totalorder %s16, 0
    %p147 = por %p145, %p146
    %p148 = scmp.ne.s32.totalorder %s134, %s135
    %p149 = scmp.eq.s32.totalorder %s17, 1
    %p150 = por %p148, %p149
    %p152 = scmp.ne.s32.totalorder %s135, %s151
    %p153 = scmp.eq.s32.totalorder %s17, 0
    %p154 = por %p152, %p153
    %p155 = scmp.le.s32.totalorder 1, %s11
    %p156 = scmp.lt.s32.totalorder %s11, 3
    %p157 = pnand %p155, %p156
    %p158 = pneg %p157
    // Predicated region
    $region9: #{detector_forward.9} parent=5 // pred_check
      _
    $region10: #{detector_forward.9} parent=5 // pred_check_branch
      %160 = sbr.rel (%p157) target = $region12
    $region11: #{detector_forward.9} parent=5 // pred_region
      %s161 = ssub.s32 %s11, 1
      // Predicated region
      $region13: #{detector_forward.9} parent=11 // pred_check
        %p162 = pneg %p58
      $region14: #{detector_forward.9} parent=11 // pred_check_branch
        %164 = sbr.rel (%p162) target = $region16
      $region15: #{detector_forward.9} parent=11 // pred_region
        _
      $region16: #{detector_forward.9} parent=11 // pred_fallthru
        _
      // Predicated region
      $region17: #{detector_forward.9} parent=11 // pred_check
        %p165 = pneg %p79
      $region18: #{detector_forward.9} parent=11 // pred_check_branch
        %167 = sbr.rel (%p165) target = $region20
      $region19: #{detector_forward.9} parent=11 // pred_region
        _
      $region20: #{detector_forward.9} parent=11 // pred_fallthru
        _
      // Predicated region
      $region21: #{detector_forward.9} parent=11 // pred_check
        %p168 = pneg %p100
      $region22: #{detector_forward.9} parent=11 // pred_check_branch
        %170 = sbr.rel (%p168) target = $region24
      $region23: #{detector_forward.9} parent=11 // pred_region
        _
      $region24: #{detector_forward.9} parent=11 // pred_fallthru
        _
      // Predicated region
      $region25: #{detector_forward.9} parent=11 // pred_check
        %p171 = pneg %p121
      $region26: #{detector_forward.9} parent=11 // pred_check_branch
        %173 = sbr.rel (%p171) target = $region28
      $region27: #{detector_forward.9} parent=11 // pred_region
        _
      $region28: #{detector_forward.9} parent=11 // pred_fallthru
        _
    $region12: #{detector_forward.9} parent=5 // pred_fallthru
      _
    %p174 = scmp.lt.s32.totalorder %s11, 2
    // Predicated region
    $region29: #{detector_forward.9} parent=5 // pred_check
      %p175 = pneg %p174
    $region30: #{detector_forward.9} parent=5 // pred_check_branch
      %177 = sbr.rel (%p175) target = $region32
    $region31: #{detector_forward.9} parent=5 // pred_region
      // Predicated region
      $region33: #{detector_forward.9} parent=31 // pred_check
        %p178 = pneg %p31
      $region34: #{detector_forward.9} parent=31 // pred_check_branch
        %180 = sbr.rel (%p178) target = $region36
      $region35: #{detector_forward.9} parent=31 // pred_region
        %p181 = scmp.lt.s32.totalorder %s11, 1
        %s182 = scalar_select %p181, %s11, 1
        %s183 = smul.addr %s182, 72
        %s184 = smul.addr %s183, 4
        %s185 = scalar_lea.vmem %s0, %s184
      $region36: #{detector_forward.9} parent=31 // pred_fallthru
        _
    $region32: #{detector_forward.9} parent=5 // pred_fallthru
      _
    %p186 = scmp.le.s32.totalorder 1, %s11
    %p187 = scmp.lt.s32.totalorder %s11, 3
    %p188 = pnand %p186, %p187
    %p189 = pneg %p188
    // Predicated region
    $region37: #{detector_forward.9} parent=5 // pred_check
      _
    $region38: #{detector_forward.9} parent=5 // pred_check_branch
      %191 = sbr.rel (%p188) target = $region40
    $region39: #{detector_forward.9} parent=5 // pred_region
      %s192 = ssub.s32 %s11, 1
      %p193 = scmp.lt.s32.totalorder %s16, 1
      %s194 = scalar_select %p193, %s16, 1
      %s195 = smul.addr %s194, 72
      %s196 = smul.addr %s195, 4
      %s197 = scalar_lea.vmem %s0, %s196
      %p198 = pneg %p37
      %p199 = pneg %p34
      %p200 = pneg %p58
      %p201 = pneg %p55
      %p202 = pneg %p79
      %p203 = pneg %p76
      %p204 = pneg %p100
      %p205 = pneg %p97
      %p206 = pneg %p121
      %p207 = pneg %p118
      %p208 = pneg %p147
      %p209 = pneg %p144
      %p210 = scmp.lt.s32.totalorder %s16, 1
      %s211 = scalar_select %p210, %s16, 1
      %s212 = smul.addr %s211, 8
      %s213 = smul.addr %s212, 4
      %s214 = scalar_lea.vmem %s5, %s213
      %p215 = scmp.lt.s32.totalorder %s16, 1
      %s216 = scalar_select %p215, %s16, 1
      %s217 = smul.addr %s216, 72
      %s218 = smul.addr %s217, 4
      %s219 = scalar_lea.vmem %s0, %s218
      %p220 = scmp.lt.s32.totalorder %s16, 1
      %s221 = scalar_select %p220, %s16, 1
      %s222 = smul.addr %s221, 8
      %s223 = smul.addr %s222, 4
      %s224 = scalar_lea.vmem %s5, %s223
      %v226 = vld [vmem:[%s219] sm:$0xf]
      %v227 = vld [vmem:[%s219 + $0x8] sm:$0xf]
      %v228 = vld [vmem:[%s219 + $0x10] sm:$0xf]
      %v229 = vld [vmem:[%s219 + $0x18] sm:$0xf]
      %v230 = vld [vmem:[%s219 + $0x20] sm:$0xf]
      %v231 = vld [vmem:[%s219 + $0x28] sm:$0xf]
      %v232 = vld [vmem:[%s219 + $0x30] sm:$0xf]
      %v233 = vld [vmem:[%s219 + $0x38] sm:$0xf]
      %v234 = vunpack.c.l.bf16 %v226
      %v235 = vunpack.c.l.bf16 %v227
      %v236 = vunpack.c.l.bf16 %v228
      %v237 = vunpack.c.l.bf16 %v229
      %v238 = vunpack.c.l.bf16 %v230
      %v239 = vunpack.c.l.bf16 %v231
      %v240 = vunpack.c.l.bf16 %v232
      %v241 = vunpack.c.l.bf16 %v233
      %s242 = scalar_lea.vmem %s219, 72
      %v243 = vld [vmem:[%s242] sm:$0xf]
      %v244 = vld [vmem:[%s242 + $0x8] sm:$0xf]
      %v245 = vld [vmem:[%s242 + $0x10] sm:$0xf]
      %v246 = vld [vmem:[%s242 + $0x18] sm:$0xf]
      %v247 = vld [vmem:[%s242 + $0x20] sm:$0xf]
      %v248 = vld [vmem:[%s242 + $0x28] sm:$0xf]
      %v249 = vld [vmem:[%s242 + $0x30] sm:$0xf]
      %v250 = vld [vmem:[%s242 + $0x38] sm:$0xf]
      %v251 = vunpack.c.l.bf16 %v243
      %v252 = vunpack.c.l.bf16 %v244
      %v253 = vunpack.c.l.bf16 %v245
      %v254 = vunpack.c.l.bf16 %v246
      %v255 = vunpack.c.l.bf16 %v247
      %v256 = vunpack.c.l.bf16 %v248
      %v257 = vunpack.c.l.bf16 %v249
      %v258 = vunpack.c.l.bf16 %v250
      %v259 = vld [vmem:[%s219 + $0x4] sm:$0x1]
      %v260 = vld [vmem:[%s219 + $0xc] sm:$0x1]
      %v261 = vld [vmem:[%s219 + $0x14] sm:$0x1]
      %v262 = vld [vmem:[%s219 + $0x1c] sm:$0x1]
      %v263 = vld [vmem:[%s219 + $0x24] sm:$0x1]
      %v264 = vld [vmem:[%s219 + $0x2c] sm:$0x1]
      %v265 = vld [vmem:[%s219 + $0x34] sm:$0x1]
      %v266 = vld [vmem:[%s219 + $0x3c] sm:$0x1]
      %v267 = vunpack.c.l.bf16 %v259
      %v268 = vunpack.c.l.bf16 %v260
      %v269 = vunpack.c.l.bf16 %v261
      %v270 = vunpack.c.l.bf16 %v262
      %v271 = vunpack.c.l.bf16 %v263
      %v272 = vunpack.c.l.bf16 %v264
      %v273 = vunpack.c.l.bf16 %v265
      %v274 = vunpack.c.l.bf16 %v266
      %vm291 = vcmask 1046528
      %v292 = vrot.slane %v234, 1
      %v293 = vrot.slane %v267, 1
      %v294 = vsel %vm291, %v292, %v293
      %v295 = vrot.slane %v235, 1
      %v296 = vrot.slane %v268, 1
      %v297 = vsel %vm291, %v295, %v296
      %v298 = vrot.slane %v236, 1
      %v299 = vrot.slane %v269, 1
      %v300 = vsel %vm291, %v298, %v299
      %v301 = vrot.slane %v237, 1
      %v302 = vrot.slane %v270, 1
      %v303 = vsel %vm291, %v301, %v302
      %v304 = vrot.slane %v238, 1
      %v305 = vrot.slane %v271, 1
      %v306 = vsel %vm291, %v304, %v305
      %v307 = vrot.slane %v239, 1
      %v308 = vrot.slane %v272, 1
      %v309 = vsel %vm291, %v307, %v308
      %v310 = vrot.slane %v240, 1
      %v311 = vrot.slane %v273, 1
      %v312 = vsel %vm291, %v310, %v311
      %v313 = vrot.slane %v241, 1
      %v314 = vrot.slane %v274, 1
      %v315 = vsel %vm291, %v313, %v314
      %s316 = scalar_lea.vmem %s219, 144
      %v317 = vld [vmem:[%s316] sm:$0xf]
      %v318 = vld [vmem:[%s316 + $0x8] sm:$0xf]
      %v319 = vld [vmem:[%s316 + $0x10] sm:$0xf]
      %v320 = vld [vmem:[%s316 + $0x18] sm:$0xf]
      %v321 = vld [vmem:[%s316 + $0x20] sm:$0xf]
      %v322 = vld [vmem:[%s316 + $0x28] sm:$0xf]
      %v323 = vld [vmem:[%s316 + $0x30] sm:$0xf]
      %v324 = vld [vmem:[%s316 + $0x38] sm:$0xf]
      %v325 = vunpack.c.l.bf16 %v317
      %v326 = vunpack.c.l.bf16 %v318
      %v327 = vunpack.c.l.bf16 %v319
      %v328 = vunpack.c.l.bf16 %v320
      %v329 = vunpack.c.l.bf16 %v321
      %v330 = vunpack.c.l.bf16 %v322
      %v331 = vunpack.c.l.bf16 %v323
      %v332 = vunpack.c.l.bf16 %v324
      %s333 = scalar_lea.vmem %s219, 216
      %v334 = vld [vmem:[%s333] sm:$0xf]
      %v335 = vld [vmem:[%s333 + $0x8] sm:$0xf]
      %v336 = vld [vmem:[%s333 + $0x10] sm:$0xf]
      %v337 = vld [vmem:[%s333 + $0x18] sm:$0xf]
      %v338 = vld [vmem:[%s333 + $0x20] sm:$0xf]
      %v339 = vld [vmem:[%s333 + $0x28] sm:$0xf]
      %v340 = vld [vmem:[%s333 + $0x30] sm:$0xf]
      %v341 = vld [vmem:[%s333 + $0x38] sm:$0xf]
      %v342 = vunpack.c.l.bf16 %v334
      %v343 = vunpack.c.l.bf16 %v335
      %v344 = vunpack.c.l.bf16 %v336
      %v345 = vunpack.c.l.bf16 %v337
      %v346 = vunpack.c.l.bf16 %v338
      %v347 = vunpack.c.l.bf16 %v339
      %v348 = vunpack.c.l.bf16 %v340
      %v349 = vunpack.c.l.bf16 %v341
      %v350 = vld [vmem:[%s316 + $0x4] sm:$0x1]
      %v351 = vld [vmem:[%s316 + $0xc] sm:$0x1]
      %v352 = vld [vmem:[%s316 + $0x14] sm:$0x1]
      %v353 = vld [vmem:[%s316 + $0x1c] sm:$0x1]
      %v354 = vld [vmem:[%s316 + $0x24] sm:$0x1]
      %v355 = vld [vmem:[%s316 + $0x2c] sm:$0x1]
      %v356 = vld [vmem:[%s316 + $0x34] sm:$0x1]
      %v357 = vld [vmem:[%s316 + $0x3c] sm:$0x1]
      %v358 = vunpack.c.l.bf16 %v350
      %v359 = vunpack.c.l.bf16 %v351
      %v360 = vunpack.c.l.bf16 %v352
      %v361 = vunpack.c.l.bf16 %v353
      %v362 = vunpack.c.l.bf16 %v354
      %v363 = vunpack.c.l.bf16 %v355
      %v364 = vunpack.c.l.bf16 %v356
      %v365 = vunpack.c.l.bf16 %v357
      %v382 = vrot.slane %v325, 1
      %v383 = vrot.slane %v358, 1
      %v384 = vsel %vm291, %v382, %v383
      %v385 = vrot.slane %v326, 1
      %v386 = vrot.slane %v359, 1
      %v387 = vsel %vm291, %v385, %v386
      %v388 = vrot.slane %v327, 1
      %v389 = vrot.slane %v360, 1
      %v390 = vsel %vm291, %v388, %v389
      %v391 = vrot.slane %v328, 1
      %v392 = vrot.slane %v361, 1
      %v393 = vsel %vm291, %v391, %v392
      %v394 = vrot.slane %v329, 1
      %v395 = vrot.slane %v362, 1
      %v396 = vsel %vm291, %v394, %v395
      %v397 = vrot.slane %v330, 1
      %v398 = vrot.slane %v363, 1
      %v399 = vsel %vm291, %v397, %v398
      %v400 = vrot.slane %v331, 1
      %v401 = vrot.slane %v364, 1
      %v402 = vsel %vm291, %v400, %v401
      %v403 = vrot.slane %v332, 1
      %v404 = vrot.slane %v365, 1
      %v405 = vsel %vm291, %v403, %v404
      %s406 = scalar_lea.vmem %s219, 8
      %v407 = vld [vmem:[%s406] sm:$0xf]
      %v408 = vld [vmem:[%s406 + $0x8] sm:$0xf]
      %v409 = vld [vmem:[%s406 + $0x10] sm:$0xf]
      %v410 = vld [vmem:[%s406 + $0x18] sm:$0xf]
      %v411 = vld [vmem:[%s406 + $0x20] sm:$0xf]
      %v412 = vld [vmem:[%s406 + $0x28] sm:$0xf]
      %v413 = vld [vmem:[%s406 + $0x30] sm:$0xf]
      %v414 = vld [vmem:[%s406 + $0x38] sm:$0xf]
      %v415 = vunpack.c.l.bf16 %v407
      %v416 = vunpack.c.l.bf16 %v408
      %v417 = vunpack.c.l.bf16 %v409
      %v418 = vunpack.c.l.bf16 %v410
      %v419 = vunpack.c.l.bf16 %v411
      %v420 = vunpack.c.l.bf16 %v412
      %v421 = vunpack.c.l.bf16 %v413
      %v422 = vunpack.c.l.bf16 %v414
      %s423 = scalar_lea.vmem %s219, 80
      %v424 = vld [vmem:[%s423] sm:$0xf]
      %v425 = vld [vmem:[%s423 + $0x8] sm:$0xf]
      %v426 = vld [vmem:[%s423 + $0x10] sm:$0xf]
      %v427 = vld [vmem:[%s423 + $0x18] sm:$0xf]
      %v428 = vld [vmem:[%s423 + $0x20] sm:$0xf]
      %v429 = vld [vmem:[%s423 + $0x28] sm:$0xf]
      %v430 = vld [vmem:[%s423 + $0x30] sm:$0xf]
      %v431 = vld [vmem:[%s423 + $0x38] sm:$0xf]
      %v432 = vunpack.c.l.bf16 %v424
      %v433 = vunpack.c.l.bf16 %v425
      %v434 = vunpack.c.l.bf16 %v426
      %v435 = vunpack.c.l.bf16 %v427
      %v436 = vunpack.c.l.bf16 %v428
      %v437 = vunpack.c.l.bf16 %v429
      %v438 = vunpack.c.l.bf16 %v430
      %v439 = vunpack.c.l.bf16 %v431
      %v440 = vld [vmem:[%s406 + $0x4] sm:$0x1]
      %v441 = vld [vmem:[%s406 + $0xc] sm:$0x1]
      %v442 = vld [vmem:[%s406 + $0x14] sm:$0x1]
      %v443 = vld [vmem:[%s406 + $0x1c] sm:$0x1]
      %v444 = vld [vmem:[%s406 + $0x24] sm:$0x1]
      %v445 = vld [vmem:[%s406 + $0x2c] sm:$0x1]
      %v446 = vld [vmem:[%s406 + $0x34] sm:$0x1]
      %v447 = vld [vmem:[%s406 + $0x3c] sm:$0x1]
      %v448 = vunpack.c.l.bf16 %v440
      %v449 = vunpack.c.l.bf16 %v441
      %v450 = vunpack.c.l.bf16 %v442
      %v451 = vunpack.c.l.bf16 %v443
      %v452 = vunpack.c.l.bf16 %v444
      %v453 = vunpack.c.l.bf16 %v445
      %v454 = vunpack.c.l.bf16 %v446
      %v455 = vunpack.c.l.bf16 %v447
      %v472 = vrot.slane %v415, 1
      %v473 = vrot.slane %v448, 1
      %v474 = vsel %vm291, %v472, %v473
      %v475 = vrot.slane %v416, 1
      %v476 = vrot.slane %v449, 1
      %v477 = vsel %vm291, %v475, %v476
      %v478 = vrot.slane %v417, 1
      %v479 = vrot.slane %v450, 1
      %v480 = vsel %vm291, %v478, %v479
      %v481 = vrot.slane %v418, 1
      %v482 = vrot.slane %v451, 1
      %v483 = vsel %vm291, %v481, %v482
      %v484 = vrot.slane %v419, 1
      %v485 = vrot.slane %v452, 1
      %v486 = vsel %vm291, %v484, %v485
      %v487 = vrot.slane %v420, 1
      %v488 = vrot.slane %v453, 1
      %v489 = vsel %vm291, %v487, %v488
      %v490 = vrot.slane %v421, 1
      %v491 = vrot.slane %v454, 1
      %v492 = vsel %vm291, %v490, %v491
      %v493 = vrot.slane %v422, 1
      %v494 = vrot.slane %v455, 1
      %v495 = vsel %vm291, %v493, %v494
      %504 = vrot.lane.b32.xlu0 %v251, 3
      %v505 = vpop.permute.xlu0 %504
      %506 = vrot.lane.b32.xlu0 %v252, 3
      %v507 = vpop.permute.xlu0 %506
      %508 = vrot.lane.b32.xlu0 %v253, 3
      %v509 = vpop.permute.xlu0 %508
      %510 = vrot.lane.b32.xlu0 %v254, 3
      %v511 = vpop.permute.xlu0 %510
      %512 = vrot.lane.b32.xlu0 %v255, 3
      %v513 = vpop.permute.xlu0 %512
      %514 = vrot.lane.b32.xlu0 %v256, 3
      %v515 = vpop.permute.xlu0 %514
      %516 = vrot.lane.b32.xlu0 %v257, 3
      %v517 = vpop.permute.xlu0 %516
      %518 = vrot.lane.b32.xlu0 %v258, 3
      %v519 = vpop.permute.xlu0 %518
      %528 = vrot.lane.b32.xlu0 %v294, 6
      %v529 = vpop.permute.xlu0 %528
      %530 = vrot.lane.b32.xlu0 %v297, 6
      %v531 = vpop.permute.xlu0 %530
      %532 = vrot.lane.b32.xlu0 %v300, 6
      %v533 = vpop.permute.xlu0 %532
      %534 = vrot.lane.b32.xlu0 %v303, 6
      %v535 = vpop.permute.xlu0 %534
      %536 = vrot.lane.b32.xlu0 %v306, 6
      %v537 = vpop.permute.xlu0 %536
      %538 = vrot.lane.b32.xlu0 %v309, 6
      %v539 = vpop.permute.xlu0 %538
      %540 = vrot.lane.b32.xlu0 %v312, 6
      %v541 = vpop.permute.xlu0 %540
      %542 = vrot.lane.b32.xlu0 %v315, 6
      %v543 = vpop.permute.xlu0 %542
      %552 = vrot.lane.b32.xlu0 %v325, 9
      %v553 = vpop.permute.xlu0 %552
      %554 = vrot.lane.b32.xlu0 %v326, 9
      %v555 = vpop.permute.xlu0 %554
      %556 = vrot.lane.b32.xlu0 %v327, 9
      %v557 = vpop.permute.xlu0 %556
      %558 = vrot.lane.b32.xlu0 %v328, 9
      %v559 = vpop.permute.xlu0 %558
      %560 = vrot.lane.b32.xlu0 %v329, 9
      %v561 = vpop.permute.xlu0 %560
      %562 = vrot.lane.b32.xlu0 %v330, 9
      %v563 = vpop.permute.xlu0 %562
      %564 = vrot.lane.b32.xlu0 %v331, 9
      %v565 = vpop.permute.xlu0 %564
      %566 = vrot.lane.b32.xlu0 %v332, 9
      %v567 = vpop.permute.xlu0 %566
      %584 = vrot.lane.b32.xlu0 %v342, 12
      %v585 = vpop.permute.xlu0 %584
      %586 = vrot.lane.b32.xlu0 %v343, 12
      %v587 = vpop.permute.xlu0 %586
      %588 = vrot.lane.b32.xlu0 %v344, 12
      %v589 = vpop.permute.xlu0 %588
      %590 = vrot.lane.b32.xlu0 %v345, 12
      %v591 = vpop.permute.xlu0 %590
      %592 = vrot.lane.b32.xlu0 %v346, 12
      %v593 = vpop.permute.xlu0 %592
      %594 = vrot.lane.b32.xlu0 %v347, 12
      %v595 = vpop.permute.xlu0 %594
      %596 = vrot.lane.b32.xlu0 %v348, 12
      %v597 = vpop.permute.xlu0 %596
      %598 = vrot.lane.b32.xlu0 %v349, 12
      %v599 = vpop.permute.xlu0 %598
      %608 = vrot.lane.b32.xlu0 %v384, 15
      %v609 = vpop.permute.xlu0 %608
      %610 = vrot.lane.b32.xlu0 %v387, 15
      %v611 = vpop.permute.xlu0 %610
      %612 = vrot.lane.b32.xlu0 %v390, 15
      %v613 = vpop.permute.xlu0 %612
      %614 = vrot.lane.b32.xlu0 %v393, 15
      %v615 = vpop.permute.xlu0 %614
      %616 = vrot.lane.b32.xlu0 %v396, 15
      %v617 = vpop.permute.xlu0 %616
      %618 = vrot.lane.b32.xlu0 %v399, 15
      %v619 = vpop.permute.xlu0 %618
      %620 = vrot.lane.b32.xlu0 %v402, 15
      %v621 = vpop.permute.xlu0 %620
      %622 = vrot.lane.b32.xlu0 %v405, 15
      %v623 = vpop.permute.xlu0 %622
      %632 = vrot.lane.b32.xlu0 %v415, 18
      %v633 = vpop.permute.xlu0 %632
      %634 = vrot.lane.b32.xlu0 %v416, 18
      %v635 = vpop.permute.xlu0 %634
      %636 = vrot.lane.b32.xlu0 %v417, 18
      %v637 = vpop.permute.xlu0 %636
      %638 = vrot.lane.b32.xlu0 %v418, 18
      %v639 = vpop.permute.xlu0 %638
      %640 = vrot.lane.b32.xlu0 %v419, 18
      %v641 = vpop.permute.xlu0 %640
      %642 = vrot.lane.b32.xlu0 %v420, 18
      %v643 = vpop.permute.xlu0 %642
      %644 = vrot.lane.b32.xlu0 %v421, 18
      %v645 = vpop.permute.xlu0 %644
      %646 = vrot.lane.b32.xlu0 %v422, 18
      %v647 = vpop.permute.xlu0 %646
      %664 = vrot.lane.b32.xlu0 %v432, 21
      %v665 = vpop.permute.xlu0 %664
      %666 = vrot.lane.b32.xlu0 %v433, 21
      %v667 = vpop.permute.xlu0 %666
      %668 = vrot.lane.b32.xlu0 %v434, 21
      %v669 = vpop.permute.xlu0 %668
      %670 = vrot.lane.b32.xlu0 %v435, 21
      %v671 = vpop.permute.xlu0 %670
      %672 = vrot.lane.b32.xlu0 %v436, 21
      %v673 = vpop.permute.xlu0 %672
      %674 = vrot.lane.b32.xlu0 %v437, 21
      %v675 = vpop.permute.xlu0 %674
      %676 = vrot.lane.b32.xlu0 %v438, 21
      %v677 = vpop.permute.xlu0 %676
      %678 = vrot.lane.b32.xlu0 %v439, 21
      %v679 = vpop.permute.xlu0 %678
      %688 = vrot.lane.b32.xlu0 %v474, 24
      %v689 = vpop.permute.xlu0 %688
      %690 = vrot.lane.b32.xlu0 %v477, 24
      %v691 = vpop.permute.xlu0 %690
      %692 = vrot.lane.b32.xlu0 %v480, 24
      %v693 = vpop.permute.xlu0 %692
      %694 = vrot.lane.b32.xlu0 %v483, 24
      %v695 = vpop.permute.xlu0 %694
      %696 = vrot.lane.b32.xlu0 %v486, 24
      %v697 = vpop.permute.xlu0 %696
      %698 = vrot.lane.b32.xlu0 %v489, 24
      %v699 = vpop.permute.xlu0 %698
      %700 = vrot.lane.b32.xlu0 %v492, 24
      %v701 = vpop.permute.xlu0 %700
      %702 = vrot.lane.b32.xlu0 %v495, 24
      %v703 = vpop.permute.xlu0 %702
      %vm712 = vcmask 23552
      %v713 = vsel %vm712, %v234, %v505
      %v714 = vsel %vm712, %v235, %v507
      %v715 = vsel %vm712, %v236, %v509
      %v716 = vsel %vm712, %v237, %v511
      %v717 = vsel %vm712, %v238, %v513
      %v718 = vsel %vm712, %v239, %v515
      %v719 = vsel %vm712, %v240, %v517
      %v720 = vsel %vm712, %v241, %v519
      %vm721 = vcmask 48128
      %v722 = vsel %vm721, %v713, %v529
      %v723 = vsel %vm721, %v714, %v531
      %v724 = vsel %vm721, %v715, %v533
      %v725 = vsel %vm721, %v716, %v535
      %v726 = vsel %vm721, %v717, %v537
      %v727 = vsel %vm721, %v718, %v539
      %v728 = vsel %vm721, %v719, %v541
      %v729 = vsel %vm721, %v720, %v543
      %vm730 = vcmask 72704
      %v731 = vsel %vm730, %v722, %v553
      %v732 = vsel %vm730, %v723, %v555
      %v733 = vsel %vm730, %v724, %v557
      %v734 = vsel %vm730, %v725, %v559
      %v735 = vsel %vm730, %v726, %v561
      %v736 = vsel %vm730, %v727, %v563
      %v737 = vsel %vm730, %v728, %v565
      %v738 = vsel %vm730, %v729, %v567
      %vm739 = vcmask 97280
      %v740 = vsel %vm739, %v731, %v585
      %v741 = vsel %vm739, %v732, %v587
      %v742 = vsel %vm739, %v733, %v589
      %v743 = vsel %vm739, %v734, %v591
      %v744 = vsel %vm739, %v735, %v593
      %v745 = vsel %vm739, %v736, %v595
      %v746 = vsel %vm739, %v737, %v597
      %v747 = vsel %vm739, %v738, %v599
      %vm748 = vcmask 121856
      %v749 = vsel %vm748, %v740, %v609
      %v750 = vsel %vm748, %v741, %v611
      %v751 = vsel %vm748, %v742, %v613
      %v752 = vsel %vm748, %v743, %v615
      %v753 = vsel %vm748, %v744, %v617
      %v754 = vsel %vm748, %v745, %v619
      %v755 = vsel %vm748, %v746, %v621
      %v756 = vsel %vm748, %v747, %v623
      %vm757 = vcmask 146432
      %v758 = vsel %vm757, %v749, %v633
      %v759 = vsel %vm757, %v750, %v635
      %v760 = vsel %vm757, %v751, %v637
      %v761 = vsel %vm757, %v752, %v639
      %v762 = vsel %vm757, %v753, %v641
      %v763 = vsel %vm757, %v754, %v643
      %v764 = vsel %vm757, %v755, %v645
      %v765 = vsel %vm757, %v756, %v647
      %vm766 = vcmask 171008
      %v767 = vsel %vm766, %v758, %v665
      %v768 = vsel %vm766, %v759, %v667
      %v769 = vsel %vm766, %v760, %v669
      %v770 = vsel %vm766, %v761, %v671
      %v771 = vsel %vm766, %v762, %v673
      %v772 = vsel %vm766, %v763, %v675
      %v773 = vsel %vm766, %v764, %v677
      %v774 = vsel %vm766, %v765, %v679
      %vm775 = vcmask 195584
      %v776 = vsel %vm775, %v767, %v689
      %v777 = vsel %vm775, %v768, %v691
      %v778 = vsel %vm775, %v769, %v693
      %v779 = vsel %vm775, %v770, %v695
      %v780 = vsel %vm775, %v771, %v697
      %v781 = vsel %vm775, %v772, %v699
      %v782 = vsel %vm775, %v773, %v701
      %v783 = vsel %vm775, %v774, %v703
      %v784 = vpack.c.bf16 %v777, %v776
      %v785 = vpack.c.bf16 %v779, %v778
      %v786 = vpack.c.bf16 %v781, %v780
      %v787 = vpack.c.bf16 %v783, %v782
      %v788 = vld [vmem:[%s1] sm:$0xf]
      %v789 = vld [vmem:[%s1 + $0x4] sm:$0xf]
      %v790 = vld [vmem:[%s1 + $0x8] sm:$0xf]
      %v791 = vld [vmem:[%s1 + $0xc] sm:$0x3]
      %v792 = vld [vmem:[%s2] sm:$0x1]
      %v794 = vperm.slane %v792, 0
      %v800 = vunpack.c.l.b16 %v788
      %v801 = vunpack.c.l.b16 %v789
      %v802 = vunpack.c.l.b16 %v790
      %v803 = vunpack.c.l.b16 %v791
      %v804 = vpack.c.b16 %v801, %v800
      %v805 = vpack.c.b16 %v803, %v802
      %vm807 = vcmask 220160
      %v809 = vsel %vm807, %v784, 0
      %v812 = vsel %vm807, %v785, 0
      %v815 = vsel %vm807, %v786, 0
      %v818 = vsel %vm807, %v787, 0
      %vm820 = vcmask 1044480
      %vm821 = vcmask 1045504
      %v822 = vsel %vm820, 4294967295, 65535
      %v823 = vsel %vm821, %v822, 0
      %v825 = vand.u32 %v805, %v823
      %827 = vmatpush.bf16.msra.mxu0 0
      %828 = vmatpush.bf16.msra.mxu0 0
      %829 = vmatpush.bf16.msra.mxu0 0
      %830 = vmatpush.bf16.msra.mxu0 0
      %831 = vmatpush.bf16.msra.mxu0 0
      %832 = vmatpush.bf16.msra.mxu0 0
      %833 = vmatpush.bf16.msra.mxu0 %v825
      %834 = vmatpush.bf16.msra.mxu0 %v804
      %835 = vmatmul.bf16.gmra.mxu0 %v809
      %v836 = vpop.f32.mrf.mxu0
      %v837 = vadd.f32 %v794, %v836
      %v838 = vpop.f32.mrf.mxu0
      %v839 = vadd.f32 %v794, %v838
      %840 = vmatmul.bf16.gmra.mxu0 %v812
      %v841 = vpop.f32.mrf.mxu0
      %v842 = vadd.f32 %v794, %v841
      %v843 = vpop.f32.mrf.mxu0
      %v844 = vadd.f32 %v794, %v843
      %845 = vmatmul.bf16.gmra.mxu0 %v815
      %v846 = vpop.f32.mrf.mxu0
      %v847 = vadd.f32 %v794, %v846
      %v848 = vpop.f32.mrf.mxu0
      %v849 = vadd.f32 %v794, %v848
      %850 = vmatmul.bf16.gmra.mxu0 %v818
      %v851 = vpop.f32.mrf.mxu0
      %v852 = vadd.f32 %v794, %v851
      %v853 = vpop.f32.mrf.mxu0
      %v854 = vadd.f32 %v794, %v853
      %855 = vdwg.mxu0
      %v856 = vmax.f32 %v837, 0.0
      %v857 = vmax.f32 %v839, 0.0
      %v858 = vmax.f32 %v842, 0.0
      %v859 = vmax.f32 %v844, 0.0
      %v860 = vmax.f32 %v847, 0.0
      %v861 = vmax.f32 %v849, 0.0
      %v862 = vmax.f32 %v852, 0.0
      %v863 = vmax.f32 %v854, 0.0
      %v872 = vrot.slane %v856, 7
      %v873 = vrot.slane %v857, 7
      %v874 = vrot.slane %v858, 7
      %v875 = vrot.slane %v859, 7
      %v876 = vrot.slane %v860, 7
      %v877 = vrot.slane %v861, 7
      %v878 = vrot.slane %v862, 7
      %v879 = vrot.slane %v863, 7
      %vm888 = vcmask 1040384
      %v889 = vsel %vm888, 0.0, %v872
      %v890 = vsel %vm888, 0.0, %v873
      %v891 = vsel %vm888, 0.0, %v874
      %v892 = vsel %vm888, 0.0, %v875
      %v893 = vsel %vm888, 0.0, %v876
      %v894 = vsel %vm888, 0.0, %v877
      %v895 = vsel %vm888, 0.0, %v878
      %v896 = vsel %vm888, 0.0, %v879
      %v897 = vsel %vm888, %v872, 0.0
      %v898 = vsel %vm888, %v873, 0.0
      %v899 = vsel %vm888, %v874, 0.0
      %v900 = vsel %vm888, %v875, 0.0
      %v901 = vsel %vm888, %v876, 0.0
      %v902 = vsel %vm888, %v877, 0.0
      %v903 = vsel %vm888, %v878, 0.0
      %v904 = vsel %vm888, %v879, 0.0
      %v920 = vrot.slane 0.0, 1
      %v921 = vsel %vm291, %v920, %v920
      %v922 = vrot.slane %v889, 1
      %v923 = vrot.slane %v897, 1
      %v924 = vsel %vm291, %v922, %v923
      %v925 = vrot.slane %v890, 1
      %v926 = vrot.slane %v898, 1
      %v927 = vsel %vm291, %v925, %v926
      %v928 = vrot.slane %v891, 1
      %v929 = vrot.slane %v899, 1
      %v930 = vsel %vm291, %v928, %v929
      %v931 = vrot.slane %v892, 1
      %v932 = vrot.slane %v900, 1
      %v933 = vsel %vm291, %v931, %v932
      %v934 = vrot.slane %v893, 1
      %v935 = vrot.slane %v901, 1
      %v936 = vsel %vm291, %v934, %v935
      %v937 = vrot.slane %v894, 1
      %v938 = vrot.slane %v902, 1
      %v939 = vsel %vm291, %v937, %v938
      %v940 = vrot.slane %v895, 1
      %v941 = vrot.slane %v903, 1
      %v942 = vsel %vm291, %v940, %v941
      %v943 = vrot.slane 0.0, 2
      %v944 = vsel %vm821, %v943, %v943
      %v945 = vrot.slane %v889, 2
      %v946 = vrot.slane %v897, 2
      %v947 = vsel %vm821, %v945, %v946
      %v948 = vrot.slane %v890, 2
      %v949 = vrot.slane %v898, 2
      %v950 = vsel %vm821, %v948, %v949
      %v951 = vrot.slane %v891, 2
      %v952 = vrot.slane %v899, 2
      %v953 = vsel %vm821, %v951, %v952
      %v954 = vrot.slane %v892, 2
      %v955 = vrot.slane %v900, 2
      %v956 = vsel %vm821, %v954, %v955
      %v957 = vrot.slane %v893, 2
      %v958 = vrot.slane %v901, 2
      %v959 = vsel %vm821, %v957, %v958
      %v960 = vrot.slane %v894, 2
      %v961 = vrot.slane %v902, 2
      %v962 = vsel %vm821, %v960, %v961
      %v963 = vrot.slane %v895, 2
      %v964 = vrot.slane %v903, 2
      %v965 = vsel %vm821, %v963, %v964
      %v968 = vrot.slane %v896, 1
      %v969 = vrot.slane %v904, 1
      %v970 = vsel %vm291, %v968, %v969
      %v971 = vrot.slane %v896, 2
      %v972 = vrot.slane %v904, 2
      %v973 = vsel %vm821, %v971, %v972
      %982 = vrot.lane.b32.xlu0 %v921, 16
      %v983 = vpop.permute.xlu0 %982
      %984 = vrot.lane.b32.xlu0 %v924, 16
      %v985 = vpop.permute.xlu0 %984
      %986 = vrot.lane.b32.xlu0 %v927, 16
      %v987 = vpop.permute.xlu0 %986
      %988 = vrot.lane.b32.xlu0 %v930, 16
      %v989 = vpop.permute.xlu0 %988
      %990 = vrot.lane.b32.xlu0 %v933, 16
      %v991 = vpop.permute.xlu0 %990
      %992 = vrot.lane.b32.xlu0 %v936, 16
      %v993 = vpop.permute.xlu0 %992
      %994 = vrot.lane.b32.xlu0 %v939, 16
      %v995 = vpop.permute.xlu0 %994
      %996 = vrot.lane.b32.xlu0 %v942, 16
      %v997 = vpop.permute.xlu0 %996
      %1006 = vrot.lane.b32.xlu0 %v944, 32
      %v1007 = vpop.permute.xlu0 %1006
      %1008 = vrot.lane.b32.xlu0 %v947, 32
      %v1009 = vpop.permute.xlu0 %1008
      %1010 = vrot.lane.b32.xlu0 %v950, 32
      %v1011 = vpop.permute.xlu0 %1010
      %1012 = vrot.lane.b32.xlu0 %v953, 32
      %v1013 = vpop.permute.xlu0 %1012
      %1014 = vrot.lane.b32.xlu0 %v956, 32
      %v1015 = vpop.permute.xlu0 %1014
      %1016 = vrot.lane.b32.xlu0 %v959, 32
      %v1017 = vpop.permute.xlu0 %1016
      %1018 = vrot.lane.b32.xlu0 %v962, 32
      %v1019 = vpop.permute.xlu0 %1018
      %1020 = vrot.lane.b32.xlu0 %v965, 32
      %v1021 = vpop.permute.xlu0 %1020
      %1030 = vrot.lane.b32.xlu0 %v889, 48
      %v1031 = vpop.permute.xlu0 %1030
      %1032 = vrot.lane.b32.xlu0 %v890, 48
      %v1033 = vpop.permute.xlu0 %1032
      %1034 = vrot.lane.b32.xlu0 %v891, 48
      %v1035 = vpop.permute.xlu0 %1034
      %1036 = vrot.lane.b32.xlu0 %v892, 48
      %v1037 = vpop.permute.xlu0 %1036
      %1038 = vrot.lane.b32.xlu0 %v893, 48
      %v1039 = vpop.permute.xlu0 %1038
      %1040 = vrot.lane.b32.xlu0 %v894, 48
      %v1041 = vpop.permute.xlu0 %1040
      %1042 = vrot.lane.b32.xlu0 %v895, 48
      %v1043 = vpop.permute.xlu0 %1042
      %1044 = vrot.lane.b32.xlu0 %v896, 48
      %v1045 = vpop.permute.xlu0 %1044
      %1054 = vrot.lane.b32.xlu0 %v924, 64
      %v1055 = vpop.permute.xlu0 %1054
      %1056 = vrot.lane.b32.xlu0 %v927, 64
      %v1057 = vpop.permute.xlu0 %1056
      %1058 = vrot.lane.b32.xlu0 %v930, 64
      %v1059 = vpop.permute.xlu0 %1058
      %1060 = vrot.lane.b32.xlu0 %v933, 64
      %v1061 = vpop.permute.xlu0 %1060
      %1062 = vrot.lane.b32.xlu0 %v936, 64
      %v1063 = vpop.permute.xlu0 %1062
      %1064 = vrot.lane.b32.xlu0 %v939, 64
      %v1065 = vpop.permute.xlu0 %1064
      %1066 = vrot.lane.b32.xlu0 %v942, 64
      %v1067 = vpop.permute.xlu0 %1066
      %1068 = vrot.lane.b32.xlu0 %v970, 64
      %v1069 = vpop.permute.xlu0 %1068
      %1078 = vrot.lane.b32.xlu0 %v947, 80
      %v1079 = vpop.permute.xlu0 %1078
      %1080 = vrot.lane.b32.xlu0 %v950, 80
      %v1081 = vpop.permute.xlu0 %1080
      %1082 = vrot.lane.b32.xlu0 %v953, 80
      %v1083 = vpop.permute.xlu0 %1082
      %1084 = vrot.lane.b32.xlu0 %v956, 80
      %v1085 = vpop.permute.xlu0 %1084
      %1086 = vrot.lane.b32.xlu0 %v959, 80
      %v1087 = vpop.permute.xlu0 %1086
      %1088 = vrot.lane.b32.xlu0 %v962, 80
      %v1089 = vpop.permute.xlu0 %1088
      %1090 = vrot.lane.b32.xlu0 %v965, 80
      %v1091 = vpop.permute.xlu0 %1090
      %1092 = vrot.lane.b32.xlu0 %v973, 80
      %v1093 = vpop.permute.xlu0 %1092
      %1102 = vrot.lane.b32.xlu0 %v890, 96
      %v1103 = vpop.permute.xlu0 %1102
      %1104 = vrot.lane.b32.xlu0 %v891, 96
      %v1105 = vpop.permute.xlu0 %1104
      %1106 = vrot.lane.b32.xlu0 %v892, 96
      %v1107 = vpop.permute.xlu0 %1106
      %1108 = vrot.lane.b32.xlu0 %v893, 96
      %v1109 = vpop.permute.xlu0 %1108
      %1110 = vrot.lane.b32.xlu0 %v894, 96
      %v1111 = vpop.permute.xlu0 %1110
      %1112 = vrot.lane.b32.xlu0 %v895, 96
      %v1113 = vpop.permute.xlu0 %1112
      %1114 = vrot.lane.b32.xlu0 %v896, 96
      %v1115 = vpop.permute.xlu0 %1114
      %1116 = vrot.lane.b32.xlu0 0.0, 96
      %v1117 = vpop.permute.xlu0 %1116
      %1126 = vrot.lane.b32.xlu0 %v927, 112
      %v1127 = vpop.permute.xlu0 %1126
      %1128 = vrot.lane.b32.xlu0 %v930, 112
      %v1129 = vpop.permute.xlu0 %1128
      %1130 = vrot.lane.b32.xlu0 %v933, 112
      %v1131 = vpop.permute.xlu0 %1130
      %1132 = vrot.lane.b32.xlu0 %v936, 112
      %v1133 = vpop.permute.xlu0 %1132
      %1134 = vrot.lane.b32.xlu0 %v939, 112
      %v1135 = vpop.permute.xlu0 %1134
      %1136 = vrot.lane.b32.xlu0 %v942, 112
      %v1137 = vpop.permute.xlu0 %1136
      %1138 = vrot.lane.b32.xlu0 %v970, 112
      %v1139 = vpop.permute.xlu0 %1138
      %1140 = vrot.lane.b32.xlu0 %v921, 112
      %v1141 = vpop.permute.xlu0 %1140
      %vm1150 = vcmask 130048
      %v1151 = vsel %vm1150, 0.0, %v983
      %v1152 = vsel %vm1150, %v889, %v985
      %v1153 = vsel %vm1150, %v890, %v987
      %v1154 = vsel %vm1150, %v891, %v989
      %v1155 = vsel %vm1150, %v892, %v991
      %v1156 = vsel %vm1150, %v893, %v993
      %v1157 = vsel %vm1150, %v894, %v995
      %v1158 = vsel %vm1150, %v895, %v997
      %vm1159 = vcmask 261120
      %v1160 = vsel %vm1159, %v1151, %v1007
      %v1161 = vsel %vm1159, %v1152, %v1009
      %v1162 = vsel %vm1159, %v1153, %v1011
      %v1163 = vsel %vm1159, %v1154, %v1013
      %v1164 = vsel %vm1159, %v1155, %v1015
      %v1165 = vsel %vm1159, %v1156, %v1017
      %v1166 = vsel %vm1159, %v1157, %v1019
      %v1167 = vsel %vm1159, %v1158, %v1021
      %vm1168 = vcmask 392192
      %v1169 = vsel %vm1168, %v1160, %v1031
      %v1170 = vsel %vm1168, %v1161, %v1033
      %v1171 = vsel %vm1168, %v1162, %v1035
      %v1172 = vsel %vm1168, %v1163, %v1037
      %v1173 = vsel %vm1168, %v1164, %v1039
      %v1174 = vsel %vm1168, %v1165, %v1041
      %v1175 = vsel %vm1168, %v1166, %v1043
      %v1176 = vsel %vm1168, %v1167, %v1045
      %vm1177 = vcmask 523264
      %v1178 = vsel %vm1177, %v1169, %v1055
      %v1179 = vsel %vm1177, %v1170, %v1057
      %v1180 = vsel %vm1177, %v1171, %v1059
      %v1181 = vsel %vm1177, %v1172, %v1061
      %v1182 = vsel %vm1177, %v1173, %v1063
      %v1183 = vsel %vm1177, %v1174, %v1065
      %v1184 = vsel %vm1177, %v1175, %v1067
      %v1185 = vsel %vm1177, %v1176, %v1069
      %vm1186 = vcmask 654336
      %v1187 = vsel %vm1186, %v1178, %v1079
      %v1188 = vsel %vm1186, %v1179, %v1081
      %v1189 = vsel %vm1186, %v1180, %v1083
      %v1190 = vsel %vm1186, %v1181, %v1085
      %v1191 = vsel %vm1186, %v1182, %v1087
      %v1192 = vsel %vm1186, %v1183, %v1089
      %v1193 = vsel %vm1186, %v1184, %v1091
      %v1194 = vsel %vm1186, %v1185, %v1093
      %vm1195 = vcmask 785408
      %v1196 = vsel %vm1195, %v1187, %v1103
      %v1197 = vsel %vm1195, %v1188, %v1105
      %v1198 = vsel %vm1195, %v1189, %v1107
      %v1199 = vsel %vm1195, %v1190, %v1109
      %v1200 = vsel %vm1195, %v1191, %v1111
      %v1201 = vsel %vm1195, %v1192, %v1113
      %v1202 = vsel %vm1195, %v1193, %v1115
      %v1203 = vsel %vm1195, %v1194, %v1117
      %vm1204 = vcmask 916480
      %v1205 = vsel %vm1204, %v1196, %v1127
      %v1206 = vsel %vm1204, %v1197, %v1129
      %v1207 = vsel %vm1204, %v1198, %v1131
      %v1208 = vsel %vm1204, %v1199, %v1133
      %v1209 = vsel %vm1204, %v1200, %v1135
      %v1210 = vsel %vm1204, %v1201, %v1137
      %v1211 = vsel %vm1204, %v1202, %v1139
      %v1212 = vsel %vm1204, %v1203, %v1141
      %v1213 = vpack.c.bf16 %v1206, %v1205
      %v1214 = vpack.c.bf16 %v953, %v950
      %v1215 = vpack.c.bf16 %v1208, %v1207
      %v1216 = vpack.c.bf16 %v959, %v956
      %v1217 = vpack.c.bf16 %v1210, %v1209
      %v1218 = vpack.c.bf16 %v965, %v962
      %v1219 = vpack.c.bf16 %v1212, %v1211
      %v1220 = vpack.c.bf16 %v944, %v973
      %v1221 = vld [vmem:[%s3] sm:$0xf]
      %v1222 = vld [vmem:[%s3 + $0x4] sm:$0xf]
      %v1223 = vld [vmem:[%s3 + $0x8] sm:$0xf]
      %v1224 = vld [vmem:[%s3 + $0xc] sm:$0xf]
      %v1225 = vld [vmem:[%s3 + $0x10] sm:$0xf]
      %v1226 = vld [vmem:[%s3 + $0x14] sm:$0xf]
      %v1227 = vld [vmem:[%s3 + $0x18] sm:$0xf]
      %v1228 = vld [vmem:[%s3 + $0x1c] sm:$0xf]
      %v1229 = vld [vmem:[%s3 + $0x20] sm:$0xf]
      %v1230 = vld [vmem:[%s3 + $0x24] sm:$0xf]
      %v1231 = vld [vmem:[%s3 + $0x28] sm:$0xf]
      %v1232 = vld [vmem:[%s3 + $0x2c] sm:$0xf]
      %v1233 = vld [vmem:[%s3 + $0x30] sm:$0xf]
      %v1234 = vld [vmem:[%s3 + $0x34] sm:$0xf]
      %v1235 = vld [vmem:[%s3 + $0x38] sm:$0xf]
      %v1236 = vld [vmem:[%s3 + $0x3c] sm:$0xf]
      %v1237 = vld [vmem:[%s3 + $0x40] sm:$0xf]
      %v1238 = vld [vmem:[%s3 + $0x44] sm:$0xf]
      %v1239 = vld [vmem:[%s4] sm:$0x1]
      %v1241 = vperm.slane %v1239, 0
      %v1261 = vunpack.c.l.b16 %v1221
      %v1262 = vunpack.c.l.b16 %v1222
      %v1263 = vunpack.c.l.b16 %v1223
      %v1264 = vunpack.c.l.b16 %v1224
      %v1265 = vunpack.c.l.b16 %v1225
      %v1266 = vunpack.c.l.b16 %v1226
      %v1267 = vunpack.c.l.b16 %v1227
      %v1268 = vunpack.c.l.b16 %v1228
      %v1269 = vunpack.c.l.b16 %v1229
      %v1270 = vunpack.c.l.b16 %v1230
      %v1271 = vunpack.c.l.b16 %v1231
      %v1272 = vunpack.c.l.b16 %v1232
      %v1273 = vunpack.c.l.b16 %v1233
      %v1274 = vunpack.c.l.b16 %v1234
      %v1275 = vunpack.c.l.b16 %v1235
      %v1276 = vunpack.c.l.b16 %v1236
      %v1277 = vunpack.c.l.b16 %v1237
      %v1278 = vunpack.c.l.b16 %v1238
      %v1279 = vpack.c.b16 %v1262, %v1261
      %v1280 = vpack.c.b16 %v1264, %v1263
      %v1281 = vpack.c.b16 %v1266, %v1265
      %v1282 = vpack.c.b16 %v1268, %v1267
      %v1283 = vpack.c.b16 %v1270, %v1269
      %v1284 = vpack.c.b16 %v1272, %v1271
      %v1285 = vpack.c.b16 %v1274, %v1273
      %v1286 = vpack.c.b16 %v1276, %v1275
      %v1287 = vpack.c.b16 %v1278, %v1277
      %v1298 = vsel %vm1150, %v1214, 0
      %v1301 = vsel %vm1150, %v1216, 0
      %v1304 = vsel %vm1150, %v1218, 0
      %v1307 = vsel %vm1150, %v1220, 0
      %1309 = vmatpush.bf16.msra.mxu0 %v1286
      %1310 = vmatpush.bf16.msra.mxu0 %v1285
      %1311 = vmatpush.bf16.msra.mxu0 %v1284
      %1312 = vmatpush.bf16.msra.mxu0 %v1283
      %1313 = vmatpush.bf16.msra.mxu0 %v1282
      %1314 = vmatpush.bf16.msra.mxu0 %v1281
      %1315 = vmatpush.bf16.msra.mxu0 %v1280
      %1316 = vmatpush.bf16.msra.mxu0 %v1279
      %1317 = vmatmul.bf16.gmra.mxu0 %v1213
      %v1318 = vpop.f32.mrf.mxu0
      %v1319 = vadd.f32 %v1241, %v1318
      %v1320 = vpop.f32.mrf.mxu0
      %v1321 = vadd.f32 %v1241, %v1320
      %1322 = vmatmul.bf16.gmra.mxu0 %v1215
      %v1323 = vpop.f32.mrf.mxu0
      %v1324 = vadd.f32 %v1241, %v1323
      %v1325 = vpop.f32.mrf.mxu0
      %v1326 = vadd.f32 %v1241, %v1325
      %1327 = vmatmul.bf16.gmra.mxu0 %v1217
      %v1328 = vpop.f32.mrf.mxu0
      %v1329 = vadd.f32 %v1241, %v1328
      %v1330 = vpop.f32.mrf.mxu0
      %v1331 = vadd.f32 %v1241, %v1330
      %1332 = vmatmul.bf16.gmra.mxu0 %v1219
      %v1333 = vpop.f32.mrf.mxu0
      %v1334 = vadd.f32 %v1241, %v1333
      %v1335 = vpop.f32.mrf.mxu0
      %v1336 = vadd.f32 %v1241, %v1335
      %1337 = vdwg.mxu0
      %1338 = vmatpush.bf16.msra.mxu0 0
      %1339 = vmatpush.bf16.msra.mxu0 0
      %1340 = vmatpush.bf16.msra.mxu0 0
      %1341 = vmatpush.bf16.msra.mxu0 0
      %1342 = vmatpush.bf16.msra.mxu0 0
      %1343 = vmatpush.bf16.msra.mxu0 0
      %1344 = vmatpush.bf16.msra.mxu0 0
      %1345 = vmatpush.bf16.msra.mxu0 %v1287
      %1346 = vmatmul.bf16.gmra.mxu0 %v1298
      %v1347 = vpop.f32.mrf.mxu0
      %v1348 = vadd.f32 %v1319, %v1347
      %v1349 = vpop.f32.mrf.mxu0
      %v1350 = vadd.f32 %v1321, %v1349
      %1351 = vmatmul.bf16.gmra.mxu0 %v1301
      %v1352 = vpop.f32.mrf.mxu0
      %v1353 = vadd.f32 %v1324, %v1352
      %v1354 = vpop.f32.mrf.mxu0
      %v1355 = vadd.f32 %v1326, %v1354
      %1356 = vmatmul.bf16.gmra.mxu0 %v1304
      %v1357 = vpop.f32.mrf.mxu0
      %v1358 = vadd.f32 %v1329, %v1357
      %v1359 = vpop.f32.mrf.mxu0
      %v1360 = vadd.f32 %v1331, %v1359
      %1361 = vmatmul.bf16.gmra.mxu0 %v1307
      %v1362 = vpop.f32.mrf.mxu0
      %v1363 = vadd.f32 %v1334, %v1362
      %v1364 = vpop.f32.mrf.mxu0
      %v1365 = vadd.f32 %v1336, %v1364
      %1366 = vdwg.mxu0
      %v1367 = vmax.f32 %v1348, 0.0
      %v1368 = vmax.f32 %v1350, 0.0
      %v1369 = vmax.f32 %v1353, 0.0
      %v1370 = vmax.f32 %v1355, 0.0
      %v1371 = vmax.f32 %v1358, 0.0
      %v1372 = vmax.f32 %v1360, 0.0
      %v1373 = vmax.f32 %v1363, 0.0
      %v1374 = vmax.f32 %v1365, 0.0
      %v1375 = vpack.c.bf16 %v1367, %v1367
      %v1376 = vpack.c.bf16 %v1368, %v1368
      %v1377 = vpack.c.bf16 %v1369, %v1369
      %v1378 = vpack.c.bf16 %v1370, %v1370
      %v1379 = vpack.c.bf16 %v1371, %v1371
      %v1380 = vpack.c.bf16 %v1372, %v1372
      %v1381 = vpack.c.bf16 %v1373, %v1373
      %v1382 = vpack.c.bf16 %v1374, %v1374
      %vm1383 = vcmask 125952
      %1384 = vst.msk [vmem:[%s224] sm:$0xf] %vm1383, %v1375
      %1385 = vst.msk [vmem:[%s224 + $0x4] sm:$0xf] %vm1383, %v1376
      %1386 = vst.msk [vmem:[%s224 + $0x8] sm:$0xf] %vm1383, %v1377
      %1387 = vst.msk [vmem:[%s224 + $0xc] sm:$0xf] %vm1383, %v1378
      %1388 = vst.msk [vmem:[%s224 + $0x10] sm:$0xf] %vm1383, %v1379
      %1389 = vst.msk [vmem:[%s224 + $0x14] sm:$0xf] %vm1383, %v1380
      %1390 = vst.msk [vmem:[%s224 + $0x18] sm:$0xf] %vm1383, %v1381
      %1391 = vst.msk [vmem:[%s224 + $0x1c] sm:$0xf] %vm1383, %v1382
      %p1392 = scmp.lt.s32.totalorder %s16, 1
      %s1393 = scalar_select %p1392, %s16, 1
      %s1394 = smul.addr %s1393, 8
      %s1395 = smul.addr %s1394, 4
      %s1396 = scalar_lea.vmem %s5, %s1395
      // Predicated region
      $region41: #{detector_forward.9} parent=39 // pred_check
        %p1397 = pneg %p144
      $region42: #{detector_forward.9} parent=39 // pred_check_branch
        %1399 = sbr.rel (%p1397) target = $region44
      $region43: #{detector_forward.9} parent=39 // pred_region
        _
      $region44: #{detector_forward.9} parent=39 // pred_fallthru
        _
    $region40: #{detector_forward.9} parent=5 // pred_fallthru
      _
    %p1400 = scmp.le.s32.totalorder 2, %s11
    // Predicated region
    $region45: #{detector_forward.9} parent=5 // pred_check
      %p1401 = pneg %p1400
    $region46: #{detector_forward.9} parent=5 // pred_check_branch
      %1403 = sbr.rel (%p1401) target = $region48
    $region47: #{detector_forward.9} parent=5 // pred_region
      %s1404 = ssub.s32 %s11, 2
      // Predicated region
      $region49: #{detector_forward.9} parent=47 // pred_check
        %p1405 = pneg %p150
      $region50: #{detector_forward.9} parent=47 // pred_check_branch
        %1407 = sbr.rel (%p1405) target = $region52
      $region51: #{detector_forward.9} parent=47 // pred_region
        %p1408 = scmp.lt.s32.totalorder %s17, 1
        %s1409 = scalar_select %p1408, %s17, 1
        %s1410 = smul.addr %s1409, 8
        %s1411 = smul.addr %s1410, 4
        %s1412 = scalar_lea.vmem %s5, %s1411
      $region52: #{detector_forward.9} parent=47 // pred_fallthru
        _
    $region48: #{detector_forward.9} parent=5 // pred_fallthru
      _
  $region6: #{detector_forward.9} parent=0 // loop_footer
    %s15 = sadd.s32 1, %s11
  $region7: #{detector_forward.9} parent=0 // loop_footer_branch
    %10 = sbr.rel target = $region3
  $region8: #{detector_forward.9} parent=0 // loop_exit
    _

// kernel: detector_forward.10
$region0: #{detector_forward.10}
  #allocation0 [shape = 'u32[]', space=smem, size = 0x4, offset = 0x4, fixed_abs, tag = 'smem constant byte address 0x4 - core index']
  #allocation1 [shape = 'u32[72,128]{1,0:T(1,128)}', space=vmem, size = 0x9000, scoped, tag = 'internal scratch']
  %s0 = inlined_call_operand.vmem [shape: bf16[2,4,5,5,16], index: 0, kind: input, shape index: {}]
  %s1 = inlined_call_operand.vmem [shape: bf16[144,32], index: 1, kind: input, shape index: {}]
  %s2 = inlined_call_operand.vmem [shape: f32[1,32], index: 2, kind: input, shape index: {}]
  %s3 = inlined_call_operand.vmem [shape: bf16[288,32], index: 3, kind: input, shape index: {}]
  %s4 = inlined_call_operand.vmem [shape: f32[1,32], index: 4, kind: input, shape index: {}]
  %s5 = inlined_call_operand.vmem [shape: bf16[2,16,32], index: 5, kind: output, shape index: {}]
  %s6 = sld [smem:[#allocation0]]
  $region53: #{detector_forward.10} parent=0
    _
  %s8 = ssub.s32 1, %s6
  %s9 = scalar_select 0, %s8, %s6
  loop: start=0, step=1, limit=4
  $region2: #{detector_forward.10} parent=0 // loop_pre_header
    _
  $region3: #{detector_forward.10} parent=0 // loop_header
    %s11 = sphi 0, %s15
    %p12 = scmp.ge.s32.totalorder %s11, 4
    %s21 = sphi 0, %s23
    %s24 = sphi 0, %s21
    %s25 = sphi 0, %s24
    %s41 = sphi 0, %s25
    %s45 = sphi 0, %s45
    %s47 = sphi 0, %s45
    %s48 = sphi 0, %s47
    %s62 = sphi 0, %s48
    %s66 = sphi 0, %s66
    %s68 = sphi 0, %s66
    %s69 = sphi 0, %s68
    %s83 = sphi 0, %s69
    %s87 = sphi 0, %s87
    %s89 = sphi 0, %s87
    %s90 = sphi 0, %s89
    %s104 = sphi 0, %s90
    %s108 = sphi 0, %s108
    %s110 = sphi 0, %s108
    %s111 = sphi 0, %s110
    %s125 = sphi 0, %s111
    %s131 = sphi 0, %s133
    %s134 = sphi 0, %s131
    %s135 = sphi 0, %s134
    %s151 = sphi 0, %s135
  $region4: #{detector_forward.10} parent=0 // loop_header_branch
    %14 = sbr.rel (%p12) target = $region8
  $region5: #{detector_forward.10} parent=0 // loop_body
    %s16 = ssub.s32 %s11, 1
    %s17 = ssub.s32 %s11, 2
    %s18 = sadd.s32 %s11, 1
    %s19 = ssub.s32 %s11, %s18
    %p20 = scmp.eq.s32.totalorder %s19, 0
    %s22 = sadd.s32 %s21, 1
    %s23 = scalar_select %p20, %s21, %s22
    %p26 = pneg %p20
    %p27 = scmp.eq.s32.totalorder %s11, 1
    %p28 = por %p26, %p27
    %p29 = scmp.ne.s32.totalorder %s21, %s24
    %p30 = scmp.eq.s32.totalorder %s11, 0
    %p31 = por %p29, %p30
    %p32 = scmp.ne.s32.totalorder %s21, %s24
    %p33 = scmp.eq.s32.totalorder %s16, 1
    %p34 = por %p32, %p33
    %p35 = scmp.ne.s32.totalorder %s24, %s25
    %p36 = scmp.eq.s32.totalorder %s16, 0
    %p37 = por %p35, %p36
    %p38 = scmp.ne.s32.totalorder %s24, %s25
    %p39 = scmp.eq.s32.totalorder %s17, 1
    %p40 = por %p38, %p39
    %p42 = scmp.ne.s32.totalorder %s25, %s41
    %p43 = scmp.eq.s32.totalorder %s17, 0
    %p44 = por %p42, %p43
    %s46 = sadd.s32 %s45, 1
    %p49 = scmp.eq.s32.totalorder %s11, 1
    %p50 = scmp.ne.s32.totalorder %s45, %s47
    %p51 = scmp.eq.s32.totalorder %s11, 0
    %p52 = por %p50, %p51
    %p53 = scmp.ne.s32.totalorder %s45, %s47
    %p54 = scmp.eq.s32.totalorder %s16, 1
    %p55 = por %p53, %p54
    %p56 = scmp.ne.s32.totalorder %s47, %s48
    %p57 = scmp.eq.s32.totalorder %s16, 0
    %p58 = por %p56, %p57
    %p59 = scmp.ne.s32.totalorder %s47, %s48
    %p60 = scmp.eq.s32.totalorder %s17, 1
    %p61 = por %p59, %p60
    %p63 = scmp.ne.s32.totalorder %s48, %s62
    %p64 = scmp.eq.s32.totalorder %s17, 0
    %p65 = por %p63, %p64
    %s67 = sadd.s32 %s66, 1
    %p70 = scmp.eq.s32.totalorder %s11, 1
    %p71 = scmp.ne.s32.totalorder %s66, %s68
    %p72 = scmp.eq.s32.totalorder %s11, 0
    %p73 = por %p71, %p72
    %p74 = scmp.ne.s32.totalorder %s66, %s68
    %p75 = scmp.eq.s32.totalorder %s16, 1
    %p76 = por %p74, %p75
    %p77 = scmp.ne.s32.totalorder %s68, %s69
    %p78 = scmp.eq.s32.totalorder %s16, 0
    %p79 = por %p77, %p78
    %p80 = scmp.ne.s32.totalorder %s68, %s69
    %p81 = scmp.eq.s32.totalorder %s17, 1
    %p82 = por %p80, %p81
    %p84 = scmp.ne.s32.totalorder %s69, %s83
    %p85 = scmp.eq.s32.totalorder %s17, 0
    %p86 = por %p84, %p85
    %s88 = sadd.s32 %s87, 1
    %p91 = scmp.eq.s32.totalorder %s11, 1
    %p92 = scmp.ne.s32.totalorder %s87, %s89
    %p93 = scmp.eq.s32.totalorder %s11, 0
    %p94 = por %p92, %p93
    %p95 = scmp.ne.s32.totalorder %s87, %s89
    %p96 = scmp.eq.s32.totalorder %s16, 1
    %p97 = por %p95, %p96
    %p98 = scmp.ne.s32.totalorder %s89, %s90
    %p99 = scmp.eq.s32.totalorder %s16, 0
    %p100 = por %p98, %p99
    %p101 = scmp.ne.s32.totalorder %s89, %s90
    %p102 = scmp.eq.s32.totalorder %s17, 1
    %p103 = por %p101, %p102
    %p105 = scmp.ne.s32.totalorder %s90, %s104
    %p106 = scmp.eq.s32.totalorder %s17, 0
    %p107 = por %p105, %p106
    %s109 = sadd.s32 %s108, 1
    %p112 = scmp.eq.s32.totalorder %s11, 1
    %p113 = scmp.ne.s32.totalorder %s108, %s110
    %p114 = scmp.eq.s32.totalorder %s11, 0
    %p115 = por %p113, %p114
    %p116 = scmp.ne.s32.totalorder %s108, %s110
    %p117 = scmp.eq.s32.totalorder %s16, 1
    %p118 = por %p116, %p117
    %p119 = scmp.ne.s32.totalorder %s110, %s111
    %p120 = scmp.eq.s32.totalorder %s16, 0
    %p121 = por %p119, %p120
    %p122 = scmp.ne.s32.totalorder %s110, %s111
    %p123 = scmp.eq.s32.totalorder %s17, 1
    %p124 = por %p122, %p123
    %p126 = scmp.ne.s32.totalorder %s111, %s125
    %p127 = scmp.eq.s32.totalorder %s17, 0
    %p128 = por %p126, %p127
    %s129 = ssub.s32 %s11, %s18
    %p130 = scmp.eq.s32.totalorder %s129, 0
    %s132 = sadd.s32 %s131, 1
    %s133 = scalar_select %p130, %s131, %s132
    %p136 = pneg %p130
    %p137 = scmp.eq.s32.totalorder %s11, 1
    %p138 = por %p136, %p137
    %p139 = scmp.ne.s32.totalorder %s131, %s134
    %p140 = scmp.eq.s32.totalorder %s11, 0
    %p141 = por %p139, %p140
    %p142 = scmp.ne.s32.totalorder %s131, %s134
    %p143 = scmp.eq.s32.totalorder %s16, 1
    %p144 = por %p142, %p143
    %p145 = scmp.ne.s32.totalorder %s134, %s135
    %p146 = scmp.eq.s32.totalorder %s16, 0
    %p147 = por %p145, %p146
    %p148 = scmp.ne.s32.totalorder %s134, %s135
    %p149 = scmp.eq.s32.totalorder %s17, 1
    %p150 = por %p148, %p149
    %p152 = scmp.ne.s32.totalorder %s135, %s151
    %p153 = scmp.eq.s32.totalorder %s17, 0
    %p154 = por %p152, %p153
    %p155 = scmp.le.s32.totalorder 1, %s11
    %p156 = scmp.lt.s32.totalorder %s11, 3
    %p157 = pnand %p155, %p156
    %p158 = pneg %p157
    // Predicated region
    $region9: #{detector_forward.10} parent=5 // pred_check
      _
    $region10: #{detector_forward.10} parent=5 // pred_check_branch
      %160 = sbr.rel (%p157) target = $region12
    $region11: #{detector_forward.10} parent=5 // pred_region
      %s161 = ssub.s32 %s11, 1
      // Predicated region
      $region13: #{detector_forward.10} parent=11 // pred_check
        %p162 = pneg %p58
      $region14: #{detector_forward.10} parent=11 // pred_check_branch
        %164 = sbr.rel (%p162) target = $region16
      $region15: #{detector_forward.10} parent=11 // pred_region
        _
      $region16: #{detector_forward.10} parent=11 // pred_fallthru
        _
      // Predicated region
      $region17: #{detector_forward.10} parent=11 // pred_check
        %p165 = pneg %p79
      $region18: #{detector_forward.10} parent=11 // pred_check_branch
        %167 = sbr.rel (%p165) target = $region20
      $region19: #{detector_forward.10} parent=11 // pred_region
        _
      $region20: #{detector_forward.10} parent=11 // pred_fallthru
        _
      // Predicated region
      $region21: #{detector_forward.10} parent=11 // pred_check
        %p168 = pneg %p100
      $region22: #{detector_forward.10} parent=11 // pred_check_branch
        %170 = sbr.rel (%p168) target = $region24
      $region23: #{detector_forward.10} parent=11 // pred_region
        _
      $region24: #{detector_forward.10} parent=11 // pred_fallthru
        _
      // Predicated region
      $region25: #{detector_forward.10} parent=11 // pred_check
        %p171 = pneg %p121
      $region26: #{detector_forward.10} parent=11 // pred_check_branch
        %173 = sbr.rel (%p171) target = $region28
      $region27: #{detector_forward.10} parent=11 // pred_region
        _
      $region28: #{detector_forward.10} parent=11 // pred_fallthru
        _
    $region12: #{detector_forward.10} parent=5 // pred_fallthru
      _
    %p174 = scmp.lt.s32.totalorder %s11, 2
    // Predicated region
    $region29: #{detector_forward.10} parent=5 // pred_check
      %p175 = pneg %p174
    $region30: #{detector_forward.10} parent=5 // pred_check_branch
      %177 = sbr.rel (%p175) target = $region32
    $region31: #{detector_forward.10} parent=5 // pred_region
      // Predicated region
      $region33: #{detector_forward.10} parent=31 // pred_check
        %p178 = pneg %p31
      $region34: #{detector_forward.10} parent=31 // pred_check_branch
        %180 = sbr.rel (%p178) target = $region36
      $region35: #{detector_forward.10} parent=31 // pred_region
        %p181 = scmp.lt.s32.totalorder %s11, 1
        %s182 = scalar_select %p181, %s11, 1
        %s183 = smul.addr %s182, 20
        %s184 = smul.addr %s183, 4
        %s185 = scalar_lea.vmem %s0, %s184
      $region36: #{detector_forward.10} parent=31 // pred_fallthru
        _
    $region32: #{detector_forward.10} parent=5 // pred_fallthru
      _
    %p186 = scmp.le.s32.totalorder 1, %s11
    %p187 = scmp.lt.s32.totalorder %s11, 3
    %p188 = pnand %p186, %p187
    %p189 = pneg %p188
    // Predicated region
    $region37: #{detector_forward.10} parent=5 // pred_check
      _
    $region38: #{detector_forward.10} parent=5 // pred_check_branch
      %191 = sbr.rel (%p188) target = $region40
    $region39: #{detector_forward.10} parent=5 // pred_region
      %s192 = ssub.s32 %s11, 1
      %p193 = scmp.lt.s32.totalorder %s16, 1
      %s194 = scalar_select %p193, %s16, 1
      %s195 = smul.addr %s194, 20
      %s196 = smul.addr %s195, 4
      %s197 = scalar_lea.vmem %s0, %s196
      %p198 = pneg %p37
      %p199 = pneg %p34
      %p200 = pneg %p58
      %p201 = pneg %p55
      %p202 = pneg %p79
      %p203 = pneg %p76
      %p204 = pneg %p100
      %p205 = pneg %p97
      %p206 = pneg %p121
      %p207 = pneg %p118
      %p208 = pneg %p147
      %p209 = pneg %p144
      %p210 = scmp.lt.s32.totalorder %s16, 1
      %s211 = scalar_select %p210, %s16, 1
      %s212 = smul.addr %s211, 2
      %s213 = smul.addr %s212, 4
      %s214 = scalar_lea.vmem %s5, %s213
      %p215 = scmp.lt.s32.totalorder %s16, 1
      %s216 = scalar_select %p215, %s16, 1
      %s217 = smul.addr %s216, 20
      %s218 = smul.addr %s217, 4
      %s219 = scalar_lea.vmem %s0, %s218
      %p220 = scmp.lt.s32.totalorder %s16, 1
      %s221 = scalar_select %p220, %s16, 1
      %s222 = smul.addr %s221, 2
      %s223 = smul.addr %s222, 4
      %s224 = scalar_lea.vmem %s5, %s223
      %v226 = vld [vmem:[%s219] sm:$0x3]
      %v227 = vld [vmem:[%s219 + $0x4] sm:$0x3]
      %v228 = vld [vmem:[%s219 + $0x8] sm:$0x3]
      %v229 = vld [vmem:[%s219 + $0xc] sm:$0x3]
      %v230 = vunpack.c.l.bf16 %v226
      %v231 = vunpack.c.l.bf16 %v227
      %v232 = vunpack.c.l.bf16 %v228
      %v233 = vunpack.c.l.bf16 %v229
      %s234 = scalar_lea.vmem %s219, 20
      %v235 = vld [vmem:[%s234] sm:$0x3]
      %v236 = vld [vmem:[%s234 + $0x4] sm:$0x3]
      %v237 = vld [vmem:[%s234 + $0x8] sm:$0x3]
      %v238 = vld [vmem:[%s234 + $0xc] sm:$0x3]
      %v239 = vunpack.c.l.bf16 %v235
      %v240 = vunpack.c.l.bf16 %v236
      %v241 = vunpack.c.l.bf16 %v237
      %v242 = vunpack.c.l.bf16 %v238
      %v243 = vld [vmem:[%s219] sm:$0x7]
      %v244 = vld [vmem:[%s219 + $0x4] sm:$0x7]
      %v245 = vld [vmem:[%s219 + $0x8] sm:$0x7]
      %v246 = vld [vmem:[%s219 + $0xc] sm:$0x7]
      %v247 = vunpack.c.l.bf16 %v243
      %v248 = vunpack.c.l.bf16 %v244
      %v249 = vunpack.c.l.bf16 %v245
      %v250 = vunpack.c.l.bf16 %v246
      %v255 = vrot.slane %v247, 4
      %v256 = vrot.slane %v248, 4
      %v257 = vrot.slane %v249, 4
      %v258 = vrot.slane %v250, 4
      %vm259 = vcmask 1042432
      %vm260 = vcmask 1046532
      %vm261 = vmor %vm259, %vm260
      %v262 = vrot.slane %v247, 5
      %v263 = vrot.slane %v262, 4
      %v264 = vrot.slane %v255, 5
      %v265 = vsel %vm261, %v263, %v264
      %v266 = vrot.slane %v248, 5
      %v267 = vrot.slane %v266, 4
      %v268 = vrot.slane %v256, 5
      %v269 = vsel %vm261, %v267, %v268
      %v270 = vrot.slane %v249, 5
      %v271 = vrot.slane %v270, 4
      %v272 = vrot.slane %v257, 5
      %v273 = vsel %vm261, %v271, %v272
      %v274 = vrot.slane %v250, 5
      %v275 = vrot.slane %v274, 4
      %v276 = vrot.slane %v258, 5
      %v277 = vsel %vm261, %v275, %v276
      %s278 = scalar_lea.vmem %s219, 40
      %v279 = vld [vmem:[%s278] sm:$0x3]
      %v280 = vld [vmem:[%s278 + $0x4] sm:$0x3]
      %v281 = vld [vmem:[%s278 + $0x8] sm:$0x3]
      %v282 = vld [vmem:[%s278 + $0xc] sm:$0x3]
      %v283 = vunpack.c.l.bf16 %v279
      %v284 = vunpack.c.l.bf16 %v280
      %v285 = vunpack.c.l.bf16 %v281
      %v286 = vunpack.c.l.bf16 %v282
      %s287 = scalar_lea.vmem %s219, 60
      %v288 = vld [vmem:[%s287] sm:$0x3]
      %v289 = vld [vmem:[%s287 + $0x4] sm:$0x3]
      %v290 = vld [vmem:[%s287 + $0x8] sm:$0x3]
      %v291 = vld [vmem:[%s287 + $0xc] sm:$0x3]
      %v292 = vunpack.c.l.bf16 %v288
      %v293 = vunpack.c.l.bf16 %v289
      %v294 = vunpack.c.l.bf16 %v290
      %v295 = vunpack.c.l.bf16 %v291
      %v296 = vld [vmem:[%s278] sm:$0x7]
      %v297 = vld [vmem:[%s278 + $0x4] sm:$0x7]
      %v298 = vld [vmem:[%s278 + $0x8] sm:$0x7]
      %v299 = vld [vmem:[%s278 + $0xc] sm:$0x7]
      %v300 = vunpack.c.l.bf16 %v296
      %v301 = vunpack.c.l.bf16 %v297
      %v302 = vunpack.c.l.bf16 %v298
      %v303 = vunpack.c.l.bf16 %v299
      %v308 = vrot.slane %v300, 4
      %v309 = vrot.slane %v301, 4
      %v310 = vrot.slane %v302, 4
      %v311 = vrot.slane %v303, 4
      %v312 = vrot.slane %v300, 5
      %v313 = vrot.slane %v312, 4
      %v314 = vrot.slane %v308, 5
      %v315 = vsel %vm261, %v313, %v314
      %v316 = vrot.slane %v301, 5
      %v317 = vrot.slane %v316, 4
      %v318 = vrot.slane %v309, 5
      %v319 = vsel %vm261, %v317, %v318
      %v320 = vrot.slane %v302, 5
      %v321 = vrot.slane %v320, 4
      %v322 = vrot.slane %v310, 5
      %v323 = vsel %vm261, %v321, %v322
      %v324 = vrot.slane %v303, 5
      %v325 = vrot.slane %v324, 4
      %v326 = vrot.slane %v311, 5
      %v327 = vsel %vm261, %v325, %v326
      %s328 = scalar_lea.vmem %s219, 4
      %v329 = vld [vmem:[%s328] sm:$0x3]
      %v330 = vld [vmem:[%s328 + $0x4] sm:$0x3]
      %v331 = vld [vmem:[%s328 + $0x8] sm:$0x3]
      %v332 = vld [vmem:[%s328 + $0xc] sm:$0x3]
      %v333 = vunpack.c.l.bf16 %v329
      %v334 = vunpack.c.l.bf16 %v330
      %v335 = vunpack.c.l.bf16 %v331
      %v336 = vunpack.c.l.bf16 %v332
      %s337 = scalar_lea.vmem %s219, 24
      %v338 = vld [vmem:[%s337] sm:$0x3]
      %v339 = vld [vmem:[%s337 + $0x4] sm:$0x3]
      %v340 = vld [vmem:[%s337 + $0x8] sm:$0x3]
      %v341 = vld [vmem:[%s337 + $0xc] sm:$0x3]
      %v342 = vunpack.c.l.bf16 %v338
      %v343 = vunpack.c.l.bf16 %v339
      %v344 = vunpack.c.l.bf16 %v340
      %v345 = vunpack.c.l.bf16 %v341
      %v346 = vld [vmem:[%s328] sm:$0x7]
      %v347 = vld [vmem:[%s328 + $0x4] sm:$0x7]
      %v348 = vld [vmem:[%s328 + $0x8] sm:$0x7]
      %v349 = vld [vmem:[%s328 + $0xc] sm:$0x7]
      %v350 = vunpack.c.l.bf16 %v346
      %v351 = vunpack.c.l.bf16 %v347
      %v352 = vunpack.c.l.bf16 %v348
      %v353 = vunpack.c.l.bf16 %v349
      %v358 = vrot.slane %v350, 4
      %v359 = vrot.slane %v351, 4
      %v360 = vrot.slane %v352, 4
      %v361 = vrot.slane %v353, 4
      %v362 = vrot.slane %v350, 5
      %v363 = vrot.slane %v362, 4
      %v364 = vrot.slane %v358, 5
      %v365 = vsel %vm261, %v363, %v364
      %v366 = vrot.slane %v351, 5
      %v367 = vrot.slane %v366, 4
      %v368 = vrot.slane %v359, 5
      %v369 = vsel %vm261, %v367, %v368
      %v370 = vrot.slane %v352, 5
      %v371 = vrot.slane %v370, 4
      %v372 = vrot.slane %v360, 5
      %v373 = vsel %vm261, %v371, %v372
      %v374 = vrot.slane %v353, 5
      %v375 = vrot.slane %v374, 4
      %v376 = vrot.slane %v361, 5
      %v377 = vsel %vm261, %v375, %v376
      %382 = vst [vmem:[#allocation1] ss:$2 sm:$0xff] %v230
      %s383 = scalar_lea.vmem [#allocation1], 1
      %384 = vst [vmem:[%s383] ss:$2 sm:$0xff] %v231
      %s385 = scalar_lea.vmem [#allocation1], 16
      %386 = vst [vmem:[%s385] ss:$2 sm:$0xff] %v232
      %s387 = scalar_lea.vmem [#allocation1], 17
      %388 = vst [vmem:[%s387] ss:$2 sm:$0xff] %v233
      %v389 = vld.sshfl [vmem:[#allocation1] sm:$0xff pattern:$0x75316420]
      %v390 = vld.sshfl [vmem:[#allocation1 + $0x10] sm:$0xff pattern:$0x75316420]
      %397 = vst [vmem:[#allocation1] ss:$2 sm:$0xff] %v239
      %s398 = scalar_lea.vmem [#allocation1], 1
      %399 = vst [vmem:[%s398] ss:$2 sm:$0xff] %v240
      %s400 = scalar_lea.vmem [#allocation1], 16
      %401 = vst [vmem:[%s400] ss:$2 sm:$0xff] %v241
      %s402 = scalar_lea.vmem [#allocation1], 17
      %403 = vst [vmem:[%s402] ss:$2 sm:$0xff] %v242
      %v404 = vld.sshfl [vmem:[#allocation1] sm:$0xff pattern:$0x75316420]
      %v405 = vld.sshfl [vmem:[#allocation1 + $0x10] sm:$0xff pattern:$0x75316420]
      %406 = vrot.lane.b32.xlu0 %v404, 16
      %v407 = vpop.permute.xlu0 %406
      %408 = vrot.lane.b32.xlu0 %v405, 16
      %v409 = vpop.permute.xlu0 %408
      %412 = vst [vmem:[#allocation1] ss:$2 sm:$0xff] %v265
      %s413 = scalar_lea.vmem [#allocation1], 1
      %414 = vst [vmem:[%s413] ss:$2 sm:$0xff] %v269
      %s415 = scalar_lea.vmem [#allocation1], 16
      %416 = vst [vmem:[%s415] ss:$2 sm:$0xff] %v273
      %s417 = scalar_lea.vmem [#allocation1], 17
      %418 = vst [vmem:[%s417] ss:$2 sm:$0xff] %v277
      %v419 = vld.sshfl [vmem:[#allocation1] sm:$0xff pattern:$0x75316420]
      %v420 = vld.sshfl [vmem:[#allocation1 + $0x10] sm:$0xff pattern:$0x75316420]
      %421 = vrot.lane.b32.xlu0 %v419, 32
      %v422 = vpop.permute.xlu0 %421
      %423 = vrot.lane.b32.xlu0 %v420, 32
      %v424 = vpop.permute.xlu0 %423
      %431 = vst [vmem:[#allocation1] ss:$2 sm:$0xff] %v283
      %s432 = scalar_lea.vmem [#allocation1], 1
      %433 = vst [vmem:[%s432] ss:$2 sm:$0xff] %v284
      %s434 = scalar_lea.vmem [#allocation1], 16
      %435 = vst [vmem:[%s434] ss:$2 sm:$0xff] %v285
      %s436 = scalar_lea.vmem [#allocation1], 17
      %437 = vst [vmem:[%s436] ss:$2 sm:$0xff] %v286
      %v438 = vld.sshfl [vmem:[#allocation1] sm:$0xff pattern:$0x75316420]
      %v439 = vld.sshfl [vmem:[#allocation1 + $0x10] sm:$0xff pattern:$0x75316420]
      %440 = vrot.lane.b32.xlu0 %v438, 48
      %v441 = vpop.permute.xlu0 %440
      %442 = vrot.lane.b32.xlu0 %v439, 48
      %v443 = vpop.permute.xlu0 %442
      %450 = vst [vmem:[#allocation1] ss:$2 sm:$0xff] %v292
      %s451 = scalar_lea.vmem [#allocation1], 1
      %452 = vst [vmem:[%s451] ss:$2 sm:$0xff] %v293
      %s453 = scalar_lea.vmem [#allocation1], 16
      %454 = vst [vmem:[%s453] ss:$2 sm:$0xff] %v294
      %s455 = scalar_lea.vmem [#allocation1], 17
      %456 = vst [vmem:[%s455] ss:$2 sm:$0xff] %v295
      %v457 = vld.sshfl [vmem:[#allocation1] sm:$0xff pattern:$0x75316420]
      %v458 = vld.sshfl [vmem:[#allocation1 + $0x10] sm:$0xff pattern:$0x75316420]
      %459 = vrot.lane.b32.xlu0 %v457, 64
      %v460 = vpop.permute.xlu0 %459
      %461 = vrot.lane.b32.xlu0 %v458, 64
      %v462 = vpop.permute.xlu0 %461
      %465 = vst [vmem:[#allocation1] ss:$2 sm:$0xff] %v315
      %s466 = scalar_lea.vmem [#allocation1], 1
      %467 = vst [vmem:[%s466] ss:$2 sm:$0xff] %v319
      %s468 = scalar_lea.vmem [#allocation1], 16
      %469 = vst [vmem:[%s468] ss:$2 sm:$0xff] %v323
      %s470 = scalar_lea.vmem [#allocation1], 17
      %471 = vst [vmem:[%s470] ss:$2 sm:$0xff] %v327
      %v472 = vld.sshfl [vmem:[#allocation1] sm:$0xff pattern:$0x75316420]
      %v473 = vld.sshfl [vmem:[#allocation1 + $0x10] sm:$0xff pattern:$0x75316420]
      %474 = vrot.lane.b32.xlu0 %v472, 80
      %v475 = vpop.permute.xlu0 %474
      %476 = vrot.lane.b32.xlu0 %v473, 80
      %v477 = vpop.permute.xlu0 %476
      %484 = vst [vmem:[#allocation1] ss:$2 sm:$0xff] %v333
      %s485 = scalar_lea.vmem [#allocation1], 1
      %486 = vst [vmem:[%s485] ss:$2 sm:$0xff] %v334
      %s487 = scalar_lea.vmem [#allocation1], 16
      %488 = vst [vmem:[%s487] ss:$2 sm:$0xff] %v335
      %s489 = scalar_lea.vmem [#allocation1], 17
      %490 = vst [vmem:[%s489] ss:$2 sm:$0xff] %v336
      %v491 = vld.sshfl [vmem:[#allocation1] sm:$0xff pattern:$0x75316420]
      %v492 = vld.sshfl [vmem:[#allocation1 + $0x10] sm:$0xff pattern:$0x75316420]
      %493 = vrot.lane.b32.xlu0 %v491, 96
      %v494 = vpop.permute.xlu0 %493
      %495 = vrot.lane.b32.xlu0 %v492, 96
      %v496 = vpop.permute.xlu0 %495
      %503 = vst [vmem:[#allocation1] ss:$2 sm:$0xff] %v342
      %s504 = scalar_lea.vmem [#allocation1], 1
      %505 = vst [vmem:[%s504] ss:$2 sm:$0xff] %v343
      %s506 = scalar_lea.vmem [#allocation1], 16
      %507 = vst [vmem:[%s506] ss:$2 sm:$0xff] %v344
      %s508 = scalar_lea.vmem [#allocation1], 17
      %509 = vst [vmem:[%s508] ss:$2 sm:$0xff] %v345
      %v510 = vld.sshfl [vmem:[#allocation1] sm:$0xff pattern:$0x75316420]
      %v511 = vld.sshfl [vmem:[#allocation1 + $0x10] sm:$0xff pattern:$0x75316420]
      %512 = vrot.lane.b32.xlu0 %v510, 112
      %v513 = vpop.permute.xlu0 %512
      %514 = vrot.lane.b32.xlu0 %v511, 112
      %v515 = vpop.permute.xlu0 %514
      %518 = vst [vmem:[#allocation1] ss:$2 sm:$0xff] %v365
      %s519 = scalar_lea.vmem [#allocation1], 1
      %520 = vst [vmem:[%s519] ss:$2 sm:$0xff] %v369
      %s521 = scalar_lea.vmem [#allocation1], 16
      %522 = vst [vmem:[%s521] ss:$2 sm:$0xff] %v373
      %s523 = scalar_lea.vmem [#allocation1], 17
      %524 = vst [vmem:[%s523] ss:$2 sm:$0xff] %v377
      %v525 = vld.sshfl [vmem:[#allocation1] sm:$0xff pattern:$0x75316420]
      %v526 = vld.sshfl [vmem:[#allocation1 + $0x10] sm:$0xff pattern:$0x75316420]
      %vm529 = vcmask 130048
      %v530 = vsel %vm529, %v389, %v407
      %v531 = vsel %vm529, %v390, %v409
      %vm532 = vcmask 261120
      %v533 = vsel %vm532, %v530, %v422
      %v534 = vsel %vm532, %v531, %v424
      %vm535 = vcmask 392192
      %v536 = vsel %vm535, %v533, %v441
      %v537 = vsel %vm535, %v534, %v443
      %vm538 = vcmask 523264
      %v539 = vsel %vm538, %v536, %v460
      %v540 = vsel %vm538, %v537, %v462
      %vm541 = vcmask 654336
      %v542 = vsel %vm541, %v539, %v475
      %v543 = vsel %vm541, %v540, %v477
      %vm544 = vcmask 785408
      %v545 = vsel %vm544, %v542, %v494
      %v546 = vsel %vm544, %v543, %v496
      %vm547 = vcmask 916480
      %v548 = vsel %vm547, %v545, %v513
      %v549 = vsel %vm547, %v546, %v515
      %v550 = vpack.c.bf16 %v549, %v548
      %v551 = vpack.c.bf16 %v526, %v525
      %v552 = vld [vmem:[%s1] sm:$0xf]
      %v553 = vld [vmem:[%s1 + $0x4] sm:$0xf]
      %v554 = vld [vmem:[%s1 + $0x8] sm:$0xf]
      %v555 = vld [vmem:[%s1 + $0xc] sm:$0xf]
      %v556 = vld [vmem:[%s1 + $0x10] sm:$0xf]
      %v557 = vld [vmem:[%s1 + $0x14] sm:$0xf]
      %v558 = vld [vmem:[%s1 + $0x18] sm:$0xf]
      %v559 = vld [vmem:[%s1 + $0x1c] sm:$0xf]
      %v560 = vld [vmem:[%s1 + $0x20] sm:$0xf]
      %v561 = vld [vmem:[%s1 + $0x24] sm:$0xf]
      %v562 = vld [vmem:[%s1 + $0x28] sm:$0xf]
      %v563 = vld [vmem:[%s1 + $0x2c] sm:$0xf]
      %v564 = vld [vmem:[%s1 + $0x30] sm:$0xf]
      %v565 = vld [vmem:[%s1 + $0x34] sm:$0xf]
      %v566 = vld [vmem:[%s1 + $0x38] sm:$0xf]
      %v567 = vld [vmem:[%s1 + $0x3c] sm:$0xf]
      %v568 = vld [vmem:[%s1 + $0x40] sm:$0xf]
      %v569 = vld [vmem:[%s1 + $0x44] sm:$0xf]
      %v570 = vld [vmem:[%s2] sm:$0x1]
      %v572 = vperm.slane %v570, 0
      %v592 = vunpack.c.l.b16 %v552
      %v593 = vunpack.c.l.b16 %v553
      %v594 = vunpack.c.l.b16 %v554
      %v595 = vunpack.c.l.b16 %v555
      %v596 = vunpack.c.l.b16 %v556
      %v597 = vunpack.c.l.b16 %v557
      %v598 = vunpack.c.l.b16 %v558
      %v599 = vunpack.c.l.b16 %v559
      %v600 = vunpack.c.l.b16 %v560
      %v601 = vunpack.c.l.b16 %v561
      %v602 = vunpack.c.l.b16 %v562
      %v603 = vunpack.c.l.b16 %v563
      %v604 = vunpack.c.l.b16 %v564
      %v605 = vunpack.c.l.b16 %v565
      %v606 = vunpack.c.l.b16 %v566
      %v607 = vunpack.c.l.b16 %v567
      %v608 = vunpack.c.l.b16 %v568
      %v609 = vunpack.c.l.b16 %v569
      %v610 = vpack.c.b16 %v593, %v592
      %v611 = vpack.c.b16 %v595, %v594
      %v612 = vpack.c.b16 %v597, %v596
      %v613 = vpack.c.b16 %v599, %v598
      %v614 = vpack.c.b16 %v601, %v600
      %v615 = vpack.c.b16 %v603, %v602
      %v616 = vpack.c.b16 %v605, %v604
      %v617 = vpack.c.b16 %v607, %v606
      %v618 = vpack.c.b16 %v609, %v608
      %v629 = vsel %vm529, %v551, 0
      %631 = vmatpush.bf16.msra.mxu0 %v617
      %632 = vmatpush.bf16.msra.mxu0 %v616
      %633 = vmatpush.bf16.msra.mxu0 %v615
      %634 = vmatpush.bf16.msra.mxu0 %v614
      %635 = vmatpush.bf16.msra.mxu0 %v613
      %636 = vmatpush.bf16.msra.mxu0 %v612
      %637 = vmatpush.bf16.msra.mxu0 %v611
      %638 = vmatpush.bf16.msra.mxu0 %v610
      %639 = vmatmul.bf16.gmra.mxu0 %v550
      %v640 = vpop.f32.mrf.mxu0
      %v641 = vadd.f32 %v572, %v640
      %v642 = vpop.f32.mrf.mxu0
      %v643 = vadd.f32 %v572, %v642
      %644 = vdwg.mxu0
      %645 = vmatpush.bf16.msra.mxu0 0
      %646 = vmatpush.bf16.msra.mxu0 0
      %647 = vmatpush.bf16.msra.mxu0 0
      %648 = vmatpush.bf16.msra.mxu0 0
      %649 = vmatpush.bf16.msra.mxu0 0
      %650 = vmatpush.bf16.msra.mxu0 0
      %651 = vmatpush.bf16.msra.mxu0 0
      %652 = vmatpush.bf16.msra.mxu0 %v618
      %653 = vmatmul.bf16.gmra.mxu0 %v629
      %v654 = vpop.f32.mrf.mxu0
      %v655 = vadd.f32 %v641, %v654
      %v656 = vpop.f32.mrf.mxu0
      %v657 = vadd.f32 %v643, %v656
      %658 = vdwg.mxu0
      %v659 = vmax.f32 %v655, 0.0
      %v660 = vmax.f32 %v657, 0.0
      %v663 = vrot.slane %v659, 4
      %v664 = vrot.slane %v660, 4
      %665 = vst [vmem:[#allocation1] ss:$2 sm:$0xff] %v659
      %v666 = vld.sshfl [vmem:[#allocation1] sm:$0xff pattern:$0x75316420]
      %s667 = scalar_lea.vmem [#allocation1], 16
      %668 = vst [vmem:[%s667] ss:$2 sm:$0xff] %v663
      %v669 = vld.sshfl [vmem:[#allocation1 + $0x10] sm:$0xff pattern:$0x75316420]
      %s670 = scalar_lea.vmem [#allocation1], 32
      %671 = vst [vmem:[%s670] ss:$2 sm:$0xff] %v660
      %v672 = vld.sshfl [vmem:[#allocation1 + $0x20] sm:$0xff pattern:$0x75316420]
      %s673 = scalar_lea.vmem [#allocation1], 48
      %674 = vst [vmem:[%s673] ss:$2 sm:$0xff] %v664
      %v675 = vld.sshfl [vmem:[#allocation1 + $0x30] sm:$0xff pattern:$0x75316420]
      %v676 = vrot.slane %v666, 7
      %v677 = vrot.slane %v669, 7
      %v678 = vrot.slane %v672, 7
      %v679 = vrot.slane %v675, 7
      %vm684 = vcmask 1040384
      %v685 = vsel %vm684, 0.0, %v676
      %v686 = vsel %vm684, 0.0, %v677
      %v687 = vsel %vm684, 0.0, %v678
      %v688 = vsel %vm684, 0.0, %v679
      %vm689 = vcmask 1044480
      %v690 = vsel %vm689, %v685, 0.0
      %v691 = vsel %vm689, %v686, 0.0
      %v692 = vsel %vm689, %v687, 0.0
      %v693 = vsel %vm689, %v688, 0.0
      %v698 = vrot.slane 0.0, 4
      %v699 = vrot.slane %v690, 4
      %v700 = vrot.slane %v691, 4
      %v701 = vrot.slane %v692, 4
      %v702 = vrot.slane 0.0, 5
      %v703 = vrot.slane %v702, 4
      %v704 = vrot.slane %v698, 5
      %v705 = vsel %vm261, %v703, %v704
      %v706 = vrot.slane %v690, 5
      %v707 = vrot.slane %v706, 4
      %v708 = vrot.slane %v699, 5
      %v709 = vsel %vm261, %v707, %v708
      %v710 = vrot.slane %v691, 5
      %v711 = vrot.slane %v710, 4
      %v712 = vrot.slane %v700, 5
      %v713 = vsel %vm261, %v711, %v712
      %v714 = vrot.slane %v692, 5
      %v715 = vrot.slane %v714, 4
      %v716 = vrot.slane %v701, 5
      %v717 = vsel %vm261, %v715, %v716
      %vm718 = vcmask 1041408
      %vm719 = vcmask 1045508
      %vm720 = vmor %vm718, %vm719
      %v721 = vrot.slane 0.0, 6
      %v722 = vrot.slane %v721, 4
      %v723 = vrot.slane %v698, 6
      %v724 = vsel %vm720, %v722, %v723
      %v725 = vrot.slane %v690, 6
      %v726 = vrot.slane %v725, 4
      %v727 = vrot.slane %v699, 6
      %v728 = vsel %vm720, %v726, %v727
      %v729 = vrot.slane %v691, 6
      %v730 = vrot.slane %v729, 4
      %v731 = vrot.slane %v700, 6
      %v732 = vsel %vm720, %v730, %v731
      %v733 = vrot.slane %v692, 6
      %v734 = vrot.slane %v733, 4
      %v735 = vrot.slane %v701, 6
      %v736 = vsel %vm720, %v734, %v735
      %v738 = vrot.slane %v693, 4
      %v739 = vrot.slane %v693, 5
      %v740 = vrot.slane %v739, 4
      %v741 = vrot.slane %v738, 5
      %v742 = vsel %vm261, %v740, %v741
      %v743 = vrot.slane %v693, 6
      %v744 = vrot.slane %v743, 4
      %v745 = vrot.slane %v738, 6
      %v746 = vsel %vm720, %v744, %v745
      %747 = vst [vmem:[#allocation1] ss:$2 sm:$0xff] 0.0
      %s748 = scalar_lea.vmem [#allocation1], 1
      %749 = vst [vmem:[%s748] ss:$2 sm:$0xff] %v690
      %s750 = scalar_lea.vmem [#allocation1], 16
      %751 = vst [vmem:[%s750] ss:$2 sm:$0xff] %v691
      %s752 = scalar_lea.vmem [#allocation1], 17
      %753 = vst [vmem:[%s752] ss:$2 sm:$0xff] %v692
      %v754 = vld.sshfl [vmem:[#allocation1] sm:$0xff pattern:$0x75316420]
      %v755 = vld.sshfl [vmem:[#allocation1 + $0x10] sm:$0xff pattern:$0x75316420]
      %758 = vst [vmem:[#allocation1] ss:$2 sm:$0xff] %v705
      %s759 = scalar_lea.vmem [#allocation1], 1
      %760 = vst [vmem:[%s759] ss:$2 sm:$0xff] %v709
      %s761 = scalar_lea.vmem [#allocation1], 16
      %762 = vst [vmem:[%s761] ss:$2 sm:$0xff] %v713
      %s763 = scalar_lea.vmem [#allocation1], 17
      %764 = vst [vmem:[%s763] ss:$2 sm:$0xff] %v717
      %v765 = vld.sshfl [vmem:[#allocation1] sm:$0xff pattern:$0x75316420]
      %v766 = vld.sshfl [vmem:[#allocation1 + $0x10] sm:$0xff pattern:$0x75316420]
      %767 = vrot.lane.b32.xlu0 %v765, 32
      %v768 = vpop.permute.xlu0 %767
      %769 = vrot.lane.b32.xlu0 %v766, 32
      %v770 = vpop.permute.xlu0 %769
      %773 = vst [vmem:[#allocation1] ss:$2 sm:$0xff] %v724
      %s774 = scalar_lea.vmem [#allocation1], 1
      %775 = vst [vmem:[%s774] ss:$2 sm:$0xff] %v728
      %s776 = scalar_lea.vmem [#allocation1], 16
      %777 = vst [vmem:[%s776] ss:$2 sm:$0xff] %v732
      %s778 = scalar_lea.vmem [#allocation1], 17
      %779 = vst [vmem:[%s778] ss:$2 sm:$0xff] %v736
      %v780 = vld.sshfl [vmem:[#allocation1] sm:$0xff pattern:$0x75316420]
      %v781 = vld.sshfl [vmem:[#allocation1 + $0x10] sm:$0xff pattern:$0x75316420]
      %782 = vrot.lane.b32.xlu0 %v780, 64
      %v783 = vpop.permute.xlu0 %782
      %784 = vrot.lane.b32.xlu0 %v781, 64
      %v785 = vpop.permute.xlu0 %784
      %788 = vst [vmem:[#allocation1] ss:$2 sm:$0xff] %v690
      %s789 = scalar_lea.vmem [#allocation1], 1
      %790 = vst [vmem:[%s789] ss:$2 sm:$0xff] %v691
      %s791 = scalar_lea.vmem [#allocation1], 16
      %792 = vst [vmem:[%s791] ss:$2 sm:$0xff] %v692
      %s793 = scalar_lea.vmem [#allocation1], 17
      %794 = vst [vmem:[%s793] ss:$2 sm:$0xff] %v693
      %v795 = vld.sshfl [vmem:[#allocation1] sm:$0xff pattern:$0x75316420]
      %v796 = vld.sshfl [vmem:[#allocation1 + $0x10] sm:$0xff pattern:$0x75316420]
      %797 = vrot.lane.b32.xlu0 %v795, 96
      %v798 = vpop.permute.xlu0 %797
      %799 = vrot.lane.b32.xlu0 %v796, 96
      %v800 = vpop.permute.xlu0 %799
      %803 = vst [vmem:[#allocation1] ss:$2 sm:$0xff] %v709
      %s804 = scalar_lea.vmem [#allocation1], 1
      %805 = vst [vmem:[%s804] ss:$2 sm:$0xff] %v713
      %s806 = scalar_lea.vmem [#allocation1], 16
      %807 = vst [vmem:[%s806] ss:$2 sm:$0xff] %v717
      %s808 = scalar_lea.vmem [#allocation1], 17
      %809 = vst [vmem:[%s808] ss:$2 sm:$0xff] %v742
      %v810 = vld.sshfl [vmem:[#allocation1] sm:$0xff pattern:$0x75316420]
      %v811 = vld.sshfl [vmem:[#allocation1 + $0x10] sm:$0xff pattern:$0x75316420]
      %814 = vst [vmem:[#allocation1] ss:$2 sm:$0xff] %v728
      %s815 = scalar_lea.vmem [#allocation1], 1
      %816 = vst [vmem:[%s815] ss:$2 sm:$0xff] %v732
      %s817 = scalar_lea.vmem [#allocation1], 16
      %818 = vst [vmem:[%s817] ss:$2 sm:$0xff] %v736
      %s819 = scalar_lea.vmem [#allocation1], 17
      %820 = vst [vmem:[%s819] ss:$2 sm:$0xff] %v746
      %v821 = vld.sshfl [vmem:[#allocation1] sm:$0xff pattern:$0x75316420]
      %v822 = vld.sshfl [vmem:[#allocation1 + $0x10] sm:$0xff pattern:$0x75316420]
      %823 = vrot.lane.b32.xlu0 %v821, 32
      %v824 = vpop.permute.xlu0 %823
      %825 = vrot.lane.b32.xlu0 %v822, 32
      %v826 = vpop.permute.xlu0 %825
      %829 = vst [vmem:[#allocation1] ss:$2 sm:$0xff] %v691
      %s830 = scalar_lea.vmem [#allocation1], 1
      %831 = vst [vmem:[%s830] ss:$2 sm:$0xff] %v692
      %s832 = scalar_lea.vmem [#allocation1], 16
      %833 = vst [vmem:[%s832] ss:$2 sm:$0xff] %v693
      %s834 = scalar_lea.vmem [#allocation1], 17
      %835 = vst [vmem:[%s834] ss:$2 sm:$0xff] 0.0
      %v836 = vld.sshfl [vmem:[#allocation1] sm:$0xff pattern:$0x75316420]
      %v837 = vld.sshfl [vmem:[#allocation1 + $0x10] sm:$0xff pattern:$0x75316420]
      %838 = vrot.lane.b32.xlu0 %v836, 64
      %v839 = vpop.permute.xlu0 %838
      %840 = vrot.lane.b32.xlu0 %v837, 64
      %v841 = vpop.permute.xlu0 %840
      %844 = vst [vmem:[#allocation1] ss:$2 sm:$0xff] %v713
      %s845 = scalar_lea.vmem [#allocation1], 1
      %846 = vst [vmem:[%s845] ss:$2 sm:$0xff] %v717
      %s847 = scalar_lea.vmem [#allocation1], 16
      %848 = vst [vmem:[%s847] ss:$2 sm:$0xff] %v742
      %s849 = scalar_lea.vmem [#allocation1], 17
      %850 = vst [vmem:[%s849] ss:$2 sm:$0xff] %v705
      %v851 = vld.sshfl [vmem:[#allocation1] sm:$0xff pattern:$0x75316420]
      %v852 = vld.sshfl [vmem:[#allocation1 + $0x10] sm:$0xff pattern:$0x75316420]
      %853 = vrot.lane.b32.xlu0 %v851, 96
      %v854 = vpop.permute.xlu0 %853
      %855 = vrot.lane.b32.xlu0 %v852, 96
      %v856 = vpop.permute.xlu0 %855
      %859 = vst [vmem:[#allocation1] ss:$2 sm:$0xff] %v732
      %s860 = scalar_lea.vmem [#allocation1], 1
      %861 = vst [vmem:[%s860] ss:$2 sm:$0xff] %v736
      %s862 = scalar_lea.vmem [#allocation1], 16
      %863 = vst [vmem:[%s862] ss:$2 sm:$0xff] %v746
      %s864 = scalar_lea.vmem [#allocation1], 17
      %865 = vst [vmem:[%s864] ss:$2 sm:$0xff] %v724
      %v866 = vld.sshfl [vmem:[#allocation1] sm:$0xff pattern:$0x75316420]
      %v867 = vld.sshfl [vmem:[#allocation1 + $0x10] sm:$0xff pattern:$0x75316420]
      %v870 = vsel %vm532, %v754, %v768
      %v871 = vsel %vm532, %v755, %v770
      %v872 = vsel %vm538, %v870, %v783
      %v873 = vsel %vm538, %v871, %v785
      %v874 = vsel %vm544, %v872, %v798
      %v875 = vsel %vm544, %v873, %v800
      %v876 = vsel %vm532, %v810, %v824
      %v877 = vsel %vm532, %v811, %v826
      %v878 = vsel %vm538, %v876, %v839
      %v879 = vsel %vm538, %v877, %v841
      %v880 = vsel %vm544, %v878, %v854
      %v881 = vsel %vm544, %v879, %v856
      %v882 = vpack.c.bf16 %v875, %v874
      %v883 = vpack.c.bf16 %v881, %v880
      %v884 = vpack.c.bf16 %v867, %v866
      %v885 = vld [vmem:[%s3] sm:$0xf]
      %v886 = vld [vmem:[%s3 + $0x4] sm:$0xf]
      %v887 = vld [vmem:[%s3 + $0x8] sm:$0xf]
      %v888 = vld [vmem:[%s3 + $0xc] sm:$0xf]
      %v889 = vld [vmem:[%s3 + $0x10] sm:$0xf]
      %v890 = vld [vmem:[%s3 + $0x14] sm:$0xf]
      %v891 = vld [vmem:[%s3 + $0x18] sm:$0xf]
      %v892 = vld [vmem:[%s3 + $0x1c] sm:$0xf]
      %v893 = vld [vmem:[%s3 + $0x20] sm:$0xf]
      %v894 = vld [vmem:[%s3 + $0x24] sm:$0xf]
      %v895 = vld [vmem:[%s3 + $0x28] sm:$0xf]
      %v896 = vld [vmem:[%s3 + $0x2c] sm:$0xf]
      %v897 = vld [vmem:[%s3 + $0x30] sm:$0xf]
      %v898 = vld [vmem:[%s3 + $0x34] sm:$0xf]
      %v899 = vld [vmem:[%s3 + $0x38] sm:$0xf]
      %v900 = vld [vmem:[%s3 + $0x3c] sm:$0xf]
      %v901 = vld [vmem:[%s3 + $0x40] sm:$0xf]
      %v902 = vld [vmem:[%s3 + $0x44] sm:$0xf]
      %v903 = vld [vmem:[%s3 + $0x48] sm:$0xf]
      %v904 = vld [vmem:[%s3 + $0x4c] sm:$0xf]
      %v905 = vld [vmem:[%s3 + $0x50] sm:$0xf]
      %v906 = vld [vmem:[%s3 + $0x54] sm:$0xf]
      %v907 = vld [vmem:[%s3 + $0x58] sm:$0xf]
      %v908 = vld [vmem:[%s3 + $0x5c] sm:$0xf]
      %v909 = vld [vmem:[%s3 + $0x60] sm:$0xf]
      %v910 = vld [vmem:[%s3 + $0x64] sm:$0xf]
      %v911 = vld [vmem:[%s3 + $0x68] sm:$0xf]
      %v912 = vld [vmem:[%s3 + $0x6c] sm:$0xf]
      %v913 = vld [vmem:[%s3 + $0x70] sm:$0xf]
      %v914 = vld [vmem:[%s3 + $0x74] sm:$0xf]
      %v915 = vld [vmem:[%s3 + $0x78] sm:$0xf]
      %v916 = vld [vmem:[%s3 + $0x7c] sm:$0xf]
      %v917 = vld [vmem:[%s3 + $0x80] sm:$0xf]
      %v918 = vld [vmem:[%s3 + $0x84] sm:$0xf]
      %v919 = vld [vmem:[%s3 + $0x88] sm:$0xf]
      %v920 = vld [vmem:[%s3 + $0x8c] sm:$0xf]
      %v921 = vld [vmem:[%s4] sm:$0x1]
      %v923 = vperm.slane %v921, 0
      %v961 = vunpack.c.l.b16 %v885
      %v962 = vunpack.c.l.b16 %v886
      %v963 = vunpack.c.l.b16 %v887
      %v964 = vunpack.c.l.b16 %v888
      %v965 = vunpack.c.l.b16 %v889
      %v966 = vunpack.c.l.b16 %v890
      %v967 = vunpack.c.l.b16 %v891
      %v968 = vunpack.c.l.b16 %v892
      %v969 = vunpack.c.l.b16 %v893
      %v970 = vunpack.c.l.b16 %v894
      %v971 = vunpack.c.l.b16 %v895
      %v972 = vunpack.c.l.b16 %v896
      %v973 = vunpack.c.l.b16 %v897
      %v974 = vunpack.c.l.b16 %v898
      %v975 = vunpack.c.l.b16 %v899
      %v976 = vunpack.c.l.b16 %v900
      %v977 = vunpack.c.l.b16 %v901
      %v978 = vunpack.c.l.b16 %v902
      %v979 = vunpack.c.l.b16 %v903
      %v980 = vunpack.c.l.b16 %v904
      %v981 = vunpack.c.l.b16 %v905
      %v982 = vunpack.c.l.b16 %v906
      %v983 = vunpack.c.l.b16 %v907
      %v984 = vunpack.c.l.b16 %v908
      %v985 = vunpack.c.l.b16 %v909
      %v986 = vunpack.c.l.b16 %v910
      %v987 = vunpack.c.l.b16 %v911
      %v988 = vunpack.c.l.b16 %v912
      %v989 = vunpack.c.l.b16 %v913
      %v990 = vunpack.c.l.b16 %v914
      %v991 = vunpack.c.l.b16 %v915
      %v992 = vunpack.c.l.b16 %v916
      %v993 = vunpack.c.l.b16 %v917
      %v994 = vunpack.c.l.b16 %v918
      %v995 = vunpack.c.l.b16 %v919
      %v996 = vunpack.c.l.b16 %v920
      %v997 = vpack.c.b16 %v962, %v961
      %v998 = vpack.c.b16 %v964, %v963
      %v999 = vpack.c.b16 %v966, %v965
      %v1000 = vpack.c.b16 %v968, %v967
      %v1001 = vpack.c.b16 %v970, %v969
      %v1002 = vpack.c.b16 %v972, %v971
      %v1003 = vpack.c.b16 %v974, %v973
      %v1004 = vpack.c.b16 %v976, %v975
      %v1005 = vpack.c.b16 %v978, %v977
      %v1006 = vpack.c.b16 %v980, %v979
      %v1007 = vpack.c.b16 %v982, %v981
      %v1008 = vpack.c.b16 %v984, %v983
      %v1009 = vpack.c.b16 %v986, %v985
      %v1010 = vpack.c.b16 %v988, %v987
      %v1011 = vpack.c.b16 %v990, %v989
      %v1012 = vpack.c.b16 %v992, %v991
      %v1013 = vpack.c.b16 %v994, %v993
      %v1014 = vpack.c.b16 %v996, %v995
      %v1034 = vsel %vm532, %v884, 0
      %1036 = vmatpush.bf16.msra.mxu0 %v1004
      %1037 = vmatpush.bf16.msra.mxu0 %v1003
      %1038 = vmatpush.bf16.msra.mxu0 %v1002
      %1039 = vmatpush.bf16.msra.mxu0 %v1001
      %1040 = vmatpush.bf16.msra.mxu0 %v1000
      %1041 = vmatpush.bf16.msra.mxu0 %v999
      %1042 = vmatpush.bf16.msra.mxu0 %v998
      %1043 = vmatpush.bf16.msra.mxu0 %v997
      %1044 = vmatmul.bf16.gmra.mxu0 %v882
      %v1045 = vpop.f32.mrf.mxu0
      %v1046 = vadd.f32 %v923, %v1045
      %v1047 = vpop.f32.mrf.mxu0
      %v1048 = vadd.f32 %v923, %v1047
      %1049 = vdwg.mxu0
      %1050 = vmatpush.bf16.msra.mxu0 %v1012
      %1051 = vmatpush.bf16.msra.mxu0 %v1011
      %1052 = vmatpush.bf16.msra.mxu0 %v1010
      %1053 = vmatpush.bf16.msra.mxu0 %v1009
      %1054 = vmatpush.bf16.msra.mxu0 %v1008
      %1055 = vmatpush.bf16.msra.mxu0 %v1007
      %1056 = vmatpush.bf16.msra.mxu0 %v1006
      %1057 = vmatpush.bf16.msra.mxu0 %v1005
      %1058 = vmatmul.bf16.gmra.mxu0 %v883
      %v1059 = vpop.f32.mrf.mxu0
      %v1060 = vadd.f32 %v1046, %v1059
      %v1061 = vpop.f32.mrf.mxu0
      %v1062 = vadd.f32 %v1048, %v1061
      %1063 = vdwg.mxu0
      %1064 = vmatpush.bf16.msra.mxu0 0
      %1065 = vmatpush.bf16.msra.mxu0 0
      %1066 = vmatpush.bf16.msra.mxu0 0
      %1067 = vmatpush.bf16.msra.mxu0 0
      %1068 = vmatpush.bf16.msra.mxu0 0
      %1069 = vmatpush.bf16.msra.mxu0 0
      %1070 = vmatpush.bf16.msra.mxu0 %v1014
      %1071 = vmatpush.bf16.msra.mxu0 %v1013
      %1072 = vmatmul.bf16.gmra.mxu0 %v1034
      %v1073 = vpop.f32.mrf.mxu0
      %v1074 = vadd.f32 %v1060, %v1073
      %v1075 = vpop.f32.mrf.mxu0
      %v1076 = vadd.f32 %v1062, %v1075
      %1077 = vdwg.mxu0
      %v1078 = vmax.f32 %v1074, 0.0
      %v1079 = vmax.f32 %v1076, 0.0
      %v1080 = vpack.c.bf16 %v1078, %v1078
      %v1081 = vpack.c.bf16 %v1079, %v1079
      %vm1082 = vcmask 257024
      %1083 = vst.msk [vmem:[%s224] sm:$0xf] %vm1082, %v1080
      %1084 = vst.msk [vmem:[%s224 + $0x4] sm:$0xf] %vm1082, %v1081
      %p1085 = scmp.lt.s32.totalorder %s16, 1
      %s1086 = scalar_select %p1085, %s16, 1
      %s1087 = smul.addr %s1086, 2
      %s1088 = smul.addr %s1087, 4
      %s1089 = scalar_lea.vmem %s5, %s1088
      // Predicated region
      $region41: #{detector_forward.10} parent=39 // pred_check
        %p1090 = pneg %p144
      $region42: #{detector_forward.10} parent=39 // pred_check_branch
        %1092 = sbr.rel (%p1090) target = $region44
      $region43: #{detector_forward.10} parent=39 // pred_region
        _
      $region44: #{detector_forward.10} parent=39 // pred_fallthru
        _
    $region40: #{detector_forward.10} parent=5 // pred_fallthru
      _
    %p1093 = scmp.le.s32.totalorder 2, %s11
    // Predicated region
    $region45: #{detector_forward.10} parent=5 // pred_check
      %p1094 = pneg %p1093
    $region46: #{detector_forward.10} parent=5 // pred_check_branch
      %1096 = sbr.rel (%p1094) target = $region48
    $region47: #{detector_forward.10} parent=5 // pred_region
      %s1097 = ssub.s32 %s11, 2
      // Predicated region
      $region49: #{detector_forward.10} parent=47 // pred_check
        %p1098 = pneg %p150
      $region50: #{detector_forward.10} parent=47 // pred_check_branch
        %1100 = sbr.rel (%p1098) target = $region52
      $region51: #{detector_forward.10} parent=47 // pred_region
        %p1101 = scmp.lt.s32.totalorder %s17, 1
        %s1102 = scalar_select %p1101, %s17, 1
        %s1103 = smul.addr %s1102, 2
        %s1104 = smul.addr %s1103, 4
        %s1105 = scalar_lea.vmem %s5, %s1104
      $region52: #{detector_forward.10} parent=47 // pred_fallthru
        _
    $region48: #{detector_forward.10} parent=5 // pred_fallthru
      _
  $region6: #{detector_forward.10} parent=0 // loop_footer
    %s15 = sadd.s32 1, %s11
  $region7: #{detector_forward.10} parent=0 // loop_footer_branch
    %10 = sbr.rel target = $region3
  $region8: #{detector_forward.10} parent=0 // loop_exit
    _

// kernel: detector_forward.11
$region0: #{detector_forward.11}
  #allocation0 [shape = 'u32[]', space=smem, size = 0x4, offset = 0x4, fixed_abs, tag = 'smem constant byte address 0x4 - core index']
  #allocation1 [shape = 'u32[72,128]{1,0:T(1,128)}', space=vmem, size = 0x9000, scoped, tag = 'internal scratch']
  %s0 = inlined_call_operand.vmem [shape: bf16[2,4,3,3,32], index: 0, kind: input, shape index: {}]
  %s1 = inlined_call_operand.vmem [shape: bf16[288,64], index: 1, kind: input, shape index: {}]
  %s2 = inlined_call_operand.vmem [shape: f32[1,64], index: 2, kind: input, shape index: {}]
  %s3 = inlined_call_operand.vmem [shape: bf16[576,64], index: 3, kind: input, shape index: {}]
  %s4 = inlined_call_operand.vmem [shape: f32[1,64], index: 4, kind: input, shape index: {}]
  %s5 = inlined_call_operand.vmem [shape: bf16[2,4,64], index: 5, kind: output, shape index: {}]
  %s6 = sld [smem:[#allocation0]]
  $region53: #{detector_forward.11} parent=0
    _
  %s8 = ssub.s32 1, %s6
  %s9 = scalar_select 0, %s8, %s6
  loop: start=0, step=1, limit=4
  $region2: #{detector_forward.11} parent=0 // loop_pre_header
    _
  $region3: #{detector_forward.11} parent=0 // loop_header
    %s11 = sphi 0, %s15
    %p12 = scmp.ge.s32.totalorder %s11, 4
    %s21 = sphi 0, %s23
    %s24 = sphi 0, %s21
    %s25 = sphi 0, %s24
    %s41 = sphi 0, %s25
    %s45 = sphi 0, %s45
    %s47 = sphi 0, %s45
    %s48 = sphi 0, %s47
    %s62 = sphi 0, %s48
    %s66 = sphi 0, %s66
    %s68 = sphi 0, %s66
    %s69 = sphi 0, %s68
    %s83 = sphi 0, %s69
    %s87 = sphi 0, %s87
    %s89 = sphi 0, %s87
    %s90 = sphi 0, %s89
    %s104 = sphi 0, %s90
    %s108 = sphi 0, %s108
    %s110 = sphi 0, %s108
    %s111 = sphi 0, %s110
    %s125 = sphi 0, %s111
    %s131 = sphi 0, %s133
    %s134 = sphi 0, %s131
    %s135 = sphi 0, %s134
    %s151 = sphi 0, %s135
  $region4: #{detector_forward.11} parent=0 // loop_header_branch
    %14 = sbr.rel (%p12) target = $region8
  $region5: #{detector_forward.11} parent=0 // loop_body
    %s16 = ssub.s32 %s11, 1
    %s17 = ssub.s32 %s11, 2
    %s18 = sadd.s32 %s11, 1
    %s19 = ssub.s32 %s11, %s18
    %p20 = scmp.eq.s32.totalorder %s19, 0
    %s22 = sadd.s32 %s21, 1
    %s23 = scalar_select %p20, %s21, %s22
    %p26 = pneg %p20
    %p27 = scmp.eq.s32.totalorder %s11, 1
    %p28 = por %p26, %p27
    %p29 = scmp.ne.s32.totalorder %s21, %s24
    %p30 = scmp.eq.s32.totalorder %s11, 0
    %p31 = por %p29, %p30
    %p32 = scmp.ne.s32.totalorder %s21, %s24
    %p33 = scmp.eq.s32.totalorder %s16, 1
    %p34 = por %p32, %p33
    %p35 = scmp.ne.s32.totalorder %s24, %s25
    %p36 = scmp.eq.s32.totalorder %s16, 0
    %p37 = por %p35, %p36
    %p38 = scmp.ne.s32.totalorder %s24, %s25
    %p39 = scmp.eq.s32.totalorder %s17, 1
    %p40 = por %p38, %p39
    %p42 = scmp.ne.s32.totalorder %s25, %s41
    %p43 = scmp.eq.s32.totalorder %s17, 0
    %p44 = por %p42, %p43
    %s46 = sadd.s32 %s45, 1
    %p49 = scmp.eq.s32.totalorder %s11, 1
    %p50 = scmp.ne.s32.totalorder %s45, %s47
    %p51 = scmp.eq.s32.totalorder %s11, 0
    %p52 = por %p50, %p51
    %p53 = scmp.ne.s32.totalorder %s45, %s47
    %p54 = scmp.eq.s32.totalorder %s16, 1
    %p55 = por %p53, %p54
    %p56 = scmp.ne.s32.totalorder %s47, %s48
    %p57 = scmp.eq.s32.totalorder %s16, 0
    %p58 = por %p56, %p57
    %p59 = scmp.ne.s32.totalorder %s47, %s48
    %p60 = scmp.eq.s32.totalorder %s17, 1
    %p61 = por %p59, %p60
    %p63 = scmp.ne.s32.totalorder %s48, %s62
    %p64 = scmp.eq.s32.totalorder %s17, 0
    %p65 = por %p63, %p64
    %s67 = sadd.s32 %s66, 1
    %p70 = scmp.eq.s32.totalorder %s11, 1
    %p71 = scmp.ne.s32.totalorder %s66, %s68
    %p72 = scmp.eq.s32.totalorder %s11, 0
    %p73 = por %p71, %p72
    %p74 = scmp.ne.s32.totalorder %s66, %s68
    %p75 = scmp.eq.s32.totalorder %s16, 1
    %p76 = por %p74, %p75
    %p77 = scmp.ne.s32.totalorder %s68, %s69
    %p78 = scmp.eq.s32.totalorder %s16, 0
    %p79 = por %p77, %p78
    %p80 = scmp.ne.s32.totalorder %s68, %s69
    %p81 = scmp.eq.s32.totalorder %s17, 1
    %p82 = por %p80, %p81
    %p84 = scmp.ne.s32.totalorder %s69, %s83
    %p85 = scmp.eq.s32.totalorder %s17, 0
    %p86 = por %p84, %p85
    %s88 = sadd.s32 %s87, 1
    %p91 = scmp.eq.s32.totalorder %s11, 1
    %p92 = scmp.ne.s32.totalorder %s87, %s89
    %p93 = scmp.eq.s32.totalorder %s11, 0
    %p94 = por %p92, %p93
    %p95 = scmp.ne.s32.totalorder %s87, %s89
    %p96 = scmp.eq.s32.totalorder %s16, 1
    %p97 = por %p95, %p96
    %p98 = scmp.ne.s32.totalorder %s89, %s90
    %p99 = scmp.eq.s32.totalorder %s16, 0
    %p100 = por %p98, %p99
    %p101 = scmp.ne.s32.totalorder %s89, %s90
    %p102 = scmp.eq.s32.totalorder %s17, 1
    %p103 = por %p101, %p102
    %p105 = scmp.ne.s32.totalorder %s90, %s104
    %p106 = scmp.eq.s32.totalorder %s17, 0
    %p107 = por %p105, %p106
    %s109 = sadd.s32 %s108, 1
    %p112 = scmp.eq.s32.totalorder %s11, 1
    %p113 = scmp.ne.s32.totalorder %s108, %s110
    %p114 = scmp.eq.s32.totalorder %s11, 0
    %p115 = por %p113, %p114
    %p116 = scmp.ne.s32.totalorder %s108, %s110
    %p117 = scmp.eq.s32.totalorder %s16, 1
    %p118 = por %p116, %p117
    %p119 = scmp.ne.s32.totalorder %s110, %s111
    %p120 = scmp.eq.s32.totalorder %s16, 0
    %p121 = por %p119, %p120
    %p122 = scmp.ne.s32.totalorder %s110, %s111
    %p123 = scmp.eq.s32.totalorder %s17, 1
    %p124 = por %p122, %p123
    %p126 = scmp.ne.s32.totalorder %s111, %s125
    %p127 = scmp.eq.s32.totalorder %s17, 0
    %p128 = por %p126, %p127
    %s129 = ssub.s32 %s11, %s18
    %p130 = scmp.eq.s32.totalorder %s129, 0
    %s132 = sadd.s32 %s131, 1
    %s133 = scalar_select %p130, %s131, %s132
    %p136 = pneg %p130
    %p137 = scmp.eq.s32.totalorder %s11, 1
    %p138 = por %p136, %p137
    %p139 = scmp.ne.s32.totalorder %s131, %s134
    %p140 = scmp.eq.s32.totalorder %s11, 0
    %p141 = por %p139, %p140
    %p142 = scmp.ne.s32.totalorder %s131, %s134
    %p143 = scmp.eq.s32.totalorder %s16, 1
    %p144 = por %p142, %p143
    %p145 = scmp.ne.s32.totalorder %s134, %s135
    %p146 = scmp.eq.s32.totalorder %s16, 0
    %p147 = por %p145, %p146
    %p148 = scmp.ne.s32.totalorder %s134, %s135
    %p149 = scmp.eq.s32.totalorder %s17, 1
    %p150 = por %p148, %p149
    %p152 = scmp.ne.s32.totalorder %s135, %s151
    %p153 = scmp.eq.s32.totalorder %s17, 0
    %p154 = por %p152, %p153
    %p155 = scmp.le.s32.totalorder 1, %s11
    %p156 = scmp.lt.s32.totalorder %s11, 3
    %p157 = pnand %p155, %p156
    %p158 = pneg %p157
    // Predicated region
    $region9: #{detector_forward.11} parent=5 // pred_check
      _
    $region10: #{detector_forward.11} parent=5 // pred_check_branch
      %160 = sbr.rel (%p157) target = $region12
    $region11: #{detector_forward.11} parent=5 // pred_region
      %s161 = ssub.s32 %s11, 1
      // Predicated region
      $region13: #{detector_forward.11} parent=11 // pred_check
        %p162 = pneg %p58
      $region14: #{detector_forward.11} parent=11 // pred_check_branch
        %164 = sbr.rel (%p162) target = $region16
      $region15: #{detector_forward.11} parent=11 // pred_region
        _
      $region16: #{detector_forward.11} parent=11 // pred_fallthru
        _
      // Predicated region
      $region17: #{detector_forward.11} parent=11 // pred_check
        %p165 = pneg %p79
      $region18: #{detector_forward.11} parent=11 // pred_check_branch
        %167 = sbr.rel (%p165) target = $region20
      $region19: #{detector_forward.11} parent=11 // pred_region
        _
      $region20: #{detector_forward.11} parent=11 // pred_fallthru
        _
      // Predicated region
      $region21: #{detector_forward.11} parent=11 // pred_check
        %p168 = pneg %p100
      $region22: #{detector_forward.11} parent=11 // pred_check_branch
        %170 = sbr.rel (%p168) target = $region24
      $region23: #{detector_forward.11} parent=11 // pred_region
        _
      $region24: #{detector_forward.11} parent=11 // pred_fallthru
        _
      // Predicated region
      $region25: #{detector_forward.11} parent=11 // pred_check
        %p171 = pneg %p121
      $region26: #{detector_forward.11} parent=11 // pred_check_branch
        %173 = sbr.rel (%p171) target = $region28
      $region27: #{detector_forward.11} parent=11 // pred_region
        _
      $region28: #{detector_forward.11} parent=11 // pred_fallthru
        _
    $region12: #{detector_forward.11} parent=5 // pred_fallthru
      _
    %p174 = scmp.lt.s32.totalorder %s11, 2
    // Predicated region
    $region29: #{detector_forward.11} parent=5 // pred_check
      %p175 = pneg %p174
    $region30: #{detector_forward.11} parent=5 // pred_check_branch
      %177 = sbr.rel (%p175) target = $region32
    $region31: #{detector_forward.11} parent=5 // pred_region
      // Predicated region
      $region33: #{detector_forward.11} parent=31 // pred_check
        %p178 = pneg %p31
      $region34: #{detector_forward.11} parent=31 // pred_check_branch
        %180 = sbr.rel (%p178) target = $region36
      $region35: #{detector_forward.11} parent=31 // pred_region
        %p181 = scmp.lt.s32.totalorder %s11, 1
        %s182 = scalar_select %p181, %s11, 1
        %s183 = smul.addr %s182, 12
        %s184 = smul.addr %s183, 2
        %s185 = scalar_lea.vmem %s0, %s184
      $region36: #{detector_forward.11} parent=31 // pred_fallthru
        _
    $region32: #{detector_forward.11} parent=5 // pred_fallthru
      _
    %p186 = scmp.le.s32.totalorder 1, %s11
    %p187 = scmp.lt.s32.totalorder %s11, 3
    %p188 = pnand %p186, %p187
    %p189 = pneg %p188
    // Predicated region
    $region37: #{detector_forward.11} parent=5 // pred_check
      _
    $region38: #{detector_forward.11} parent=5 // pred_check_branch
      %191 = sbr.rel (%p188) target = $region40
    $region39: #{detector_forward.11} parent=5 // pred_region
      %s192 = ssub.s32 %s11, 1
      %p193 = scmp.lt.s32.totalorder %s16, 1
      %s194 = scalar_select %p193, %s16, 1
      %s195 = smul.addr %s194, 12
      %s196 = smul.addr %s195, 2
      %s197 = scalar_lea.vmem %s0, %s196
      %p198 = pneg %p37
      %p199 = pneg %p34
      %p200 = pneg %p58
      %p201 = pneg %p55
      %p202 = pneg %p79
      %p203 = pneg %p76
      %p204 = pneg %p100
      %p205 = pneg %p97
      %p206 = pneg %p121
      %p207 = pneg %p118
      %p208 = pneg %p147
      %p209 = pneg %p144
      %p210 = scmp.lt.s32.totalorder %s16, 1
      %s211 = scalar_select %p210, %s16, 1
      %s212 = smul.addr %s211, 2
      %s213 = scalar_lea.vmem %s5, %s212
      %p214 = scmp.lt.s32.totalorder %s16, 1
      %s215 = scalar_select %p214, %s16, 1
      %s216 = smul.addr %s215, 12
      %s217 = smul.addr %s216, 2
      %s218 = scalar_lea.vmem %s0, %s217
      %p219 = scmp.lt.s32.totalorder %s16, 1
      %s220 = scalar_select %p219, %s16, 1
      %s221 = smul.addr %s220, 2
      %s222 = scalar_lea.vmem %s5, %s221
      %v224 = vld [vmem:[%s218] sm:$0x1]
      %v225 = vld [vmem:[%s218 + $0x2] sm:$0x1]
      %v226 = vunpack.c.l.bf16 %v224
      %v227 = vunpack.c.l.bf16 %v225
      %s228 = scalar_lea.vmem %s218, 6
      %v229 = vld [vmem:[%s228] sm:$0x1]
      %v230 = vld [vmem:[%s228 + $0x2] sm:$0x1]
      %v231 = vunpack.c.l.bf16 %v229
      %v232 = vunpack.c.l.bf16 %v230
      %v233 = vld [vmem:[%s218] sm:$0x3]
      %v234 = vld [vmem:[%s218 + $0x2] sm:$0x3]
      %v235 = vunpack.c.l.bf16 %v233
      %v236 = vunpack.c.l.bf16 %v234
      %v239 = vrot.slane %v235, 2
      %v240 = vrot.slane %v236, 2
      %vm241 = vcmask 1041408
      %v242 = vsel %vm241, %v235, %v239
      %vm243 = vcmask 1043458
      %v244 = vsel %vm243, %v235, %v239
      %v245 = vrot.slane %v244, 2
      %v246 = vsel %vm241, %v236, %v240
      %v247 = vsel %vm243, %v236, %v240
      %v248 = vrot.slane %v247, 2
      %vm249 = vcmask 1040384
      %vm250 = vcmask 1042434
      %vm251 = vmor %vm249, %vm250
      %vm252 = vcmask 1044484
      %vm253 = vmor %vm251, %vm252
      %vm254 = vcmask 1046534
      %vm255 = vmor %vm253, %vm254
      %v256 = vrot.slane %v242, 7
      %v257 = vrot.slane %v256, 2
      %v258 = vrot.slane %v245, 7
      %v259 = vsel %vm255, %v257, %v258
      %v260 = vrot.slane %v246, 7
      %v261 = vrot.slane %v260, 2
      %v262 = vrot.slane %v248, 7
      %v263 = vsel %vm255, %v261, %v262
      %s264 = scalar_lea.vmem %s218, 12
      %v265 = vld [vmem:[%s264] sm:$0x1]
      %v266 = vld [vmem:[%s264 + $0x2] sm:$0x1]
      %v267 = vunpack.c.l.bf16 %v265
      %v268 = vunpack.c.l.bf16 %v266
      %s269 = scalar_lea.vmem %s218, 18
      %v270 = vld [vmem:[%s269] sm:$0x1]
      %v271 = vld [vmem:[%s269 + $0x2] sm:$0x1]
      %v272 = vunpack.c.l.bf16 %v270
      %v273 = vunpack.c.l.bf16 %v271
      %v274 = vld [vmem:[%s264] sm:$0x3]
      %v275 = vld [vmem:[%s264 + $0x2] sm:$0x3]
      %v276 = vunpack.c.l.bf16 %v274
      %v277 = vunpack.c.l.bf16 %v275
      %v280 = vrot.slane %v276, 2
      %v281 = vrot.slane %v277, 2
      %v282 = vsel %vm241, %v276, %v280
      %v283 = vsel %vm243, %v276, %v280
      %v284 = vrot.slane %v283, 2
      %v285 = vsel %vm241, %v277, %v281
      %v286 = vsel %vm243, %v277, %v281
      %v287 = vrot.slane %v286, 2
      %v288 = vrot.slane %v282, 7
      %v289 = vrot.slane %v288, 2
      %v290 = vrot.slane %v284, 7
      %v291 = vsel %vm255, %v289, %v290
      %v292 = vrot.slane %v285, 7
      %v293 = vrot.slane %v292, 2
      %v294 = vrot.slane %v287, 7
      %v295 = vsel %vm255, %v293, %v294
      %s296 = scalar_lea.vmem %s218, 2
      %v297 = vld [vmem:[%s296] sm:$0x1]
      %v298 = vld [vmem:[%s296 + $0x2] sm:$0x1]
      %v299 = vunpack.c.l.bf16 %v297
      %v300 = vunpack.c.l.bf16 %v298
      %s301 = scalar_lea.vmem %s218, 8
      %v302 = vld [vmem:[%s301] sm:$0x1]
      %v303 = vld [vmem:[%s301 + $0x2] sm:$0x1]
      %v304 = vunpack.c.l.bf16 %v302
      %v305 = vunpack.c.l.bf16 %v303
      %v306 = vld [vmem:[%s296] sm:$0x3]
      %v307 = vld [vmem:[%s296 + $0x2] sm:$0x3]
      %v308 = vunpack.c.l.bf16 %v306
      %v309 = vunpack.c.l.bf16 %v307
      %v312 = vrot.slane %v308, 2
      %v313 = vrot.slane %v309, 2
      %v314 = vsel %vm241, %v308, %v312
      %v315 = vsel %vm243, %v308, %v312
      %v316 = vrot.slane %v315, 2
      %v317 = vsel %vm241, %v309, %v313
      %v318 = vsel %vm243, %v309, %v313
      %v319 = vrot.slane %v318, 2
      %v320 = vrot.slane %v314, 7
      %v321 = vrot.slane %v320, 2
      %v322 = vrot.slane %v316, 7
      %v323 = vsel %vm255, %v321, %v322
      %v324 = vrot.slane %v317, 7
      %v325 = vrot.slane %v324, 2
      %v326 = vrot.slane %v319, 7
      %v327 = vsel %vm255, %v325, %v326
      %330 = vst [vmem:[#allocation1] ss:$4 sm:$0xff] %v226
      %s331 = scalar_lea.vmem [#allocation1], 1
      %332 = vst [vmem:[%s331] ss:$4 sm:$0xff] %v227
      %v333 = vld.sshfl [vmem:[#allocation1] sm:$0xff pattern:$0x73625140]
      %337 = vst [vmem:[#allocation1] ss:$4 sm:$0xff] %v231
      %s338 = scalar_lea.vmem [#allocation1], 1
      %339 = vst [vmem:[%s338] ss:$4 sm:$0xff] %v232
      %v340 = vld.sshfl [vmem:[#allocation1] sm:$0xff pattern:$0x73625140]
      %341 = vrot.lane.b32.xlu0 %v340, 32
      %v342 = vpop.permute.xlu0 %341
      %344 = vst [vmem:[#allocation1] ss:$4 sm:$0xff] %v259
      %s345 = scalar_lea.vmem [#allocation1], 1
      %346 = vst [vmem:[%s345] ss:$4 sm:$0xff] %v263
      %v347 = vld.sshfl [vmem:[#allocation1] sm:$0xff pattern:$0x73625140]
      %348 = vrot.lane.b32.xlu0 %v347, 64
      %v349 = vpop.permute.xlu0 %348
      %353 = vst [vmem:[#allocation1] ss:$4 sm:$0xff] %v267
      %s354 = scalar_lea.vmem [#allocation1], 1
      %355 = vst [vmem:[%s354] ss:$4 sm:$0xff] %v268
      %v356 = vld.sshfl [vmem:[#allocation1] sm:$0xff pattern:$0x73625140]
      %357 = vrot.lane.b32.xlu0 %v356, 96
      %v358 = vpop.permute.xlu0 %357
      %362 = vst [vmem:[#allocation1] ss:$4 sm:$0xff] %v272
      %s363 = scalar_lea.vmem [#allocation1], 1
      %364 = vst [vmem:[%s363] ss:$4 sm:$0xff] %v273
      %v365 = vld.sshfl [vmem:[#allocation1] sm:$0xff pattern:$0x73625140]
      %367 = vst [vmem:[#allocation1] ss:$4 sm:$0xff] %v291
      %s368 = scalar_lea.vmem [#allocation1], 1
      %369 = vst [vmem:[%s368] ss:$4 sm:$0xff] %v295
      %v370 = vld.sshfl [vmem:[#allocation1] sm:$0xff pattern:$0x73625140]
      %371 = vrot.lane.b32.xlu0 %v370, 32
      %v372 = vpop.permute.xlu0 %371
      %376 = vst [vmem:[#allocation1] ss:$4 sm:$0xff] %v299
      %s377 = scalar_lea.vmem [#allocation1], 1
      %378 = vst [vmem:[%s377] ss:$4 sm:$0xff] %v300
      %v379 = vld.sshfl [vmem:[#allocation1] sm:$0xff pattern:$0x73625140]
      %380 = vrot.lane.b32.xlu0 %v379, 64
      %v381 = vpop.permute.xlu0 %380
      %385 = vst [vmem:[#allocation1] ss:$4 sm:$0xff] %v304
      %s386 = scalar_lea.vmem [#allocation1], 1
      %387 = vst [vmem:[%s386] ss:$4 sm:$0xff] %v305
      %v388 = vld.sshfl [vmem:[#allocation1] sm:$0xff pattern:$0x73625140]
      %389 = vrot.lane.b32.xlu0 %v388, 96
      %v390 = vpop.permute.xlu0 %389
      %392 = vst [vmem:[#allocation1] ss:$4 sm:$0xff] %v323
      %s393 = scalar_lea.vmem [#allocation1], 1
      %394 = vst [vmem:[%s393] ss:$4 sm:$0xff] %v327
      %v395 = vld.sshfl [vmem:[#allocation1] sm:$0xff pattern:$0x73625140]
      %vm397 = vcmask 261120
      %v398 = vsel %vm397, %v333, %v342
      %vm399 = vcmask 523264
      %v400 = vsel %vm399, %v398, %v349
      %vm401 = vcmask 785408
      %v402 = vsel %vm401, %v400, %v358
      %v403 = vsel %vm397, %v365, %v372
      %v404 = vsel %vm399, %v403, %v381
      %v405 = vsel %vm401, %v404, %v390
      %v406 = vpack.c.bf16 %v402, %v402
      %v407 = vpack.c.bf16 %v405, %v405
      %v408 = vpack.c.bf16 %v395, %v395
      %v409 = vld [vmem:[%s1] sm:$0xf]
      %v410 = vld [vmem:[%s1 + $0x4] sm:$0xf]
      %v411 = vld [vmem:[%s1 + $0x8] sm:$0xf]
      %v412 = vld [vmem:[%s1 + $0xc] sm:$0xf]
      %v413 = vld [vmem:[%s1 + $0x10] sm:$0xf]
      %v414 = vld [vmem:[%s1 + $0x14] sm:$0xf]
      %v415 = vld [vmem:[%s1 + $0x18] sm:$0xf]
      %v416 = vld [vmem:[%s1 + $0x1c] sm:$0xf]
      %v417 = vld [vmem:[%s1 + $0x20] sm:$0xf]
      %v418 = vld [vmem:[%s1 + $0x24] sm:$0xf]
      %v419 = vld [vmem:[%s1 + $0x28] sm:$0xf]
      %v420 = vld [vmem:[%s1 + $0x2c] sm:$0xf]
      %v421 = vld [vmem:[%s1 + $0x30] sm:$0xf]
      %v422 = vld [vmem:[%s1 + $0x34] sm:$0xf]
      %v423 = vld [vmem:[%s1 + $0x38] sm:$0xf]
      %v424 = vld [vmem:[%s1 + $0x3c] sm:$0xf]
      %v425 = vld [vmem:[%s1 + $0x40] sm:$0xf]
      %v426 = vld [vmem:[%s1 + $0x44] sm:$0xf]
      %v427 = vld [vmem:[%s1 + $0x48] sm:$0xf]
      %v428 = vld [vmem:[%s1 + $0x4c] sm:$0xf]
      %v429 = vld [vmem:[%s1 + $0x50] sm:$0xf]
      %v430 = vld [vmem:[%s1 + $0x54] sm:$0xf]
      %v431 = vld [vmem:[%s1 + $0x58] sm:$0xf]
      %v432 = vld [vmem:[%s1 + $0x5c] sm:$0xf]
      %v433 = vld [vmem:[%s1 + $0x60] sm:$0xf]
      %v434 = vld [vmem:[%s1 + $0x64] sm:$0xf]
      %v435 = vld [vmem:[%s1 + $0x68] sm:$0xf]
      %v436 = vld [vmem:[%s1 + $0x6c] sm:$0xf]
      %v437 = vld [vmem:[%s1 + $0x70] sm:$0xf]
      %v438 = vld [vmem:[%s1 + $0x74] sm:$0xf]
      %v439 = vld [vmem:[%s1 + $0x78] sm:$0xf]
      %v440 = vld [vmem:[%s1 + $0x7c] sm:$0xf]
      %v441 = vld [vmem:[%s1 + $0x80] sm:$0xf]
      %v442 = vld [vmem:[%s1 + $0x84] sm:$0xf]
      %v443 = vld [vmem:[%s1 + $0x88] sm:$0xf]
      %v444 = vld [vmem:[%s1 + $0x8c] sm:$0xf]
      %v445 = vld [vmem:[%s2] sm:$0x1]
      %v447 = vperm.slane %v445, 0
      %v485 = vunpack.c.l.b16 %v409
      %v486 = vunpack.c.l.b16 %v410
      %v487 = vunpack.c.l.b16 %v411
      %v488 = vunpack.c.l.b16 %v412
      %v489 = vunpack.c.l.b16 %v413
      %v490 = vunpack.c.l.b16 %v414
      %v491 = vunpack.c.l.b16 %v415
      %v492 = vunpack.c.l.b16 %v416
      %v493 = vunpack.c.l.b16 %v417
      %v494 = vunpack.c.l.b16 %v418
      %v495 = vunpack.c.l.b16 %v419
      %v496 = vunpack.c.l.b16 %v420
      %v497 = vunpack.c.l.b16 %v421
      %v498 = vunpack.c.l.b16 %v422
      %v499 = vunpack.c.l.b16 %v423
      %v500 = vunpack.c.l.b16 %v424
      %v501 = vunpack.c.l.b16 %v425
      %v502 = vunpack.c.l.b16 %v426
      %v503 = vunpack.c.l.b16 %v427
      %v504 = vunpack.c.l.b16 %v428
      %v505 = vunpack.c.l.b16 %v429
      %v506 = vunpack.c.l.b16 %v430
      %v507 = vunpack.c.l.b16 %v431
      %v508 = vunpack.c.l.b16 %v432
      %v509 = vunpack.c.l.b16 %v433
      %v510 = vunpack.c.l.b16 %v434
      %v511 = vunpack.c.l.b16 %v435
      %v512 = vunpack.c.l.b16 %v436
      %v513 = vunpack.c.l.b16 %v437
      %v514 = vunpack.c.l.b16 %v438
      %v515 = vunpack.c.l.b16 %v439
      %v516 = vunpack.c.l.b16 %v440
      %v517 = vunpack.c.l.b16 %v441
      %v518 = vunpack.c.l.b16 %v442
      %v519 = vunpack.c.l.b16 %v443
      %v520 = vunpack.c.l.b16 %v444
      %v521 = vpack.c.b16 %v486, %v485
      %v522 = vpack.c.b16 %v488, %v487
      %v523 = vpack.c.b16 %v490, %v489
      %v524 = vpack.c.b16 %v492, %v491
      %v525 = vpack.c.b16 %v494, %v493
      %v526 = vpack.c.b16 %v496, %v495
      %v527 = vpack.c.b16 %v498, %v497
      %v528 = vpack.c.b16 %v500, %v499
      %v529 = vpack.c.b16 %v502, %v501
      %v530 = vpack.c.b16 %v504, %v503
      %v531 = vpack.c.b16 %v506, %v505
      %v532 = vpack.c.b16 %v508, %v507
      %v533 = vpack.c.b16 %v510, %v509
      %v534 = vpack.c.b16 %v512, %v511
      %v535 = vpack.c.b16 %v514, %v513
      %v536 = vpack.c.b16 %v516, %v515
      %v537 = vpack.c.b16 %v518, %v517
      %v538 = vpack.c.b16 %v520, %v519
      %v558 = vsel %vm397, %v408, 0
      %560 = vmatpush.bf16.msra.mxu0 %v528
      %561 = vmatpush.bf16.msra.mxu0 %v527
      %562 = vmatpush.bf16.msra.mxu0 %v526
      %563 = vmatpush.bf16.msra.mxu0 %v525
      %564 = vmatpush.bf16.msra.mxu0 %v524
      %565 = vmatpush.bf16.msra.mxu0 %v523
      %566 = vmatpush.bf16.msra.mxu0 %v522
      %567 = vmatpush.bf16.msra.mxu0 %v521
      %568 = vmatmul.bf16.gmra.mxu0 %v406
      %v569 = vpop.f32.mrf.mxu0
      %v570 = vadd.f32 %v447, %v569
      %v571 = vpop.f32.mrf.mxu0
      %572 = vdwg.mxu0
      %573 = vmatpush.bf16.msra.mxu0 %v536
      %574 = vmatpush.bf16.msra.mxu0 %v535
      %575 = vmatpush.bf16.msra.mxu0 %v534
      %576 = vmatpush.bf16.msra.mxu0 %v533
      %577 = vmatpush.bf16.msra.mxu0 %v532
      %578 = vmatpush.bf16.msra.mxu0 %v531
      %579 = vmatpush.bf16.msra.mxu0 %v530
      %580 = vmatpush.bf16.msra.mxu0 %v529
      %581 = vmatmul.bf16.gmra.mxu0 %v407
      %v582 = vpop.f32.mrf.mxu0
      %v583 = vadd.f32 %v570, %v582
      %v584 = vpop.f32.mrf.mxu0
      %585 = vdwg.mxu0
      %586 = vmatpush.bf16.msra.mxu0 0
      %587 = vmatpush.bf16.msra.mxu0 0
      %588 = vmatpush.bf16.msra.mxu0 0
      %589 = vmatpush.bf16.msra.mxu0 0
      %590 = vmatpush.bf16.msra.mxu0 0
      %591 = vmatpush.bf16.msra.mxu0 0
      %592 = vmatpush.bf16.msra.mxu0 %v538
      %593 = vmatpush.bf16.msra.mxu0 %v537
      %594 = vmatmul.bf16.gmra.mxu0 %v558
      %v595 = vpop.f32.mrf.mxu0
      %v596 = vadd.f32 %v583, %v595
      %v597 = vpop.f32.mrf.mxu0
      %598 = vdwg.mxu0
      %v599 = vmax.f32 %v596, 0.0
      %v601 = vrot.slane %v599, 2
      %602 = vst [vmem:[#allocation1] ss:$4 sm:$0xff] %v599
      %v603 = vld.sshfl [vmem:[#allocation1] sm:$0xff pattern:$0x73625140]
      %s604 = scalar_lea.vmem [#allocation1], 32
      %605 = vst [vmem:[%s604] ss:$4 sm:$0xff] %v601
      %v606 = vld.sshfl [vmem:[#allocation1 + $0x20] sm:$0xff pattern:$0x73625140]
      %v607 = vrot.slane %v603, 7
      %v608 = vrot.slane %v606, 7
      %v611 = vsel %vm249, 0.0, %v607
      %v612 = vsel %vm249, 0.0, %v608
      %vm613 = vcmask 1042432
      %v614 = vsel %vm613, %v611, 0.0
      %v615 = vsel %vm613, %v612, 0.0
      %v618 = vrot.slane 0.0, 2
      %v619 = vrot.slane %v614, 2
      %v620 = vrot.slane 0.0, 7
      %v621 = vrot.slane %v620, 2
      %v622 = vrot.slane %v618, 7
      %v623 = vsel %vm255, %v621, %v622
      %v624 = vrot.slane %v614, 7
      %v625 = vrot.slane %v624, 2
      %v626 = vrot.slane %v619, 7
      %v627 = vsel %vm255, %v625, %v626
      %628 = vst.sshfl [vmem:[#allocation1] sm:$0xff pattern:$0x73625140] 0.0
      %s629 = scalar_lea.vmem [#allocation1], 1
      %v630 = vld [vmem:[%s629] ss:$4 sm:$0xff]
      %631 = vst.sshfl [vmem:[#allocation1 + $0x20] sm:$0xff pattern:$0x73625140] %v614
      %s632 = scalar_lea.vmem [#allocation1], 33
      %v633 = vld [vmem:[%s632] ss:$4 sm:$0xff]
      %v635 = vrot.slane %v615, 2
      %v636 = vrot.slane %v615, 7
      %v637 = vrot.slane %v636, 2
      %v638 = vrot.slane %v635, 7
      %v639 = vsel %vm255, %v637, %v638
      %640 = vst.sshfl [vmem:[#allocation1] sm:$0xff pattern:$0x73625140] %v614
      %s641 = scalar_lea.vmem [#allocation1], 1
      %v642 = vld [vmem:[%s641] ss:$4 sm:$0xff]
      %643 = vst.sshfl [vmem:[#allocation1 + $0x20] sm:$0xff pattern:$0x73625140] %v615
      %s644 = scalar_lea.vmem [#allocation1], 33
      %v645 = vld [vmem:[%s644] ss:$4 sm:$0xff]
      %646 = vst.sshfl [vmem:[#allocation1] sm:$0xff pattern:$0x73625140] %v615
      %s647 = scalar_lea.vmem [#allocation1], 1
      %v648 = vld [vmem:[%s647] ss:$4 sm:$0xff]
      %649 = vst.sshfl [vmem:[#allocation1 + $0x20] sm:$0xff pattern:$0x73625140] 0.0
      %s650 = scalar_lea.vmem [#allocation1], 33
      %v651 = vld [vmem:[%s650] ss:$4 sm:$0xff]
      %652 = vst [vmem:[#allocation1] ss:$4 sm:$0xff] 0.0
      %s653 = scalar_lea.vmem [#allocation1], 1
      %654 = vst [vmem:[%s653] ss:$4 sm:$0xff] %v614
      %v655 = vld.sshfl [vmem:[#allocation1] sm:$0xff pattern:$0x73625140]
      %657 = vst [vmem:[#allocation1] ss:$4 sm:$0xff] %v623
      %s658 = scalar_lea.vmem [#allocation1], 1
      %659 = vst [vmem:[%s658] ss:$4 sm:$0xff] %v627
      %v660 = vld.sshfl [vmem:[#allocation1] sm:$0xff pattern:$0x73625140]
      %661 = vrot.lane.b32.xlu0 %v660, 64
      %v662 = vpop.permute.xlu0 %661
      %664 = vst [vmem:[#allocation1] ss:$4 sm:$0xff] %v630
      %s665 = scalar_lea.vmem [#allocation1], 1
      %666 = vst [vmem:[%s665] ss:$4 sm:$0xff] %v633
      %v667 = vld.sshfl [vmem:[#allocation1] sm:$0xff pattern:$0x73625140]
      %669 = vst [vmem:[#allocation1] ss:$4 sm:$0xff] %v614
      %s670 = scalar_lea.vmem [#allocation1], 1
      %671 = vst [vmem:[%s670] ss:$4 sm:$0xff] %v615
      %v672 = vld.sshfl [vmem:[#allocation1] sm:$0xff pattern:$0x73625140]
      %673 = vrot.lane.b32.xlu0 %v672, 64
      %v674 = vpop.permute.xlu0 %673
      %676 = vst [vmem:[#allocation1] ss:$4 sm:$0xff] %v627
      %s677 = scalar_lea.vmem [#allocation1], 1
      %678 = vst [vmem:[%s677] ss:$4 sm:$0xff] %v639
      %v679 = vld.sshfl [vmem:[#allocation1] sm:$0xff pattern:$0x73625140]
      %681 = vst [vmem:[#allocation1] ss:$4 sm:$0xff] %v642
      %s682 = scalar_lea.vmem [#allocation1], 1
      %683 = vst [vmem:[%s682] ss:$4 sm:$0xff] %v645
      %v684 = vld.sshfl [vmem:[#allocation1] sm:$0xff pattern:$0x73625140]
      %685 = vrot.lane.b32.xlu0 %v684, 64
      %v686 = vpop.permute.xlu0 %685
      %688 = vst [vmem:[#allocation1] ss:$4 sm:$0xff] %v615
      %s689 = scalar_lea.vmem [#allocation1], 1
      %690 = vst [vmem:[%s689] ss:$4 sm:$0xff] 0.0
      %v691 = vld.sshfl [vmem:[#allocation1] sm:$0xff pattern:$0x73625140]
      %693 = vst [vmem:[#allocation1] ss:$4 sm:$0xff] %v639
      %s694 = scalar_lea.vmem [#allocation1], 1
      %695 = vst [vmem:[%s694] ss:$4 sm:$0xff] %v623
      %v696 = vld.sshfl [vmem:[#allocation1] sm:$0xff pattern:$0x73625140]
      %697 = vrot.lane.b32.xlu0 %v696, 64
      %v698 = vpop.permute.xlu0 %697
      %700 = vst [vmem:[#allocation1] ss:$4 sm:$0xff] %v648
      %s701 = scalar_lea.vmem [#allocation1], 1
      %702 = vst [vmem:[%s701] ss:$4 sm:$0xff] %v651
      %v703 = vld.sshfl [vmem:[#allocation1] sm:$0xff pattern:$0x73625140]
      %v705 = vsel %vm399, %v655, %v662
      %v706 = vsel %vm399, %v667, %v674
      %v707 = vsel %vm399, %v679, %v686
      %v708 = vsel %vm399, %v691, %v698
      %v709 = vpack.c.bf16 %v705, %v705
      %v710 = vpack.c.bf16 %v706, %v706
      %v711 = vpack.c.bf16 %v707, %v707
      %v712 = vpack.c.bf16 %v708, %v708
      %v713 = vpack.c.bf16 %v703, %v703
      %v714 = vld [vmem:[%s3] sm:$0xf]
      %v715 = vld [vmem:[%s3 + $0x4] sm:$0xf]
      %v716 = vld [vmem:[%s3 + $0x8] sm:$0xf]
      %v717 = vld [vmem:[%s3 + $0xc] sm:$0xf]
      %v718 = vld [vmem:[%s3 + $0x10] sm:$0xf]
      %v719 = vld [vmem:[%s3 + $0x14] sm:$0xf]
      %v720 = vld [vmem:[%s3 + $0x18] sm:$0xf]
      %v721 = vld [vmem:[%s3 + $0x1c] sm:$0xf]
      %v722 = vld [vmem:[%s3 + $0x20] sm:$0xf]
      %v723 = vld [vmem:[%s3 + $0x24] sm:$0xf]
      %v724 = vld [vmem:[%s3 + $0x28] sm:$0xf]
      %v725 = vld [vmem:[%s3 + $0x2c] sm:$0xf]
      %v726 = vld [vmem:[%s3 + $0x30] sm:$0xf]
      %v727 = vld [vmem:[%s3 + $0x34] sm:$0xf]
      %v728 = vld [vmem:[%s3 + $0x38] sm:$0xf]
      %v729 = vld [vmem:[%s3 + $0x3c] sm:$0xf]
      %v730 = vld [vmem:[%s3 + $0x40] sm:$0xf]
      %v731 = vld [vmem:[%s3 + $0x44] sm:$0xf]
      %v732 = vld [vmem:[%s3 + $0x48] sm:$0xf]
      %v733 = vld [vmem:[%s3 + $0x4c] sm:$0xf]
      %v734 = vld [vmem:[%s3 + $0x50] sm:$0xf]
      %v735 = vld [vmem:[%s3 + $0x54] sm:$0xf]
      %v736 = vld [vmem:[%s3 + $0x58] sm:$0xf]
      %v737 = vld [vmem:[%s3 + $0x5c] sm:$0xf]
      %v738 = vld [vmem:[%s3 + $0x60] sm:$0xf]
      %v739 = vld [vmem:[%s3 + $0x64] sm:$0xf]
      %v740 = vld [vmem:[%s3 + $0x68] sm:$0xf]
      %v741 = vld [vmem:[%s3 + $0x6c] sm:$0xf]
      %v742 = vld [vmem:[%s3 + $0x70] sm:$0xf]
      %v743 = vld [vmem:[%s3 + $0x74] sm:$0xf]
      %v744 = vld [vmem:[%s3 + $0x78] sm:$0xf]
      %v745 = vld [vmem:[%s3 + $0x7c] sm:$0xf]
      %v746 = vld [vmem:[%s3 + $0x80] sm:$0xf]
      %v747 = vld [vmem:[%s3 + $0x84] sm:$0xf]
      %v748 = vld [vmem:[%s3 + $0x88] sm:$0xf]
      %v749 = vld [vmem:[%s3 + $0x8c] sm:$0xf]
      %v750 = vld [vmem:[%s3 + $0x90] sm:$0xf]
      %v751 = vld [vmem:[%s3 + $0x94] sm:$0xf]
      %v752 = vld [vmem:[%s3 + $0x98] sm:$0xf]
      %v753 = vld [vmem:[%s3 + $0x9c] sm:$0xf]
      %v754 = vld [vmem:[%s3 + $0xa0] sm:$0xf]
      %v755 = vld [vmem:[%s3 + $0xa4] sm:$0xf]
      %v756 = vld [vmem:[%s3 + $0xa8] sm:$0xf]
      %v757 = vld [vmem:[%s3 + $0xac] sm:$0xf]
      %v758 = vld [vmem:[%s3 + $0xb0] sm:$0xf]
      %v759 = vld [vmem:[%s3 + $0xb4] sm:$0xf]
      %v760 = vld [vmem:[%s3 + $0xb8] sm:$0xf]
      %v761 = vld [vmem:[%s3 + $0xbc] sm:$0xf]
      %v762 = vld [vmem:[%s3 + $0xc0] sm:$0xf]
      %v763 = vld [vmem:[%s3 + $0xc4] sm:$0xf]
      %v764 = vld [vmem:[%s3 + $0xc8] sm:$0xf]
      %v765 = vld [vmem:[%s3 + $0xcc] sm:$0xf]
      %v766 = vld [vmem:[%s3 + $0xd0] sm:$0xf]
      %v767 = vld [vmem:[%s3 + $0xd4] sm:$0xf]
      %v768 = vld [vmem:[%s3 + $0xd8] sm:$0xf]
      %v769 = vld [vmem:[%s3 + $0xdc] sm:$0xf]
      %v770 = vld [vmem:[%s3 + $0xe0] sm:$0xf]
      %v771 = vld [vmem:[%s3 + $0xe4] sm:$0xf]
      %v772 = vld [vmem:[%s3 + $0xe8] sm:$0xf]
      %v773 = vld [vmem:[%s3 + $0xec] sm:$0xf]
      %v774 = vld [vmem:[%s3 + $0xf0] sm:$0xf]
      %v775 = vld [vmem:[%s3 + $0xf4] sm:$0xf]
      %v776 = vld [vmem:[%s3 + $0xf8] sm:$0xf]
      %v777 = vld [vmem:[%s3 + $0xfc] sm:$0xf]
      %v778 = vld [vmem:[%s3 + $0x100] sm:$0xf]
      %v779 = vld [vmem:[%s3 + $0x104] sm:$0xf]
      %v780 = vld [vmem:[%s3 + $0x108] sm:$0xf]
      %v781 = vld [vmem:[%s3 + $0x10c] sm:$0xf]
      %v782 = vld [vmem:[%s3 + $0x110] sm:$0xf]
      %v783 = vld [vmem:[%s3 + $0x114] sm:$0xf]
      %v784 = vld [vmem:[%s3 + $0x118] sm:$0xf]
      %v785 = vld [vmem:[%s3 + $0x11c] sm:$0xf]
      %v786 = vld [vmem:[%s4] sm:$0x1]
      %v788 = vperm.slane %v786, 0
      %v862 = vunpack.c.l.b16 %v714
      %v863 = vunpack.c.l.b16 %v715
      %v864 = vunpack.c.l.b16 %v716
      %v865 = vunpack.c.l.b16 %v717
      %v866 = vunpack.c.l.b16 %v718
      %v867 = vunpack.c.l.b16 %v719
      %v868 = vunpack.c.l.b16 %v720
      %v869 = vunpack.c.l.b16 %v721
      %v870 = vunpack.c.l.b16 %v722
      %v871 = vunpack.c.l.b16 %v723
      %v872 = vunpack.c.l.b16 %v724
      %v873 = vunpack.c.l.b16 %v725
      %v874 = vunpack.c.l.b16 %v726
      %v875 = vunpack.c.l.b16 %v727
      %v876 = vunpack.c.l.b16 %v728
      %v877 = vunpack.c.l.b16 %v729
      %v878 = vunpack.c.l.b16 %v730
      %v879 = vunpack.c.l.b16 %v731
      %v880 = vunpack.c.l.b16 %v732
      %v881 = vunpack.c.l.b16 %v733
      %v882 = vunpack.c.l.b16 %v734
      %v883 = vunpack.c.l.b16 %v735
      %v884 = vunpack.c.l.b16 %v736
      %v885 = vunpack.c.l.b16 %v737
      %v886 = vunpack.c.l.b16 %v738
      %v887 = vunpack.c.l.b16 %v739
      %v888 = vunpack.c.l.b16 %v740
      %v889 = vunpack.c.l.b16 %v741
      %v890 = vunpack.c.l.b16 %v742
      %v891 = vunpack.c.l.b16 %v743
      %v892 = vunpack.c.l.b16 %v744
      %v893 = vunpack.c.l.b16 %v745
      %v894 = vunpack.c.l.b16 %v746
      %v895 = vunpack.c.l.b16 %v747
      %v896 = vunpack.c.l.b16 %v748
      %v897 = vunpack.c.l.b16 %v749
      %v898 = vunpack.c.l.b16 %v750
      %v899 = vunpack.c.l.b16 %v751
      %v900 = vunpack.c.l.b16 %v752
      %v901 = vunpack.c.l.b16 %v753
      %v902 = vunpack.c.l.b16 %v754
      %v903 = vunpack.c.l.b16 %v755
      %v904 = vunpack.c.l.b16 %v756
      %v905 = vunpack.c.l.b16 %v757
      %v906 = vunpack.c.l.b16 %v758
      %v907 = vunpack.c.l.b16 %v759
      %v908 = vunpack.c.l.b16 %v760
      %v909 = vunpack.c.l.b16 %v761
      %v910 = vunpack.c.l.b16 %v762
      %v911 = vunpack.c.l.b16 %v763
      %v912 = vunpack.c.l.b16 %v764
      %v913 = vunpack.c.l.b16 %v765
      %v914 = vunpack.c.l.b16 %v766
      %v915 = vunpack.c.l.b16 %v767
      %v916 = vunpack.c.l.b16 %v768
      %v917 = vunpack.c.l.b16 %v769
      %v918 = vunpack.c.l.b16 %v770
      %v919 = vunpack.c.l.b16 %v771
      %v920 = vunpack.c.l.b16 %v772
      %v921 = vunpack.c.l.b16 %v773
      %v922 = vunpack.c.l.b16 %v774
      %v923 = vunpack.c.l.b16 %v775
      %v924 = vunpack.c.l.b16 %v776
      %v925 = vunpack.c.l.b16 %v777
      %v926 = vunpack.c.l.b16 %v778
      %v927 = vunpack.c.l.b16 %v779
      %v928 = vunpack.c.l.b16 %v780
      %v929 = vunpack.c.l.b16 %v781
      %v930 = vunpack.c.l.b16 %v782
      %v931 = vunpack.c.l.b16 %v783
      %v932 = vunpack.c.l.b16 %v784
      %v933 = vunpack.c.l.b16 %v785
      %v934 = vpack.c.b16 %v863, %v862
      %v935 = vpack.c.b16 %v865, %v864
      %v936 = vpack.c.b16 %v867, %v866
      %v937 = vpack.c.b16 %v869, %v868
      %v938 = vpack.c.b16 %v871, %v870
      %v939 = vpack.c.b16 %v873, %v872
      %v940 = vpack.c.b16 %v875, %v874
      %v941 = vpack.c.b16 %v877, %v876
      %v942 = vpack.c.b16 %v879, %v878
      %v943 = vpack.c.b16 %v881, %v880
      %v944 = vpack.c.b16 %v883, %v882
      %v945 = vpack.c.b16 %v885, %v884
      %v946 = vpack.c.b16 %v887, %v886
      %v947 = vpack.c.b16 %v889, %v888
      %v948 = vpack.c.b16 %v891, %v890
      %v949 = vpack.c.b16 %v893, %v892
      %v950 = vpack.c.b16 %v895, %v894
      %v951 = vpack.c.b16 %v897, %v896
      %v952 = vpack.c.b16 %v899, %v898
      %v953 = vpack.c.b16 %v901, %v900
      %v954 = vpack.c.b16 %v903, %v902
      %v955 = vpack.c.b16 %v905, %v904
      %v956 = vpack.c.b16 %v907, %v906
      %v957 = vpack.c.b16 %v909, %v908
      %v958 = vpack.c.b16 %v911, %v910
      %v959 = vpack.c.b16 %v913, %v912
      %v960 = vpack.c.b16 %v915, %v914
      %v961 = vpack.c.b16 %v917, %v916
      %v962 = vpack.c.b16 %v919, %v918
      %v963 = vpack.c.b16 %v921, %v920
      %v964 = vpack.c.b16 %v923, %v922
      %v965 = vpack.c.b16 %v925, %v924
      %v966 = vpack.c.b16 %v927, %v926
      %v967 = vpack.c.b16 %v929, %v928
      %v968 = vpack.c.b16 %v931, %v930
      %v969 = vpack.c.b16 %v933, %v932
      %v1007 = vsel %vm399, %v713, 0
      %1009 = vmatpush.bf16.msra.mxu0 %v941
      %1010 = vmatpush.bf16.msra.mxu0 %v940
      %1011 = vmatpush.bf16.msra.mxu0 %v939
      %1012 = vmatpush.bf16.msra.mxu0 %v938
      %1013 = vmatpush.bf16.msra.mxu0 %v937
      %1014 = vmatpush.bf16.msra.mxu0 %v936
      %1015 = vmatpush.bf16.msra.mxu0 %v935
      %1016 = vmatpush.bf16.msra.mxu0 %v934
      %1017 = vmatmul.bf16.gmra.mxu0 %v709
      %v1018 = vpop.f32.mrf.mxu0
      %v1019 = vadd.f32 %v788, %v1018
      %v1020 = vpop.f32.mrf.mxu0
      %1021 = vdwg.mxu0
      %1022 = vmatpush.bf16.msra.mxu0 %v949
      %1023 = vmatpush.bf16.msra.mxu0 %v948
      %1024 = vmatpush.bf16.msra.mxu0 %v947
      %1025 = vmatpush.bf16.msra.mxu0 %v946
      %1026 = vmatpush.bf16.msra.mxu0 %v945
      %1027 = vmatpush.bf16.msra.mxu0 %v944
      %1028 = vmatpush.bf16.msra.mxu0 %v943
      %1029 = vmatpush.bf16.msra.mxu0 %v942
      %1030 = vmatmul.bf16.gmra.mxu0 %v710
      %v1031 = vpop.f32.mrf.mxu0
      %v1032 = vadd.f32 %v1019, %v1031
      %v1033 = vpop.f32.mrf.mxu0
      %1034 = vdwg.mxu0
      %1035 = vmatpush.bf16.msra.mxu0 %v957
      %1036 = vmatpush.bf16.msra.mxu0 %v956
      %1037 = vmatpush.bf16.msra.mxu0 %v955
      %1038 = vmatpush.bf16.msra.mxu0 %v954
      %1039 = vmatpush.bf16.msra.mxu0 %v953
      %1040 = vmatpush.bf16.msra.mxu0 %v952
      %1041 = vmatpush.bf16.msra.mxu0 %v951
      %1042 = vmatpush.bf16.msra.mxu0 %v950
      %1043 = vmatmul.bf16.gmra.mxu0 %v711
      %v1044 = vpop.f32.mrf.mxu0
      %v1045 = vadd.f32 %v1032, %v1044
      %v1046 = vpop.f32.mrf.mxu0
      %1047 = vdwg.mxu0
      %1048 = vmatpush.bf16.msra.mxu0 %v965
      %1049 = vmatpush.bf16.msra.mxu0 %v964
      %1050 = vmatpush.bf16.msra.mxu0 %v963
      %1051 = vmatpush.bf16.msra.mxu0 %v962
      %1052 = vmatpush.bf16.msra.mxu0 %v961
      %1053 = vmatpush.bf16.msra.mxu0 %v960
      %1054 = vmatpush.bf16.msra.mxu0 %v959
      %1055 = vmatpush.bf16.msra.mxu0 %v958
      %1056 = vmatmul.bf16.gmra.mxu0 %v712
      %v1057 = vpop.f32.mrf.mxu0
      %v1058 = vadd.f32 %v1045, %v1057
      %v1059 = vpop.f32.mrf.mxu0
      %1060 = vdwg.mxu0
      %1061 = vmatpush.bf16.msra.mxu0 0
      %1062 = vmatpush.bf16.msra.mxu0 0
      %1063 = vmatpush.bf16.msra.mxu0 0
      %1064 = vmatpush.bf16.msra.mxu0 0
      %1065 = vmatpush.bf16.msra.mxu0 %v969
      %1066 = vmatpush.bf16.msra.mxu0 %v968
      %1067 = vmatpush.bf16.msra.mxu0 %v967
      %1068 = vmatpush.bf16.msra.mxu0 %v966
      %1069 = vmatmul.bf16.gmra.mxu0 %v1007
      %v1070 = vpop.f32.mrf.mxu0
      %v1071 = vadd.f32 %v1058, %v1070
      %v1072 = vpop.f32.mrf.mxu0
      %1073 = vdwg.mxu0
      %v1074 = vmax.f32 %v1071, 0.0
      %v1075 = vpack.c.bf16 %v1074, %v1074
      %vm1076 = vcmask 517120
      %1077 = vst.msk [vmem:[%s222] sm:$0x3] %vm1076, %v1075
      %p1078 = scmp.lt.s32.totalorder %s16, 1
      %s1079 = scalar_select %p1078, %s16, 1
      %s1080 = smul.addr %s1079, 2
      %s1081 = scalar_lea.vmem %s5, %s1080
      // Predicated region
      $region41: #{detector_forward.11} parent=39 // pred_check
        %p1082 = pneg %p144
      $region42: #{detector_forward.11} parent=39 // pred_check_branch
        %1084 = sbr.rel (%p1082) target = $region44
      $region43: #{detector_forward.11} parent=39 // pred_region
        _
      $region44: #{detector_forward.11} parent=39 // pred_fallthru
        _
    $region40: #{detector_forward.11} parent=5 // pred_fallthru
      _
    %p1085 = scmp.le.s32.totalorder 2, %s11
    // Predicated region
    $region45: #{detector_forward.11} parent=5 // pred_check
      %p1086 = pneg %p1085
    $region46: #{detector_forward.11} parent=5 // pred_check_branch
      %1088 = sbr.rel (%p1086) target = $region48
    $region47: #{detector_forward.11} parent=5 // pred_region
      %s1089 = ssub.s32 %s11, 2
      // Predicated region
      $region49: #{detector_forward.11} parent=47 // pred_check
        %p1090 = pneg %p150
      $region50: #{detector_forward.11} parent=47 // pred_check_branch
        %1092 = sbr.rel (%p1090) target = $region52
      $region51: #{detector_forward.11} parent=47 // pred_region
        %p1093 = scmp.lt.s32.totalorder %s17, 1
        %s1094 = scalar_select %p1093, %s17, 1
        %s1095 = smul.addr %s1094, 2
        %s1096 = scalar_lea.vmem %s5, %s1095
      $region52: #{detector_forward.11} parent=47 // pred_fallthru
        _
    $region48: #{detector_forward.11} parent=5 // pred_fallthru
      _
  $region6: #{detector_forward.11} parent=0 // loop_footer
    %s15 = sadd.s32 1, %s11
  $region7: #{detector_forward.11} parent=0 // loop_footer_branch
    %10 = sbr.rel target = $region3
  $region8: #{detector_forward.11} parent=0 // loop_exit
    _

// kernel: detector_forward.14
$region0: #{detector_forward.14}
  #allocation0 [shape = 'u32[]', space=smem, size = 0x4, offset = 0x4, fixed_abs, tag = 'smem constant byte address 0x4 - core index']
  #allocation1 [shape = 'u32[72,128]{1,0:T(1,128)}', space=vmem, size = 0x9000, scoped, tag = 'internal scratch']
  %s0 = inlined_call_operand.vmem [shape: bf16[2,1,3,3,128], index: 0, kind: input, shape index: {}]
  %s1 = inlined_call_operand.vmem [shape: bf16[512,256], index: 1, kind: input, shape index: {}]
  %s2 = inlined_call_operand.vmem [shape: f32[1,256], index: 2, kind: input, shape index: {}]
  %s3 = inlined_call_operand.vmem [shape: bf16[2,4,256], index: 3, kind: output, shape index: {}]
  %s4 = sld [smem:[#allocation0]]
  $region45: #{detector_forward.14} parent=0
    _
  %s6 = ssub.s32 1, %s4
  %s7 = scalar_select 0, %s6, %s4
  loop: start=0, step=1, limit=4
  $region2: #{detector_forward.14} parent=0 // loop_pre_header
    _
  $region3: #{detector_forward.14} parent=0 // loop_header
    %s9 = sphi 0, %s13
    %p10 = scmp.ge.s32.totalorder %s9, 4
    %s19 = sphi 0, %s21
    %s22 = sphi 0, %s19
    %s23 = sphi 0, %s22
    %s39 = sphi 0, %s23
    %s43 = sphi 0, %s43
    %s45 = sphi 0, %s43
    %s46 = sphi 0, %s45
    %s60 = sphi 0, %s46
    %s64 = sphi 0, %s64
    %s66 = sphi 0, %s64
    %s67 = sphi 0, %s66
    %s81 = sphi 0, %s67
    %s87 = sphi 0, %s89
    %s90 = sphi 0, %s87
    %s91 = sphi 0, %s90
    %s107 = sphi 0, %s91
  $region4: #{detector_forward.14} parent=0 // loop_header_branch
    %12 = sbr.rel (%p10) target = $region8
  $region5: #{detector_forward.14} parent=0 // loop_body
    %s14 = ssub.s32 %s9, 1
    %s15 = ssub.s32 %s9, 2
    %s16 = sadd.s32 %s9, 1
    %s17 = ssub.s32 %s9, %s16
    %p18 = scmp.eq.s32.totalorder %s17, 0
    %s20 = sadd.s32 %s19, 1
    %s21 = scalar_select %p18, %s19, %s20
    %p24 = pneg %p18
    %p25 = scmp.eq.s32.totalorder %s9, 1
    %p26 = por %p24, %p25
    %p27 = scmp.ne.s32.totalorder %s19, %s22
    %p28 = scmp.eq.s32.totalorder %s9, 0
    %p29 = por %p27, %p28
    %p30 = scmp.ne.s32.totalorder %s19, %s22
    %p31 = scmp.eq.s32.totalorder %s14, 1
    %p32 = por %p30, %p31
    %p33 = scmp.ne.s32.totalorder %s22, %s23
    %p34 = scmp.eq.s32.totalorder %s14, 0
    %p35 = por %p33, %p34
    %p36 = scmp.ne.s32.totalorder %s22, %s23
    %p37 = scmp.eq.s32.totalorder %s15, 1
    %p38 = por %p36, %p37
    %p40 = scmp.ne.s32.totalorder %s23, %s39
    %p41 = scmp.eq.s32.totalorder %s15, 0
    %p42 = por %p40, %p41
    %s44 = sadd.s32 %s43, 1
    %p47 = scmp.eq.s32.totalorder %s9, 1
    %p48 = scmp.ne.s32.totalorder %s43, %s45
    %p49 = scmp.eq.s32.totalorder %s9, 0
    %p50 = por %p48, %p49
    %p51 = scmp.ne.s32.totalorder %s43, %s45
    %p52 = scmp.eq.s32.totalorder %s14, 1
    %p53 = por %p51, %p52
    %p54 = scmp.ne.s32.totalorder %s45, %s46
    %p55 = scmp.eq.s32.totalorder %s14, 0
    %p56 = por %p54, %p55
    %p57 = scmp.ne.s32.totalorder %s45, %s46
    %p58 = scmp.eq.s32.totalorder %s15, 1
    %p59 = por %p57, %p58
    %p61 = scmp.ne.s32.totalorder %s46, %s60
    %p62 = scmp.eq.s32.totalorder %s15, 0
    %p63 = por %p61, %p62
    %s65 = sadd.s32 %s64, 1
    %p68 = scmp.eq.s32.totalorder %s9, 1
    %p69 = scmp.ne.s32.totalorder %s64, %s66
    %p70 = scmp.eq.s32.totalorder %s9, 0
    %p71 = por %p69, %p70
    %p72 = scmp.ne.s32.totalorder %s64, %s66
    %p73 = scmp.eq.s32.totalorder %s14, 1
    %p74 = por %p72, %p73
    %p75 = scmp.ne.s32.totalorder %s66, %s67
    %p76 = scmp.eq.s32.totalorder %s14, 0
    %p77 = por %p75, %p76
    %p78 = scmp.ne.s32.totalorder %s66, %s67
    %p79 = scmp.eq.s32.totalorder %s15, 1
    %p80 = por %p78, %p79
    %p82 = scmp.ne.s32.totalorder %s67, %s81
    %p83 = scmp.eq.s32.totalorder %s15, 0
    %p84 = por %p82, %p83
    %s85 = ssub.s32 %s9, %s16
    %p86 = scmp.eq.s32.totalorder %s85, 0
    %s88 = sadd.s32 %s87, 1
    %s89 = scalar_select %p86, %s87, %s88
    %p92 = pneg %p86
    %p93 = scmp.eq.s32.totalorder %s9, 1
    %p94 = por %p92, %p93
    %p95 = scmp.ne.s32.totalorder %s87, %s90
    %p96 = scmp.eq.s32.totalorder %s9, 0
    %p97 = por %p95, %p96
    %p98 = scmp.ne.s32.totalorder %s87, %s90
    %p99 = scmp.eq.s32.totalorder %s14, 1
    %p100 = por %p98, %p99
    %p101 = scmp.ne.s32.totalorder %s90, %s91
    %p102 = scmp.eq.s32.totalorder %s14, 0
    %p103 = por %p101, %p102
    %p104 = scmp.ne.s32.totalorder %s90, %s91
    %p105 = scmp.eq.s32.totalorder %s15, 1
    %p106 = por %p104, %p105
    %p108 = scmp.ne.s32.totalorder %s91, %s107
    %p109 = scmp.eq.s32.totalorder %s15, 0
    %p110 = por %p108, %p109
    %p111 = scmp.le.s32.totalorder 1, %s9
    %p112 = scmp.lt.s32.totalorder %s9, 3
    %p113 = pnand %p111, %p112
    %p114 = pneg %p113
    // Predicated region
    $region9: #{detector_forward.14} parent=5 // pred_check
      _
    $region10: #{detector_forward.14} parent=5 // pred_check_branch
      %116 = sbr.rel (%p113) target = $region12
    $region11: #{detector_forward.14} parent=5 // pred_region
      %s117 = ssub.s32 %s9, 1
      // Predicated region
      $region13: #{detector_forward.14} parent=11 // pred_check
        %p118 = pneg %p56
      $region14: #{detector_forward.14} parent=11 // pred_check_branch
        %120 = sbr.rel (%p118) target = $region16
      $region15: #{detector_forward.14} parent=11 // pred_region
        _
      $region16: #{detector_forward.14} parent=11 // pred_fallthru
        _
      // Predicated region
      $region17: #{detector_forward.14} parent=11 // pred_check
        %p121 = pneg %p77
      $region18: #{detector_forward.14} parent=11 // pred_check_branch
        %123 = sbr.rel (%p121) target = $region20
      $region19: #{detector_forward.14} parent=11 // pred_region
        _
      $region20: #{detector_forward.14} parent=11 // pred_fallthru
        _
    $region12: #{detector_forward.14} parent=5 // pred_fallthru
      _
    %p124 = scmp.lt.s32.totalorder %s9, 2
    // Predicated region
    $region21: #{detector_forward.14} parent=5 // pred_check
      %p125 = pneg %p124
    $region22: #{detector_forward.14} parent=5 // pred_check_branch
      %127 = sbr.rel (%p125) target = $region24
    $region23: #{detector_forward.14} parent=5 // pred_region
      // Predicated region
      $region25: #{detector_forward.14} parent=23 // pred_check
        %p128 = pneg %p29
      $region26: #{detector_forward.14} parent=23 // pred_check_branch
        %130 = sbr.rel (%p128) target = $region28
      $region27: #{detector_forward.14} parent=23 // pred_region
        %p131 = scmp.lt.s32.totalorder %s9, 1
        %s132 = scalar_select %p131, %s9, 1
        %s133 = smul.addr %s132, 3
        %s134 = smul.addr %s133, 2
        %s135 = scalar_lea.vmem %s0, %s134
      $region28: #{detector_forward.14} parent=23 // pred_fallthru
        _
    $region24: #{detector_forward.14} parent=5 // pred_fallthru
      _
    %p136 = scmp.le.s32.totalorder 1, %s9
    %p137 = scmp.lt.s32.totalorder %s9, 3
    %p138 = pnand %p136, %p137
    %p139 = pneg %p138
    // Predicated region
    $region29: #{detector_forward.14} parent=5 // pred_check
      _
    $region30: #{detector_forward.14} parent=5 // pred_check_branch
      %141 = sbr.rel (%p138) target = $region32
    $region31: #{detector_forward.14} parent=5 // pred_region
      %s142 = ssub.s32 %s9, 1
      %p143 = scmp.lt.s32.totalorder %s14, 1
      %s144 = scalar_select %p143, %s14, 1
      %s145 = smul.addr %s144, 3
      %s146 = smul.addr %s145, 2
      %s147 = scalar_lea.vmem %s0, %s146
      %p148 = pneg %p35
      %p149 = pneg %p32
      %p150 = pneg %p56
      %p151 = pneg %p53
      %p152 = pneg %p77
      %p153 = pneg %p74
      %p154 = pneg %p103
      %p155 = pneg %p100
      %p156 = scmp.lt.s32.totalorder %s14, 1
      %s157 = scalar_select %p156, %s14, 1
      %s158 = smul.addr %s157, 2
      %s159 = smul.addr %s158, 2
      %s160 = scalar_lea.vmem %s3, %s159
      %p161 = scmp.lt.s32.totalorder %s14, 1
      %s162 = scalar_select %p161, %s14, 1
      %s163 = smul.addr %s162, 3
      %s164 = smul.addr %s163, 2
      %s165 = scalar_lea.vmem %s0, %s164
      %p166 = scmp.lt.s32.totalorder %s14, 1
      %s167 = scalar_select %p166, %s14, 1
      %s168 = smul.addr %s167, 2
      %s169 = smul.addr %s168, 2
      %s170 = scalar_lea.vmem %s3, %s169
      %v171 = vld [vmem:[%s165] sm:$0x1]
      %v172 = vld [vmem:[%s165 + $0x2] sm:$0x1]
      %v173 = vunpack.c.l.bf16 %v171
      %v174 = vunpack.c.l.bf16 %v172
      %v175 = vld [vmem:[%s165] sm:$0x3]
      %v176 = vld [vmem:[%s165 + $0x2] sm:$0x3]
      %v177 = vunpack.c.l.bf16 %v175
      %v178 = vunpack.c.l.bf16 %v176
      %v181 = vrot.slane %v177, 2
      %v182 = vrot.slane %v178, 2
      %vm183 = vcmask 1041408
      %v184 = vsel %vm183, %v177, %v181
      %vm185 = vcmask 1043458
      %v186 = vsel %vm185, %v177, %v181
      %v187 = vrot.slane %v186, 2
      %v188 = vsel %vm183, %v178, %v182
      %v189 = vsel %vm185, %v178, %v182
      %v190 = vrot.slane %v189, 2
      %vm191 = vcmask 1040384
      %vm192 = vcmask 1042434
      %vm193 = vmor %vm191, %vm192
      %vm194 = vcmask 1044484
      %vm195 = vmor %vm193, %vm194
      %vm196 = vcmask 1046534
      %vm197 = vmor %vm195, %vm196
      %v198 = vrot.slane %v184, 7
      %v199 = vrot.slane %v198, 2
      %v200 = vrot.slane %v187, 7
      %v201 = vsel %vm197, %v199, %v200
      %v202 = vrot.slane %v188, 7
      %v203 = vrot.slane %v202, 2
      %v204 = vrot.slane %v190, 7
      %v205 = vsel %vm197, %v203, %v204
      %s206 = scalar_lea.vmem %s165, 2
      %v207 = vld [vmem:[%s206] sm:$0x1]
      %v208 = vld [vmem:[%s206 + $0x2] sm:$0x1]
      %v209 = vunpack.c.l.bf16 %v207
      %v210 = vunpack.c.l.bf16 %v208
      %v211 = vld [vmem:[%s206] sm:$0x3]
      %v212 = vld [vmem:[%s206 + $0x2] sm:$0x3]
      %v213 = vunpack.c.l.bf16 %v211
      %v214 = vunpack.c.l.bf16 %v212
      %v217 = vrot.slane %v213, 2
      %v218 = vrot.slane %v214, 2
      %v219 = vsel %vm183, %v213, %v217
      %v220 = vsel %vm185, %v213, %v217
      %v221 = vrot.slane %v220, 2
      %v222 = vsel %vm183, %v214, %v218
      %v223 = vsel %vm185, %v214, %v218
      %v224 = vrot.slane %v223, 2
      %v225 = vrot.slane %v219, 7
      %v226 = vrot.slane %v225, 2
      %v227 = vrot.slane %v221, 7
      %v228 = vsel %vm197, %v226, %v227
      %v229 = vrot.slane %v222, 7
      %v230 = vrot.slane %v229, 2
      %v231 = vrot.slane %v224, 7
      %v232 = vsel %vm197, %v230, %v231
      %235 = vst [vmem:[#allocation1] ss:$4 sm:$0xff] %v173
      %s236 = scalar_lea.vmem [#allocation1], 1
      %237 = vst [vmem:[%s236] ss:$4 sm:$0xff] %v174
      %v238 = vld.sshfl [vmem:[#allocation1] sm:$0xff pattern:$0x73625140]
      %240 = vst [vmem:[#allocation1] ss:$4 sm:$0xff] %v201
      %s241 = scalar_lea.vmem [#allocation1], 1
      %242 = vst [vmem:[%s241] ss:$4 sm:$0xff] %v205
      %v243 = vld.sshfl [vmem:[#allocation1] sm:$0xff pattern:$0x73625140]
      %247 = vst [vmem:[#allocation1] ss:$4 sm:$0xff] %v209
      %s248 = scalar_lea.vmem [#allocation1], 1
      %249 = vst [vmem:[%s248] ss:$4 sm:$0xff] %v210
      %v250 = vld.sshfl [vmem:[#allocation1] sm:$0xff pattern:$0x73625140]
      %252 = vst [vmem:[#allocation1] ss:$4 sm:$0xff] %v228
      %s253 = scalar_lea.vmem [#allocation1], 1
      %254 = vst [vmem:[%s253] ss:$4 sm:$0xff] %v232
      %v255 = vld.sshfl [vmem:[#allocation1] sm:$0xff pattern:$0x73625140]
      %v257 = vpack.c.bf16 %v238, %v238
      %v258 = vpack.c.bf16 %v243, %v243
      %v259 = vpack.c.bf16 %v250, %v250
      %v260 = vpack.c.bf16 %v255, %v255
      %v261 = vld [vmem:[%s1] sm:$0xff]
      %v262 = vld [vmem:[%s1 + $0x8] sm:$0xff]
      %v263 = vld [vmem:[%s1 + $0x10] sm:$0xff]
      %v264 = vld [vmem:[%s1 + $0x18] sm:$0xff]
      %v265 = vld [vmem:[%s1 + $0x20] sm:$0xff]
      %v266 = vld [vmem:[%s1 + $0x28] sm:$0xff]
      %v267 = vld [vmem:[%s1 + $0x30] sm:$0xff]
      %v268 = vld [vmem:[%s1 + $0x38] sm:$0xff]
      %v269 = vld [vmem:[%s1 + $0x40] sm:$0xff]
      %v270 = vld [vmem:[%s1 + $0x48] sm:$0xff]
      %v271 = vld [vmem:[%s1 + $0x50] sm:$0xff]
      %v272 = vld [vmem:[%s1 + $0x58] sm:$0xff]
      %v273 = vld [vmem:[%s1 + $0x60] sm:$0xff]
      %v274 = vld [vmem:[%s1 + $0x68] sm:$0xff]
      %v275 = vld [vmem:[%s1 + $0x70] sm:$0xff]
      %v276 = vld [vmem:[%s1 + $0x78] sm:$0xff]
      %v277 = vld [vmem:[%s1 + $0x80] sm:$0xff]
      %v278 = vld [vmem:[%s1 + $0x88] sm:$0xff]
      %v279 = vld [vmem:[%s1 + $0x90] sm:$0xff]
      %v280 = vld [vmem:[%s1 + $0x98] sm:$0xff]
      %v281 = vld [vmem:[%s1 + $0xa0] sm:$0xff]
      %v282 = vld [vmem:[%s1 + $0xa8] sm:$0xff]
      %v283 = vld [vmem:[%s1 + $0xb0] sm:$0xff]
      %v284 = vld [vmem:[%s1 + $0xb8] sm:$0xff]
      %v285 = vld [vmem:[%s1 + $0xc0] sm:$0xff]
      %v286 = vld [vmem:[%s1 + $0xc8] sm:$0xff]
      %v287 = vld [vmem:[%s1 + $0xd0] sm:$0xff]
      %v288 = vld [vmem:[%s1 + $0xd8] sm:$0xff]
      %v289 = vld [vmem:[%s1 + $0xe0] sm:$0xff]
      %v290 = vld [vmem:[%s1 + $0xe8] sm:$0xff]
      %v291 = vld [vmem:[%s1 + $0xf0] sm:$0xff]
      %v292 = vld [vmem:[%s1 + $0xf8] sm:$0xff]
      %v293 = vld [vmem:[%s1 + $0x100] sm:$0xff]
      %v294 = vld [vmem:[%s1 + $0x108] sm:$0xff]
      %v295 = vld [vmem:[%s1 + $0x110] sm:$0xff]
      %v296 = vld [vmem:[%s1 + $0x118] sm:$0xff]
      %v297 = vld [vmem:[%s1 + $0x120] sm:$0xff]
      %v298 = vld [vmem:[%s1 + $0x128] sm:$0xff]
      %v299 = vld [vmem:[%s1 + $0x130] sm:$0xff]
      %v300 = vld [vmem:[%s1 + $0x138] sm:$0xff]
      %v301 = vld [vmem:[%s1 + $0x140] sm:$0xff]
      %v302 = vld [vmem:[%s1 + $0x148] sm:$0xff]
      %v303 = vld [vmem:[%s1 + $0x150] sm:$0xff]
      %v304 = vld [vmem:[%s1 + $0x158] sm:$0xff]
      %v305 = vld [vmem:[%s1 + $0x160] sm:$0xff]
      %v306 = vld [vmem:[%s1 + $0x168] sm:$0xff]
      %v307 = vld [vmem:[%s1 + $0x170] sm:$0xff]
      %v308 = vld [vmem:[%s1 + $0x178] sm:$0xff]
      %v309 = vld [vmem:[%s1 + $0x180] sm:$0xff]
      %v310 = vld [vmem:[%s1 + $0x188] sm:$0xff]
      %v311 = vld [vmem:[%s1 + $0x190] sm:$0xff]
      %v312 = vld [vmem:[%s1 + $0x198] sm:$0xff]
      %v313 = vld [vmem:[%s1 + $0x1a0] sm:$0xff]
      %v314 = vld [vmem:[%s1 + $0x1a8] sm:$0xff]
      %v315 = vld [vmem:[%s1 + $0x1b0] sm:$0xff]
      %v316 = vld [vmem:[%s1 + $0x1b8] sm:$0xff]
      %v317 = vld [vmem:[%s1 + $0x1c0] sm:$0xff]
      %v318 = vld [vmem:[%s1 + $0x1c8] sm:$0xff]
      %v319 = vld [vmem:[%s1 + $0x1d0] sm:$0xff]
      %v320 = vld [vmem:[%s1 + $0x1d8] sm:$0xff]
      %v321 = vld [vmem:[%s1 + $0x1e0] sm:$0xff]
      %v322 = vld [vmem:[%s1 + $0x1e8] sm:$0xff]
      %v323 = vld [vmem:[%s1 + $0x1f0] sm:$0xff]
      %v324 = vld [vmem:[%s1 + $0x1f8] sm:$0xff]
      %v325 = vld [vmem:[%s2] sm:$0x3]
      %v327 = vperm.slane %v325, 0
      %v328 = vperm.slane %v325, 1
      %v395 = vunpack.c.l.b16 %v261
      %v396 = vunpack.c.h.b16 %v261
      %v397 = vunpack.c.l.b16 %v262
      %v398 = vunpack.c.h.b16 %v262
      %v399 = vunpack.c.l.b16 %v263
      %v400 = vunpack.c.h.b16 %v263
      %v401 = vunpack.c.l.b16 %v264
      %v402 = vunpack.c.h.b16 %v264
      %v403 = vunpack.c.l.b16 %v265
      %v404 = vunpack.c.h.b16 %v265
      %v405 = vunpack.c.l.b16 %v266
      %v406 = vunpack.c.h.b16 %v266
      %v407 = vunpack.c.l.b16 %v267
      %v408 = vunpack.c.h.b16 %v267
      %v409 = vunpack.c.l.b16 %v268
      %v410 = vunpack.c.h.b16 %v268
      %v411 = vunpack.c.l.b16 %v269
      %v412 = vunpack.c.h.b16 %v269
      %v413 = vunpack.c.l.b16 %v270
      %v414 = vunpack.c.h.b16 %v270
      %v415 = vunpack.c.l.b16 %v271
      %v416 = vunpack.c.h.b16 %v271
      %v417 = vunpack.c.l.b16 %v272
      %v418 = vunpack.c.h.b16 %v272
      %v419 = vunpack.c.l.b16 %v273
      %v420 = vunpack.c.h.b16 %v273
      %v421 = vunpack.c.l.b16 %v274
      %v422 = vunpack.c.h.b16 %v274
      %v423 = vunpack.c.l.b16 %v275
      %v424 = vunpack.c.h.b16 %v275
      %v425 = vunpack.c.l.b16 %v276
      %v426 = vunpack.c.h.b16 %v276
      %v427 = vunpack.c.l.b16 %v277
      %v428 = vunpack.c.h.b16 %v277
      %v429 = vunpack.c.l.b16 %v278
      %v430 = vunpack.c.h.b16 %v278
      %v431 = vunpack.c.l.b16 %v279
      %v432 = vunpack.c.h.b16 %v279
      %v433 = vunpack.c.l.b16 %v280
      %v434 = vunpack.c.h.b16 %v280
      %v435 = vunpack.c.l.b16 %v281
      %v436 = vunpack.c.h.b16 %v281
      %v437 = vunpack.c.l.b16 %v282
      %v438 = vunpack.c.h.b16 %v282
      %v439 = vunpack.c.l.b16 %v283
      %v440 = vunpack.c.h.b16 %v283
      %v441 = vunpack.c.l.b16 %v284
      %v442 = vunpack.c.h.b16 %v284
      %v443 = vunpack.c.l.b16 %v285
      %v444 = vunpack.c.h.b16 %v285
      %v445 = vunpack.c.l.b16 %v286
      %v446 = vunpack.c.h.b16 %v286
      %v447 = vunpack.c.l.b16 %v287
      %v448 = vunpack.c.h.b16 %v287
      %v449 = vunpack.c.l.b16 %v288
      %v450 = vunpack.c.h.b16 %v288
      %v451 = vunpack.c.l.b16 %v289
      %v452 = vunpack.c.h.b16 %v289
      %v453 = vunpack.c.l.b16 %v290
      %v454 = vunpack.c.h.b16 %v290
      %v455 = vunpack.c.l.b16 %v291
      %v456 = vunpack.c.h.b16 %v291
      %v457 = vunpack.c.l.b16 %v292
      %v458 = vunpack.c.h.b16 %v292
      %v459 = vunpack.c.l.b16 %v293
      %v460 = vunpack.c.h.b16 %v293
      %v461 = vunpack.c.l.b16 %v294
      %v462 = vunpack.c.h.b16 %v294
      %v463 = vunpack.c.l.b16 %v295
      %v464 = vunpack.c.h.b16 %v295
      %v465 = vunpack.c.l.b16 %v296
      %v466 = vunpack.c.h.b16 %v296
      %v467 = vunpack.c.l.b16 %v297
      %v468 = vunpack.c.h.b16 %v297
      %v469 = vunpack.c.l.b16 %v298
      %v470 = vunpack.c.h.b16 %v298
      %v471 = vunpack.c.l.b16 %v299
      %v472 = vunpack.c.h.b16 %v299
      %v473 = vunpack.c.l.b16 %v300
      %v474 = vunpack.c.h.b16 %v300
      %v475 = vunpack.c.l.b16 %v301
      %v476 = vunpack.c.h.b16 %v301
      %v477 = vunpack.c.l.b16 %v302
      %v478 = vunpack.c.h.b16 %v302
      %v479 = vunpack.c.l.b16 %v303
      %v480 = vunpack.c.h.b16 %v303
      %v481 = vunpack.c.l.b16 %v304
      %v482 = vunpack.c.h.b16 %v304
      %v483 = vunpack.c.l.b16 %v305
      %v484 = vunpack.c.h.b16 %v305
      %v485 = vunpack.c.l.b16 %v306
      %v486 = vunpack.c.h.b16 %v306
      %v487 = vunpack.c.l.b16 %v307
      %v488 = vunpack.c.h.b16 %v307
      %v489 = vunpack.c.l.b16 %v308
      %v490 = vunpack.c.h.b16 %v308
      %v491 = vunpack.c.l.b16 %v309
      %v492 = vunpack.c.h.b16 %v309
      %v493 = vunpack.c.l.b16 %v310
      %v494 = vunpack.c.h.b16 %v310
      %v495 = vunpack.c.l.b16 %v311
      %v496 = vunpack.c.h.b16 %v311
      %v497 = vunpack.c.l.b16 %v312
      %v498 = vunpack.c.h.b16 %v312
      %v499 = vunpack.c.l.b16 %v313
      %v500 = vunpack.c.h.b16 %v313
      %v501 = vunpack.c.l.b16 %v314
      %v502 = vunpack.c.h.b16 %v314
      %v503 = vunpack.c.l.b16 %v315
      %v504 = vunpack.c.h.b16 %v315
      %v505 = vunpack.c.l.b16 %v316
      %v506 = vunpack.c.h.b16 %v316
      %v507 = vunpack.c.l.b16 %v317
      %v508 = vunpack.c.h.b16 %v317
      %v509 = vunpack.c.l.b16 %v318
      %v510 = vunpack.c.h.b16 %v318
      %v511 = vunpack.c.l.b16 %v319
      %v512 = vunpack.c.h.b16 %v319
      %v513 = vunpack.c.l.b16 %v320
      %v514 = vunpack.c.h.b16 %v320
      %v515 = vunpack.c.l.b16 %v321
      %v516 = vunpack.c.h.b16 %v321
      %v517 = vunpack.c.l.b16 %v322
      %v518 = vunpack.c.h.b16 %v322
      %v519 = vunpack.c.l.b16 %v323
      %v520 = vunpack.c.h.b16 %v323
      %v521 = vunpack.c.l.b16 %v324
      %v522 = vunpack.c.h.b16 %v324
      %v523 = vpack.c.b16 %v397, %v395
      %v524 = vpack.c.b16 %v398, %v396
      %v525 = vpack.c.b16 %v401, %v399
      %v526 = vpack.c.b16 %v402, %v400
      %v527 = vpack.c.b16 %v405, %v403
      %v528 = vpack.c.b16 %v406, %v404
      %v529 = vpack.c.b16 %v409, %v407
      %v530 = vpack.c.b16 %v410, %v408
      %v531 = vpack.c.b16 %v413, %v411
      %v532 = vpack.c.b16 %v414, %v412
      %v533 = vpack.c.b16 %v417, %v415
      %v534 = vpack.c.b16 %v418, %v416
      %v535 = vpack.c.b16 %v421, %v419
      %v536 = vpack.c.b16 %v422, %v420
      %v537 = vpack.c.b16 %v425, %v423
      %v538 = vpack.c.b16 %v426, %v424
      %v539 = vpack.c.b16 %v429, %v427
      %v540 = vpack.c.b16 %v430, %v428
      %v541 = vpack.c.b16 %v433, %v431
      %v542 = vpack.c.b16 %v434, %v432
      %v543 = vpack.c.b16 %v437, %v435
      %v544 = vpack.c.b16 %v438, %v436
      %v545 = vpack.c.b16 %v441, %v439
      %v546 = vpack.c.b16 %v442, %v440
      %v547 = vpack.c.b16 %v445, %v443
      %v548 = vpack.c.b16 %v446, %v444
      %v549 = vpack.c.b16 %v449, %v447
      %v550 = vpack.c.b16 %v450, %v448
      %v551 = vpack.c.b16 %v453, %v451
      %v552 = vpack.c.b16 %v454, %v452
      %v553 = vpack.c.b16 %v457, %v455
      %v554 = vpack.c.b16 %v458, %v456
      %v555 = vpack.c.b16 %v461, %v459
      %v556 = vpack.c.b16 %v462, %v460
      %v557 = vpack.c.b16 %v465, %v463
      %v558 = vpack.c.b16 %v466, %v464
      %v559 = vpack.c.b16 %v469, %v467
      %v560 = vpack.c.b16 %v470, %v468
      %v561 = vpack.c.b16 %v473, %v471
      %v562 = vpack.c.b16 %v474, %v472
      %v563 = vpack.c.b16 %v477, %v475
      %v564 = vpack.c.b16 %v478, %v476
      %v565 = vpack.c.b16 %v481, %v479
      %v566 = vpack.c.b16 %v482, %v480
      %v567 = vpack.c.b16 %v485, %v483
      %v568 = vpack.c.b16 %v486, %v484
      %v569 = vpack.c.b16 %v489, %v487
      %v570 = vpack.c.b16 %v490, %v488
      %v571 = vpack.c.b16 %v493, %v491
      %v572 = vpack.c.b16 %v494, %v492
      %v573 = vpack.c.b16 %v497, %v495
      %v574 = vpack.c.b16 %v498, %v496
      %v575 = vpack.c.b16 %v501, %v499
      %v576 = vpack.c.b16 %v502, %v500
      %v577 = vpack.c.b16 %v505, %v503
      %v578 = vpack.c.b16 %v506, %v504
      %v579 = vpack.c.b16 %v509, %v507
      %v580 = vpack.c.b16 %v510, %v508
      %v581 = vpack.c.b16 %v513, %v511
      %v582 = vpack.c.b16 %v514, %v512
      %v583 = vpack.c.b16 %v517, %v515
      %v584 = vpack.c.b16 %v518, %v516
      %v585 = vpack.c.b16 %v521, %v519
      %v586 = vpack.c.b16 %v522, %v520
      %651 = vmatpush.bf16.msra.mxu0 %v537
      %652 = vmatpush.bf16.msra.mxu0 %v535
      %653 = vmatpush.bf16.msra.mxu0 %v533
      %654 = vmatpush.bf16.msra.mxu0 %v531
      %655 = vmatpush.bf16.msra.mxu0 %v529
      %656 = vmatpush.bf16.msra.mxu0 %v527
      %657 = vmatpush.bf16.msra.mxu0 %v525
      %658 = vmatpush.bf16.msra.mxu0 %v523
      %659 = vmatmul.bf16.gmra.mxu0 %v257
      %v660 = vpop.f32.mrf.mxu0
      %v661 = vadd.f32 %v327, %v660
      %v662 = vpop.f32.mrf.mxu0
      %663 = vdwg.mxu0
      %664 = vmatpush.bf16.msra.mxu0 %v553
      %665 = vmatpush.bf16.msra.mxu0 %v551
      %666 = vmatpush.bf16.msra.mxu0 %v549
      %667 = vmatpush.bf16.msra.mxu0 %v547
      %668 = vmatpush.bf16.msra.mxu0 %v545
      %669 = vmatpush.bf16.msra.mxu0 %v543
      %670 = vmatpush.bf16.msra.mxu0 %v541
      %671 = vmatpush.bf16.msra.mxu0 %v539
      %672 = vmatmul.bf16.gmra.mxu0 %v258
      %v673 = vpop.f32.mrf.mxu0
      %v674 = vadd.f32 %v661, %v673
      %v675 = vpop.f32.mrf.mxu0
      %676 = vdwg.mxu0
      %677 = vmatpush.bf16.msra.mxu0 %v569
      %678 = vmatpush.bf16.msra.mxu0 %v567
      %679 = vmatpush.bf16.msra.mxu0 %v565
      %680 = vmatpush.bf16.msra.mxu0 %v563
      %681 = vmatpush.bf16.msra.mxu0 %v561
      %682 = vmatpush.bf16.msra.mxu0 %v559
      %683 = vmatpush.bf16.msra.mxu0 %v557
      %684 = vmatpush.bf16.msra.mxu0 %v555
      %685 = vmatmul.bf16.gmra.mxu0 %v259
      %v686 = vpop.f32.mrf.mxu0
      %v687 = vadd.f32 %v674, %v686
      %v688 = vpop.f32.mrf.mxu0
      %689 = vdwg.mxu0
      %690 = vmatpush.bf16.msra.mxu0 %v585
      %691 = vmatpush.bf16.msra.mxu0 %v583
      %692 = vmatpush.bf16.msra.mxu0 %v581
      %693 = vmatpush.bf16.msra.mxu0 %v579
      %694 = vmatpush.bf16.msra.mxu0 %v577
      %695 = vmatpush.bf16.msra.mxu0 %v575
      %696 = vmatpush.bf16.msra.mxu0 %v573
      %697 = vmatpush.bf16.msra.mxu0 %v571
      %698 = vmatmul.bf16.gmra.mxu0 %v260
      %v699 = vpop.f32.mrf.mxu0
      %v700 = vadd.f32 %v687, %v699
      %v701 = vpop.f32.mrf.mxu0
      %702 = vdwg.mxu0
      %703 = vmatpush.bf16.msra.mxu0 %v538
      %704 = vmatpush.bf16.msra.mxu0 %v536
      %705 = vmatpush.bf16.msra.mxu0 %v534
      %706 = vmatpush.bf16.msra.mxu0 %v532
      %707 = vmatpush.bf16.msra.mxu0 %v530
      %708 = vmatpush.bf16.msra.mxu0 %v528
      %709 = vmatpush.bf16.msra.mxu0 %v526
      %710 = vmatpush.bf16.msra.mxu0 %v524
      %711 = vmatmul.bf16.gmra.mxu0 %v257
      %v712 = vpop.f32.mrf.mxu0
      %v713 = vadd.f32 %v328, %v712
      %v714 = vpop.f32.mrf.mxu0
      %715 = vdwg.mxu0
      %716 = vmatpush.bf16.msra.mxu0 %v554
      %717 = vmatpush.bf16.msra.mxu0 %v552
      %718 = vmatpush.bf16.msra.mxu0 %v550
      %719 = vmatpush.bf16.msra.mxu0 %v548
      %720 = vmatpush.bf16.msra.mxu0 %v546
      %721 = vmatpush.bf16.msra.mxu0 %v544
      %722 = vmatpush.bf16.msra.mxu0 %v542
      %723 = vmatpush.bf16.msra.mxu0 %v540
      %724 = vmatmul.bf16.gmra.mxu0 %v258
      %v725 = vpop.f32.mrf.mxu0
      %v726 = vadd.f32 %v713, %v725
      %v727 = vpop.f32.mrf.mxu0
      %728 = vdwg.mxu0
      %729 = vmatpush.bf16.msra.mxu0 %v570
      %730 = vmatpush.bf16.msra.mxu0 %v568
      %731 = vmatpush.bf16.msra.mxu0 %v566
      %732 = vmatpush.bf16.msra.mxu0 %v564
      %733 = vmatpush.bf16.msra.mxu0 %v562
      %734 = vmatpush.bf16.msra.mxu0 %v560
      %735 = vmatpush.bf16.msra.mxu0 %v558
      %736 = vmatpush.bf16.msra.mxu0 %v556
      %737 = vmatmul.bf16.gmra.mxu0 %v259
      %v738 = vpop.f32.mrf.mxu0
      %v739 = vadd.f32 %v726, %v738
      %v740 = vpop.f32.mrf.mxu0
      %741 = vdwg.mxu0
      %742 = vmatpush.bf16.msra.mxu0 %v586
      %743 = vmatpush.bf16.msra.mxu0 %v584
      %744 = vmatpush.bf16.msra.mxu0 %v582
      %745 = vmatpush.bf16.msra.mxu0 %v580
      %746 = vmatpush.bf16.msra.mxu0 %v578
      %747 = vmatpush.bf16.msra.mxu0 %v576
      %748 = vmatpush.bf16.msra.mxu0 %v574
      %749 = vmatpush.bf16.msra.mxu0 %v572
      %750 = vmatmul.bf16.gmra.mxu0 %v260
      %v751 = vpop.f32.mrf.mxu0
      %v752 = vadd.f32 %v739, %v751
      %v753 = vpop.f32.mrf.mxu0
      %754 = vdwg.mxu0
      %v755 = vmax.f32 %v700, 0.0
      %v756 = vmax.f32 %v752, 0.0
      %v757 = vpack.c.bf16 %v756, %v755
      %v759 = vrot.slane %v757, 2
      %v762 = vsel %vm183, %v757, %v759
      %764 = vst [vmem:[%s170] sm:$0xf] %v762
      %p765 = scmp.lt.s32.totalorder %s14, 1
      %s766 = scalar_select %p765, %s14, 1
      %s767 = smul.addr %s766, 2
      %s768 = smul.addr %s767, 2
      %s769 = scalar_lea.vmem %s3, %s768
      // Predicated region
      $region33: #{detector_forward.14} parent=31 // pred_check
        %p770 = pneg %p100
      $region34: #{detector_forward.14} parent=31 // pred_check_branch
        %772 = sbr.rel (%p770) target = $region36
      $region35: #{detector_forward.14} parent=31 // pred_region
        _
      $region36: #{detector_forward.14} parent=31 // pred_fallthru
        _
    $region32: #{detector_forward.14} parent=5 // pred_fallthru
      _
    %p773 = scmp.le.s32.totalorder 2, %s9
    // Predicated region
    $region37: #{detector_forward.14} parent=5 // pred_check
      %p774 = pneg %p773
    $region38: #{detector_forward.14} parent=5 // pred_check_branch
      %776 = sbr.rel (%p774) target = $region40
    $region39: #{detector_forward.14} parent=5 // pred_region
      %s777 = ssub.s32 %s9, 2
      // Predicated region
      $region41: #{detector_forward.14} parent=39 // pred_check
        %p778 = pneg %p106
      $region42: #{detector_forward.14} parent=39 // pred_check_branch
        %780 = sbr.rel (%p778) target = $region44
      $region43: #{detector_forward.14} parent=39 // pred_region
        %p781 = scmp.lt.s32.totalorder %s15, 1
        %s782 = scalar_select %p781, %s15, 1
        %s783 = smul.addr %s782, 2
        %s784 = smul.addr %s783, 2
        %s785 = scalar_lea.vmem %s3, %s784
      $region44: #{detector_forward.14} parent=39 // pred_fallthru
        _
    $region40: #{detector_forward.14} parent=5 // pred_fallthru
      _
  $region6: #{detector_forward.14} parent=0 // loop_footer
    %s13 = sadd.s32 1, %s9
  $region7: #{detector_forward.14} parent=0 // loop_footer_branch
    %8 = sbr.rel target = $region3
  $region8: #{detector_forward.14} parent=0 // loop_exit
    _

// kernel: detector_forward.12
$region0: #{detector_forward.12}
  #allocation0 [shape = 'u32[]', space=smem, size = 0x4, offset = 0x4, fixed_abs, tag = 'smem constant byte address 0x4 - core index']
  #allocation1 [shape = 'u32[72,128]{1,0:T(1,128)}', space=vmem, size = 0x9000, scoped, tag = 'internal scratch']
  %s0 = inlined_call_operand.vmem [shape: bf16[2,4,2,2,64], index: 0, kind: input, shape index: {}]
  %s1 = inlined_call_operand.vmem [shape: bf16[576,128], index: 1, kind: input, shape index: {}]
  %s2 = inlined_call_operand.vmem [shape: f32[1,128], index: 2, kind: input, shape index: {}]
  %s3 = inlined_call_operand.vmem [shape: bf16[1152,128], index: 3, kind: input, shape index: {}]
  %s4 = inlined_call_operand.vmem [shape: f32[1,128], index: 4, kind: input, shape index: {}]
  %s5 = inlined_call_operand.vmem [shape: bf16[2,1,128], index: 5, kind: output, shape index: {}]
  %s6 = sld [smem:[#allocation0]]
  $region53: #{detector_forward.12} parent=0
    _
  %s8 = ssub.s32 1, %s6
  %s9 = scalar_select 0, %s8, %s6
  loop: start=0, step=1, limit=4
  $region2: #{detector_forward.12} parent=0 // loop_pre_header
    _
  $region3: #{detector_forward.12} parent=0 // loop_header
    %s11 = sphi 0, %s15
    %p12 = scmp.ge.s32.totalorder %s11, 4
    %s21 = sphi 0, %s23
    %s24 = sphi 0, %s21
    %s25 = sphi 0, %s24
    %s41 = sphi 0, %s25
    %s45 = sphi 0, %s45
    %s47 = sphi 0, %s45
    %s48 = sphi 0, %s47
    %s62 = sphi 0, %s48
    %s66 = sphi 0, %s66
    %s68 = sphi 0, %s66
    %s69 = sphi 0, %s68
    %s83 = sphi 0, %s69
    %s87 = sphi 0, %s87
    %s89 = sphi 0, %s87
    %s90 = sphi 0, %s89
    %s104 = sphi 0, %s90
    %s108 = sphi 0, %s108
    %s110 = sphi 0, %s108
    %s111 = sphi 0, %s110
    %s125 = sphi 0, %s111
    %s131 = sphi 0, %s133
    %s134 = sphi 0, %s131
    %s135 = sphi 0, %s134
    %s151 = sphi 0, %s135
  $region4: #{detector_forward.12} parent=0 // loop_header_branch
    %14 = sbr.rel (%p12) target = $region8
  $region5: #{detector_forward.12} parent=0 // loop_body
    %s16 = ssub.s32 %s11, 1
    %s17 = ssub.s32 %s11, 2
    %s18 = sadd.s32 %s11, 1
    %s19 = ssub.s32 %s11, %s18
    %p20 = scmp.eq.s32.totalorder %s19, 0
    %s22 = sadd.s32 %s21, 1
    %s23 = scalar_select %p20, %s21, %s22
    %p26 = pneg %p20
    %p27 = scmp.eq.s32.totalorder %s11, 1
    %p28 = por %p26, %p27
    %p29 = scmp.ne.s32.totalorder %s21, %s24
    %p30 = scmp.eq.s32.totalorder %s11, 0
    %p31 = por %p29, %p30
    %p32 = scmp.ne.s32.totalorder %s21, %s24
    %p33 = scmp.eq.s32.totalorder %s16, 1
    %p34 = por %p32, %p33
    %p35 = scmp.ne.s32.totalorder %s24, %s25
    %p36 = scmp.eq.s32.totalorder %s16, 0
    %p37 = por %p35, %p36
    %p38 = scmp.ne.s32.totalorder %s24, %s25
    %p39 = scmp.eq.s32.totalorder %s17, 1
    %p40 = por %p38, %p39
    %p42 = scmp.ne.s32.totalorder %s25, %s41
    %p43 = scmp.eq.s32.totalorder %s17, 0
    %p44 = por %p42, %p43
    %s46 = sadd.s32 %s45, 1
    %p49 = scmp.eq.s32.totalorder %s11, 1
    %p50 = scmp.ne.s32.totalorder %s45, %s47
    %p51 = scmp.eq.s32.totalorder %s11, 0
    %p52 = por %p50, %p51
    %p53 = scmp.ne.s32.totalorder %s45, %s47
    %p54 = scmp.eq.s32.totalorder %s16, 1
    %p55 = por %p53, %p54
    %p56 = scmp.ne.s32.totalorder %s47, %s48
    %p57 = scmp.eq.s32.totalorder %s16, 0
    %p58 = por %p56, %p57
    %p59 = scmp.ne.s32.totalorder %s47, %s48
    %p60 = scmp.eq.s32.totalorder %s17, 1
    %p61 = por %p59, %p60
    %p63 = scmp.ne.s32.totalorder %s48, %s62
    %p64 = scmp.eq.s32.totalorder %s17, 0
    %p65 = por %p63, %p64
    %s67 = sadd.s32 %s66, 1
    %p70 = scmp.eq.s32.totalorder %s11, 1
    %p71 = scmp.ne.s32.totalorder %s66, %s68
    %p72 = scmp.eq.s32.totalorder %s11, 0
    %p73 = por %p71, %p72
    %p74 = scmp.ne.s32.totalorder %s66, %s68
    %p75 = scmp.eq.s32.totalorder %s16, 1
    %p76 = por %p74, %p75
    %p77 = scmp.ne.s32.totalorder %s68, %s69
    %p78 = scmp.eq.s32.totalorder %s16, 0
    %p79 = por %p77, %p78
    %p80 = scmp.ne.s32.totalorder %s68, %s69
    %p81 = scmp.eq.s32.totalorder %s17, 1
    %p82 = por %p80, %p81
    %p84 = scmp.ne.s32.totalorder %s69, %s83
    %p85 = scmp.eq.s32.totalorder %s17, 0
    %p86 = por %p84, %p85
    %s88 = sadd.s32 %s87, 1
    %p91 = scmp.eq.s32.totalorder %s11, 1
    %p92 = scmp.ne.s32.totalorder %s87, %s89
    %p93 = scmp.eq.s32.totalorder %s11, 0
    %p94 = por %p92, %p93
    %p95 = scmp.ne.s32.totalorder %s87, %s89
    %p96 = scmp.eq.s32.totalorder %s16, 1
    %p97 = por %p95, %p96
    %p98 = scmp.ne.s32.totalorder %s89, %s90
    %p99 = scmp.eq.s32.totalorder %s16, 0
    %p100 = por %p98, %p99
    %p101 = scmp.ne.s32.totalorder %s89, %s90
    %p102 = scmp.eq.s32.totalorder %s17, 1
    %p103 = por %p101, %p102
    %p105 = scmp.ne.s32.totalorder %s90, %s104
    %p106 = scmp.eq.s32.totalorder %s17, 0
    %p107 = por %p105, %p106
    %s109 = sadd.s32 %s108, 1
    %p112 = scmp.eq.s32.totalorder %s11, 1
    %p113 = scmp.ne.s32.totalorder %s108, %s110
    %p114 = scmp.eq.s32.totalorder %s11, 0
    %p115 = por %p113, %p114
    %p116 = scmp.ne.s32.totalorder %s108, %s110
    %p117 = scmp.eq.s32.totalorder %s16, 1
    %p118 = por %p116, %p117
    %p119 = scmp.ne.s32.totalorder %s110, %s111
    %p120 = scmp.eq.s32.totalorder %s16, 0
    %p121 = por %p119, %p120
    %p122 = scmp.ne.s32.totalorder %s110, %s111
    %p123 = scmp.eq.s32.totalorder %s17, 1
    %p124 = por %p122, %p123
    %p126 = scmp.ne.s32.totalorder %s111, %s125
    %p127 = scmp.eq.s32.totalorder %s17, 0
    %p128 = por %p126, %p127
    %s129 = ssub.s32 %s11, %s18
    %p130 = scmp.eq.s32.totalorder %s129, 0
    %s132 = sadd.s32 %s131, 1
    %s133 = scalar_select %p130, %s131, %s132
    %p136 = pneg %p130
    %p137 = scmp.eq.s32.totalorder %s11, 1
    %p138 = por %p136, %p137
    %p139 = scmp.ne.s32.totalorder %s131, %s134
    %p140 = scmp.eq.s32.totalorder %s11, 0
    %p141 = por %p139, %p140
    %p142 = scmp.ne.s32.totalorder %s131, %s134
    %p143 = scmp.eq.s32.totalorder %s16, 1
    %p144 = por %p142, %p143
    %p145 = scmp.ne.s32.totalorder %s134, %s135
    %p146 = scmp.eq.s32.totalorder %s16, 0
    %p147 = por %p145, %p146
    %p148 = scmp.ne.s32.totalorder %s134, %s135
    %p149 = scmp.eq.s32.totalorder %s17, 1
    %p150 = por %p148, %p149
    %p152 = scmp.ne.s32.totalorder %s135, %s151
    %p153 = scmp.eq.s32.totalorder %s17, 0
    %p154 = por %p152, %p153
    %p155 = scmp.le.s32.totalorder 1, %s11
    %p156 = scmp.lt.s32.totalorder %s11, 3
    %p157 = pnand %p155, %p156
    %p158 = pneg %p157
    // Predicated region
    $region9: #{detector_forward.12} parent=5 // pred_check
      _
    $region10: #{detector_forward.12} parent=5 // pred_check_branch
      %160 = sbr.rel (%p157) target = $region12
    $region11: #{detector_forward.12} parent=5 // pred_region
      %s161 = ssub.s32 %s11, 1
      // Predicated region
      $region13: #{detector_forward.12} parent=11 // pred_check
        %p162 = pneg %p58
      $region14: #{detector_forward.12} parent=11 // pred_check_branch
        %164 = sbr.rel (%p162) target = $region16
      $region15: #{detector_forward.12} parent=11 // pred_region
        _
      $region16: #{detector_forward.12} parent=11 // pred_fallthru
        _
      // Predicated region
      $region17: #{detector_forward.12} parent=11 // pred_check
        %p165 = pneg %p79
      $region18: #{detector_forward.12} parent=11 // pred_check_branch
        %167 = sbr.rel (%p165) target = $region20
      $region19: #{detector_forward.12} parent=11 // pred_region
        _
      $region20: #{detector_forward.12} parent=11 // pred_fallthru
        _
      // Predicated region
      $region21: #{detector_forward.12} parent=11 // pred_check
        %p168 = pneg %p100
      $region22: #{detector_forward.12} parent=11 // pred_check_branch
        %170 = sbr.rel (%p168) target = $region24
      $region23: #{detector_forward.12} parent=11 // pred_region
        _
      $region24: #{detector_forward.12} parent=11 // pred_fallthru
        _
      // Predicated region
      $region25: #{detector_forward.12} parent=11 // pred_check
        %p171 = pneg %p121
      $region26: #{detector_forward.12} parent=11 // pred_check_branch
        %173 = sbr.rel (%p171) target = $region28
      $region27: #{detector_forward.12} parent=11 // pred_region
        _
      $region28: #{detector_forward.12} parent=11 // pred_fallthru
        _
    $region12: #{detector_forward.12} parent=5 // pred_fallthru
      _
    %p174 = scmp.lt.s32.totalorder %s11, 2
    // Predicated region
    $region29: #{detector_forward.12} parent=5 // pred_check
      %p175 = pneg %p174
    $region30: #{detector_forward.12} parent=5 // pred_check_branch
      %177 = sbr.rel (%p175) target = $region32
    $region31: #{detector_forward.12} parent=5 // pred_region
      // Predicated region
      $region33: #{detector_forward.12} parent=31 // pred_check
        %p178 = pneg %p31
      $region34: #{detector_forward.12} parent=31 // pred_check_branch
        %180 = sbr.rel (%p178) target = $region36
      $region35: #{detector_forward.12} parent=31 // pred_region
        %p181 = scmp.lt.s32.totalorder %s11, 1
        %s182 = scalar_select %p181, %s11, 1
        %s183 = smul.addr %s182, 8
        %s184 = scalar_lea.vmem %s0, %s183
      $region36: #{detector_forward.12} parent=31 // pred_fallthru
        _
    $region32: #{detector_forward.12} parent=5 // pred_fallthru
      _
    %p185 = scmp.le.s32.totalorder 1, %s11
    %p186 = scmp.lt.s32.totalorder %s11, 3
    %p187 = pnand %p185, %p186
    %p188 = pneg %p187
    // Predicated region
    $region37: #{detector_forward.12} parent=5 // pred_check
      _
    $region38: #{detector_forward.12} parent=5 // pred_check_branch
      %190 = sbr.rel (%p187) target = $region40
    $region39: #{detector_forward.12} parent=5 // pred_region
      %s191 = ssub.s32 %s11, 1
      %p192 = scmp.lt.s32.totalorder %s16, 1
      %s193 = scalar_select %p192, %s16, 1
      %s194 = smul.addr %s193, 8
      %s195 = scalar_lea.vmem %s0, %s194
      %p196 = pneg %p37
      %p197 = pneg %p34
      %p198 = pneg %p58
      %p199 = pneg %p55
      %p200 = pneg %p79
      %p201 = pneg %p76
      %p202 = pneg %p100
      %p203 = pneg %p97
      %p204 = pneg %p121
      %p205 = pneg %p118
      %p206 = pneg %p147
      %p207 = pneg %p144
      %p208 = scmp.lt.s32.totalorder %s16, 1
      %s209 = scalar_select %p208, %s16, 1
      %s210 = scalar_lea.vmem %s5, %s209
      %p211 = scmp.lt.s32.totalorder %s16, 1
      %s212 = scalar_select %p211, %s16, 1
      %s213 = smul.addr %s212, 8
      %s214 = scalar_lea.vmem %s0, %s213
      %p215 = scmp.lt.s32.totalorder %s16, 1
      %s216 = scalar_select %p215, %s16, 1
      %s217 = scalar_lea.vmem %s5, %s216
      %v219 = vld [vmem:[%s214] sm:$0x1]
      %v220 = vunpack.c.l.bf16 %v219
      %s221 = scalar_lea.vmem %s214, 2
      %v222 = vld [vmem:[%s221] sm:$0x1]
      %v223 = vunpack.c.l.bf16 %v222
      %s224 = scalar_lea.vmem %s214, 4
      %v225 = vld [vmem:[%s224] sm:$0x1]
      %v226 = vunpack.c.l.bf16 %v225
      %s227 = scalar_lea.vmem %s214, 6
      %v228 = vld [vmem:[%s227] sm:$0x1]
      %v229 = vunpack.c.l.bf16 %v228
      %s230 = scalar_lea.vmem %s214, 1
      %v231 = vld [vmem:[%s230] sm:$0x1]
      %v232 = vunpack.c.l.bf16 %v231
      %s233 = scalar_lea.vmem %s214, 3
      %v234 = vld [vmem:[%s233] sm:$0x1]
      %v235 = vunpack.c.l.bf16 %v234
      %v237 = vperm.slane %v223, 0
      %238 = vrot.lane.b32.xlu0 %v237, 64
      %v239 = vpop.permute.xlu0 %238
      %v242 = vperm.slane %v220, 1
      %v245 = vperm.slane %v226, 0
      %246 = vrot.lane.b32.xlu0 %v245, 64
      %v247 = vpop.permute.xlu0 %246
      %v249 = vperm.slane %v226, 1
      %250 = vrot.lane.b32.xlu0 %v249, 64
      %v251 = vpop.permute.xlu0 %250
      %v254 = vperm.slane %v235, 0
      %255 = vrot.lane.b32.xlu0 %v254, 64
      %v256 = vpop.permute.xlu0 %255
      %v259 = vperm.slane %v232, 1
      %vm261 = vcmask 523264
      %v262 = vsel %vm261, %v220, %v239
      %v263 = vsel %vm261, %v242, %v247
      %v264 = vsel %vm261, %v229, %v251
      %v265 = vsel %vm261, %v232, %v256
      %v266 = vpack.c.bf16 %v262, %v262
      %v267 = vpack.c.bf16 %v263, %v263
      %v268 = vpack.c.bf16 %v264, %v264
      %v269 = vpack.c.bf16 %v265, %v265
      %v270 = vpack.c.bf16 %v259, %v259
      %v271 = vld [vmem:[%s1] sm:$0xf]
      %v272 = vld [vmem:[%s1 + $0x4] sm:$0xf]
      %v273 = vld [vmem:[%s1 + $0x8] sm:$0xf]
      %v274 = vld [vmem:[%s1 + $0xc] sm:$0xf]
      %v275 = vld [vmem:[%s1 + $0x10] sm:$0xf]
      %v276 = vld [vmem:[%s1 + $0x14] sm:$0xf]
      %v277 = vld [vmem:[%s1 + $0x18] sm:$0xf]
      %v278 = vld [vmem:[%s1 + $0x1c] sm:$0xf]
      %v279 = vld [vmem:[%s1 + $0x20] sm:$0xf]
      %v280 = vld [vmem:[%s1 + $0x24] sm:$0xf]
      %v281 = vld [vmem:[%s1 + $0x28] sm:$0xf]
      %v282 = vld [vmem:[%s1 + $0x2c] sm:$0xf]
      %v283 = vld [vmem:[%s1 + $0x30] sm:$0xf]
      %v284 = vld [vmem:[%s1 + $0x34] sm:$0xf]
      %v285 = vld [vmem:[%s1 + $0x38] sm:$0xf]
      %v286 = vld [vmem:[%s1 + $0x3c] sm:$0xf]
      %v287 = vld [vmem:[%s1 + $0x40] sm:$0xf]
      %v288 = vld [vmem:[%s1 + $0x44] sm:$0xf]
      %v289 = vld [vmem:[%s1 + $0x48] sm:$0xf]
      %v290 = vld [vmem:[%s1 + $0x4c] sm:$0xf]
      %v291 = vld [vmem:[%s1 + $0x50] sm:$0xf]
      %v292 = vld [vmem:[%s1 + $0x54] sm:$0xf]
      %v293 = vld [vmem:[%s1 + $0x58] sm:$0xf]
      %v294 = vld [vmem:[%s1 + $0x5c] sm:$0xf]
      %v295 = vld [vmem:[%s1 + $0x60] sm:$0xf]
      %v296 = vld [vmem:[%s1 + $0x64] sm:$0xf]
      %v297 = vld [vmem:[%s1 + $0x68] sm:$0xf]
      %v298 = vld [vmem:[%s1 + $0x6c] sm:$0xf]
      %v299 = vld [vmem:[%s1 + $0x70] sm:$0xf]
      %v300 = vld [vmem:[%s1 + $0x74] sm:$0xf]
      %v301 = vld [vmem:[%s1 + $0x78] sm:$0xf]
      %v302 = vld [vmem:[%s1 + $0x7c] sm:$0xf]
      %v303 = vld [vmem:[%s1 + $0x80] sm:$0xf]
      %v304 = vld [vmem:[%s1 + $0x84] sm:$0xf]
      %v305 = vld [vmem:[%s1 + $0x88] sm:$0xf]
      %v306 = vld [vmem:[%s1 + $0x8c] sm:$0xf]
      %v307 = vld [vmem:[%s1 + $0x90] sm:$0xf]
      %v308 = vld [vmem:[%s1 + $0x94] sm:$0xf]
      %v309 = vld [vmem:[%s1 + $0x98] sm:$0xf]
      %v310 = vld [vmem:[%s1 + $0x9c] sm:$0xf]
      %v311 = vld [vmem:[%s1 + $0xa0] sm:$0xf]
      %v312 = vld [vmem:[%s1 + $0xa4] sm:$0xf]
      %v313 = vld [vmem:[%s1 + $0xa8] sm:$0xf]
      %v314 = vld [vmem:[%s1 + $0xac] sm:$0xf]
      %v315 = vld [vmem:[%s1 + $0xb0] sm:$0xf]
      %v316 = vld [vmem:[%s1 + $0xb4] sm:$0xf]
      %v317 = vld [vmem:[%s1 + $0xb8] sm:$0xf]
      %v318 = vld [vmem:[%s1 + $0xbc] sm:$0xf]
      %v319 = vld [vmem:[%s1 + $0xc0] sm:$0xf]
      %v320 = vld [vmem:[%s1 + $0xc4] sm:$0xf]
      %v321 = vld [vmem:[%s1 + $0xc8] sm:$0xf]
      %v322 = vld [vmem:[%s1 + $0xcc] sm:$0xf]
      %v323 = vld [vmem:[%s1 + $0xd0] sm:$0xf]
      %v324 = vld [vmem:[%s1 + $0xd4] sm:$0xf]
      %v325 = vld [vmem:[%s1 + $0xd8] sm:$0xf]
      %v326 = vld [vmem:[%s1 + $0xdc] sm:$0xf]
      %v327 = vld [vmem:[%s1 + $0xe0] sm:$0xf]
      %v328 = vld [vmem:[%s1 + $0xe4] sm:$0xf]
      %v329 = vld [vmem:[%s1 + $0xe8] sm:$0xf]
      %v330 = vld [vmem:[%s1 + $0xec] sm:$0xf]
      %v331 = vld [vmem:[%s1 + $0xf0] sm:$0xf]
      %v332 = vld [vmem:[%s1 + $0xf4] sm:$0xf]
      %v333 = vld [vmem:[%s1 + $0xf8] sm:$0xf]
      %v334 = vld [vmem:[%s1 + $0xfc] sm:$0xf]
      %v335 = vld [vmem:[%s1 + $0x100] sm:$0xf]
      %v336 = vld [vmem:[%s1 + $0x104] sm:$0xf]
      %v337 = vld [vmem:[%s1 + $0x108] sm:$0xf]
      %v338 = vld [vmem:[%s1 + $0x10c] sm:$0xf]
      %v339 = vld [vmem:[%s1 + $0x110] sm:$0xf]
      %v340 = vld [vmem:[%s1 + $0x114] sm:$0xf]
      %v341 = vld [vmem:[%s1 + $0x118] sm:$0xf]
      %v342 = vld [vmem:[%s1 + $0x11c] sm:$0xf]
      %v343 = vld [vmem:[%s2] sm:$0x1]
      %v416 = vunpack.c.l.b16 %v271
      %v417 = vunpack.c.l.b16 %v272
      %v418 = vunpack.c.l.b16 %v273
      %v419 = vunpack.c.l.b16 %v274
      %v420 = vunpack.c.l.b16 %v275
      %v421 = vunpack.c.l.b16 %v276
      %v422 = vunpack.c.l.b16 %v277
      %v423 = vunpack.c.l.b16 %v278
      %v424 = vunpack.c.l.b16 %v279
      %v425 = vunpack.c.l.b16 %v280
      %v426 = vunpack.c.l.b16 %v281
      %v427 = vunpack.c.l.b16 %v282
      %v428 = vunpack.c.l.b16 %v283
      %v429 = vunpack.c.l.b16 %v284
      %v430 = vunpack.c.l.b16 %v285
      %v431 = vunpack.c.l.b16 %v286
      %v432 = vunpack.c.l.b16 %v287
      %v433 = vunpack.c.l.b16 %v288
      %v434 = vunpack.c.l.b16 %v289
      %v435 = vunpack.c.l.b16 %v290
      %v436 = vunpack.c.l.b16 %v291
      %v437 = vunpack.c.l.b16 %v292
      %v438 = vunpack.c.l.b16 %v293
      %v439 = vunpack.c.l.b16 %v294
      %v440 = vunpack.c.l.b16 %v295
      %v441 = vunpack.c.l.b16 %v296
      %v442 = vunpack.c.l.b16 %v297
      %v443 = vunpack.c.l.b16 %v298
      %v444 = vunpack.c.l.b16 %v299
      %v445 = vunpack.c.l.b16 %v300
      %v446 = vunpack.c.l.b16 %v301
      %v447 = vunpack.c.l.b16 %v302
      %v448 = vunpack.c.l.b16 %v303
      %v449 = vunpack.c.l.b16 %v304
      %v450 = vunpack.c.l.b16 %v305
      %v451 = vunpack.c.l.b16 %v306
      %v452 = vunpack.c.l.b16 %v307
      %v453 = vunpack.c.l.b16 %v308
      %v454 = vunpack.c.l.b16 %v309
      %v455 = vunpack.c.l.b16 %v310
      %v456 = vunpack.c.l.b16 %v311
      %v457 = vunpack.c.l.b16 %v312
      %v458 = vunpack.c.l.b16 %v313
      %v459 = vunpack.c.l.b16 %v314
      %v460 = vunpack.c.l.b16 %v315
      %v461 = vunpack.c.l.b16 %v316
      %v462 = vunpack.c.l.b16 %v317
      %v463 = vunpack.c.l.b16 %v318
      %v464 = vunpack.c.l.b16 %v319
      %v465 = vunpack.c.l.b16 %v320
      %v466 = vunpack.c.l.b16 %v321
      %v467 = vunpack.c.l.b16 %v322
      %v468 = vunpack.c.l.b16 %v323
      %v469 = vunpack.c.l.b16 %v324
      %v470 = vunpack.c.l.b16 %v325
      %v471 = vunpack.c.l.b16 %v326
      %v472 = vunpack.c.l.b16 %v327
      %v473 = vunpack.c.l.b16 %v328
      %v474 = vunpack.c.l.b16 %v329
      %v475 = vunpack.c.l.b16 %v330
      %v476 = vunpack.c.l.b16 %v331
      %v477 = vunpack.c.l.b16 %v332
      %v478 = vunpack.c.l.b16 %v333
      %v479 = vunpack.c.l.b16 %v334
      %v480 = vunpack.c.l.b16 %v335
      %v481 = vunpack.c.l.b16 %v336
      %v482 = vunpack.c.l.b16 %v337
      %v483 = vunpack.c.l.b16 %v338
      %v484 = vunpack.c.l.b16 %v339
      %v485 = vunpack.c.l.b16 %v340
      %v486 = vunpack.c.l.b16 %v341
      %v487 = vunpack.c.l.b16 %v342
      %v488 = vpack.c.b16 %v417, %v416
      %v489 = vpack.c.b16 %v419, %v418
      %v490 = vpack.c.b16 %v421, %v420
      %v491 = vpack.c.b16 %v423, %v422
      %v492 = vpack.c.b16 %v425, %v424
      %v493 = vpack.c.b16 %v427, %v426
      %v494 = vpack.c.b16 %v429, %v428
      %v495 = vpack.c.b16 %v431, %v430
      %v496 = vpack.c.b16 %v433, %v432
      %v497 = vpack.c.b16 %v435, %v434
      %v498 = vpack.c.b16 %v437, %v436
      %v499 = vpack.c.b16 %v439, %v438
      %v500 = vpack.c.b16 %v441, %v440
      %v501 = vpack.c.b16 %v443, %v442
      %v502 = vpack.c.b16 %v445, %v444
      %v503 = vpack.c.b16 %v447, %v446
      %v504 = vpack.c.b16 %v449, %v448
      %v505 = vpack.c.b16 %v451, %v450
      %v506 = vpack.c.b16 %v453, %v452
      %v507 = vpack.c.b16 %v455, %v454
      %v508 = vpack.c.b16 %v457, %v456
      %v509 = vpack.c.b16 %v459, %v458
      %v510 = vpack.c.b16 %v461, %v460
      %v511 = vpack.c.b16 %v463, %v462
      %v512 = vpack.c.b16 %v465, %v464
      %v513 = vpack.c.b16 %v467, %v466
      %v514 = vpack.c.b16 %v469, %v468
      %v515 = vpack.c.b16 %v471, %v470
      %v516 = vpack.c.b16 %v473, %v472
      %v517 = vpack.c.b16 %v475, %v474
      %v518 = vpack.c.b16 %v477, %v476
      %v519 = vpack.c.b16 %v479, %v478
      %v520 = vpack.c.b16 %v481, %v480
      %v521 = vpack.c.b16 %v483, %v482
      %v522 = vpack.c.b16 %v485, %v484
      %v523 = vpack.c.b16 %v487, %v486
      %v561 = vsel %vm261, %v270, 0
      %563 = vmatpush.bf16.msra.mxu0 %v495
      %564 = vmatpush.bf16.msra.mxu0 %v494
      %565 = vmatpush.bf16.msra.mxu0 %v493
      %566 = vmatpush.bf16.msra.mxu0 %v492
      %567 = vmatpush.bf16.msra.mxu0 %v491
      %568 = vmatpush.bf16.msra.mxu0 %v490
      %569 = vmatpush.bf16.msra.mxu0 %v489
      %570 = vmatpush.bf16.msra.mxu0 %v488
      %571 = vmatmul.bf16.gmra.mxu0 %v266
      %v572 = vpop.f32.mrf.mxu0
      %v573 = vadd.f32 %v343, %v572
      %v574 = vpop.f32.mrf.mxu0
      %575 = vdwg.mxu0
      %576 = vmatpush.bf16.msra.mxu0 %v503
      %577 = vmatpush.bf16.msra.mxu0 %v502
      %578 = vmatpush.bf16.msra.mxu0 %v501
      %579 = vmatpush.bf16.msra.mxu0 %v500
      %580 = vmatpush.bf16.msra.mxu0 %v499
      %581 = vmatpush.bf16.msra.mxu0 %v498
      %582 = vmatpush.bf16.msra.mxu0 %v497
      %583 = vmatpush.bf16.msra.mxu0 %v496
      %584 = vmatmul.bf16.gmra.mxu0 %v267
      %v585 = vpop.f32.mrf.mxu0
      %v586 = vadd.f32 %v573, %v585
      %v587 = vpop.f32.mrf.mxu0
      %588 = vdwg.mxu0
      %589 = vmatpush.bf16.msra.mxu0 %v511
      %590 = vmatpush.bf16.msra.mxu0 %v510
      %591 = vmatpush.bf16.msra.mxu0 %v509
      %592 = vmatpush.bf16.msra.mxu0 %v508
      %593 = vmatpush.bf16.msra.mxu0 %v507
      %594 = vmatpush.bf16.msra.mxu0 %v506
      %595 = vmatpush.bf16.msra.mxu0 %v505
      %596 = vmatpush.bf16.msra.mxu0 %v504
      %597 = vmatmul.bf16.gmra.mxu0 %v268
      %v598 = vpop.f32.mrf.mxu0
      %v599 = vadd.f32 %v586, %v598
      %v600 = vpop.f32.mrf.mxu0
      %601 = vdwg.mxu0
      %602 = vmatpush.bf16.msra.mxu0 %v519
      %603 = vmatpush.bf16.msra.mxu0 %v518
      %604 = vmatpush.bf16.msra.mxu0 %v517
      %605 = vmatpush.bf16.msra.mxu0 %v516
      %606 = vmatpush.bf16.msra.mxu0 %v515
      %607 = vmatpush.bf16.msra.mxu0 %v514
      %608 = vmatpush.bf16.msra.mxu0 %v513
      %609 = vmatpush.bf16.msra.mxu0 %v512
      %610 = vmatmul.bf16.gmra.mxu0 %v269
      %v611 = vpop.f32.mrf.mxu0
      %v612 = vadd.f32 %v599, %v611
      %v613 = vpop.f32.mrf.mxu0
      %614 = vdwg.mxu0
      %615 = vmatpush.bf16.msra.mxu0 0
      %616 = vmatpush.bf16.msra.mxu0 0
      %617 = vmatpush.bf16.msra.mxu0 0
      %618 = vmatpush.bf16.msra.mxu0 0
      %619 = vmatpush.bf16.msra.mxu0 %v523
      %620 = vmatpush.bf16.msra.mxu0 %v522
      %621 = vmatpush.bf16.msra.mxu0 %v521
      %622 = vmatpush.bf16.msra.mxu0 %v520
      %623 = vmatmul.bf16.gmra.mxu0 %v561
      %v624 = vpop.f32.mrf.mxu0
      %v625 = vadd.f32 %v612, %v624
      %v626 = vpop.f32.mrf.mxu0
      %627 = vdwg.mxu0
      %v628 = vmax.f32 %v625, 0.0
      %v630 = vrot.slane %v628, 7
      %vm632 = vcmask 1040384
      %v633 = vsel %vm632, 0.0, %v630
      %vm634 = vcmask 1041408
      %v635 = vsel %vm634, %v633, 0.0
      %v637 = vrot.slane 0.0, 1
      %v639 = vrot.slane 0.0, 2
      %v642 = vrot.slane %v635, 1
      %v644 = vrot.slane %v635, 2
      %v646 = vpack.c.bf16 0.0, 0.0
      %v647 = vpack.c.bf16 %v637, %v637
      %v648 = vpack.c.bf16 %v639, %v639
      %v649 = vpack.c.bf16 %v635, %v635
      %v650 = vpack.c.bf16 %v642, %v642
      %v651 = vpack.c.bf16 %v644, %v644
      %v652 = vld [vmem:[%s3] sm:$0xf]
      %v653 = vld [vmem:[%s3 + $0x4] sm:$0xf]
      %v654 = vld [vmem:[%s3 + $0x8] sm:$0xf]
      %v655 = vld [vmem:[%s3 + $0xc] sm:$0xf]
      %v656 = vld [vmem:[%s3 + $0x10] sm:$0xf]
      %v657 = vld [vmem:[%s3 + $0x14] sm:$0xf]
      %v658 = vld [vmem:[%s3 + $0x18] sm:$0xf]
      %v659 = vld [vmem:[%s3 + $0x1c] sm:$0xf]
      %v660 = vld [vmem:[%s3 + $0x20] sm:$0xf]
      %v661 = vld [vmem:[%s3 + $0x24] sm:$0xf]
      %v662 = vld [vmem:[%s3 + $0x28] sm:$0xf]
      %v663 = vld [vmem:[%s3 + $0x2c] sm:$0xf]
      %v664 = vld [vmem:[%s3 + $0x30] sm:$0xf]
      %v665 = vld [vmem:[%s3 + $0x34] sm:$0xf]
      %v666 = vld [vmem:[%s3 + $0x38] sm:$0xf]
      %v667 = vld [vmem:[%s3 + $0x3c] sm:$0xf]
      %v668 = vld [vmem:[%s3 + $0x40] sm:$0xf]
      %v669 = vld [vmem:[%s3 + $0x44] sm:$0xf]
      %v670 = vld [vmem:[%s3 + $0x48] sm:$0xf]
      %v671 = vld [vmem:[%s3 + $0x4c] sm:$0xf]
      %v672 = vld [vmem:[%s3 + $0x50] sm:$0xf]
      %v673 = vld [vmem:[%s3 + $0x54] sm:$0xf]
      %v674 = vld [vmem:[%s3 + $0x58] sm:$0xf]
      %v675 = vld [vmem:[%s3 + $0x5c] sm:$0xf]
      %v676 = vld [vmem:[%s3 + $0x60] sm:$0xf]
      %v677 = vld [vmem:[%s3 + $0x64] sm:$0xf]
      %v678 = vld [vmem:[%s3 + $0x68] sm:$0xf]
      %v679 = vld [vmem:[%s3 + $0x6c] sm:$0xf]
      %v680 = vld [vmem:[%s3 + $0x70] sm:$0xf]
      %v681 = vld [vmem:[%s3 + $0x74] sm:$0xf]
      %v682 = vld [vmem:[%s3 + $0x78] sm:$0xf]
      %v683 = vld [vmem:[%s3 + $0x7c] sm:$0xf]
      %v684 = vld [vmem:[%s3 + $0x80] sm:$0xf]
      %v685 = vld [vmem:[%s3 + $0x84] sm:$0xf]
      %v686 = vld [vmem:[%s3 + $0x88] sm:$0xf]
      %v687 = vld [vmem:[%s3 + $0x8c] sm:$0xf]
      %v688 = vld [vmem:[%s3 + $0x90] sm:$0xf]
      %v689 = vld [vmem:[%s3 + $0x94] sm:$0xf]
      %v690 = vld [vmem:[%s3 + $0x98] sm:$0xf]
      %v691 = vld [vmem:[%s3 + $0x9c] sm:$0xf]
      %v692 = vld [vmem:[%s3 + $0xa0] sm:$0xf]
      %v693 = vld [vmem:[%s3 + $0xa4] sm:$0xf]
      %v694 = vld [vmem:[%s3 + $0xa8] sm:$0xf]
      %v695 = vld [vmem:[%s3 + $0xac] sm:$0xf]
      %v696 = vld [vmem:[%s3 + $0xb0] sm:$0xf]
      %v697 = vld [vmem:[%s3 + $0xb4] sm:$0xf]
      %v698 = vld [vmem:[%s3 + $0xb8] sm:$0xf]
      %v699 = vld [vmem:[%s3 + $0xbc] sm:$0xf]
      %v700 = vld [vmem:[%s3 + $0xc0] sm:$0xf]
      %v701 = vld [vmem:[%s3 + $0xc4] sm:$0xf]
      %v702 = vld [vmem:[%s3 + $0xc8] sm:$0xf]
      %v703 = vld [vmem:[%s3 + $0xcc] sm:$0xf]
      %v704 = vld [vmem:[%s3 + $0xd0] sm:$0xf]
      %v705 = vld [vmem:[%s3 + $0xd4] sm:$0xf]
      %v706 = vld [vmem:[%s3 + $0xd8] sm:$0xf]
      %v707 = vld [vmem:[%s3 + $0xdc] sm:$0xf]
      %v708 = vld [vmem:[%s3 + $0xe0] sm:$0xf]
      %v709 = vld [vmem:[%s3 + $0xe4] sm:$0xf]
      %v710 = vld [vmem:[%s3 + $0xe8] sm:$0xf]
      %v711 = vld [vmem:[%s3 + $0xec] sm:$0xf]
      %v712 = vld [vmem:[%s3 + $0xf0] sm:$0xf]
      %v713 = vld [vmem:[%s3 + $0xf4] sm:$0xf]
      %v714 = vld [vmem:[%s3 + $0xf8] sm:$0xf]
      %v715 = vld [vmem:[%s3 + $0xfc] sm:$0xf]
      %v716 = vld [vmem:[%s3 + $0x100] sm:$0xf]
      %v717 = vld [vmem:[%s3 + $0x104] sm:$0xf]
      %v718 = vld [vmem:[%s3 + $0x108] sm:$0xf]
      %v719 = vld [vmem:[%s3 + $0x10c] sm:$0xf]
      %v720 = vld [vmem:[%s3 + $0x110] sm:$0xf]
      %v721 = vld [vmem:[%s3 + $0x114] sm:$0xf]
      %v722 = vld [vmem:[%s3 + $0x118] sm:$0xf]
      %v723 = vld [vmem:[%s3 + $0x11c] sm:$0xf]
      %v724 = vld [vmem:[%s3 + $0x120] sm:$0xf]
      %v725 = vld [vmem:[%s3 + $0x124] sm:$0xf]
      %v726 = vld [vmem:[%s3 + $0x128] sm:$0xf]
      %v727 = vld [vmem:[%s3 + $0x12c] sm:$0xf]
      %v728 = vld [vmem:[%s3 + $0x130] sm:$0xf]
      %v729 = vld [vmem:[%s3 + $0x134] sm:$0xf]
      %v730 = vld [vmem:[%s3 + $0x138] sm:$0xf]
      %v731 = vld [vmem:[%s3 + $0x13c] sm:$0xf]
      %v732 = vld [vmem:[%s3 + $0x140] sm:$0xf]
      %v733 = vld [vmem:[%s3 + $0x144] sm:$0xf]
      %v734 = vld [vmem:[%s3 + $0x148] sm:$0xf]
      %v735 = vld [vmem:[%s3 + $0x14c] sm:$0xf]
      %v736 = vld [vmem:[%s3 + $0x150] sm:$0xf]
      %v737 = vld [vmem:[%s3 + $0x154] sm:$0xf]
      %v738 = vld [vmem:[%s3 + $0x158] sm:$0xf]
      %v739 = vld [vmem:[%s3 + $0x15c] sm:$0xf]
      %v740 = vld [vmem:[%s3 + $0x160] sm:$0xf]
      %v741 = vld [vmem:[%s3 + $0x164] sm:$0xf]
      %v742 = vld [vmem:[%s3 + $0x168] sm:$0xf]
      %v743 = vld [vmem:[%s3 + $0x16c] sm:$0xf]
      %v744 = vld [vmem:[%s3 + $0x170] sm:$0xf]
      %v745 = vld [vmem:[%s3 + $0x174] sm:$0xf]
      %v746 = vld [vmem:[%s3 + $0x178] sm:$0xf]
      %v747 = vld [vmem:[%s3 + $0x17c] sm:$0xf]
      %v748 = vld [vmem:[%s3 + $0x180] sm:$0xf]
      %v749 = vld [vmem:[%s3 + $0x184] sm:$0xf]
      %v750 = vld [vmem:[%s3 + $0x188] sm:$0xf]
      %v751 = vld [vmem:[%s3 + $0x18c] sm:$0xf]
      %v752 = vld [vmem:[%s3 + $0x190] sm:$0xf]
      %v753 = vld [vmem:[%s3 + $0x194] sm:$0xf]
      %v754 = vld [vmem:[%s3 + $0x198] sm:$0xf]
      %v755 = vld [vmem:[%s3 + $0x19c] sm:$0xf]
      %v756 = vld [vmem:[%s3 + $0x1a0] sm:$0xf]
      %v757 = vld [vmem:[%s3 + $0x1a4] sm:$0xf]
      %v758 = vld [vmem:[%s3 + $0x1a8] sm:$0xf]
      %v759 = vld [vmem:[%s3 + $0x1ac] sm:$0xf]
      %v760 = vld [vmem:[%s3 + $0x1b0] sm:$0xf]
      %v761 = vld [vmem:[%s3 + $0x1b4] sm:$0xf]
      %v762 = vld [vmem:[%s3 + $0x1b8] sm:$0xf]
      %v763 = vld [vmem:[%s3 + $0x1bc] sm:$0xf]
      %v764 = vld [vmem:[%s3 + $0x1c0] sm:$0xf]
      %v765 = vld [vmem:[%s3 + $0x1c4] sm:$0xf]
      %v766 = vld [vmem:[%s3 + $0x1c8] sm:$0xf]
      %v767 = vld [vmem:[%s3 + $0x1cc] sm:$0xf]
      %v768 = vld [vmem:[%s3 + $0x1d0] sm:$0xf]
      %v769 = vld [vmem:[%s3 + $0x1d4] sm:$0xf]
      %v770 = vld [vmem:[%s3 + $0x1d8] sm:$0xf]
      %v771 = vld [vmem:[%s3 + $0x1dc] sm:$0xf]
      %v772 = vld [vmem:[%s3 + $0x1e0] sm:$0xf]
      %v773 = vld [vmem:[%s3 + $0x1e4] sm:$0xf]
      %v774 = vld [vmem:[%s3 + $0x1e8] sm:$0xf]
      %v775 = vld [vmem:[%s3 + $0x1ec] sm:$0xf]
      %v776 = vld [vmem:[%s3 + $0x1f0] sm:$0xf]
      %v777 = vld [vmem:[%s3 + $0x1f4] sm:$0xf]
      %v778 = vld [vmem:[%s3 + $0x1f8] sm:$0xf]
      %v779 = vld [vmem:[%s3 + $0x1fc] sm:$0xf]
      %v780 = vld [vmem:[%s3 + $0x200] sm:$0xf]
      %v781 = vld [vmem:[%s3 + $0x204] sm:$0xf]
      %v782 = vld [vmem:[%s3 + $0x208] sm:$0xf]
      %v783 = vld [vmem:[%s3 + $0x20c] sm:$0xf]
      %v784 = vld [vmem:[%s3 + $0x210] sm:$0xf]
      %v785 = vld [vmem:[%s3 + $0x214] sm:$0xf]
      %v786 = vld [vmem:[%s3 + $0x218] sm:$0xf]
      %v787 = vld [vmem:[%s3 + $0x21c] sm:$0xf]
      %v788 = vld [vmem:[%s3 + $0x220] sm:$0xf]
      %v789 = vld [vmem:[%s3 + $0x224] sm:$0xf]
      %v790 = vld [vmem:[%s3 + $0x228] sm:$0xf]
      %v791 = vld [vmem:[%s3 + $0x22c] sm:$0xf]
      %v792 = vld [vmem:[%s3 + $0x230] sm:$0xf]
      %v793 = vld [vmem:[%s3 + $0x234] sm:$0xf]
      %v794 = vld [vmem:[%s3 + $0x238] sm:$0xf]
      %v795 = vld [vmem:[%s3 + $0x23c] sm:$0xf]
      %v796 = vld [vmem:[%s4] sm:$0x1]
      %v941 = vunpack.c.l.b16 %v652
      %v942 = vunpack.c.l.b16 %v653
      %v943 = vunpack.c.l.b16 %v654
      %v944 = vunpack.c.l.b16 %v655
      %v945 = vunpack.c.l.b16 %v656
      %v946 = vunpack.c.l.b16 %v657
      %v947 = vunpack.c.l.b16 %v658
      %v948 = vunpack.c.l.b16 %v659
      %v949 = vunpack.c.l.b16 %v660
      %v950 = vunpack.c.l.b16 %v661
      %v951 = vunpack.c.l.b16 %v662
      %v952 = vunpack.c.l.b16 %v663
      %v953 = vunpack.c.l.b16 %v664
      %v954 = vunpack.c.l.b16 %v665
      %v955 = vunpack.c.l.b16 %v666
      %v956 = vunpack.c.l.b16 %v667
      %v957 = vunpack.c.l.b16 %v668
      %v958 = vunpack.c.l.b16 %v669
      %v959 = vunpack.c.l.b16 %v670
      %v960 = vunpack.c.l.b16 %v671
      %v961 = vunpack.c.l.b16 %v672
      %v962 = vunpack.c.l.b16 %v673
      %v963 = vunpack.c.l.b16 %v674
      %v964 = vunpack.c.l.b16 %v675
      %v965 = vunpack.c.l.b16 %v676
      %v966 = vunpack.c.l.b16 %v677
      %v967 = vunpack.c.l.b16 %v678
      %v968 = vunpack.c.l.b16 %v679
      %v969 = vunpack.c.l.b16 %v680
      %v970 = vunpack.c.l.b16 %v681
      %v971 = vunpack.c.l.b16 %v682
      %v972 = vunpack.c.l.b16 %v683
      %v973 = vunpack.c.l.b16 %v684
      %v974 = vunpack.c.l.b16 %v685
      %v975 = vunpack.c.l.b16 %v686
      %v976 = vunpack.c.l.b16 %v687
      %v977 = vunpack.c.l.b16 %v688
      %v978 = vunpack.c.l.b16 %v689
      %v979 = vunpack.c.l.b16 %v690
      %v980 = vunpack.c.l.b16 %v691
      %v981 = vunpack.c.l.b16 %v692
      %v982 = vunpack.c.l.b16 %v693
      %v983 = vunpack.c.l.b16 %v694
      %v984 = vunpack.c.l.b16 %v695
      %v985 = vunpack.c.l.b16 %v696
      %v986 = vunpack.c.l.b16 %v697
      %v987 = vunpack.c.l.b16 %v698
      %v988 = vunpack.c.l.b16 %v699
      %v989 = vunpack.c.l.b16 %v700
      %v990 = vunpack.c.l.b16 %v701
      %v991 = vunpack.c.l.b16 %v702
      %v992 = vunpack.c.l.b16 %v703
      %v993 = vunpack.c.l.b16 %v704
      %v994 = vunpack.c.l.b16 %v705
      %v995 = vunpack.c.l.b16 %v706
      %v996 = vunpack.c.l.b16 %v707
      %v997 = vunpack.c.l.b16 %v708
      %v998 = vunpack.c.l.b16 %v709
      %v999 = vunpack.c.l.b16 %v710
      %v1000 = vunpack.c.l.b16 %v711
      %v1001 = vunpack.c.l.b16 %v712
      %v1002 = vunpack.c.l.b16 %v713
      %v1003 = vunpack.c.l.b16 %v714
      %v1004 = vunpack.c.l.b16 %v715
      %v1005 = vunpack.c.l.b16 %v716
      %v1006 = vunpack.c.l.b16 %v717
      %v1007 = vunpack.c.l.b16 %v718
      %v1008 = vunpack.c.l.b16 %v719
      %v1009 = vunpack.c.l.b16 %v720
      %v1010 = vunpack.c.l.b16 %v721
      %v1011 = vunpack.c.l.b16 %v722
      %v1012 = vunpack.c.l.b16 %v723
      %v1013 = vunpack.c.l.b16 %v724
      %v1014 = vunpack.c.l.b16 %v725
      %v1015 = vunpack.c.l.b16 %v726
      %v1016 = vunpack.c.l.b16 %v727
      %v1017 = vunpack.c.l.b16 %v728
      %v1018 = vunpack.c.l.b16 %v729
      %v1019 = vunpack.c.l.b16 %v730
      %v1020 = vunpack.c.l.b16 %v731
      %v1021 = vunpack.c.l.b16 %v732
      %v1022 = vunpack.c.l.b16 %v733
      %v1023 = vunpack.c.l.b16 %v734
      %v1024 = vunpack.c.l.b16 %v735
      %v1025 = vunpack.c.l.b16 %v736
      %v1026 = vunpack.c.l.b16 %v737
      %v1027 = vunpack.c.l.b16 %v738
      %v1028 = vunpack.c.l.b16 %v739
      %v1029 = vunpack.c.l.b16 %v740
      %v1030 = vunpack.c.l.b16 %v741
      %v1031 = vunpack.c.l.b16 %v742
      %v1032 = vunpack.c.l.b16 %v743
      %v1033 = vunpack.c.l.b16 %v744
      %v1034 = vunpack.c.l.b16 %v745
      %v1035 = vunpack.c.l.b16 %v746
      %v1036 = vunpack.c.l.b16 %v747
      %v1037 = vunpack.c.l.b16 %v748
      %v1038 = vunpack.c.l.b16 %v749
      %v1039 = vunpack.c.l.b16 %v750
      %v1040 = vunpack.c.l.b16 %v751
      %v1041 = vunpack.c.l.b16 %v752
      %v1042 = vunpack.c.l.b16 %v753
      %v1043 = vunpack.c.l.b16 %v754
      %v1044 = vunpack.c.l.b16 %v755
      %v1045 = vunpack.c.l.b16 %v756
      %v1046 = vunpack.c.l.b16 %v757
      %v1047 = vunpack.c.l.b16 %v758
      %v1048 = vunpack.c.l.b16 %v759
      %v1049 = vunpack.c.l.b16 %v760
      %v1050 = vunpack.c.l.b16 %v761
      %v1051 = vunpack.c.l.b16 %v762
      %v1052 = vunpack.c.l.b16 %v763
      %v1053 = vunpack.c.l.b16 %v764
      %v1054 = vunpack.c.l.b16 %v765
      %v1055 = vunpack.c.l.b16 %v766
      %v1056 = vunpack.c.l.b16 %v767
      %v1057 = vunpack.c.l.b16 %v768
      %v1058 = vunpack.c.l.b16 %v769
      %v1059 = vunpack.c.l.b16 %v770
      %v1060 = vunpack.c.l.b16 %v771
      %v1061 = vunpack.c.l.b16 %v772
      %v1062 = vunpack.c.l.b16 %v773
      %v1063 = vunpack.c.l.b16 %v774
      %v1064 = vunpack.c.l.b16 %v775
      %v1065 = vunpack.c.l.b16 %v776
      %v1066 = vunpack.c.l.b16 %v777
      %v1067 = vunpack.c.l.b16 %v778
      %v1068 = vunpack.c.l.b16 %v779
      %v1069 = vunpack.c.l.b16 %v780
      %v1070 = vunpack.c.l.b16 %v781
      %v1071 = vunpack.c.l.b16 %v782
      %v1072 = vunpack.c.l.b16 %v783
      %v1073 = vunpack.c.l.b16 %v784
      %v1074 = vunpack.c.l.b16 %v785
      %v1075 = vunpack.c.l.b16 %v786
      %v1076 = vunpack.c.l.b16 %v787
      %v1077 = vunpack.c.l.b16 %v788
      %v1078 = vunpack.c.l.b16 %v789
      %v1079 = vunpack.c.l.b16 %v790
      %v1080 = vunpack.c.l.b16 %v791
      %v1081 = vunpack.c.l.b16 %v792
      %v1082 = vunpack.c.l.b16 %v793
      %v1083 = vunpack.c.l.b16 %v794
      %v1084 = vunpack.c.l.b16 %v795
      %v1085 = vpack.c.b16 %v942, %v941
      %v1086 = vpack.c.b16 %v944, %v943
      %v1087 = vpack.c.b16 %v946, %v945
      %v1088 = vpack.c.b16 %v948, %v947
      %v1089 = vpack.c.b16 %v950, %v949
      %v1090 = vpack.c.b16 %v952, %v951
      %v1091 = vpack.c.b16 %v954, %v953
      %v1092 = vpack.c.b16 %v956, %v955
      %v1093 = vpack.c.b16 %v958, %v957
      %v1094 = vpack.c.b16 %v960, %v959
      %v1095 = vpack.c.b16 %v962, %v961
      %v1096 = vpack.c.b16 %v964, %v963
      %v1097 = vpack.c.b16 %v966, %v965
      %v1098 = vpack.c.b16 %v968, %v967
      %v1099 = vpack.c.b16 %v970, %v969
      %v1100 = vpack.c.b16 %v972, %v971
      %v1101 = vpack.c.b16 %v974, %v973
      %v1102 = vpack.c.b16 %v976, %v975
      %v1103 = vpack.c.b16 %v978, %v977
      %v1104 = vpack.c.b16 %v980, %v979
      %v1105 = vpack.c.b16 %v982, %v981
      %v1106 = vpack.c.b16 %v984, %v983
      %v1107 = vpack.c.b16 %v986, %v985
      %v1108 = vpack.c.b16 %v988, %v987
      %v1109 = vpack.c.b16 %v990, %v989
      %v1110 = vpack.c.b16 %v992, %v991
      %v1111 = vpack.c.b16 %v994, %v993
      %v1112 = vpack.c.b16 %v996, %v995
      %v1113 = vpack.c.b16 %v998, %v997
      %v1114 = vpack.c.b16 %v1000, %v999
      %v1115 = vpack.c.b16 %v1002, %v1001
      %v1116 = vpack.c.b16 %v1004, %v1003
      %v1117 = vpack.c.b16 %v1006, %v1005
      %v1118 = vpack.c.b16 %v1008, %v1007
      %v1119 = vpack.c.b16 %v1010, %v1009
      %v1120 = vpack.c.b16 %v1012, %v1011
      %v1121 = vpack.c.b16 %v1014, %v1013
      %v1122 = vpack.c.b16 %v1016, %v1015
      %v1123 = vpack.c.b16 %v1018, %v1017
      %v1124 = vpack.c.b16 %v1020, %v1019
      %v1125 = vpack.c.b16 %v1022, %v1021
      %v1126 = vpack.c.b16 %v1024, %v1023
      %v1127 = vpack.c.b16 %v1026, %v1025
      %v1128 = vpack.c.b16 %v1028, %v1027
      %v1129 = vpack.c.b16 %v1030, %v1029
      %v1130 = vpack.c.b16 %v1032, %v1031
      %v1131 = vpack.c.b16 %v1034, %v1033
      %v1132 = vpack.c.b16 %v1036, %v1035
      %v1133 = vpack.c.b16 %v1038, %v1037
      %v1134 = vpack.c.b16 %v1040, %v1039
      %v1135 = vpack.c.b16 %v1042, %v1041
      %v1136 = vpack.c.b16 %v1044, %v1043
      %v1137 = vpack.c.b16 %v1046, %v1045
      %v1138 = vpack.c.b16 %v1048, %v1047
      %v1139 = vpack.c.b16 %v1050, %v1049
      %v1140 = vpack.c.b16 %v1052, %v1051
      %v1141 = vpack.c.b16 %v1054, %v1053
      %v1142 = vpack.c.b16 %v1056, %v1055
      %v1143 = vpack.c.b16 %v1058, %v1057
      %v1144 = vpack.c.b16 %v1060, %v1059
      %v1145 = vpack.c.b16 %v1062, %v1061
      %v1146 = vpack.c.b16 %v1064, %v1063
      %v1147 = vpack.c.b16 %v1066, %v1065
      %v1148 = vpack.c.b16 %v1068, %v1067
      %v1149 = vpack.c.b16 %v1070, %v1069
      %v1150 = vpack.c.b16 %v1072, %v1071
      %v1151 = vpack.c.b16 %v1074, %v1073
      %v1152 = vpack.c.b16 %v1076, %v1075
      %v1153 = vpack.c.b16 %v1078, %v1077
      %v1154 = vpack.c.b16 %v1080, %v1079
      %v1155 = vpack.c.b16 %v1082, %v1081
      %v1156 = vpack.c.b16 %v1084, %v1083
      %1229 = vmatpush.bf16.msra.mxu0 %v1092
      %1230 = vmatpush.bf16.msra.mxu0 %v1091
      %1231 = vmatpush.bf16.msra.mxu0 %v1090
      %1232 = vmatpush.bf16.msra.mxu0 %v1089
      %1233 = vmatpush.bf16.msra.mxu0 %v1088
      %1234 = vmatpush.bf16.msra.mxu0 %v1087
      %1235 = vmatpush.bf16.msra.mxu0 %v1086
      %1236 = vmatpush.bf16.msra.mxu0 %v1085
      %1237 = vmatmul.bf16.gmra.mxu0 %v646
      %v1238 = vpop.f32.mrf.mxu0
      %v1239 = vadd.f32 %v796, %v1238
      %v1240 = vpop.f32.mrf.mxu0
      %1241 = vdwg.mxu0
      %1242 = vmatpush.bf16.msra.mxu0 %v1100
      %1243 = vmatpush.bf16.msra.mxu0 %v1099
      %1244 = vmatpush.bf16.msra.mxu0 %v1098
      %1245 = vmatpush.bf16.msra.mxu0 %v1097
      %1246 = vmatpush.bf16.msra.mxu0 %v1096
      %1247 = vmatpush.bf16.msra.mxu0 %v1095
      %1248 = vmatpush.bf16.msra.mxu0 %v1094
      %1249 = vmatpush.bf16.msra.mxu0 %v1093
      %1250 = vmatmul.bf16.gmra.mxu0 %v647
      %v1251 = vpop.f32.mrf.mxu0
      %v1252 = vadd.f32 %v1239, %v1251
      %v1253 = vpop.f32.mrf.mxu0
      %1254 = vdwg.mxu0
      %1255 = vmatpush.bf16.msra.mxu0 %v1108
      %1256 = vmatpush.bf16.msra.mxu0 %v1107
      %1257 = vmatpush.bf16.msra.mxu0 %v1106
      %1258 = vmatpush.bf16.msra.mxu0 %v1105
      %1259 = vmatpush.bf16.msra.mxu0 %v1104
      %1260 = vmatpush.bf16.msra.mxu0 %v1103
      %1261 = vmatpush.bf16.msra.mxu0 %v1102
      %1262 = vmatpush.bf16.msra.mxu0 %v1101
      %1263 = vmatmul.bf16.gmra.mxu0 %v648
      %v1264 = vpop.f32.mrf.mxu0
      %v1265 = vadd.f32 %v1252, %v1264
      %v1266 = vpop.f32.mrf.mxu0
      %1267 = vdwg.mxu0
      %1268 = vmatpush.bf16.msra.mxu0 %v1116
      %1269 = vmatpush.bf16.msra.mxu0 %v1115
      %1270 = vmatpush.bf16.msra.mxu0 %v1114
      %1271 = vmatpush.bf16.msra.mxu0 %v1113
      %1272 = vmatpush.bf16.msra.mxu0 %v1112
      %1273 = vmatpush.bf16.msra.mxu0 %v1111
      %1274 = vmatpush.bf16.msra.mxu0 %v1110
      %1275 = vmatpush.bf16.msra.mxu0 %v1109
      %1276 = vmatmul.bf16.gmra.mxu0 %v649
      %v1277 = vpop.f32.mrf.mxu0
      %v1278 = vadd.f32 %v1265, %v1277
      %v1279 = vpop.f32.mrf.mxu0
      %1280 = vdwg.mxu0
      %1281 = vmatpush.bf16.msra.mxu0 %v1124
      %1282 = vmatpush.bf16.msra.mxu0 %v1123
      %1283 = vmatpush.bf16.msra.mxu0 %v1122
      %1284 = vmatpush.bf16.msra.mxu0 %v1121
      %1285 = vmatpush.bf16.msra.mxu0 %v1120
      %1286 = vmatpush.bf16.msra.mxu0 %v1119
      %1287 = vmatpush.bf16.msra.mxu0 %v1118
      %1288 = vmatpush.bf16.msra.mxu0 %v1117
      %1289 = vmatmul.bf16.gmra.mxu0 %v650
      %v1290 = vpop.f32.mrf.mxu0
      %v1291 = vadd.f32 %v1278, %v1290
      %v1292 = vpop.f32.mrf.mxu0
      %1293 = vdwg.mxu0
      %1294 = vmatpush.bf16.msra.mxu0 %v1132
      %1295 = vmatpush.bf16.msra.mxu0 %v1131
      %1296 = vmatpush.bf16.msra.mxu0 %v1130
      %1297 = vmatpush.bf16.msra.mxu0 %v1129
      %1298 = vmatpush.bf16.msra.mxu0 %v1128
      %1299 = vmatpush.bf16.msra.mxu0 %v1127
      %1300 = vmatpush.bf16.msra.mxu0 %v1126
      %1301 = vmatpush.bf16.msra.mxu0 %v1125
      %1302 = vmatmul.bf16.gmra.mxu0 %v651
      %v1303 = vpop.f32.mrf.mxu0
      %v1304 = vadd.f32 %v1291, %v1303
      %v1305 = vpop.f32.mrf.mxu0
      %1306 = vdwg.mxu0
      %1307 = vmatpush.bf16.msra.mxu0 %v1140
      %1308 = vmatpush.bf16.msra.mxu0 %v1139
      %1309 = vmatpush.bf16.msra.mxu0 %v1138
      %1310 = vmatpush.bf16.msra.mxu0 %v1137
      %1311 = vmatpush.bf16.msra.mxu0 %v1136
      %1312 = vmatpush.bf16.msra.mxu0 %v1135
      %1313 = vmatpush.bf16.msra.mxu0 %v1134
      %1314 = vmatpush.bf16.msra.mxu0 %v1133
      %1315 = vmatmul.bf16.gmra.mxu0 %v646
      %v1316 = vpop.f32.mrf.mxu0
      %v1317 = vadd.f32 %v1304, %v1316
      %v1318 = vpop.f32.mrf.mxu0
      %1319 = vdwg.mxu0
      %1320 = vmatpush.bf16.msra.mxu0 %v1148
      %1321 = vmatpush.bf16.msra.mxu0 %v1147
      %1322 = vmatpush.bf16.msra.mxu0 %v1146
      %1323 = vmatpush.bf16.msra.mxu0 %v1145
      %1324 = vmatpush.bf16.msra.mxu0 %v1144
      %1325 = vmatpush.bf16.msra.mxu0 %v1143
      %1326 = vmatpush.bf16.msra.mxu0 %v1142
      %1327 = vmatpush.bf16.msra.mxu0 %v1141
      %1328 = vmatmul.bf16.gmra.mxu0 %v647
      %v1329 = vpop.f32.mrf.mxu0
      %v1330 = vadd.f32 %v1317, %v1329
      %v1331 = vpop.f32.mrf.mxu0
      %1332 = vdwg.mxu0
      %1333 = vmatpush.bf16.msra.mxu0 %v1156
      %1334 = vmatpush.bf16.msra.mxu0 %v1155
      %1335 = vmatpush.bf16.msra.mxu0 %v1154
      %1336 = vmatpush.bf16.msra.mxu0 %v1153
      %1337 = vmatpush.bf16.msra.mxu0 %v1152
      %1338 = vmatpush.bf16.msra.mxu0 %v1151
      %1339 = vmatpush.bf16.msra.mxu0 %v1150
      %1340 = vmatpush.bf16.msra.mxu0 %v1149
      %1341 = vmatmul.bf16.gmra.mxu0 %v648
      %v1342 = vpop.f32.mrf.mxu0
      %v1343 = vadd.f32 %v1330, %v1342
      %v1344 = vpop.f32.mrf.mxu0
      %1345 = vdwg.mxu0
      %v1346 = vmax.f32 %v1343, 0.0
      %v1347 = vpack.c.bf16 %v1346, %v1346
      %vm1348 = vcmask 1040384
      %vm1349 = vsmask.f32 256
      %vm1350 = vmand %vm1348, %vm1349
      %v1351 = vld [vmem:[%s217] sm:$0x1]
      %v1352 = vsel %vm1350, %v1347, %v1351
      %1353 = vst [vmem:[%s217] sm:$0x1] %v1352
      %p1354 = scmp.lt.s32.totalorder %s16, 1
      %s1355 = scalar_select %p1354, %s16, 1
      %s1356 = scalar_lea.vmem %s5, %s1355
      // Predicated region
      $region41: #{detector_forward.12} parent=39 // pred_check
        %p1357 = pneg %p144
      $region42: #{detector_forward.12} parent=39 // pred_check_branch
        %1359 = sbr.rel (%p1357) target = $region44
      $region43: #{detector_forward.12} parent=39 // pred_region
        _
      $region44: #{detector_forward.12} parent=39 // pred_fallthru
        _
    $region40: #{detector_forward.12} parent=5 // pred_fallthru
      _
    %p1360 = scmp.le.s32.totalorder 2, %s11
    // Predicated region
    $region45: #{detector_forward.12} parent=5 // pred_check
      %p1361 = pneg %p1360
    $region46: #{detector_forward.12} parent=5 // pred_check_branch
      %1363 = sbr.rel (%p1361) target = $region48
    $region47: #{detector_forward.12} parent=5 // pred_region
      %s1364 = ssub.s32 %s11, 2
      // Predicated region
      $region49: #{detector_forward.12} parent=47 // pred_check
        %p1365 = pneg %p150
      $region50: #{detector_forward.12} parent=47 // pred_check_branch
        %1367 = sbr.rel (%p1365) target = $region52
      $region51: #{detector_forward.12} parent=47 // pred_region
        %p1368 = scmp.lt.s32.totalorder %s17, 1
        %s1369 = scalar_select %p1368, %s17, 1
        %s1370 = scalar_lea.vmem %s5, %s1369
      $region52: #{detector_forward.12} parent=47 // pred_fallthru
        _
    $region48: #{detector_forward.12} parent=5 // pred_fallthru
      _
  $region6: #{detector_forward.12} parent=0 // loop_footer
    %s15 = sadd.s32 1, %s11
  $region7: #{detector_forward.12} parent=0 // loop_footer_branch
    %10 = sbr.rel target = $region3
  $region8: #{detector_forward.12} parent=0 // loop_exit
    _

// kernel: detector_forward.13
$region0: #{detector_forward.13}
  #allocation0 [shape = 'u32[]', space=smem, size = 0x4, offset = 0x4, fixed_abs, tag = 'smem constant byte address 0x4 - core index']
  #allocation1 [shape = 'u32[72,128]{1,0:T(1,128)}', space=vmem, size = 0x9000, scoped, tag = 'internal scratch']
  %s0 = inlined_call_operand.vmem [shape: bf16[2,1,2,2,128], index: 0, kind: input, shape index: {}]
  %s1 = inlined_call_operand.vmem [shape: bf16[512,512], index: 1, kind: input, shape index: {}]
  %s2 = inlined_call_operand.vmem [shape: f32[1,512], index: 2, kind: input, shape index: {}]
  %s3 = inlined_call_operand.vmem [shape: bf16[2,1,512], index: 3, kind: output, shape index: {}]
  %s4 = sld [smem:[#allocation0]]
  $region45: #{detector_forward.13} parent=0
    _
  %s6 = ssub.s32 1, %s4
  %s7 = scalar_select 0, %s6, %s4
  loop: start=0, step=1, limit=4
  $region2: #{detector_forward.13} parent=0 // loop_pre_header
    _
  $region3: #{detector_forward.13} parent=0 // loop_header
    %s9 = sphi 0, %s13
    %p10 = scmp.ge.s32.totalorder %s9, 4
    %s19 = sphi 0, %s21
    %s22 = sphi 0, %s19
    %s23 = sphi 0, %s22
    %s39 = sphi 0, %s23
    %s43 = sphi 0, %s43
    %s45 = sphi 0, %s43
    %s46 = sphi 0, %s45
    %s60 = sphi 0, %s46
    %s64 = sphi 0, %s64
    %s66 = sphi 0, %s64
    %s67 = sphi 0, %s66
    %s81 = sphi 0, %s67
    %s87 = sphi 0, %s89
    %s90 = sphi 0, %s87
    %s91 = sphi 0, %s90
    %s107 = sphi 0, %s91
  $region4: #{detector_forward.13} parent=0 // loop_header_branch
    %12 = sbr.rel (%p10) target = $region8
  $region5: #{detector_forward.13} parent=0 // loop_body
    %s14 = ssub.s32 %s9, 1
    %s15 = ssub.s32 %s9, 2
    %s16 = sadd.s32 %s9, 1
    %s17 = ssub.s32 %s9, %s16
    %p18 = scmp.eq.s32.totalorder %s17, 0
    %s20 = sadd.s32 %s19, 1
    %s21 = scalar_select %p18, %s19, %s20
    %p24 = pneg %p18
    %p25 = scmp.eq.s32.totalorder %s9, 1
    %p26 = por %p24, %p25
    %p27 = scmp.ne.s32.totalorder %s19, %s22
    %p28 = scmp.eq.s32.totalorder %s9, 0
    %p29 = por %p27, %p28
    %p30 = scmp.ne.s32.totalorder %s19, %s22
    %p31 = scmp.eq.s32.totalorder %s14, 1
    %p32 = por %p30, %p31
    %p33 = scmp.ne.s32.totalorder %s22, %s23
    %p34 = scmp.eq.s32.totalorder %s14, 0
    %p35 = por %p33, %p34
    %p36 = scmp.ne.s32.totalorder %s22, %s23
    %p37 = scmp.eq.s32.totalorder %s15, 1
    %p38 = por %p36, %p37
    %p40 = scmp.ne.s32.totalorder %s23, %s39
    %p41 = scmp.eq.s32.totalorder %s15, 0
    %p42 = por %p40, %p41
    %s44 = sadd.s32 %s43, 1
    %p47 = scmp.eq.s32.totalorder %s9, 1
    %p48 = scmp.ne.s32.totalorder %s43, %s45
    %p49 = scmp.eq.s32.totalorder %s9, 0
    %p50 = por %p48, %p49
    %p51 = scmp.ne.s32.totalorder %s43, %s45
    %p52 = scmp.eq.s32.totalorder %s14, 1
    %p53 = por %p51, %p52
    %p54 = scmp.ne.s32.totalorder %s45, %s46
    %p55 = scmp.eq.s32.totalorder %s14, 0
    %p56 = por %p54, %p55
    %p57 = scmp.ne.s32.totalorder %s45, %s46
    %p58 = scmp.eq.s32.totalorder %s15, 1
    %p59 = por %p57, %p58
    %p61 = scmp.ne.s32.totalorder %s46, %s60
    %p62 = scmp.eq.s32.totalorder %s15, 0
    %p63 = por %p61, %p62
    %s65 = sadd.s32 %s64, 1
    %p68 = scmp.eq.s32.totalorder %s9, 1
    %p69 = scmp.ne.s32.totalorder %s64, %s66
    %p70 = scmp.eq.s32.totalorder %s9, 0
    %p71 = por %p69, %p70
    %p72 = scmp.ne.s32.totalorder %s64, %s66
    %p73 = scmp.eq.s32.totalorder %s14, 1
    %p74 = por %p72, %p73
    %p75 = scmp.ne.s32.totalorder %s66, %s67
    %p76 = scmp.eq.s32.totalorder %s14, 0
    %p77 = por %p75, %p76
    %p78 = scmp.ne.s32.totalorder %s66, %s67
    %p79 = scmp.eq.s32.totalorder %s15, 1
    %p80 = por %p78, %p79
    %p82 = scmp.ne.s32.totalorder %s67, %s81
    %p83 = scmp.eq.s32.totalorder %s15, 0
    %p84 = por %p82, %p83
    %s85 = ssub.s32 %s9, %s16
    %p86 = scmp.eq.s32.totalorder %s85, 0
    %s88 = sadd.s32 %s87, 1
    %s89 = scalar_select %p86, %s87, %s88
    %p92 = pneg %p86
    %p93 = scmp.eq.s32.totalorder %s9, 1
    %p94 = por %p92, %p93
    %p95 = scmp.ne.s32.totalorder %s87, %s90
    %p96 = scmp.eq.s32.totalorder %s9, 0
    %p97 = por %p95, %p96
    %p98 = scmp.ne.s32.totalorder %s87, %s90
    %p99 = scmp.eq.s32.totalorder %s14, 1
    %p100 = por %p98, %p99
    %p101 = scmp.ne.s32.totalorder %s90, %s91
    %p102 = scmp.eq.s32.totalorder %s14, 0
    %p103 = por %p101, %p102
    %p104 = scmp.ne.s32.totalorder %s90, %s91
    %p105 = scmp.eq.s32.totalorder %s15, 1
    %p106 = por %p104, %p105
    %p108 = scmp.ne.s32.totalorder %s91, %s107
    %p109 = scmp.eq.s32.totalorder %s15, 0
    %p110 = por %p108, %p109
    %p111 = scmp.le.s32.totalorder 1, %s9
    %p112 = scmp.lt.s32.totalorder %s9, 3
    %p113 = pnand %p111, %p112
    %p114 = pneg %p113
    // Predicated region
    $region9: #{detector_forward.13} parent=5 // pred_check
      _
    $region10: #{detector_forward.13} parent=5 // pred_check_branch
      %116 = sbr.rel (%p113) target = $region12
    $region11: #{detector_forward.13} parent=5 // pred_region
      %s117 = ssub.s32 %s9, 1
      // Predicated region
      $region13: #{detector_forward.13} parent=11 // pred_check
        %p118 = pneg %p56
      $region14: #{detector_forward.13} parent=11 // pred_check_branch
        %120 = sbr.rel (%p118) target = $region16
      $region15: #{detector_forward.13} parent=11 // pred_region
        _
      $region16: #{detector_forward.13} parent=11 // pred_fallthru
        _
      // Predicated region
      $region17: #{detector_forward.13} parent=11 // pred_check
        %p121 = pneg %p77
      $region18: #{detector_forward.13} parent=11 // pred_check_branch
        %123 = sbr.rel (%p121) target = $region20
      $region19: #{detector_forward.13} parent=11 // pred_region
        _
      $region20: #{detector_forward.13} parent=11 // pred_fallthru
        _
    $region12: #{detector_forward.13} parent=5 // pred_fallthru
      _
    %p124 = scmp.lt.s32.totalorder %s9, 2
    // Predicated region
    $region21: #{detector_forward.13} parent=5 // pred_check
      %p125 = pneg %p124
    $region22: #{detector_forward.13} parent=5 // pred_check_branch
      %127 = sbr.rel (%p125) target = $region24
    $region23: #{detector_forward.13} parent=5 // pred_region
      // Predicated region
      $region25: #{detector_forward.13} parent=23 // pred_check
        %p128 = pneg %p29
      $region26: #{detector_forward.13} parent=23 // pred_check_branch
        %130 = sbr.rel (%p128) target = $region28
      $region27: #{detector_forward.13} parent=23 // pred_region
        %p131 = scmp.lt.s32.totalorder %s9, 1
        %s132 = scalar_select %p131, %s9, 1
        %s133 = smul.addr %s132, 2
        %s134 = scalar_lea.vmem %s0, %s133
      $region28: #{detector_forward.13} parent=23 // pred_fallthru
        _
    $region24: #{detector_forward.13} parent=5 // pred_fallthru
      _
    %p135 = scmp.le.s32.totalorder 1, %s9
    %p136 = scmp.lt.s32.totalorder %s9, 3
    %p137 = pnand %p135, %p136
    %p138 = pneg %p137
    // Predicated region
    $region29: #{detector_forward.13} parent=5 // pred_check
      _
    $region30: #{detector_forward.13} parent=5 // pred_check_branch
      %140 = sbr.rel (%p137) target = $region32
    $region31: #{detector_forward.13} parent=5 // pred_region
      %s141 = ssub.s32 %s9, 1
      %p142 = scmp.lt.s32.totalorder %s14, 1
      %s143 = scalar_select %p142, %s14, 1
      %s144 = smul.addr %s143, 2
      %s145 = scalar_lea.vmem %s0, %s144
      %p146 = pneg %p35
      %p147 = pneg %p32
      %p148 = pneg %p56
      %p149 = pneg %p53
      %p150 = pneg %p77
      %p151 = pneg %p74
      %p152 = pneg %p103
      %p153 = pneg %p100
      %p154 = scmp.lt.s32.totalorder %s14, 1
      %s155 = scalar_select %p154, %s14, 1
      %s156 = smul.addr %s155, 4
      %s157 = scalar_lea.vmem %s3, %s156
      %p158 = scmp.lt.s32.totalorder %s14, 1
      %s159 = scalar_select %p158, %s14, 1
      %s160 = smul.addr %s159, 2
      %s161 = scalar_lea.vmem %s0, %s160
      %p162 = scmp.lt.s32.totalorder %s14, 1
      %s163 = scalar_select %p162, %s14, 1
      %s164 = smul.addr %s163, 4
      %s165 = scalar_lea.vmem %s3, %s164
      %v166 = vld [vmem:[%s161] sm:$0x1]
      %v167 = vunpack.c.l.bf16 %v166
      %s168 = scalar_lea.vmem %s161, 1
      %v169 = vld [vmem:[%s168] sm:$0x1]
      %v170 = vunpack.c.l.bf16 %v169
      %v172 = vperm.slane %v167, 1
      %v175 = vperm.slane %v170, 1
      %v177 = vpack.c.bf16 %v167, %v167
      %v178 = vpack.c.bf16 %v172, %v172
      %v179 = vpack.c.bf16 %v170, %v170
      %v180 = vpack.c.bf16 %v175, %v175
      %v181 = vld [vmem:[%s1] sm:$0xff]
      %v182 = vld [vmem:[%s1 + $0x8] sm:$0xff]
      %v183 = vld [vmem:[%s1 + $0x10] sm:$0xff]
      %v184 = vld [vmem:[%s1 + $0x18] sm:$0xff]
      %v185 = vld [vmem:[%s1 + $0x20] sm:$0xff]
      %v186 = vld [vmem:[%s1 + $0x28] sm:$0xff]
      %v187 = vld [vmem:[%s1 + $0x30] sm:$0xff]
      %v188 = vld [vmem:[%s1 + $0x38] sm:$0xff]
      %v189 = vld [vmem:[%s1 + $0x40] sm:$0xff]
      %v190 = vld [vmem:[%s1 + $0x48] sm:$0xff]
      %v191 = vld [vmem:[%s1 + $0x50] sm:$0xff]
      %v192 = vld [vmem:[%s1 + $0x58] sm:$0xff]
      %v193 = vld [vmem:[%s1 + $0x60] sm:$0xff]
      %v194 = vld [vmem:[%s1 + $0x68] sm:$0xff]
      %v195 = vld [vmem:[%s1 + $0x70] sm:$0xff]
      %v196 = vld [vmem:[%s1 + $0x78] sm:$0xff]
      %v197 = vld [vmem:[%s1 + $0x80] sm:$0xff]
      %v198 = vld [vmem:[%s1 + $0x88] sm:$0xff]
      %v199 = vld [vmem:[%s1 + $0x90] sm:$0xff]
      %v200 = vld [vmem:[%s1 + $0x98] sm:$0xff]
      %v201 = vld [vmem:[%s1 + $0xa0] sm:$0xff]
      %v202 = vld [vmem:[%s1 + $0xa8] sm:$0xff]
      %v203 = vld [vmem:[%s1 + $0xb0] sm:$0xff]
      %v204 = vld [vmem:[%s1 + $0xb8] sm:$0xff]
      %v205 = vld [vmem:[%s1 + $0xc0] sm:$0xff]
      %v206 = vld [vmem:[%s1 + $0xc8] sm:$0xff]
      %v207 = vld [vmem:[%s1 + $0xd0] sm:$0xff]
      %v208 = vld [vmem:[%s1 + $0xd8] sm:$0xff]
      %v209 = vld [vmem:[%s1 + $0xe0] sm:$0xff]
      %v210 = vld [vmem:[%s1 + $0xe8] sm:$0xff]
      %v211 = vld [vmem:[%s1 + $0xf0] sm:$0xff]
      %v212 = vld [vmem:[%s1 + $0xf8] sm:$0xff]
      %v213 = vld [vmem:[%s1 + $0x100] sm:$0xff]
      %v214 = vld [vmem:[%s1 + $0x108] sm:$0xff]
      %v215 = vld [vmem:[%s1 + $0x110] sm:$0xff]
      %v216 = vld [vmem:[%s1 + $0x118] sm:$0xff]
      %v217 = vld [vmem:[%s1 + $0x120] sm:$0xff]
      %v218 = vld [vmem:[%s1 + $0x128] sm:$0xff]
      %v219 = vld [vmem:[%s1 + $0x130] sm:$0xff]
      %v220 = vld [vmem:[%s1 + $0x138] sm:$0xff]
      %v221 = vld [vmem:[%s1 + $0x140] sm:$0xff]
      %v222 = vld [vmem:[%s1 + $0x148] sm:$0xff]
      %v223 = vld [vmem:[%s1 + $0x150] sm:$0xff]
      %v224 = vld [vmem:[%s1 + $0x158] sm:$0xff]
      %v225 = vld [vmem:[%s1 + $0x160] sm:$0xff]
      %v226 = vld [vmem:[%s1 + $0x168] sm:$0xff]
      %v227 = vld [vmem:[%s1 + $0x170] sm:$0xff]
      %v228 = vld [vmem:[%s1 + $0x178] sm:$0xff]
      %v229 = vld [vmem:[%s1 + $0x180] sm:$0xff]
      %v230 = vld [vmem:[%s1 + $0x188] sm:$0xff]
      %v231 = vld [vmem:[%s1 + $0x190] sm:$0xff]
      %v232 = vld [vmem:[%s1 + $0x198] sm:$0xff]
      %v233 = vld [vmem:[%s1 + $0x1a0] sm:$0xff]
      %v234 = vld [vmem:[%s1 + $0x1a8] sm:$0xff]
      %v235 = vld [vmem:[%s1 + $0x1b0] sm:$0xff]
      %v236 = vld [vmem:[%s1 + $0x1b8] sm:$0xff]
      %v237 = vld [vmem:[%s1 + $0x1c0] sm:$0xff]
      %v238 = vld [vmem:[%s1 + $0x1c8] sm:$0xff]
      %v239 = vld [vmem:[%s1 + $0x1d0] sm:$0xff]
      %v240 = vld [vmem:[%s1 + $0x1d8] sm:$0xff]
      %v241 = vld [vmem:[%s1 + $0x1e0] sm:$0xff]
      %v242 = vld [vmem:[%s1 + $0x1e8] sm:$0xff]
      %v243 = vld [vmem:[%s1 + $0x1f0] sm:$0xff]
      %v244 = vld [vmem:[%s1 + $0x1f8] sm:$0xff]
      %v245 = vld [vmem:[%s1 + $0x200] sm:$0xff]
      %v246 = vld [vmem:[%s1 + $0x208] sm:$0xff]
      %v247 = vld [vmem:[%s1 + $0x210] sm:$0xff]
      %v248 = vld [vmem:[%s1 + $0x218] sm:$0xff]
      %v249 = vld [vmem:[%s1 + $0x220] sm:$0xff]
      %v250 = vld [vmem:[%s1 + $0x228] sm:$0xff]
      %v251 = vld [vmem:[%s1 + $0x230] sm:$0xff]
      %v252 = vld [vmem:[%s1 + $0x238] sm:$0xff]
      %v253 = vld [vmem:[%s1 + $0x240] sm:$0xff]
      %v254 = vld [vmem:[%s1 + $0x248] sm:$0xff]
      %v255 = vld [vmem:[%s1 + $0x250] sm:$0xff]
      %v256 = vld [vmem:[%s1 + $0x258] sm:$0xff]
      %v257 = vld [vmem:[%s1 + $0x260] sm:$0xff]
      %v258 = vld [vmem:[%s1 + $0x268] sm:$0xff]
      %v259 = vld [vmem:[%s1 + $0x270] sm:$0xff]
      %v260 = vld [vmem:[%s1 + $0x278] sm:$0xff]
      %v261 = vld [vmem:[%s1 + $0x280] sm:$0xff]
      %v262 = vld [vmem:[%s1 + $0x288] sm:$0xff]
      %v263 = vld [vmem:[%s1 + $0x290] sm:$0xff]
      %v264 = vld [vmem:[%s1 + $0x298] sm:$0xff]
      %v265 = vld [vmem:[%s1 + $0x2a0] sm:$0xff]
      %v266 = vld [vmem:[%s1 + $0x2a8] sm:$0xff]
      %v267 = vld [vmem:[%s1 + $0x2b0] sm:$0xff]
      %v268 = vld [vmem:[%s1 + $0x2b8] sm:$0xff]
      %v269 = vld [vmem:[%s1 + $0x2c0] sm:$0xff]
      %v270 = vld [vmem:[%s1 + $0x2c8] sm:$0xff]
      %v271 = vld [vmem:[%s1 + $0x2d0] sm:$0xff]
      %v272 = vld [vmem:[%s1 + $0x2d8] sm:$0xff]
      %v273 = vld [vmem:[%s1 + $0x2e0] sm:$0xff]
      %v274 = vld [vmem:[%s1 + $0x2e8] sm:$0xff]
      %v275 = vld [vmem:[%s1 + $0x2f0] sm:$0xff]
      %v276 = vld [vmem:[%s1 + $0x2f8] sm:$0xff]
      %v277 = vld [vmem:[%s1 + $0x300] sm:$0xff]
      %v278 = vld [vmem:[%s1 + $0x308] sm:$0xff]
      %v279 = vld [vmem:[%s1 + $0x310] sm:$0xff]
      %v280 = vld [vmem:[%s1 + $0x318] sm:$0xff]
      %v281 = vld [vmem:[%s1 + $0x320] sm:$0xff]
      %v282 = vld [vmem:[%s1 + $0x328] sm:$0xff]
      %v283 = vld [vmem:[%s1 + $0x330] sm:$0xff]
      %v284 = vld [vmem:[%s1 + $0x338] sm:$0xff]
      %v285 = vld [vmem:[%s1 + $0x340] sm:$0xff]
      %v286 = vld [vmem:[%s1 + $0x348] sm:$0xff]
      %v287 = vld [vmem:[%s1 + $0x350] sm:$0xff]
      %v288 = vld [vmem:[%s1 + $0x358] sm:$0xff]
      %v289 = vld [vmem:[%s1 + $0x360] sm:$0xff]
      %v290 = vld [vmem:[%s1 + $0x368] sm:$0xff]
      %v291 = vld [vmem:[%s1 + $0x370] sm:$0xff]
      %v292 = vld [vmem:[%s1 + $0x378] sm:$0xff]
      %v293 = vld [vmem:[%s1 + $0x380] sm:$0xff]
      %v294 = vld [vmem:[%s1 + $0x388] sm:$0xff]
      %v295 = vld [vmem:[%s1 + $0x390] sm:$0xff]
      %v296 = vld [vmem:[%s1 + $0x398] sm:$0xff]
      %v297 = vld [vmem:[%s1 + $0x3a0] sm:$0xff]
      %v298 = vld [vmem:[%s1 + $0x3a8] sm:$0xff]
      %v299 = vld [vmem:[%s1 + $0x3b0] sm:$0xff]
      %v300 = vld [vmem:[%s1 + $0x3b8] sm:$0xff]
      %v301 = vld [vmem:[%s1 + $0x3c0] sm:$0xff]
      %v302 = vld [vmem:[%s1 + $0x3c8] sm:$0xff]
      %v303 = vld [vmem:[%s1 + $0x3d0] sm:$0xff]
      %v304 = vld [vmem:[%s1 + $0x3d8] sm:$0xff]
      %v305 = vld [vmem:[%s1 + $0x3e0] sm:$0xff]
      %v306 = vld [vmem:[%s1 + $0x3e8] sm:$0xff]
      %v307 = vld [vmem:[%s1 + $0x3f0] sm:$0xff]
      %v308 = vld [vmem:[%s1 + $0x3f8] sm:$0xff]
      %v309 = vld [vmem:[%s2] sm:$0xf]
      %v438 = vunpack.c.l.b16 %v181
      %v439 = vunpack.c.h.b16 %v181
      %v440 = vunpack.c.l.b16 %v182
      %v441 = vunpack.c.h.b16 %v182
      %v442 = vunpack.c.l.b16 %v183
      %v443 = vunpack.c.h.b16 %v183
      %v444 = vunpack.c.l.b16 %v184
      %v445 = vunpack.c.h.b16 %v184
      %v446 = vunpack.c.l.b16 %v185
      %v447 = vunpack.c.h.b16 %v185
      %v448 = vunpack.c.l.b16 %v186
      %v449 = vunpack.c.h.b16 %v186
      %v450 = vunpack.c.l.b16 %v187
      %v451 = vunpack.c.h.b16 %v187
      %v452 = vunpack.c.l.b16 %v188
      %v453 = vunpack.c.h.b16 %v188
      %v454 = vunpack.c.l.b16 %v189
      %v455 = vunpack.c.h.b16 %v189
      %v456 = vunpack.c.l.b16 %v190
      %v457 = vunpack.c.h.b16 %v190
      %v458 = vunpack.c.l.b16 %v191
      %v459 = vunpack.c.h.b16 %v191
      %v460 = vunpack.c.l.b16 %v192
      %v461 = vunpack.c.h.b16 %v192
      %v462 = vunpack.c.l.b16 %v193
      %v463 = vunpack.c.h.b16 %v193
      %v464 = vunpack.c.l.b16 %v194
      %v465 = vunpack.c.h.b16 %v194
      %v466 = vunpack.c.l.b16 %v195
      %v467 = vunpack.c.h.b16 %v195
      %v468 = vunpack.c.l.b16 %v196
      %v469 = vunpack.c.h.b16 %v196
      %v470 = vunpack.c.l.b16 %v197
      %v471 = vunpack.c.h.b16 %v197
      %v472 = vunpack.c.l.b16 %v198
      %v473 = vunpack.c.h.b16 %v198
      %v474 = vunpack.c.l.b16 %v199
      %v475 = vunpack.c.h.b16 %v199
      %v476 = vunpack.c.l.b16 %v200
      %v477 = vunpack.c.h.b16 %v200
      %v478 = vunpack.c.l.b16 %v201
      %v479 = vunpack.c.h.b16 %v201
      %v480 = vunpack.c.l.b16 %v202
      %v481 = vunpack.c.h.b16 %v202
      %v482 = vunpack.c.l.b16 %v203
      %v483 = vunpack.c.h.b16 %v203
      %v484 = vunpack.c.l.b16 %v204
      %v485 = vunpack.c.h.b16 %v204
      %v486 = vunpack.c.l.b16 %v205
      %v487 = vunpack.c.h.b16 %v205
      %v488 = vunpack.c.l.b16 %v206
      %v489 = vunpack.c.h.b16 %v206
      %v490 = vunpack.c.l.b16 %v207
      %v491 = vunpack.c.h.b16 %v207
      %v492 = vunpack.c.l.b16 %v208
      %v493 = vunpack.c.h.b16 %v208
      %v494 = vunpack.c.l.b16 %v209
      %v495 = vunpack.c.h.b16 %v209
      %v496 = vunpack.c.l.b16 %v210
      %v497 = vunpack.c.h.b16 %v210
      %v498 = vunpack.c.l.b16 %v211
      %v499 = vunpack.c.h.b16 %v211
      %v500 = vunpack.c.l.b16 %v212
      %v501 = vunpack.c.h.b16 %v212
      %v502 = vunpack.c.l.b16 %v213
      %v503 = vunpack.c.h.b16 %v213
      %v504 = vunpack.c.l.b16 %v214
      %v505 = vunpack.c.h.b16 %v214
      %v506 = vunpack.c.l.b16 %v215
      %v507 = vunpack.c.h.b16 %v215
      %v508 = vunpack.c.l.b16 %v216
      %v509 = vunpack.c.h.b16 %v216
      %v510 = vunpack.c.l.b16 %v217
      %v511 = vunpack.c.h.b16 %v217
      %v512 = vunpack.c.l.b16 %v218
      %v513 = vunpack.c.h.b16 %v218
      %v514 = vunpack.c.l.b16 %v219
      %v515 = vunpack.c.h.b16 %v219
      %v516 = vunpack.c.l.b16 %v220
      %v517 = vunpack.c.h.b16 %v220
      %v518 = vunpack.c.l.b16 %v221
      %v519 = vunpack.c.h.b16 %v221
      %v520 = vunpack.c.l.b16 %v222
      %v521 = vunpack.c.h.b16 %v222
      %v522 = vunpack.c.l.b16 %v223
      %v523 = vunpack.c.h.b16 %v223
      %v524 = vunpack.c.l.b16 %v224
      %v525 = vunpack.c.h.b16 %v224
      %v526 = vunpack.c.l.b16 %v225
      %v527 = vunpack.c.h.b16 %v225
      %v528 = vunpack.c.l.b16 %v226
      %v529 = vunpack.c.h.b16 %v226
      %v530 = vunpack.c.l.b16 %v227
      %v531 = vunpack.c.h.b16 %v227
      %v532 = vunpack.c.l.b16 %v228
      %v533 = vunpack.c.h.b16 %v228
      %v534 = vunpack.c.l.b16 %v229
      %v535 = vunpack.c.h.b16 %v229
      %v536 = vunpack.c.l.b16 %v230
      %v537 = vunpack.c.h.b16 %v230
      %v538 = vunpack.c.l.b16 %v231
      %v539 = vunpack.c.h.b16 %v231
      %v540 = vunpack.c.l.b16 %v232
      %v541 = vunpack.c.h.b16 %v232
      %v542 = vunpack.c.l.b16 %v233
      %v543 = vunpack.c.h.b16 %v233
      %v544 = vunpack.c.l.b16 %v234
      %v545 = vunpack.c.h.b16 %v234
      %v546 = vunpack.c.l.b16 %v235
      %v547 = vunpack.c.h.b16 %v235
      %v548 = vunpack.c.l.b16 %v236
      %v549 = vunpack.c.h.b16 %v236
      %v550 = vunpack.c.l.b16 %v237
      %v551 = vunpack.c.h.b16 %v237
      %v552 = vunpack.c.l.b16 %v238
      %v553 = vunpack.c.h.b16 %v238
      %v554 = vunpack.c.l.b16 %v239
      %v555 = vunpack.c.h.b16 %v239
      %v556 = vunpack.c.l.b16 %v240
      %v557 = vunpack.c.h.b16 %v240
      %v558 = vunpack.c.l.b16 %v241
      %v559 = vunpack.c.h.b16 %v241
      %v560 = vunpack.c.l.b16 %v242
      %v561 = vunpack.c.h.b16 %v242
      %v562 = vunpack.c.l.b16 %v243
      %v563 = vunpack.c.h.b16 %v243
      %v564 = vunpack.c.l.b16 %v244
      %v565 = vunpack.c.h.b16 %v244
      %v566 = vunpack.c.l.b16 %v245
      %v567 = vunpack.c.h.b16 %v245
      %v568 = vunpack.c.l.b16 %v246
      %v569 = vunpack.c.h.b16 %v246
      %v570 = vunpack.c.l.b16 %v247
      %v571 = vunpack.c.h.b16 %v247
      %v572 = vunpack.c.l.b16 %v248
      %v573 = vunpack.c.h.b16 %v248
      %v574 = vunpack.c.l.b16 %v249
      %v575 = vunpack.c.h.b16 %v249
      %v576 = vunpack.c.l.b16 %v250
      %v577 = vunpack.c.h.b16 %v250
      %v578 = vunpack.c.l.b16 %v251
      %v579 = vunpack.c.h.b16 %v251
      %v580 = vunpack.c.l.b16 %v252
      %v581 = vunpack.c.h.b16 %v252
      %v582 = vunpack.c.l.b16 %v253
      %v583 = vunpack.c.h.b16 %v253
      %v584 = vunpack.c.l.b16 %v254
      %v585 = vunpack.c.h.b16 %v254
      %v586 = vunpack.c.l.b16 %v255
      %v587 = vunpack.c.h.b16 %v255
      %v588 = vunpack.c.l.b16 %v256
      %v589 = vunpack.c.h.b16 %v256
      %v590 = vunpack.c.l.b16 %v257
      %v591 = vunpack.c.h.b16 %v257
      %v592 = vunpack.c.l.b16 %v258
      %v593 = vunpack.c.h.b16 %v258
      %v594 = vunpack.c.l.b16 %v259
      %v595 = vunpack.c.h.b16 %v259
      %v596 = vunpack.c.l.b16 %v260
      %v597 = vunpack.c.h.b16 %v260
      %v598 = vunpack.c.l.b16 %v261
      %v599 = vunpack.c.h.b16 %v261
      %v600 = vunpack.c.l.b16 %v262
      %v601 = vunpack.c.h.b16 %v262
      %v602 = vunpack.c.l.b16 %v263
      %v603 = vunpack.c.h.b16 %v263
      %v604 = vunpack.c.l.b16 %v264
      %v605 = vunpack.c.h.b16 %v264
      %v606 = vunpack.c.l.b16 %v265
      %v607 = vunpack.c.h.b16 %v265
      %v608 = vunpack.c.l.b16 %v266
      %v609 = vunpack.c.h.b16 %v266
      %v610 = vunpack.c.l.b16 %v267
      %v611 = vunpack.c.h.b16 %v267
      %v612 = vunpack.c.l.b16 %v268
      %v613 = vunpack.c.h.b16 %v268
      %v614 = vunpack.c.l.b16 %v269
      %v615 = vunpack.c.h.b16 %v269
      %v616 = vunpack.c.l.b16 %v270
      %v617 = vunpack.c.h.b16 %v270
      %v618 = vunpack.c.l.b16 %v271
      %v619 = vunpack.c.h.b16 %v271
      %v620 = vunpack.c.l.b16 %v272
      %v621 = vunpack.c.h.b16 %v272
      %v622 = vunpack.c.l.b16 %v273
      %v623 = vunpack.c.h.b16 %v273
      %v624 = vunpack.c.l.b16 %v274
      %v625 = vunpack.c.h.b16 %v274
      %v626 = vunpack.c.l.b16 %v275
      %v627 = vunpack.c.h.b16 %v275
      %v628 = vunpack.c.l.b16 %v276
      %v629 = vunpack.c.h.b16 %v276
      %v630 = vunpack.c.l.b16 %v277
      %v631 = vunpack.c.h.b16 %v277
      %v632 = vunpack.c.l.b16 %v278
      %v633 = vunpack.c.h.b16 %v278
      %v634 = vunpack.c.l.b16 %v279
      %v635 = vunpack.c.h.b16 %v279
      %v636 = vunpack.c.l.b16 %v280
      %v637 = vunpack.c.h.b16 %v280
      %v638 = vunpack.c.l.b16 %v281
      %v639 = vunpack.c.h.b16 %v281
      %v640 = vunpack.c.l.b16 %v282
      %v641 = vunpack.c.h.b16 %v282
      %v642 = vunpack.c.l.b16 %v283
      %v643 = vunpack.c.h.b16 %v283
      %v644 = vunpack.c.l.b16 %v284
      %v645 = vunpack.c.h.b16 %v284
      %v646 = vunpack.c.l.b16 %v285
      %v647 = vunpack.c.h.b16 %v285
      %v648 = vunpack.c.l.b16 %v286
      %v649 = vunpack.c.h.b16 %v286
      %v650 = vunpack.c.l.b16 %v287
      %v651 = vunpack.c.h.b16 %v287
      %v652 = vunpack.c.l.b16 %v288
      %v653 = vunpack.c.h.b16 %v288
      %v654 = vunpack.c.l.b16 %v289
      %v655 = vunpack.c.h.b16 %v289
      %v656 = vunpack.c.l.b16 %v290
      %v657 = vunpack.c.h.b16 %v290
      %v658 = vunpack.c.l.b16 %v291
      %v659 = vunpack.c.h.b16 %v291
      %v660 = vunpack.c.l.b16 %v292
      %v661 = vunpack.c.h.b16 %v292
      %v662 = vunpack.c.l.b16 %v293
      %v663 = vunpack.c.h.b16 %v293
      %v664 = vunpack.c.l.b16 %v294
      %v665 = vunpack.c.h.b16 %v294
      %v666 = vunpack.c.l.b16 %v295
      %v667 = vunpack.c.h.b16 %v295
      %v668 = vunpack.c.l.b16 %v296
      %v669 = vunpack.c.h.b16 %v296
      %v670 = vunpack.c.l.b16 %v297
      %v671 = vunpack.c.h.b16 %v297
      %v672 = vunpack.c.l.b16 %v298
      %v673 = vunpack.c.h.b16 %v298
      %v674 = vunpack.c.l.b16 %v299
      %v675 = vunpack.c.h.b16 %v299
      %v676 = vunpack.c.l.b16 %v300
      %v677 = vunpack.c.h.b16 %v300
      %v678 = vunpack.c.l.b16 %v301
      %v679 = vunpack.c.h.b16 %v301
      %v680 = vunpack.c.l.b16 %v302
      %v681 = vunpack.c.h.b16 %v302
      %v682 = vunpack.c.l.b16 %v303
      %v683 = vunpack.c.h.b16 %v303
      %v684 = vunpack.c.l.b16 %v304
      %v685 = vunpack.c.h.b16 %v304
      %v686 = vunpack.c.l.b16 %v305
      %v687 = vunpack.c.h.b16 %v305
      %v688 = vunpack.c.l.b16 %v306
      %v689 = vunpack.c.h.b16 %v306
      %v690 = vunpack.c.l.b16 %v307
      %v691 = vunpack.c.h.b16 %v307
      %v692 = vunpack.c.l.b16 %v308
      %v693 = vunpack.c.h.b16 %v308
      %v694 = vpack.c.b16 %v442, %v438
      %v695 = vpack.c.b16 %v443, %v439
      %v696 = vpack.c.b16 %v444, %v440
      %v697 = vpack.c.b16 %v445, %v441
      %v698 = vpack.c.b16 %v450, %v446
      %v699 = vpack.c.b16 %v451, %v447
      %v700 = vpack.c.b16 %v452, %v448
      %v701 = vpack.c.b16 %v453, %v449
      %v702 = vpack.c.b16 %v458, %v454
      %v703 = vpack.c.b16 %v459, %v455
      %v704 = vpack.c.b16 %v460, %v456
      %v705 = vpack.c.b16 %v461, %v457
      %v706 = vpack.c.b16 %v466, %v462
      %v707 = vpack.c.b16 %v467, %v463
      %v708 = vpack.c.b16 %v468, %v464
      %v709 = vpack.c.b16 %v469, %v465
      %v710 = vpack.c.b16 %v474, %v470
      %v711 = vpack.c.b16 %v475, %v471
      %v712 = vpack.c.b16 %v476, %v472
      %v713 = vpack.c.b16 %v477, %v473
      %v714 = vpack.c.b16 %v482, %v478
      %v715 = vpack.c.b16 %v483, %v479
      %v716 = vpack.c.b16 %v484, %v480
      %v717 = vpack.c.b16 %v485, %v481
      %v718 = vpack.c.b16 %v490, %v486
      %v719 = vpack.c.b16 %v491, %v487
      %v720 = vpack.c.b16 %v492, %v488
      %v721 = vpack.c.b16 %v493, %v489
      %v722 = vpack.c.b16 %v498, %v494
      %v723 = vpack.c.b16 %v499, %v495
      %v724 = vpack.c.b16 %v500, %v496
      %v725 = vpack.c.b16 %v501, %v497
      %v726 = vpack.c.b16 %v506, %v502
      %v727 = vpack.c.b16 %v507, %v503
      %v728 = vpack.c.b16 %v508, %v504
      %v729 = vpack.c.b16 %v509, %v505
      %v730 = vpack.c.b16 %v514, %v510
      %v731 = vpack.c.b16 %v515, %v511
      %v732 = vpack.c.b16 %v516, %v512
      %v733 = vpack.c.b16 %v517, %v513
      %v734 = vpack.c.b16 %v522, %v518
      %v735 = vpack.c.b16 %v523, %v519
      %v736 = vpack.c.b16 %v524, %v520
      %v737 = vpack.c.b16 %v525, %v521
      %v738 = vpack.c.b16 %v530, %v526
      %v739 = vpack.c.b16 %v531, %v527
      %v740 = vpack.c.b16 %v532, %v528
      %v741 = vpack.c.b16 %v533, %v529
      %v742 = vpack.c.b16 %v538, %v534
      %v743 = vpack.c.b16 %v539, %v535
      %v744 = vpack.c.b16 %v540, %v536
      %v745 = vpack.c.b16 %v541, %v537
      %v746 = vpack.c.b16 %v546, %v542
      %v747 = vpack.c.b16 %v547, %v543
      %v748 = vpack.c.b16 %v548, %v544
      %v749 = vpack.c.b16 %v549, %v545
      %v750 = vpack.c.b16 %v554, %v550
      %v751 = vpack.c.b16 %v555, %v551
      %v752 = vpack.c.b16 %v556, %v552
      %v753 = vpack.c.b16 %v557, %v553
      %v754 = vpack.c.b16 %v562, %v558
      %v755 = vpack.c.b16 %v563, %v559
      %v756 = vpack.c.b16 %v564, %v560
      %v757 = vpack.c.b16 %v565, %v561
      %v758 = vpack.c.b16 %v570, %v566
      %v759 = vpack.c.b16 %v571, %v567
      %v760 = vpack.c.b16 %v572, %v568
      %v761 = vpack.c.b16 %v573, %v569
      %v762 = vpack.c.b16 %v578, %v574
      %v763 = vpack.c.b16 %v579, %v575
      %v764 = vpack.c.b16 %v580, %v576
      %v765 = vpack.c.b16 %v581, %v577
      %v766 = vpack.c.b16 %v586, %v582
      %v767 = vpack.c.b16 %v587, %v583
      %v768 = vpack.c.b16 %v588, %v584
      %v769 = vpack.c.b16 %v589, %v585
      %v770 = vpack.c.b16 %v594, %v590
      %v771 = vpack.c.b16 %v595, %v591
      %v772 = vpack.c.b16 %v596, %v592
      %v773 = vpack.c.b16 %v597, %v593
      %v774 = vpack.c.b16 %v602, %v598
      %v775 = vpack.c.b16 %v603, %v599
      %v776 = vpack.c.b16 %v604, %v600
      %v777 = vpack.c.b16 %v605, %v601
      %v778 = vpack.c.b16 %v610, %v606
      %v779 = vpack.c.b16 %v611, %v607
      %v780 = vpack.c.b16 %v612, %v608
      %v781 = vpack.c.b16 %v613, %v609
      %v782 = vpack.c.b16 %v618, %v614
      %v783 = vpack.c.b16 %v619, %v615
      %v784 = vpack.c.b16 %v620, %v616
      %v785 = vpack.c.b16 %v621, %v617
      %v786 = vpack.c.b16 %v626, %v622
      %v787 = vpack.c.b16 %v627, %v623
      %v788 = vpack.c.b16 %v628, %v624
      %v789 = vpack.c.b16 %v629, %v625
      %v790 = vpack.c.b16 %v634, %v630
      %v791 = vpack.c.b16 %v635, %v631
      %v792 = vpack.c.b16 %v636, %v632
      %v793 = vpack.c.b16 %v637, %v633
      %v794 = vpack.c.b16 %v642, %v638
      %v795 = vpack.c.b16 %v643, %v639
      %v796 = vpack.c.b16 %v644, %v640
      %v797 = vpack.c.b16 %v645, %v641
      %v798 = vpack.c.b16 %v650, %v646
      %v799 = vpack.c.b16 %v651, %v647
      %v800 = vpack.c.b16 %v652, %v648
      %v801 = vpack.c.b16 %v653, %v649
      %v802 = vpack.c.b16 %v658, %v654
      %v803 = vpack.c.b16 %v659, %v655
      %v804 = vpack.c.b16 %v660, %v656
      %v805 = vpack.c.b16 %v661, %v657
      %v806 = vpack.c.b16 %v666, %v662
      %v807 = vpack.c.b16 %v667, %v663
      %v808 = vpack.c.b16 %v668, %v664
      %v809 = vpack.c.b16 %v669, %v665
      %v810 = vpack.c.b16 %v674, %v670
      %v811 = vpack.c.b16 %v675, %v671
      %v812 = vpack.c.b16 %v676, %v672
      %v813 = vpack.c.b16 %v677, %v673
      %v814 = vpack.c.b16 %v682, %v678
      %v815 = vpack.c.b16 %v683, %v679
      %v816 = vpack.c.b16 %v684, %v680
      %v817 = vpack.c.b16 %v685, %v681
      %v818 = vpack.c.b16 %v690, %v686
      %v819 = vpack.c.b16 %v691, %v687
      %v820 = vpack.c.b16 %v692, %v688
      %v821 = vpack.c.b16 %v693, %v689
      %v951 = vperm.slane %v309, 0
      %v952 = vperm.slane %v309, 1
      %v953 = vperm.slane %v309, 2
      %v954 = vperm.slane %v309, 3
      %959 = vmatpush.bf16.msra.mxu0 %v722
      %960 = vmatpush.bf16.msra.mxu0 %v718
      %961 = vmatpush.bf16.msra.mxu0 %v714
      %962 = vmatpush.bf16.msra.mxu0 %v710
      %963 = vmatpush.bf16.msra.mxu0 %v706
      %964 = vmatpush.bf16.msra.mxu0 %v702
      %965 = vmatpush.bf16.msra.mxu0 %v698
      %966 = vmatpush.bf16.msra.mxu0 %v694
      %967 = vmatmul.bf16.gmra.mxu0 %v177
      %v968 = vpop.f32.mrf.mxu0
      %v969 = vadd.f32 %v951, %v968
      %v970 = vpop.f32.mrf.mxu0
      %971 = vdwg.mxu0
      %972 = vmatpush.bf16.msra.mxu0 %v754
      %973 = vmatpush.bf16.msra.mxu0 %v750
      %974 = vmatpush.bf16.msra.mxu0 %v746
      %975 = vmatpush.bf16.msra.mxu0 %v742
      %976 = vmatpush.bf16.msra.mxu0 %v738
      %977 = vmatpush.bf16.msra.mxu0 %v734
      %978 = vmatpush.bf16.msra.mxu0 %v730
      %979 = vmatpush.bf16.msra.mxu0 %v726
      %980 = vmatmul.bf16.gmra.mxu0 %v178
      %v981 = vpop.f32.mrf.mxu0
      %v982 = vadd.f32 %v969, %v981
      %v983 = vpop.f32.mrf.mxu0
      %984 = vdwg.mxu0
      %985 = vmatpush.bf16.msra.mxu0 %v786
      %986 = vmatpush.bf16.msra.mxu0 %v782
      %987 = vmatpush.bf16.msra.mxu0 %v778
      %988 = vmatpush.bf16.msra.mxu0 %v774
      %989 = vmatpush.bf16.msra.mxu0 %v770
      %990 = vmatpush.bf16.msra.mxu0 %v766
      %991 = vmatpush.bf16.msra.mxu0 %v762
      %992 = vmatpush.bf16.msra.mxu0 %v758
      %993 = vmatmul.bf16.gmra.mxu0 %v179
      %v994 = vpop.f32.mrf.mxu0
      %v995 = vadd.f32 %v982, %v994
      %v996 = vpop.f32.mrf.mxu0
      %997 = vdwg.mxu0
      %998 = vmatpush.bf16.msra.mxu0 %v818
      %999 = vmatpush.bf16.msra.mxu0 %v814
      %1000 = vmatpush.bf16.msra.mxu0 %v810
      %1001 = vmatpush.bf16.msra.mxu0 %v806
      %1002 = vmatpush.bf16.msra.mxu0 %v802
      %1003 = vmatpush.bf16.msra.mxu0 %v798
      %1004 = vmatpush.bf16.msra.mxu0 %v794
      %1005 = vmatpush.bf16.msra.mxu0 %v790
      %1006 = vmatmul.bf16.gmra.mxu0 %v180
      %v1007 = vpop.f32.mrf.mxu0
      %v1008 = vadd.f32 %v995, %v1007
      %v1009 = vpop.f32.mrf.mxu0
      %1010 = vdwg.mxu0
      %1011 = vmatpush.bf16.msra.mxu0 %v723
      %1012 = vmatpush.bf16.msra.mxu0 %v719
      %1013 = vmatpush.bf16.msra.mxu0 %v715
      %1014 = vmatpush.bf16.msra.mxu0 %v711
      %1015 = vmatpush.bf16.msra.mxu0 %v707
      %1016 = vmatpush.bf16.msra.mxu0 %v703
      %1017 = vmatpush.bf16.msra.mxu0 %v699
      %1018 = vmatpush.bf16.msra.mxu0 %v695
      %1019 = vmatmul.bf16.gmra.mxu0 %v177
      %v1020 = vpop.f32.mrf.mxu0
      %v1021 = vadd.f32 %v952, %v1020
      %v1022 = vpop.f32.mrf.mxu0
      %1023 = vdwg.mxu0
      %1024 = vmatpush.bf16.msra.mxu0 %v755
      %1025 = vmatpush.bf16.msra.mxu0 %v751
      %1026 = vmatpush.bf16.msra.mxu0 %v747
      %1027 = vmatpush.bf16.msra.mxu0 %v743
      %1028 = vmatpush.bf16.msra.mxu0 %v739
      %1029 = vmatpush.bf16.msra.mxu0 %v735
      %1030 = vmatpush.bf16.msra.mxu0 %v731
      %1031 = vmatpush.bf16.msra.mxu0 %v727
      %1032 = vmatmul.bf16.gmra.mxu0 %v178
      %v1033 = vpop.f32.mrf.mxu0
      %v1034 = vadd.f32 %v1021, %v1033
      %v1035 = vpop.f32.mrf.mxu0
      %1036 = vdwg.mxu0
      %1037 = vmatpush.bf16.msra.mxu0 %v787
      %1038 = vmatpush.bf16.msra.mxu0 %v783
      %1039 = vmatpush.bf16.msra.mxu0 %v779
      %1040 = vmatpush.bf16.msra.mxu0 %v775
      %1041 = vmatpush.bf16.msra.mxu0 %v771
      %1042 = vmatpush.bf16.msra.mxu0 %v767
      %1043 = vmatpush.bf16.msra.mxu0 %v763
      %1044 = vmatpush.bf16.msra.mxu0 %v759
      %1045 = vmatmul.bf16.gmra.mxu0 %v179
      %v1046 = vpop.f32.mrf.mxu0
      %v1047 = vadd.f32 %v1034, %v1046
      %v1048 = vpop.f32.mrf.mxu0
      %1049 = vdwg.mxu0
      %1050 = vmatpush.bf16.msra.mxu0 %v819
      %1051 = vmatpush.bf16.msra.mxu0 %v815
      %1052 = vmatpush.bf16.msra.mxu0 %v811
      %1053 = vmatpush.bf16.msra.mxu0 %v807
      %1054 = vmatpush.bf16.msra.mxu0 %v803
      %1055 = vmatpush.bf16.msra.mxu0 %v799
      %1056 = vmatpush.bf16.msra.mxu0 %v795
      %1057 = vmatpush.bf16.msra.mxu0 %v791
      %1058 = vmatmul.bf16.gmra.mxu0 %v180
      %v1059 = vpop.f32.mrf.mxu0
      %v1060 = vadd.f32 %v1047, %v1059
      %v1061 = vpop.f32.mrf.mxu0
      %1062 = vdwg.mxu0
      %1063 = vmatpush.bf16.msra.mxu0 %v724
      %1064 = vmatpush.bf16.msra.mxu0 %v720
      %1065 = vmatpush.bf16.msra.mxu0 %v716
      %1066 = vmatpush.bf16.msra.mxu0 %v712
      %1067 = vmatpush.bf16.msra.mxu0 %v708
      %1068 = vmatpush.bf16.msra.mxu0 %v704
      %1069 = vmatpush.bf16.msra.mxu0 %v700
      %1070 = vmatpush.bf16.msra.mxu0 %v696
      %1071 = vmatmul.bf16.gmra.mxu0 %v177
      %v1072 = vpop.f32.mrf.mxu0
      %v1073 = vadd.f32 %v953, %v1072
      %v1074 = vpop.f32.mrf.mxu0
      %1075 = vdwg.mxu0
      %1076 = vmatpush.bf16.msra.mxu0 %v756
      %1077 = vmatpush.bf16.msra.mxu0 %v752
      %1078 = vmatpush.bf16.msra.mxu0 %v748
      %1079 = vmatpush.bf16.msra.mxu0 %v744
      %1080 = vmatpush.bf16.msra.mxu0 %v740
      %1081 = vmatpush.bf16.msra.mxu0 %v736
      %1082 = vmatpush.bf16.msra.mxu0 %v732
      %1083 = vmatpush.bf16.msra.mxu0 %v728
      %1084 = vmatmul.bf16.gmra.mxu0 %v178
      %v1085 = vpop.f32.mrf.mxu0
      %v1086 = vadd.f32 %v1073, %v1085
      %v1087 = vpop.f32.mrf.mxu0
      %1088 = vdwg.mxu0
      %1089 = vmatpush.bf16.msra.mxu0 %v788
      %1090 = vmatpush.bf16.msra.mxu0 %v784
      %1091 = vmatpush.bf16.msra.mxu0 %v780
      %1092 = vmatpush.bf16.msra.mxu0 %v776
      %1093 = vmatpush.bf16.msra.mxu0 %v772
      %1094 = vmatpush.bf16.msra.mxu0 %v768
      %1095 = vmatpush.bf16.msra.mxu0 %v764
      %1096 = vmatpush.bf16.msra.mxu0 %v760
      %1097 = vmatmul.bf16.gmra.mxu0 %v179
      %v1098 = vpop.f32.mrf.mxu0
      %v1099 = vadd.f32 %v1086, %v1098
      %v1100 = vpop.f32.mrf.mxu0
      %1101 = vdwg.mxu0
      %1102 = vmatpush.bf16.msra.mxu0 %v820
      %1103 = vmatpush.bf16.msra.mxu0 %v816
      %1104 = vmatpush.bf16.msra.mxu0 %v812
      %1105 = vmatpush.bf16.msra.mxu0 %v808
      %1106 = vmatpush.bf16.msra.mxu0 %v804
      %1107 = vmatpush.bf16.msra.mxu0 %v800
      %1108 = vmatpush.bf16.msra.mxu0 %v796
      %1109 = vmatpush.bf16.msra.mxu0 %v792
      %1110 = vmatmul.bf16.gmra.mxu0 %v180
      %v1111 = vpop.f32.mrf.mxu0
      %v1112 = vadd.f32 %v1099, %v1111
      %v1113 = vpop.f32.mrf.mxu0
      %1114 = vdwg.mxu0
      %1115 = vmatpush.bf16.msra.mxu0 %v725
      %1116 = vmatpush.bf16.msra.mxu0 %v721
      %1117 = vmatpush.bf16.msra.mxu0 %v717
      %1118 = vmatpush.bf16.msra.mxu0 %v713
      %1119 = vmatpush.bf16.msra.mxu0 %v709
      %1120 = vmatpush.bf16.msra.mxu0 %v705
      %1121 = vmatpush.bf16.msra.mxu0 %v701
      %1122 = vmatpush.bf16.msra.mxu0 %v697
      %1123 = vmatmul.bf16.gmra.mxu0 %v177
      %v1124 = vpop.f32.mrf.mxu0
      %v1125 = vadd.f32 %v954, %v1124
      %v1126 = vpop.f32.mrf.mxu0
      %1127 = vdwg.mxu0
      %1128 = vmatpush.bf16.msra.mxu0 %v757
      %1129 = vmatpush.bf16.msra.mxu0 %v753
      %1130 = vmatpush.bf16.msra.mxu0 %v749
      %1131 = vmatpush.bf16.msra.mxu0 %v745
      %1132 = vmatpush.bf16.msra.mxu0 %v741
      %1133 = vmatpush.bf16.msra.mxu0 %v737
      %1134 = vmatpush.bf16.msra.mxu0 %v733
      %1135 = vmatpush.bf16.msra.mxu0 %v729
      %1136 = vmatmul.bf16.gmra.mxu0 %v178
      %v1137 = vpop.f32.mrf.mxu0
      %v1138 = vadd.f32 %v1125, %v1137
      %v1139 = vpop.f32.mrf.mxu0
      %1140 = vdwg.mxu0
      %1141 = vmatpush.bf16.msra.mxu0 %v789
      %1142 = vmatpush.bf16.msra.mxu0 %v785
      %1143 = vmatpush.bf16.msra.mxu0 %v781
      %1144 = vmatpush.bf16.msra.mxu0 %v777
      %1145 = vmatpush.bf16.msra.mxu0 %v773
      %1146 = vmatpush.bf16.msra.mxu0 %v769
      %1147 = vmatpush.bf16.msra.mxu0 %v765
      %1148 = vmatpush.bf16.msra.mxu0 %v761
      %1149 = vmatmul.bf16.gmra.mxu0 %v179
      %v1150 = vpop.f32.mrf.mxu0
      %v1151 = vadd.f32 %v1138, %v1150
      %v1152 = vpop.f32.mrf.mxu0
      %1153 = vdwg.mxu0
      %1154 = vmatpush.bf16.msra.mxu0 %v821
      %1155 = vmatpush.bf16.msra.mxu0 %v817
      %1156 = vmatpush.bf16.msra.mxu0 %v813
      %1157 = vmatpush.bf16.msra.mxu0 %v809
      %1158 = vmatpush.bf16.msra.mxu0 %v805
      %1159 = vmatpush.bf16.msra.mxu0 %v801
      %1160 = vmatpush.bf16.msra.mxu0 %v797
      %1161 = vmatpush.bf16.msra.mxu0 %v793
      %1162 = vmatmul.bf16.gmra.mxu0 %v180
      %v1163 = vpop.f32.mrf.mxu0
      %v1164 = vadd.f32 %v1151, %v1163
      %v1165 = vpop.f32.mrf.mxu0
      %1166 = vdwg.mxu0
      %v1167 = vmax.f32 %v1008, 0.0
      %v1168 = vmax.f32 %v1060, 0.0
      %v1169 = vmax.f32 %v1112, 0.0
      %v1170 = vmax.f32 %v1164, 0.0
      %v1171 = vpack.c.bf16 %v1168, %v1167
      %v1172 = vpack.c.bf16 %v1170, %v1169
      %v1175 = vrot.slane %v1171, 3
      %v1176 = vrot.slane %v1172, 6
      %v1177 = vrot.slane %v1172, 1
      %vm1178 = vcmask 1040384
      %v1181 = vsel %vm1178, %v1171, %v1175
      %vm1182 = vcmask 1042434
      %v1185 = vsel %vm1182, %v1176, %v1177
      %vm1186 = vcmask 1041408
      %v1187 = vsel %vm1186, %v1181, %v1185
      %vm1189 = vcmask 1040384
      %vm1190 = vsmask.f32 256
      %vm1191 = vmand %vm1189, %vm1190
      %vm1192 = vcmask 1041409
      %vm1193 = vsmask.f32 1280
      %vm1194 = vmand %vm1192, %vm1193
      %vm1195 = vmor %vm1194, %vm1191
      %vm1196 = vcmask 1042434
      %vm1197 = vsmask.f32 2304
      %vm1198 = vmand %vm1196, %vm1197
      %vm1199 = vmor %vm1198, %vm1195
      %vm1200 = vcmask 1043459
      %vm1201 = vsmask.f32 3328
      %vm1202 = vmand %vm1200, %vm1201
      %vm1203 = vmor %vm1202, %vm1199
      %v1204 = vld [vmem:[%s165] sm:$0xf]
      %v1205 = vsel %vm1203, %v1187, %v1204
      %1206 = vst [vmem:[%s165] sm:$0xf] %v1205
      %p1207 = scmp.lt.s32.totalorder %s14, 1
      %s1208 = scalar_select %p1207, %s14, 1
      %s1209 = smul.addr %s1208, 4
      %s1210 = scalar_lea.vmem %s3, %s1209
      // Predicated region
      $region33: #{detector_forward.13} parent=31 // pred_check
        %p1211 = pneg %p100
      $region34: #{detector_forward.13} parent=31 // pred_check_branch
        %1213 = sbr.rel (%p1211) target = $region36
      $region35: #{detector_forward.13} parent=31 // pred_region
        _
      $region36: #{detector_forward.13} parent=31 // pred_fallthru
        _
    $region32: #{detector_forward.13} parent=5 // pred_fallthru
      _
    %p1214 = scmp.le.s32.totalorder 2, %s9
    // Predicated region
    $region37: #{detector_forward.13} parent=5 // pred_check
      %p1215 = pneg %p1214
    $region38: #{detector_forward.13} parent=5 // pred_check_branch
      %1217 = sbr.rel (%p1215) target = $region40
    $region39: #{detector_forward.13} parent=5 // pred_region
      %s1218 = ssub.s32 %s9, 2
      // Predicated region
      $region41: #{detector_forward.13} parent=39 // pred_check
        %p1219 = pneg %p106
      $region42: #{detector_forward.13} parent=39 // pred_check_branch
        %1221 = sbr.rel (%p1219) target = $region44
      $region43: #{detector_forward.13} parent=39 // pred_region
        %p1222 = scmp.lt.s32.totalorder %s15, 1
        %s1223 = scalar_select %p1222, %s15, 1
        %s1224 = smul.addr %s1223, 4
        %s1225 = scalar_lea.vmem %s3, %s1224
      $region44: #{detector_forward.13} parent=39 // pred_fallthru
        _
    $region40: #{detector_forward.13} parent=5 // pred_fallthru
      _
  $region6: #{detector_forward.13} parent=0 // loop_footer
    %s13 = sadd.s32 1, %s9
  $region7: #{detector_forward.13} parent=0 // loop_footer_branch
    %8 = sbr.rel target = $region3
  $region8: #{detector_forward.13} parent=0 // loop_exit
    _

// kernel: detector_forward.15
$region0: #{detector_forward.15}
  #allocation0 [shape = 'u32[]', space=smem, size = 0x4, offset = 0x4, fixed_abs, tag = 'smem constant byte address 0x4 - core index']
  #allocation1 [shape = 'u32[72,128]{1,0:T(1,128)}', space=vmem, size = 0x9000, scoped, tag = 'internal scratch']
  %s0 = inlined_call_operand.vmem [shape: bf16[2,1,5,5,64], index: 0, kind: input, shape index: {}]
  %s1 = inlined_call_operand.vmem [shape: bf16[256,128], index: 1, kind: input, shape index: {}]
  %s2 = inlined_call_operand.vmem [shape: f32[1,128], index: 2, kind: input, shape index: {}]
  %s3 = inlined_call_operand.vmem [shape: bf16[2,16,128], index: 3, kind: output, shape index: {}]
  %s4 = sld [smem:[#allocation0]]
  $region45: #{detector_forward.15} parent=0
    _
  %s6 = ssub.s32 1, %s4
  %s7 = scalar_select 0, %s6, %s4
  loop: start=0, step=1, limit=4
  $region2: #{detector_forward.15} parent=0 // loop_pre_header
    _
  $region3: #{detector_forward.15} parent=0 // loop_header
    %s9 = sphi 0, %s13
    %p10 = scmp.ge.s32.totalorder %s9, 4
    %s19 = sphi 0, %s21
    %s22 = sphi 0, %s19
    %s23 = sphi 0, %s22
    %s39 = sphi 0, %s23
    %s43 = sphi 0, %s43
    %s45 = sphi 0, %s43
    %s46 = sphi 0, %s45
    %s60 = sphi 0, %s46
    %s64 = sphi 0, %s64
    %s66 = sphi 0, %s64
    %s67 = sphi 0, %s66
    %s81 = sphi 0, %s67
    %s87 = sphi 0, %s89
    %s90 = sphi 0, %s87
    %s91 = sphi 0, %s90
    %s107 = sphi 0, %s91
  $region4: #{detector_forward.15} parent=0 // loop_header_branch
    %12 = sbr.rel (%p10) target = $region8
  $region5: #{detector_forward.15} parent=0 // loop_body
    %s14 = ssub.s32 %s9, 1
    %s15 = ssub.s32 %s9, 2
    %s16 = sadd.s32 %s9, 1
    %s17 = ssub.s32 %s9, %s16
    %p18 = scmp.eq.s32.totalorder %s17, 0
    %s20 = sadd.s32 %s19, 1
    %s21 = scalar_select %p18, %s19, %s20
    %p24 = pneg %p18
    %p25 = scmp.eq.s32.totalorder %s9, 1
    %p26 = por %p24, %p25
    %p27 = scmp.ne.s32.totalorder %s19, %s22
    %p28 = scmp.eq.s32.totalorder %s9, 0
    %p29 = por %p27, %p28
    %p30 = scmp.ne.s32.totalorder %s19, %s22
    %p31 = scmp.eq.s32.totalorder %s14, 1
    %p32 = por %p30, %p31
    %p33 = scmp.ne.s32.totalorder %s22, %s23
    %p34 = scmp.eq.s32.totalorder %s14, 0
    %p35 = por %p33, %p34
    %p36 = scmp.ne.s32.totalorder %s22, %s23
    %p37 = scmp.eq.s32.totalorder %s15, 1
    %p38 = por %p36, %p37
    %p40 = scmp.ne.s32.totalorder %s23, %s39
    %p41 = scmp.eq.s32.totalorder %s15, 0
    %p42 = por %p40, %p41
    %s44 = sadd.s32 %s43, 1
    %p47 = scmp.eq.s32.totalorder %s9, 1
    %p48 = scmp.ne.s32.totalorder %s43, %s45
    %p49 = scmp.eq.s32.totalorder %s9, 0
    %p50 = por %p48, %p49
    %p51 = scmp.ne.s32.totalorder %s43, %s45
    %p52 = scmp.eq.s32.totalorder %s14, 1
    %p53 = por %p51, %p52
    %p54 = scmp.ne.s32.totalorder %s45, %s46
    %p55 = scmp.eq.s32.totalorder %s14, 0
    %p56 = por %p54, %p55
    %p57 = scmp.ne.s32.totalorder %s45, %s46
    %p58 = scmp.eq.s32.totalorder %s15, 1
    %p59 = por %p57, %p58
    %p61 = scmp.ne.s32.totalorder %s46, %s60
    %p62 = scmp.eq.s32.totalorder %s15, 0
    %p63 = por %p61, %p62
    %s65 = sadd.s32 %s64, 1
    %p68 = scmp.eq.s32.totalorder %s9, 1
    %p69 = scmp.ne.s32.totalorder %s64, %s66
    %p70 = scmp.eq.s32.totalorder %s9, 0
    %p71 = por %p69, %p70
    %p72 = scmp.ne.s32.totalorder %s64, %s66
    %p73 = scmp.eq.s32.totalorder %s14, 1
    %p74 = por %p72, %p73
    %p75 = scmp.ne.s32.totalorder %s66, %s67
    %p76 = scmp.eq.s32.totalorder %s14, 0
    %p77 = por %p75, %p76
    %p78 = scmp.ne.s32.totalorder %s66, %s67
    %p79 = scmp.eq.s32.totalorder %s15, 1
    %p80 = por %p78, %p79
    %p82 = scmp.ne.s32.totalorder %s67, %s81
    %p83 = scmp.eq.s32.totalorder %s15, 0
    %p84 = por %p82, %p83
    %s85 = ssub.s32 %s9, %s16
    %p86 = scmp.eq.s32.totalorder %s85, 0
    %s88 = sadd.s32 %s87, 1
    %s89 = scalar_select %p86, %s87, %s88
    %p92 = pneg %p86
    %p93 = scmp.eq.s32.totalorder %s9, 1
    %p94 = por %p92, %p93
    %p95 = scmp.ne.s32.totalorder %s87, %s90
    %p96 = scmp.eq.s32.totalorder %s9, 0
    %p97 = por %p95, %p96
    %p98 = scmp.ne.s32.totalorder %s87, %s90
    %p99 = scmp.eq.s32.totalorder %s14, 1
    %p100 = por %p98, %p99
    %p101 = scmp.ne.s32.totalorder %s90, %s91
    %p102 = scmp.eq.s32.totalorder %s14, 0
    %p103 = por %p101, %p102
    %p104 = scmp.ne.s32.totalorder %s90, %s91
    %p105 = scmp.eq.s32.totalorder %s15, 1
    %p106 = por %p104, %p105
    %p108 = scmp.ne.s32.totalorder %s91, %s107
    %p109 = scmp.eq.s32.totalorder %s15, 0
    %p110 = por %p108, %p109
    %p111 = scmp.le.s32.totalorder 1, %s9
    %p112 = scmp.lt.s32.totalorder %s9, 3
    %p113 = pnand %p111, %p112
    %p114 = pneg %p113
    // Predicated region
    $region9: #{detector_forward.15} parent=5 // pred_check
      _
    $region10: #{detector_forward.15} parent=5 // pred_check_branch
      %116 = sbr.rel (%p113) target = $region12
    $region11: #{detector_forward.15} parent=5 // pred_region
      %s117 = ssub.s32 %s9, 1
      // Predicated region
      $region13: #{detector_forward.15} parent=11 // pred_check
        %p118 = pneg %p56
      $region14: #{detector_forward.15} parent=11 // pred_check_branch
        %120 = sbr.rel (%p118) target = $region16
      $region15: #{detector_forward.15} parent=11 // pred_region
        _
      $region16: #{detector_forward.15} parent=11 // pred_fallthru
        _
      // Predicated region
      $region17: #{detector_forward.15} parent=11 // pred_check
        %p121 = pneg %p77
      $region18: #{detector_forward.15} parent=11 // pred_check_branch
        %123 = sbr.rel (%p121) target = $region20
      $region19: #{detector_forward.15} parent=11 // pred_region
        _
      $region20: #{detector_forward.15} parent=11 // pred_fallthru
        _
    $region12: #{detector_forward.15} parent=5 // pred_fallthru
      _
    %p124 = scmp.lt.s32.totalorder %s9, 2
    // Predicated region
    $region21: #{detector_forward.15} parent=5 // pred_check
      %p125 = pneg %p124
    $region22: #{detector_forward.15} parent=5 // pred_check_branch
      %127 = sbr.rel (%p125) target = $region24
    $region23: #{detector_forward.15} parent=5 // pred_region
      // Predicated region
      $region25: #{detector_forward.15} parent=23 // pred_check
        %p128 = pneg %p29
      $region26: #{detector_forward.15} parent=23 // pred_check_branch
        %130 = sbr.rel (%p128) target = $region28
      $region27: #{detector_forward.15} parent=23 // pred_region
        %p131 = scmp.lt.s32.totalorder %s9, 1
        %s132 = scalar_select %p131, %s9, 1
        %s133 = smul.addr %s132, 5
        %s134 = smul.addr %s133, 4
        %s135 = scalar_lea.vmem %s0, %s134
      $region28: #{detector_forward.15} parent=23 // pred_fallthru
        _
    $region24: #{detector_forward.15} parent=5 // pred_fallthru
      _
    %p136 = scmp.le.s32.totalorder 1, %s9
    %p137 = scmp.lt.s32.totalorder %s9, 3
    %p138 = pnand %p136, %p137
    %p139 = pneg %p138
    // Predicated region
    $region29: #{detector_forward.15} parent=5 // pred_check
      _
    $region30: #{detector_forward.15} parent=5 // pred_check_branch
      %141 = sbr.rel (%p138) target = $region32
    $region31: #{detector_forward.15} parent=5 // pred_region
      %s142 = ssub.s32 %s9, 1
      %p143 = scmp.lt.s32.totalorder %s14, 1
      %s144 = scalar_select %p143, %s14, 1
      %s145 = smul.addr %s144, 5
      %s146 = smul.addr %s145, 4
      %s147 = scalar_lea.vmem %s0, %s146
      %p148 = pneg %p35
      %p149 = pneg %p32
      %p150 = pneg %p56
      %p151 = pneg %p53
      %p152 = pneg %p77
      %p153 = pneg %p74
      %p154 = pneg %p103
      %p155 = pneg %p100
      %p156 = scmp.lt.s32.totalorder %s14, 1
      %s157 = scalar_select %p156, %s14, 1
      %s158 = smul.addr %s157, 2
      %s159 = smul.addr %s158, 4
      %s160 = scalar_lea.vmem %s3, %s159
      %p161 = scmp.lt.s32.totalorder %s14, 1
      %s162 = scalar_select %p161, %s14, 1
      %s163 = smul.addr %s162, 5
      %s164 = smul.addr %s163, 4
      %s165 = scalar_lea.vmem %s0, %s164
      %p166 = scmp.lt.s32.totalorder %s14, 1
      %s167 = scalar_select %p166, %s14, 1
      %s168 = smul.addr %s167, 2
      %s169 = smul.addr %s168, 4
      %s170 = scalar_lea.vmem %s3, %s169
      %v171 = vld [vmem:[%s165] sm:$0x3]
      %v172 = vld [vmem:[%s165 + $0x4] sm:$0x3]
      %v173 = vld [vmem:[%s165 + $0x8] sm:$0x3]
      %v174 = vld [vmem:[%s165 + $0xc] sm:$0x3]
      %v175 = vunpack.c.l.bf16 %v171
      %v176 = vunpack.c.l.bf16 %v172
      %v177 = vunpack.c.l.bf16 %v173
      %v178 = vunpack.c.l.bf16 %v174
      %v179 = vld [vmem:[%s165] sm:$0x7]
      %v180 = vld [vmem:[%s165 + $0x4] sm:$0x7]
      %v181 = vld [vmem:[%s165 + $0x8] sm:$0x7]
      %v182 = vld [vmem:[%s165 + $0xc] sm:$0x7]
      %v183 = vunpack.c.l.bf16 %v179
      %v184 = vunpack.c.l.bf16 %v180
      %v185 = vunpack.c.l.bf16 %v181
      %v186 = vunpack.c.l.bf16 %v182
      %v191 = vrot.slane %v183, 4
      %v192 = vrot.slane %v184, 4
      %v193 = vrot.slane %v185, 4
      %v194 = vrot.slane %v186, 4
      %vm195 = vcmask 1042432
      %vm196 = vcmask 1046532
      %vm197 = vmor %vm195, %vm196
      %v198 = vrot.slane %v183, 5
      %v199 = vrot.slane %v198, 4
      %v200 = vrot.slane %v191, 5
      %v201 = vsel %vm197, %v199, %v200
      %v202 = vrot.slane %v184, 5
      %v203 = vrot.slane %v202, 4
      %v204 = vrot.slane %v192, 5
      %v205 = vsel %vm197, %v203, %v204
      %v206 = vrot.slane %v185, 5
      %v207 = vrot.slane %v206, 4
      %v208 = vrot.slane %v193, 5
      %v209 = vsel %vm197, %v207, %v208
      %v210 = vrot.slane %v186, 5
      %v211 = vrot.slane %v210, 4
      %v212 = vrot.slane %v194, 5
      %v213 = vsel %vm197, %v211, %v212
      %s214 = scalar_lea.vmem %s165, 4
      %v215 = vld [vmem:[%s214] sm:$0x3]
      %v216 = vld [vmem:[%s214 + $0x4] sm:$0x3]
      %v217 = vld [vmem:[%s214 + $0x8] sm:$0x3]
      %v218 = vld [vmem:[%s214 + $0xc] sm:$0x3]
      %v219 = vunpack.c.l.bf16 %v215
      %v220 = vunpack.c.l.bf16 %v216
      %v221 = vunpack.c.l.bf16 %v217
      %v222 = vunpack.c.l.bf16 %v218
      %v223 = vld [vmem:[%s214] sm:$0x7]
      %v224 = vld [vmem:[%s214 + $0x4] sm:$0x7]
      %v225 = vld [vmem:[%s214 + $0x8] sm:$0x7]
      %v226 = vld [vmem:[%s214 + $0xc] sm:$0x7]
      %v227 = vunpack.c.l.bf16 %v223
      %v228 = vunpack.c.l.bf16 %v224
      %v229 = vunpack.c.l.bf16 %v225
      %v230 = vunpack.c.l.bf16 %v226
      %v235 = vrot.slane %v227, 4
      %v236 = vrot.slane %v228, 4
      %v237 = vrot.slane %v229, 4
      %v238 = vrot.slane %v230, 4
      %v239 = vrot.slane %v227, 5
      %v240 = vrot.slane %v239, 4
      %v241 = vrot.slane %v235, 5
      %v242 = vsel %vm197, %v240, %v241
      %v243 = vrot.slane %v228, 5
      %v244 = vrot.slane %v243, 4
      %v245 = vrot.slane %v236, 5
      %v246 = vsel %vm197, %v244, %v245
      %v247 = vrot.slane %v229, 5
      %v248 = vrot.slane %v247, 4
      %v249 = vrot.slane %v237, 5
      %v250 = vsel %vm197, %v248, %v249
      %v251 = vrot.slane %v230, 5
      %v252 = vrot.slane %v251, 4
      %v253 = vrot.slane %v238, 5
      %v254 = vsel %vm197, %v252, %v253
      %259 = vst [vmem:[#allocation1] ss:$2 sm:$0xff] %v175
      %s260 = scalar_lea.vmem [#allocation1], 1
      %261 = vst [vmem:[%s260] ss:$2 sm:$0xff] %v176
      %s262 = scalar_lea.vmem [#allocation1], 16
      %263 = vst [vmem:[%s262] ss:$2 sm:$0xff] %v177
      %s264 = scalar_lea.vmem [#allocation1], 17
      %265 = vst [vmem:[%s264] ss:$2 sm:$0xff] %v178
      %v266 = vld.sshfl [vmem:[#allocation1] sm:$0xff pattern:$0x75316420]
      %v267 = vld.sshfl [vmem:[#allocation1 + $0x10] sm:$0xff pattern:$0x75316420]
      %270 = vst [vmem:[#allocation1] ss:$2 sm:$0xff] %v201
      %s271 = scalar_lea.vmem [#allocation1], 1
      %272 = vst [vmem:[%s271] ss:$2 sm:$0xff] %v205
      %s273 = scalar_lea.vmem [#allocation1], 16
      %274 = vst [vmem:[%s273] ss:$2 sm:$0xff] %v209
      %s275 = scalar_lea.vmem [#allocation1], 17
      %276 = vst [vmem:[%s275] ss:$2 sm:$0xff] %v213
      %v277 = vld.sshfl [vmem:[#allocation1] sm:$0xff pattern:$0x75316420]
      %v278 = vld.sshfl [vmem:[#allocation1 + $0x10] sm:$0xff pattern:$0x75316420]
      %279 = vrot.lane.b32.xlu0 %v277, 64
      %v280 = vpop.permute.xlu0 %279
      %281 = vrot.lane.b32.xlu0 %v278, 64
      %v282 = vpop.permute.xlu0 %281
      %289 = vst [vmem:[#allocation1] ss:$2 sm:$0xff] %v219
      %s290 = scalar_lea.vmem [#allocation1], 1
      %291 = vst [vmem:[%s290] ss:$2 sm:$0xff] %v220
      %s292 = scalar_lea.vmem [#allocation1], 16
      %293 = vst [vmem:[%s292] ss:$2 sm:$0xff] %v221
      %s294 = scalar_lea.vmem [#allocation1], 17
      %295 = vst [vmem:[%s294] ss:$2 sm:$0xff] %v222
      %v296 = vld.sshfl [vmem:[#allocation1] sm:$0xff pattern:$0x75316420]
      %v297 = vld.sshfl [vmem:[#allocation1 + $0x10] sm:$0xff pattern:$0x75316420]
      %300 = vst [vmem:[#allocation1] ss:$2 sm:$0xff] %v242
      %s301 = scalar_lea.vmem [#allocation1], 1
      %302 = vst [vmem:[%s301] ss:$2 sm:$0xff] %v246
      %s303 = scalar_lea.vmem [#allocation1], 16
      %304 = vst [vmem:[%s303] ss:$2 sm:$0xff] %v250
      %s305 = scalar_lea.vmem [#allocation1], 17
      %306 = vst [vmem:[%s305] ss:$2 sm:$0xff] %v254
      %v307 = vld.sshfl [vmem:[#allocation1] sm:$0xff pattern:$0x75316420]
      %v308 = vld.sshfl [vmem:[#allocation1 + $0x10] sm:$0xff pattern:$0x75316420]
      %309 = vrot.lane.b32.xlu0 %v307, 64
      %v310 = vpop.permute.xlu0 %309
      %311 = vrot.lane.b32.xlu0 %v308, 64
      %v312 = vpop.permute.xlu0 %311
      %vm315 = vcmask 523264
      %v316 = vsel %vm315, %v266, %v280
      %v317 = vsel %vm315, %v267, %v282
      %v318 = vsel %vm315, %v296, %v310
      %v319 = vsel %vm315, %v297, %v312
      %v320 = vpack.c.bf16 %v317, %v316
      %v321 = vpack.c.bf16 %v319, %v318
      %v322 = vld [vmem:[%s1] sm:$0xf]
      %v323 = vld [vmem:[%s1 + $0x4] sm:$0xf]
      %v324 = vld [vmem:[%s1 + $0x8] sm:$0xf]
      %v325 = vld [vmem:[%s1 + $0xc] sm:$0xf]
      %v326 = vld [vmem:[%s1 + $0x10] sm:$0xf]
      %v327 = vld [vmem:[%s1 + $0x14] sm:$0xf]
      %v328 = vld [vmem:[%s1 + $0x18] sm:$0xf]
      %v329 = vld [vmem:[%s1 + $0x1c] sm:$0xf]
      %v330 = vld [vmem:[%s1 + $0x20] sm:$0xf]
      %v331 = vld [vmem:[%s1 + $0x24] sm:$0xf]
      %v332 = vld [vmem:[%s1 + $0x28] sm:$0xf]
      %v333 = vld [vmem:[%s1 + $0x2c] sm:$0xf]
      %v334 = vld [vmem:[%s1 + $0x30] sm:$0xf]
      %v335 = vld [vmem:[%s1 + $0x34] sm:$0xf]
      %v336 = vld [vmem:[%s1 + $0x38] sm:$0xf]
      %v337 = vld [vmem:[%s1 + $0x3c] sm:$0xf]
      %v338 = vld [vmem:[%s1 + $0x40] sm:$0xf]
      %v339 = vld [vmem:[%s1 + $0x44] sm:$0xf]
      %v340 = vld [vmem:[%s1 + $0x48] sm:$0xf]
      %v341 = vld [vmem:[%s1 + $0x4c] sm:$0xf]
      %v342 = vld [vmem:[%s1 + $0x50] sm:$0xf]
      %v343 = vld [vmem:[%s1 + $0x54] sm:$0xf]
      %v344 = vld [vmem:[%s1 + $0x58] sm:$0xf]
      %v345 = vld [vmem:[%s1 + $0x5c] sm:$0xf]
      %v346 = vld [vmem:[%s1 + $0x60] sm:$0xf]
      %v347 = vld [vmem:[%s1 + $0x64] sm:$0xf]
      %v348 = vld [vmem:[%s1 + $0x68] sm:$0xf]
      %v349 = vld [vmem:[%s1 + $0x6c] sm:$0xf]
      %v350 = vld [vmem:[%s1 + $0x70] sm:$0xf]
      %v351 = vld [vmem:[%s1 + $0x74] sm:$0xf]
      %v352 = vld [vmem:[%s1 + $0x78] sm:$0xf]
      %v353 = vld [vmem:[%s1 + $0x7c] sm:$0xf]
      %v354 = vld [vmem:[%s2] sm:$0x1]
      %v356 = vperm.slane %v354, 0
      %v390 = vunpack.c.l.b16 %v322
      %v391 = vunpack.c.l.b16 %v323
      %v392 = vunpack.c.l.b16 %v324
      %v393 = vunpack.c.l.b16 %v325
      %v394 = vunpack.c.l.b16 %v326
      %v395 = vunpack.c.l.b16 %v327
      %v396 = vunpack.c.l.b16 %v328
      %v397 = vunpack.c.l.b16 %v329
      %v398 = vunpack.c.l.b16 %v330
      %v399 = vunpack.c.l.b16 %v331
      %v400 = vunpack.c.l.b16 %v332
      %v401 = vunpack.c.l.b16 %v333
      %v402 = vunpack.c.l.b16 %v334
      %v403 = vunpack.c.l.b16 %v335
      %v404 = vunpack.c.l.b16 %v336
      %v405 = vunpack.c.l.b16 %v337
      %v406 = vunpack.c.l.b16 %v338
      %v407 = vunpack.c.l.b16 %v339
      %v408 = vunpack.c.l.b16 %v340
      %v409 = vunpack.c.l.b16 %v341
      %v410 = vunpack.c.l.b16 %v342
      %v411 = vunpack.c.l.b16 %v343
      %v412 = vunpack.c.l.b16 %v344
      %v413 = vunpack.c.l.b16 %v345
      %v414 = vunpack.c.l.b16 %v346
      %v415 = vunpack.c.l.b16 %v347
      %v416 = vunpack.c.l.b16 %v348
      %v417 = vunpack.c.l.b16 %v349
      %v418 = vunpack.c.l.b16 %v350
      %v419 = vunpack.c.l.b16 %v351
      %v420 = vunpack.c.l.b16 %v352
      %v421 = vunpack.c.l.b16 %v353
      %v422 = vpack.c.b16 %v391, %v390
      %v423 = vpack.c.b16 %v393, %v392
      %v424 = vpack.c.b16 %v395, %v394
      %v425 = vpack.c.b16 %v397, %v396
      %v426 = vpack.c.b16 %v399, %v398
      %v427 = vpack.c.b16 %v401, %v400
      %v428 = vpack.c.b16 %v403, %v402
      %v429 = vpack.c.b16 %v405, %v404
      %v430 = vpack.c.b16 %v407, %v406
      %v431 = vpack.c.b16 %v409, %v408
      %v432 = vpack.c.b16 %v411, %v410
      %v433 = vpack.c.b16 %v413, %v412
      %v434 = vpack.c.b16 %v415, %v414
      %v435 = vpack.c.b16 %v417, %v416
      %v436 = vpack.c.b16 %v419, %v418
      %v437 = vpack.c.b16 %v421, %v420
      %454 = vmatpush.bf16.msra.mxu0 %v429
      %455 = vmatpush.bf16.msra.mxu0 %v428
      %456 = vmatpush.bf16.msra.mxu0 %v427
      %457 = vmatpush.bf16.msra.mxu0 %v426
      %458 = vmatpush.bf16.msra.mxu0 %v425
      %459 = vmatpush.bf16.msra.mxu0 %v424
      %460 = vmatpush.bf16.msra.mxu0 %v423
      %461 = vmatpush.bf16.msra.mxu0 %v422
      %462 = vmatmul.bf16.gmra.mxu0 %v320
      %v463 = vpop.f32.mrf.mxu0
      %v464 = vadd.f32 %v356, %v463
      %v465 = vpop.f32.mrf.mxu0
      %v466 = vadd.f32 %v356, %v465
      %467 = vdwg.mxu0
      %468 = vmatpush.bf16.msra.mxu0 %v437
      %469 = vmatpush.bf16.msra.mxu0 %v436
      %470 = vmatpush.bf16.msra.mxu0 %v435
      %471 = vmatpush.bf16.msra.mxu0 %v434
      %472 = vmatpush.bf16.msra.mxu0 %v433
      %473 = vmatpush.bf16.msra.mxu0 %v432
      %474 = vmatpush.bf16.msra.mxu0 %v431
      %475 = vmatpush.bf16.msra.mxu0 %v430
      %476 = vmatmul.bf16.gmra.mxu0 %v321
      %v477 = vpop.f32.mrf.mxu0
      %v478 = vadd.f32 %v464, %v477
      %v479 = vpop.f32.mrf.mxu0
      %v480 = vadd.f32 %v466, %v479
      %481 = vdwg.mxu0
      %v482 = vmax.f32 %v478, 0.0
      %v483 = vmax.f32 %v480, 0.0
      %v484 = vpack.c.bf16 %v482, %v482
      %v485 = vpack.c.bf16 %v483, %v483
      %486 = vst [vmem:[%s170] sm:$0xf] %v484
      %487 = vst [vmem:[%s170 + $0x4] sm:$0xf] %v485
      %p488 = scmp.lt.s32.totalorder %s14, 1
      %s489 = scalar_select %p488, %s14, 1
      %s490 = smul.addr %s489, 2
      %s491 = smul.addr %s490, 4
      %s492 = scalar_lea.vmem %s3, %s491
      // Predicated region
      $region33: #{detector_forward.15} parent=31 // pred_check
        %p493 = pneg %p100
      $region34: #{detector_forward.15} parent=31 // pred_check_branch
        %495 = sbr.rel (%p493) target = $region36
      $region35: #{detector_forward.15} parent=31 // pred_region
        _
      $region36: #{detector_forward.15} parent=31 // pred_fallthru
        _
    $region32: #{detector_forward.15} parent=5 // pred_fallthru
      _
    %p496 = scmp.le.s32.totalorder 2, %s9
    // Predicated region
    $region37: #{detector_forward.15} parent=5 // pred_check
      %p497 = pneg %p496
    $region38: #{detector_forward.15} parent=5 // pred_check_branch
      %499 = sbr.rel (%p497) target = $region40
    $region39: #{detector_forward.15} parent=5 // pred_region
      %s500 = ssub.s32 %s9, 2
      // Predicated region
      $region41: #{detector_forward.15} parent=39 // pred_check
        %p501 = pneg %p106
      $region42: #{detector_forward.15} parent=39 // pred_check_branch
        %503 = sbr.rel (%p501) target = $region44
      $region43: #{detector_forward.15} parent=39 // pred_region
        %p504 = scmp.lt.s32.totalorder %s15, 1
        %s505 = scalar_select %p504, %s15, 1
        %s506 = smul.addr %s505, 2
        %s507 = smul.addr %s506, 4
        %s508 = scalar_lea.vmem %s3, %s507
      $region44: #{detector_forward.15} parent=39 // pred_fallthru
        _
    $region40: #{detector_forward.15} parent=5 // pred_fallthru
      _
  $region6: #{detector_forward.15} parent=0 // loop_footer
    %s13 = sadd.s32 1, %s9
  $region7: #{detector_forward.15} parent=0 // loop_footer_branch
    %8 = sbr.rel target = $region3
  $region8: #{detector_forward.15} parent=0 // loop_exit
    _

// kernel: detector_forward.16
$region0: #{detector_forward.16}
  #allocation0 [shape = 'u32[]', space=smem, size = 0x4, offset = 0x4, fixed_abs, tag = 'smem constant byte address 0x4 - core index']
  #allocation1 [shape = 'u32[72,128]{1,0:T(1,128)}', space=vmem, size = 0x9000, scoped, tag = 'internal scratch']
  %s0 = inlined_call_operand.vmem [shape: bf16[2,1,9,9,32], index: 0, kind: input, shape index: {}]
  %s1 = inlined_call_operand.vmem [shape: bf16[128,64], index: 1, kind: input, shape index: {}]
  %s2 = inlined_call_operand.vmem [shape: f32[1,64], index: 2, kind: input, shape index: {}]
  %s3 = inlined_call_operand.vmem [shape: bf16[2,64,64], index: 3, kind: output, shape index: {}]
  %s4 = sld [smem:[#allocation0]]
  $region45: #{detector_forward.16} parent=0
    _
  %s6 = ssub.s32 1, %s4
  %s7 = scalar_select 0, %s6, %s4
  loop: start=0, step=1, limit=4
  $region2: #{detector_forward.16} parent=0 // loop_pre_header
    _
  $region3: #{detector_forward.16} parent=0 // loop_header
    %s9 = sphi 0, %s13
    %p10 = scmp.ge.s32.totalorder %s9, 4
    %s19 = sphi 0, %s21
    %s22 = sphi 0, %s19
    %s23 = sphi 0, %s22
    %s39 = sphi 0, %s23
    %s43 = sphi 0, %s43
    %s45 = sphi 0, %s43
    %s46 = sphi 0, %s45
    %s60 = sphi 0, %s46
    %s64 = sphi 0, %s64
    %s66 = sphi 0, %s64
    %s67 = sphi 0, %s66
    %s81 = sphi 0, %s67
    %s87 = sphi 0, %s89
    %s90 = sphi 0, %s87
    %s91 = sphi 0, %s90
    %s107 = sphi 0, %s91
  $region4: #{detector_forward.16} parent=0 // loop_header_branch
    %12 = sbr.rel (%p10) target = $region8
  $region5: #{detector_forward.16} parent=0 // loop_body
    %s14 = ssub.s32 %s9, 1
    %s15 = ssub.s32 %s9, 2
    %s16 = sadd.s32 %s9, 1
    %s17 = ssub.s32 %s9, %s16
    %p18 = scmp.eq.s32.totalorder %s17, 0
    %s20 = sadd.s32 %s19, 1
    %s21 = scalar_select %p18, %s19, %s20
    %p24 = pneg %p18
    %p25 = scmp.eq.s32.totalorder %s9, 1
    %p26 = por %p24, %p25
    %p27 = scmp.ne.s32.totalorder %s19, %s22
    %p28 = scmp.eq.s32.totalorder %s9, 0
    %p29 = por %p27, %p28
    %p30 = scmp.ne.s32.totalorder %s19, %s22
    %p31 = scmp.eq.s32.totalorder %s14, 1
    %p32 = por %p30, %p31
    %p33 = scmp.ne.s32.totalorder %s22, %s23
    %p34 = scmp.eq.s32.totalorder %s14, 0
    %p35 = por %p33, %p34
    %p36 = scmp.ne.s32.totalorder %s22, %s23
    %p37 = scmp.eq.s32.totalorder %s15, 1
    %p38 = por %p36, %p37
    %p40 = scmp.ne.s32.totalorder %s23, %s39
    %p41 = scmp.eq.s32.totalorder %s15, 0
    %p42 = por %p40, %p41
    %s44 = sadd.s32 %s43, 1
    %p47 = scmp.eq.s32.totalorder %s9, 1
    %p48 = scmp.ne.s32.totalorder %s43, %s45
    %p49 = scmp.eq.s32.totalorder %s9, 0
    %p50 = por %p48, %p49
    %p51 = scmp.ne.s32.totalorder %s43, %s45
    %p52 = scmp.eq.s32.totalorder %s14, 1
    %p53 = por %p51, %p52
    %p54 = scmp.ne.s32.totalorder %s45, %s46
    %p55 = scmp.eq.s32.totalorder %s14, 0
    %p56 = por %p54, %p55
    %p57 = scmp.ne.s32.totalorder %s45, %s46
    %p58 = scmp.eq.s32.totalorder %s15, 1
    %p59 = por %p57, %p58
    %p61 = scmp.ne.s32.totalorder %s46, %s60
    %p62 = scmp.eq.s32.totalorder %s15, 0
    %p63 = por %p61, %p62
    %s65 = sadd.s32 %s64, 1
    %p68 = scmp.eq.s32.totalorder %s9, 1
    %p69 = scmp.ne.s32.totalorder %s64, %s66
    %p70 = scmp.eq.s32.totalorder %s9, 0
    %p71 = por %p69, %p70
    %p72 = scmp.ne.s32.totalorder %s64, %s66
    %p73 = scmp.eq.s32.totalorder %s14, 1
    %p74 = por %p72, %p73
    %p75 = scmp.ne.s32.totalorder %s66, %s67
    %p76 = scmp.eq.s32.totalorder %s14, 0
    %p77 = por %p75, %p76
    %p78 = scmp.ne.s32.totalorder %s66, %s67
    %p79 = scmp.eq.s32.totalorder %s15, 1
    %p80 = por %p78, %p79
    %p82 = scmp.ne.s32.totalorder %s67, %s81
    %p83 = scmp.eq.s32.totalorder %s15, 0
    %p84 = por %p82, %p83
    %s85 = ssub.s32 %s9, %s16
    %p86 = scmp.eq.s32.totalorder %s85, 0
    %s88 = sadd.s32 %s87, 1
    %s89 = scalar_select %p86, %s87, %s88
    %p92 = pneg %p86
    %p93 = scmp.eq.s32.totalorder %s9, 1
    %p94 = por %p92, %p93
    %p95 = scmp.ne.s32.totalorder %s87, %s90
    %p96 = scmp.eq.s32.totalorder %s9, 0
    %p97 = por %p95, %p96
    %p98 = scmp.ne.s32.totalorder %s87, %s90
    %p99 = scmp.eq.s32.totalorder %s14, 1
    %p100 = por %p98, %p99
    %p101 = scmp.ne.s32.totalorder %s90, %s91
    %p102 = scmp.eq.s32.totalorder %s14, 0
    %p103 = por %p101, %p102
    %p104 = scmp.ne.s32.totalorder %s90, %s91
    %p105 = scmp.eq.s32.totalorder %s15, 1
    %p106 = por %p104, %p105
    %p108 = scmp.ne.s32.totalorder %s91, %s107
    %p109 = scmp.eq.s32.totalorder %s15, 0
    %p110 = por %p108, %p109
    %p111 = scmp.le.s32.totalorder 1, %s9
    %p112 = scmp.lt.s32.totalorder %s9, 3
    %p113 = pnand %p111, %p112
    %p114 = pneg %p113
    // Predicated region
    $region9: #{detector_forward.16} parent=5 // pred_check
      _
    $region10: #{detector_forward.16} parent=5 // pred_check_branch
      %116 = sbr.rel (%p113) target = $region12
    $region11: #{detector_forward.16} parent=5 // pred_region
      %s117 = ssub.s32 %s9, 1
      // Predicated region
      $region13: #{detector_forward.16} parent=11 // pred_check
        %p118 = pneg %p56
      $region14: #{detector_forward.16} parent=11 // pred_check_branch
        %120 = sbr.rel (%p118) target = $region16
      $region15: #{detector_forward.16} parent=11 // pred_region
        _
      $region16: #{detector_forward.16} parent=11 // pred_fallthru
        _
      // Predicated region
      $region17: #{detector_forward.16} parent=11 // pred_check
        %p121 = pneg %p77
      $region18: #{detector_forward.16} parent=11 // pred_check_branch
        %123 = sbr.rel (%p121) target = $region20
      $region19: #{detector_forward.16} parent=11 // pred_region
        _
      $region20: #{detector_forward.16} parent=11 // pred_fallthru
        _
    $region12: #{detector_forward.16} parent=5 // pred_fallthru
      _
    %p124 = scmp.lt.s32.totalorder %s9, 2
    // Predicated region
    $region21: #{detector_forward.16} parent=5 // pred_check
      %p125 = pneg %p124
    $region22: #{detector_forward.16} parent=5 // pred_check_branch
      %127 = sbr.rel (%p125) target = $region24
    $region23: #{detector_forward.16} parent=5 // pred_region
      // Predicated region
      $region25: #{detector_forward.16} parent=23 // pred_check
        %p128 = pneg %p29
      $region26: #{detector_forward.16} parent=23 // pred_check_branch
        %130 = sbr.rel (%p128) target = $region28
      $region27: #{detector_forward.16} parent=23 // pred_region
        %p131 = scmp.lt.s32.totalorder %s9, 1
        %s132 = scalar_select %p131, %s9, 1
        %s133 = smul.addr %s132, 18
        %s134 = smul.addr %s133, 4
        %s135 = scalar_lea.vmem %s0, %s134
      $region28: #{detector_forward.16} parent=23 // pred_fallthru
        _
    $region24: #{detector_forward.16} parent=5 // pred_fallthru
      _
    %p136 = scmp.le.s32.totalorder 1, %s9
    %p137 = scmp.lt.s32.totalorder %s9, 3
    %p138 = pnand %p136, %p137
    %p139 = pneg %p138
    // Predicated region
    $region29: #{detector_forward.16} parent=5 // pred_check
      _
    $region30: #{detector_forward.16} parent=5 // pred_check_branch
      %141 = sbr.rel (%p138) target = $region32
    $region31: #{detector_forward.16} parent=5 // pred_region
      %s142 = ssub.s32 %s9, 1
      %p143 = scmp.lt.s32.totalorder %s14, 1
      %s144 = scalar_select %p143, %s14, 1
      %s145 = smul.addr %s144, 18
      %s146 = smul.addr %s145, 4
      %s147 = scalar_lea.vmem %s0, %s146
      %p148 = pneg %p35
      %p149 = pneg %p32
      %p150 = pneg %p56
      %p151 = pneg %p53
      %p152 = pneg %p77
      %p153 = pneg %p74
      %p154 = pneg %p103
      %p155 = pneg %p100
      %p156 = scmp.lt.s32.totalorder %s14, 1
      %s157 = scalar_select %p156, %s14, 1
      %s158 = smul.addr %s157, 8
      %s159 = smul.addr %s158, 4
      %s160 = scalar_lea.vmem %s3, %s159
      %p161 = scmp.lt.s32.totalorder %s14, 1
      %s162 = scalar_select %p161, %s14, 1
      %s163 = smul.addr %s162, 18
      %s164 = smul.addr %s163, 4
      %s165 = scalar_lea.vmem %s0, %s164
      %p166 = scmp.lt.s32.totalorder %s14, 1
      %s167 = scalar_select %p166, %s14, 1
      %s168 = smul.addr %s167, 8
      %s169 = smul.addr %s168, 4
      %s170 = scalar_lea.vmem %s3, %s169
      %v171 = vld [vmem:[%s165] sm:$0xf]
      %v172 = vld [vmem:[%s165 + $0x8] sm:$0xf]
      %v173 = vld [vmem:[%s165 + $0x10] sm:$0xf]
      %v174 = vld [vmem:[%s165 + $0x18] sm:$0xf]
      %v175 = vld [vmem:[%s165 + $0x20] sm:$0xf]
      %v176 = vld [vmem:[%s165 + $0x28] sm:$0xf]
      %v177 = vld [vmem:[%s165 + $0x30] sm:$0xf]
      %v178 = vld [vmem:[%s165 + $0x38] sm:$0xf]
      %v179 = vunpack.c.l.bf16 %v171
      %v180 = vunpack.c.l.bf16 %v172
      %v181 = vunpack.c.l.bf16 %v173
      %v182 = vunpack.c.l.bf16 %v174
      %v183 = vunpack.c.l.bf16 %v175
      %v184 = vunpack.c.l.bf16 %v176
      %v185 = vunpack.c.l.bf16 %v177
      %v186 = vunpack.c.l.bf16 %v178
      %v187 = vld [vmem:[%s165 + $0x4] sm:$0x1]
      %v188 = vld [vmem:[%s165 + $0xc] sm:$0x1]
      %v189 = vld [vmem:[%s165 + $0x14] sm:$0x1]
      %v190 = vld [vmem:[%s165 + $0x1c] sm:$0x1]
      %v191 = vld [vmem:[%s165 + $0x24] sm:$0x1]
      %v192 = vld [vmem:[%s165 + $0x2c] sm:$0x1]
      %v193 = vld [vmem:[%s165 + $0x34] sm:$0x1]
      %v194 = vld [vmem:[%s165 + $0x3c] sm:$0x1]
      %v195 = vunpack.c.l.bf16 %v187
      %v196 = vunpack.c.l.bf16 %v188
      %v197 = vunpack.c.l.bf16 %v189
      %v198 = vunpack.c.l.bf16 %v190
      %v199 = vunpack.c.l.bf16 %v191
      %v200 = vunpack.c.l.bf16 %v192
      %v201 = vunpack.c.l.bf16 %v193
      %v202 = vunpack.c.l.bf16 %v194
      %vm219 = vcmask 1046528
      %v220 = vrot.slane %v179, 1
      %v221 = vrot.slane %v195, 1
      %v222 = vsel %vm219, %v220, %v221
      %v223 = vrot.slane %v180, 1
      %v224 = vrot.slane %v196, 1
      %v225 = vsel %vm219, %v223, %v224
      %v226 = vrot.slane %v181, 1
      %v227 = vrot.slane %v197, 1
      %v228 = vsel %vm219, %v226, %v227
      %v229 = vrot.slane %v182, 1
      %v230 = vrot.slane %v198, 1
      %v231 = vsel %vm219, %v229, %v230
      %v232 = vrot.slane %v183, 1
      %v233 = vrot.slane %v199, 1
      %v234 = vsel %vm219, %v232, %v233
      %v235 = vrot.slane %v184, 1
      %v236 = vrot.slane %v200, 1
      %v237 = vsel %vm219, %v235, %v236
      %v238 = vrot.slane %v185, 1
      %v239 = vrot.slane %v201, 1
      %v240 = vsel %vm219, %v238, %v239
      %v241 = vrot.slane %v186, 1
      %v242 = vrot.slane %v202, 1
      %v243 = vsel %vm219, %v241, %v242
      %s244 = scalar_lea.vmem %s165, 8
      %v245 = vld [vmem:[%s244] sm:$0xf]
      %v246 = vld [vmem:[%s244 + $0x8] sm:$0xf]
      %v247 = vld [vmem:[%s244 + $0x10] sm:$0xf]
      %v248 = vld [vmem:[%s244 + $0x18] sm:$0xf]
      %v249 = vld [vmem:[%s244 + $0x20] sm:$0xf]
      %v250 = vld [vmem:[%s244 + $0x28] sm:$0xf]
      %v251 = vld [vmem:[%s244 + $0x30] sm:$0xf]
      %v252 = vld [vmem:[%s244 + $0x38] sm:$0xf]
      %v253 = vunpack.c.l.bf16 %v245
      %v254 = vunpack.c.l.bf16 %v246
      %v255 = vunpack.c.l.bf16 %v247
      %v256 = vunpack.c.l.bf16 %v248
      %v257 = vunpack.c.l.bf16 %v249
      %v258 = vunpack.c.l.bf16 %v250
      %v259 = vunpack.c.l.bf16 %v251
      %v260 = vunpack.c.l.bf16 %v252
      %v261 = vld [vmem:[%s244 + $0x4] sm:$0x1]
      %v262 = vld [vmem:[%s244 + $0xc] sm:$0x1]
      %v263 = vld [vmem:[%s244 + $0x14] sm:$0x1]
      %v264 = vld [vmem:[%s244 + $0x1c] sm:$0x1]
      %v265 = vld [vmem:[%s244 + $0x24] sm:$0x1]
      %v266 = vld [vmem:[%s244 + $0x2c] sm:$0x1]
      %v267 = vld [vmem:[%s244 + $0x34] sm:$0x1]
      %v268 = vld [vmem:[%s244 + $0x3c] sm:$0x1]
      %v269 = vunpack.c.l.bf16 %v261
      %v270 = vunpack.c.l.bf16 %v262
      %v271 = vunpack.c.l.bf16 %v263
      %v272 = vunpack.c.l.bf16 %v264
      %v273 = vunpack.c.l.bf16 %v265
      %v274 = vunpack.c.l.bf16 %v266
      %v275 = vunpack.c.l.bf16 %v267
      %v276 = vunpack.c.l.bf16 %v268
      %v293 = vrot.slane %v253, 1
      %v294 = vrot.slane %v269, 1
      %v295 = vsel %vm219, %v293, %v294
      %v296 = vrot.slane %v254, 1
      %v297 = vrot.slane %v270, 1
      %v298 = vsel %vm219, %v296, %v297
      %v299 = vrot.slane %v255, 1
      %v300 = vrot.slane %v271, 1
      %v301 = vsel %vm219, %v299, %v300
      %v302 = vrot.slane %v256, 1
      %v303 = vrot.slane %v272, 1
      %v304 = vsel %vm219, %v302, %v303
      %v305 = vrot.slane %v257, 1
      %v306 = vrot.slane %v273, 1
      %v307 = vsel %vm219, %v305, %v306
      %v308 = vrot.slane %v258, 1
      %v309 = vrot.slane %v274, 1
      %v310 = vsel %vm219, %v308, %v309
      %v311 = vrot.slane %v259, 1
      %v312 = vrot.slane %v275, 1
      %v313 = vsel %vm219, %v311, %v312
      %v314 = vrot.slane %v260, 1
      %v315 = vrot.slane %v276, 1
      %v316 = vsel %vm219, %v314, %v315
      %317 = vrot.lane.b32.xlu0 %v222, 32
      %v318 = vpop.permute.xlu0 %317
      %319 = vrot.lane.b32.xlu0 %v225, 32
      %v320 = vpop.permute.xlu0 %319
      %321 = vrot.lane.b32.xlu0 %v228, 32
      %v322 = vpop.permute.xlu0 %321
      %323 = vrot.lane.b32.xlu0 %v231, 32
      %v324 = vpop.permute.xlu0 %323
      %325 = vrot.lane.b32.xlu0 %v234, 32
      %v326 = vpop.permute.xlu0 %325
      %327 = vrot.lane.b32.xlu0 %v237, 32
      %v328 = vpop.permute.xlu0 %327
      %329 = vrot.lane.b32.xlu0 %v240, 32
      %v330 = vpop.permute.xlu0 %329
      %331 = vrot.lane.b32.xlu0 %v243, 32
      %v332 = vpop.permute.xlu0 %331
      %341 = vrot.lane.b32.xlu0 %v253, 64
      %v342 = vpop.permute.xlu0 %341
      %343 = vrot.lane.b32.xlu0 %v254, 64
      %v344 = vpop.permute.xlu0 %343
      %345 = vrot.lane.b32.xlu0 %v255, 64
      %v346 = vpop.permute.xlu0 %345
      %347 = vrot.lane.b32.xlu0 %v256, 64
      %v348 = vpop.permute.xlu0 %347
      %349 = vrot.lane.b32.xlu0 %v257, 64
      %v350 = vpop.permute.xlu0 %349
      %351 = vrot.lane.b32.xlu0 %v258, 64
      %v352 = vpop.permute.xlu0 %351
      %353 = vrot.lane.b32.xlu0 %v259, 64
      %v354 = vpop.permute.xlu0 %353
      %355 = vrot.lane.b32.xlu0 %v260, 64
      %v356 = vpop.permute.xlu0 %355
      %365 = vrot.lane.b32.xlu0 %v295, 96
      %v366 = vpop.permute.xlu0 %365
      %367 = vrot.lane.b32.xlu0 %v298, 96
      %v368 = vpop.permute.xlu0 %367
      %369 = vrot.lane.b32.xlu0 %v301, 96
      %v370 = vpop.permute.xlu0 %369
      %371 = vrot.lane.b32.xlu0 %v304, 96
      %v372 = vpop.permute.xlu0 %371
      %373 = vrot.lane.b32.xlu0 %v307, 96
      %v374 = vpop.permute.xlu0 %373
      %375 = vrot.lane.b32.xlu0 %v310, 96
      %v376 = vpop.permute.xlu0 %375
      %377 = vrot.lane.b32.xlu0 %v313, 96
      %v378 = vpop.permute.xlu0 %377
      %379 = vrot.lane.b32.xlu0 %v316, 96
      %v380 = vpop.permute.xlu0 %379
      %vm389 = vcmask 261120
      %v390 = vsel %vm389, %v179, %v318
      %v391 = vsel %vm389, %v180, %v320
      %v392 = vsel %vm389, %v181, %v322
      %v393 = vsel %vm389, %v182, %v324
      %v394 = vsel %vm389, %v183, %v326
      %v395 = vsel %vm389, %v184, %v328
      %v396 = vsel %vm389, %v185, %v330
      %v397 = vsel %vm389, %v186, %v332
      %vm398 = vcmask 523264
      %v399 = vsel %vm398, %v390, %v342
      %v400 = vsel %vm398, %v391, %v344
      %v401 = vsel %vm398, %v392, %v346
      %v402 = vsel %vm398, %v393, %v348
      %v403 = vsel %vm398, %v394, %v350
      %v404 = vsel %vm398, %v395, %v352
      %v405 = vsel %vm398, %v396, %v354
      %v406 = vsel %vm398, %v397, %v356
      %vm407 = vcmask 785408
      %v408 = vsel %vm407, %v399, %v366
      %v409 = vsel %vm407, %v400, %v368
      %v410 = vsel %vm407, %v401, %v370
      %v411 = vsel %vm407, %v402, %v372
      %v412 = vsel %vm407, %v403, %v374
      %v413 = vsel %vm407, %v404, %v376
      %v414 = vsel %vm407, %v405, %v378
      %v415 = vsel %vm407, %v406, %v380
      %v416 = vpack.c.bf16 %v409, %v408
      %v417 = vpack.c.bf16 %v411, %v410
      %v418 = vpack.c.bf16 %v413, %v412
      %v419 = vpack.c.bf16 %v415, %v414
      %v420 = vld [vmem:[%s1] sm:$0xf]
      %v421 = vld [vmem:[%s1 + $0x4] sm:$0xf]
      %v422 = vld [vmem:[%s1 + $0x8] sm:$0xf]
      %v423 = vld [vmem:[%s1 + $0xc] sm:$0xf]
      %v424 = vld [vmem:[%s1 + $0x10] sm:$0xf]
      %v425 = vld [vmem:[%s1 + $0x14] sm:$0xf]
      %v426 = vld [vmem:[%s1 + $0x18] sm:$0xf]
      %v427 = vld [vmem:[%s1 + $0x1c] sm:$0xf]
      %v428 = vld [vmem:[%s1 + $0x20] sm:$0xf]
      %v429 = vld [vmem:[%s1 + $0x24] sm:$0xf]
      %v430 = vld [vmem:[%s1 + $0x28] sm:$0xf]
      %v431 = vld [vmem:[%s1 + $0x2c] sm:$0xf]
      %v432 = vld [vmem:[%s1 + $0x30] sm:$0xf]
      %v433 = vld [vmem:[%s1 + $0x34] sm:$0xf]
      %v434 = vld [vmem:[%s1 + $0x38] sm:$0xf]
      %v435 = vld [vmem:[%s1 + $0x3c] sm:$0xf]
      %v436 = vld [vmem:[%s2] sm:$0x1]
      %v438 = vperm.slane %v436, 0
      %v456 = vunpack.c.l.b16 %v420
      %v457 = vunpack.c.l.b16 %v421
      %v458 = vunpack.c.l.b16 %v422
      %v459 = vunpack.c.l.b16 %v423
      %v460 = vunpack.c.l.b16 %v424
      %v461 = vunpack.c.l.b16 %v425
      %v462 = vunpack.c.l.b16 %v426
      %v463 = vunpack.c.l.b16 %v427
      %v464 = vunpack.c.l.b16 %v428
      %v465 = vunpack.c.l.b16 %v429
      %v466 = vunpack.c.l.b16 %v430
      %v467 = vunpack.c.l.b16 %v431
      %v468 = vunpack.c.l.b16 %v432
      %v469 = vunpack.c.l.b16 %v433
      %v470 = vunpack.c.l.b16 %v434
      %v471 = vunpack.c.l.b16 %v435
      %v472 = vpack.c.b16 %v457, %v456
      %v473 = vpack.c.b16 %v459, %v458
      %v474 = vpack.c.b16 %v461, %v460
      %v475 = vpack.c.b16 %v463, %v462
      %v476 = vpack.c.b16 %v465, %v464
      %v477 = vpack.c.b16 %v467, %v466
      %v478 = vpack.c.b16 %v469, %v468
      %v479 = vpack.c.b16 %v471, %v470
      %488 = vmatpush.bf16.msra.mxu0 %v479
      %489 = vmatpush.bf16.msra.mxu0 %v478
      %490 = vmatpush.bf16.msra.mxu0 %v477
      %491 = vmatpush.bf16.msra.mxu0 %v476
      %492 = vmatpush.bf16.msra.mxu0 %v475
      %493 = vmatpush.bf16.msra.mxu0 %v474
      %494 = vmatpush.bf16.msra.mxu0 %v473
      %495 = vmatpush.bf16.msra.mxu0 %v472
      %496 = vmatmul.bf16.gmra.mxu0 %v416
      %v497 = vpop.f32.mrf.mxu0
      %v498 = vadd.f32 %v438, %v497
      %v499 = vpop.f32.mrf.mxu0
      %v500 = vadd.f32 %v438, %v499
      %501 = vmatmul.bf16.gmra.mxu0 %v417
      %v502 = vpop.f32.mrf.mxu0
      %v503 = vadd.f32 %v438, %v502
      %v504 = vpop.f32.mrf.mxu0
      %v505 = vadd.f32 %v438, %v504
      %506 = vmatmul.bf16.gmra.mxu0 %v418
      %v507 = vpop.f32.mrf.mxu0
      %v508 = vadd.f32 %v438, %v507
      %v509 = vpop.f32.mrf.mxu0
      %v510 = vadd.f32 %v438, %v509
      %511 = vmatmul.bf16.gmra.mxu0 %v419
      %v512 = vpop.f32.mrf.mxu0
      %v513 = vadd.f32 %v438, %v512
      %v514 = vpop.f32.mrf.mxu0
      %v515 = vadd.f32 %v438, %v514
      %516 = vdwg.mxu0
      %v517 = vmax.f32 %v498, 0.0
      %v518 = vmax.f32 %v500, 0.0
      %v519 = vmax.f32 %v503, 0.0
      %v520 = vmax.f32 %v505, 0.0
      %v521 = vmax.f32 %v508, 0.0
      %v522 = vmax.f32 %v510, 0.0
      %v523 = vmax.f32 %v513, 0.0
      %v524 = vmax.f32 %v515, 0.0
      %v525 = vpack.c.bf16 %v517, %v517
      %v526 = vpack.c.bf16 %v518, %v518
      %v527 = vpack.c.bf16 %v519, %v519
      %v528 = vpack.c.bf16 %v520, %v520
      %v529 = vpack.c.bf16 %v521, %v521
      %v530 = vpack.c.bf16 %v522, %v522
      %v531 = vpack.c.bf16 %v523, %v523
      %v532 = vpack.c.bf16 %v524, %v524
      %vm533 = vcmask 519168
      %534 = vst.msk [vmem:[%s170] sm:$0xf] %vm533, %v525
      %535 = vst.msk [vmem:[%s170 + $0x4] sm:$0xf] %vm533, %v526
      %536 = vst.msk [vmem:[%s170 + $0x8] sm:$0xf] %vm533, %v527
      %537 = vst.msk [vmem:[%s170 + $0xc] sm:$0xf] %vm533, %v528
      %538 = vst.msk [vmem:[%s170 + $0x10] sm:$0xf] %vm533, %v529
      %539 = vst.msk [vmem:[%s170 + $0x14] sm:$0xf] %vm533, %v530
      %540 = vst.msk [vmem:[%s170 + $0x18] sm:$0xf] %vm533, %v531
      %541 = vst.msk [vmem:[%s170 + $0x1c] sm:$0xf] %vm533, %v532
      %p542 = scmp.lt.s32.totalorder %s14, 1
      %s543 = scalar_select %p542, %s14, 1
      %s544 = smul.addr %s543, 8
      %s545 = smul.addr %s544, 4
      %s546 = scalar_lea.vmem %s3, %s545
      // Predicated region
      $region33: #{detector_forward.16} parent=31 // pred_check
        %p547 = pneg %p100
      $region34: #{detector_forward.16} parent=31 // pred_check_branch
        %549 = sbr.rel (%p547) target = $region36
      $region35: #{detector_forward.16} parent=31 // pred_region
        _
      $region36: #{detector_forward.16} parent=31 // pred_fallthru
        _
    $region32: #{detector_forward.16} parent=5 // pred_fallthru
      _
    %p550 = scmp.le.s32.totalorder 2, %s9
    // Predicated region
    $region37: #{detector_forward.16} parent=5 // pred_check
      %p551 = pneg %p550
    $region38: #{detector_forward.16} parent=5 // pred_check_branch
      %553 = sbr.rel (%p551) target = $region40
    $region39: #{detector_forward.16} parent=5 // pred_region
      %s554 = ssub.s32 %s9, 2
      // Predicated region
      $region41: #{detector_forward.16} parent=39 // pred_check
        %p555 = pneg %p106
      $region42: #{detector_forward.16} parent=39 // pred_check_branch
        %557 = sbr.rel (%p555) target = $region44
      $region43: #{detector_forward.16} parent=39 // pred_region
        %p558 = scmp.lt.s32.totalorder %s15, 1
        %s559 = scalar_select %p558, %s15, 1
        %s560 = smul.addr %s559, 8
        %s561 = smul.addr %s560, 4
        %s562 = scalar_lea.vmem %s3, %s561
      $region44: #{detector_forward.16} parent=39 // pred_fallthru
        _
    $region40: #{detector_forward.16} parent=5 // pred_fallthru
      _
  $region6: #{detector_forward.16} parent=0 // loop_footer
    %s13 = sadd.s32 1, %s9
  $region7: #{detector_forward.16} parent=0 // loop_footer_branch
    %8 = sbr.rel target = $region3
  $region8: #{detector_forward.16} parent=0 // loop_exit
    _

// kernel: detector_forward.17
$region0: #{detector_forward.17}
  #allocation0 [shape = 'u32[]', space=smem, size = 0x4, offset = 0x4, fixed_abs, tag = 'smem constant byte address 0x4 - core index']
  #allocation1 [shape = 'u32[72,128]{1,0:T(1,128)}', space=vmem, size = 0x9000, scoped, tag = 'internal scratch']
  %s0 = inlined_call_operand.vmem [shape: bf16[2,256,16], index: 0, kind: input, shape index: {}]
  %s1 = inlined_call_operand.vmem [shape: bf16[3,16], index: 1, kind: input, shape index: {}]
  %s2 = inlined_call_operand.vmem [shape: f32[3,1], index: 2, kind: input, shape index: {}]
  %s3 = inlined_call_operand.vmem [shape: f32[2,3,256], index: 3, kind: output, shape index: {}]
  %s4 = sld [smem:[#allocation0]]
  $region45: #{detector_forward.17} parent=0
    _
  %s6 = ssub.s32 1, %s4
  %s7 = scalar_select 0, %s6, %s4
  loop: start=0, step=1, limit=4
  $region2: #{detector_forward.17} parent=0 // loop_pre_header
    _
  $region3: #{detector_forward.17} parent=0 // loop_header
    %s9 = sphi 0, %s13
    %p10 = scmp.ge.s32.totalorder %s9, 4
    %s19 = sphi 0, %s21
    %s22 = sphi 0, %s19
    %s23 = sphi 0, %s22
    %s39 = sphi 0, %s23
    %s43 = sphi 0, %s43
    %s45 = sphi 0, %s43
    %s46 = sphi 0, %s45
    %s60 = sphi 0, %s46
    %s64 = sphi 0, %s64
    %s66 = sphi 0, %s64
    %s67 = sphi 0, %s66
    %s81 = sphi 0, %s67
    %s87 = sphi 0, %s89
    %s90 = sphi 0, %s87
    %s91 = sphi 0, %s90
    %s107 = sphi 0, %s91
  $region4: #{detector_forward.17} parent=0 // loop_header_branch
    %12 = sbr.rel (%p10) target = $region8
  $region5: #{detector_forward.17} parent=0 // loop_body
    %s14 = ssub.s32 %s9, 1
    %s15 = ssub.s32 %s9, 2
    %s16 = sadd.s32 %s9, 1
    %s17 = ssub.s32 %s9, %s16
    %p18 = scmp.eq.s32.totalorder %s17, 0
    %s20 = sadd.s32 %s19, 1
    %s21 = scalar_select %p18, %s19, %s20
    %p24 = pneg %p18
    %p25 = scmp.eq.s32.totalorder %s9, 1
    %p26 = por %p24, %p25
    %p27 = scmp.ne.s32.totalorder %s19, %s22
    %p28 = scmp.eq.s32.totalorder %s9, 0
    %p29 = por %p27, %p28
    %p30 = scmp.ne.s32.totalorder %s19, %s22
    %p31 = scmp.eq.s32.totalorder %s14, 1
    %p32 = por %p30, %p31
    %p33 = scmp.ne.s32.totalorder %s22, %s23
    %p34 = scmp.eq.s32.totalorder %s14, 0
    %p35 = por %p33, %p34
    %p36 = scmp.ne.s32.totalorder %s22, %s23
    %p37 = scmp.eq.s32.totalorder %s15, 1
    %p38 = por %p36, %p37
    %p40 = scmp.ne.s32.totalorder %s23, %s39
    %p41 = scmp.eq.s32.totalorder %s15, 0
    %p42 = por %p40, %p41
    %s44 = sadd.s32 %s43, 1
    %p47 = scmp.eq.s32.totalorder %s9, 1
    %p48 = scmp.ne.s32.totalorder %s43, %s45
    %p49 = scmp.eq.s32.totalorder %s9, 0
    %p50 = por %p48, %p49
    %p51 = scmp.ne.s32.totalorder %s43, %s45
    %p52 = scmp.eq.s32.totalorder %s14, 1
    %p53 = por %p51, %p52
    %p54 = scmp.ne.s32.totalorder %s45, %s46
    %p55 = scmp.eq.s32.totalorder %s14, 0
    %p56 = por %p54, %p55
    %p57 = scmp.ne.s32.totalorder %s45, %s46
    %p58 = scmp.eq.s32.totalorder %s15, 1
    %p59 = por %p57, %p58
    %p61 = scmp.ne.s32.totalorder %s46, %s60
    %p62 = scmp.eq.s32.totalorder %s15, 0
    %p63 = por %p61, %p62
    %s65 = sadd.s32 %s64, 1
    %p68 = scmp.eq.s32.totalorder %s9, 1
    %p69 = scmp.ne.s32.totalorder %s64, %s66
    %p70 = scmp.eq.s32.totalorder %s9, 0
    %p71 = por %p69, %p70
    %p72 = scmp.ne.s32.totalorder %s64, %s66
    %p73 = scmp.eq.s32.totalorder %s14, 1
    %p74 = por %p72, %p73
    %p75 = scmp.ne.s32.totalorder %s66, %s67
    %p76 = scmp.eq.s32.totalorder %s14, 0
    %p77 = por %p75, %p76
    %p78 = scmp.ne.s32.totalorder %s66, %s67
    %p79 = scmp.eq.s32.totalorder %s15, 1
    %p80 = por %p78, %p79
    %p82 = scmp.ne.s32.totalorder %s67, %s81
    %p83 = scmp.eq.s32.totalorder %s15, 0
    %p84 = por %p82, %p83
    %s85 = ssub.s32 %s9, %s16
    %p86 = scmp.eq.s32.totalorder %s85, 0
    %s88 = sadd.s32 %s87, 1
    %s89 = scalar_select %p86, %s87, %s88
    %p92 = pneg %p86
    %p93 = scmp.eq.s32.totalorder %s9, 1
    %p94 = por %p92, %p93
    %p95 = scmp.ne.s32.totalorder %s87, %s90
    %p96 = scmp.eq.s32.totalorder %s9, 0
    %p97 = por %p95, %p96
    %p98 = scmp.ne.s32.totalorder %s87, %s90
    %p99 = scmp.eq.s32.totalorder %s14, 1
    %p100 = por %p98, %p99
    %p101 = scmp.ne.s32.totalorder %s90, %s91
    %p102 = scmp.eq.s32.totalorder %s14, 0
    %p103 = por %p101, %p102
    %p104 = scmp.ne.s32.totalorder %s90, %s91
    %p105 = scmp.eq.s32.totalorder %s15, 1
    %p106 = por %p104, %p105
    %p108 = scmp.ne.s32.totalorder %s91, %s107
    %p109 = scmp.eq.s32.totalorder %s15, 0
    %p110 = por %p108, %p109
    %p111 = scmp.le.s32.totalorder 1, %s9
    %p112 = scmp.lt.s32.totalorder %s9, 3
    %p113 = pnand %p111, %p112
    %p114 = pneg %p113
    // Predicated region
    $region9: #{detector_forward.17} parent=5 // pred_check
      _
    $region10: #{detector_forward.17} parent=5 // pred_check_branch
      %116 = sbr.rel (%p113) target = $region12
    $region11: #{detector_forward.17} parent=5 // pred_region
      %s117 = ssub.s32 %s9, 1
      // Predicated region
      $region13: #{detector_forward.17} parent=11 // pred_check
        %p118 = pneg %p56
      $region14: #{detector_forward.17} parent=11 // pred_check_branch
        %120 = sbr.rel (%p118) target = $region16
      $region15: #{detector_forward.17} parent=11 // pred_region
        _
      $region16: #{detector_forward.17} parent=11 // pred_fallthru
        _
      // Predicated region
      $region17: #{detector_forward.17} parent=11 // pred_check
        %p121 = pneg %p77
      $region18: #{detector_forward.17} parent=11 // pred_check_branch
        %123 = sbr.rel (%p121) target = $region20
      $region19: #{detector_forward.17} parent=11 // pred_region
        _
      $region20: #{detector_forward.17} parent=11 // pred_fallthru
        _
    $region12: #{detector_forward.17} parent=5 // pred_fallthru
      _
    %p124 = scmp.lt.s32.totalorder %s9, 2
    // Predicated region
    $region21: #{detector_forward.17} parent=5 // pred_check
      %p125 = pneg %p124
    $region22: #{detector_forward.17} parent=5 // pred_check_branch
      %127 = sbr.rel (%p125) target = $region24
    $region23: #{detector_forward.17} parent=5 // pred_region
      // Predicated region
      $region25: #{detector_forward.17} parent=23 // pred_check
        %p128 = pneg %p29
      $region26: #{detector_forward.17} parent=23 // pred_check_branch
        %130 = sbr.rel (%p128) target = $region28
      $region27: #{detector_forward.17} parent=23 // pred_region
        %p131 = scmp.lt.s32.totalorder %s9, 1
        %s132 = scalar_select %p131, %s9, 1
        %s133 = smul.addr %s132, 32
        %s134 = smul.addr %s133, 4
        %s135 = scalar_lea.vmem %s0, %s134
      $region28: #{detector_forward.17} parent=23 // pred_fallthru
        _
    $region24: #{detector_forward.17} parent=5 // pred_fallthru
      _
    %p136 = scmp.le.s32.totalorder 1, %s9
    %p137 = scmp.lt.s32.totalorder %s9, 3
    %p138 = pnand %p136, %p137
    %p139 = pneg %p138
    // Predicated region
    $region29: #{detector_forward.17} parent=5 // pred_check
      _
    $region30: #{detector_forward.17} parent=5 // pred_check_branch
      %141 = sbr.rel (%p138) target = $region32
    $region31: #{detector_forward.17} parent=5 // pred_region
      %s142 = ssub.s32 %s9, 1
      %p143 = scmp.lt.s32.totalorder %s14, 1
      %s144 = scalar_select %p143, %s14, 1
      %s145 = smul.addr %s144, 32
      %s146 = smul.addr %s145, 4
      %s147 = scalar_lea.vmem %s0, %s146
      %p148 = pneg %p35
      %p149 = pneg %p32
      %p150 = pneg %p56
      %p151 = pneg %p53
      %p152 = pneg %p77
      %p153 = pneg %p74
      %p154 = pneg %p103
      %p155 = pneg %p100
      %p156 = scmp.lt.s32.totalorder %s14, 1
      %s157 = scalar_select %p156, %s14, 1
      %s158 = smul.addr %s157, 2
      %s159 = smul.addr %s158, 4
      %s160 = scalar_lea.vmem %s3, %s159
      %p161 = scmp.lt.s32.totalorder %s14, 1
      %s162 = scalar_select %p161, %s14, 1
      %s163 = smul.addr %s162, 32
      %s164 = smul.addr %s163, 4
      %s165 = scalar_lea.vmem %s0, %s164
      %p166 = scmp.lt.s32.totalorder %s14, 1
      %s167 = scalar_select %p166, %s14, 1
      %s168 = smul.addr %s167, 2
      %s169 = smul.addr %s168, 4
      %s170 = scalar_lea.vmem %s3, %s169
      %v171 = vld [vmem:[%s1] sm:$0x3]
      %v172 = vld [vmem:[%s165] sm:$0xf]
      %v173 = vld [vmem:[%s165 + $0x4] sm:$0xf]
      %v174 = vld [vmem:[%s165 + $0x8] sm:$0xf]
      %v175 = vld [vmem:[%s165 + $0xc] sm:$0xf]
      %v176 = vld [vmem:[%s165 + $0x10] sm:$0xf]
      %v177 = vld [vmem:[%s165 + $0x14] sm:$0xf]
      %v178 = vld [vmem:[%s165 + $0x18] sm:$0xf]
      %v179 = vld [vmem:[%s165 + $0x1c] sm:$0xf]
      %v180 = vld [vmem:[%s165 + $0x20] sm:$0xf]
      %v181 = vld [vmem:[%s165 + $0x24] sm:$0xf]
      %v182 = vld [vmem:[%s165 + $0x28] sm:$0xf]
      %v183 = vld [vmem:[%s165 + $0x2c] sm:$0xf]
      %v184 = vld [vmem:[%s165 + $0x30] sm:$0xf]
      %v185 = vld [vmem:[%s165 + $0x34] sm:$0xf]
      %v186 = vld [vmem:[%s165 + $0x38] sm:$0xf]
      %v187 = vld [vmem:[%s165 + $0x3c] sm:$0xf]
      %v188 = vld [vmem:[%s165 + $0x40] sm:$0xf]
      %v189 = vld [vmem:[%s165 + $0x44] sm:$0xf]
      %v190 = vld [vmem:[%s165 + $0x48] sm:$0xf]
      %v191 = vld [vmem:[%s165 + $0x4c] sm:$0xf]
      %v192 = vld [vmem:[%s165 + $0x50] sm:$0xf]
      %v193 = vld [vmem:[%s165 + $0x54] sm:$0xf]
      %v194 = vld [vmem:[%s165 + $0x58] sm:$0xf]
      %v195 = vld [vmem:[%s165 + $0x5c] sm:$0xf]
      %v196 = vld [vmem:[%s165 + $0x60] sm:$0xf]
      %v197 = vld [vmem:[%s165 + $0x64] sm:$0xf]
      %v198 = vld [vmem:[%s165 + $0x68] sm:$0xf]
      %v199 = vld [vmem:[%s165 + $0x6c] sm:$0xf]
      %v200 = vld [vmem:[%s165 + $0x70] sm:$0xf]
      %v201 = vld [vmem:[%s165 + $0x74] sm:$0xf]
      %v202 = vld [vmem:[%s165 + $0x78] sm:$0xf]
      %v203 = vld [vmem:[%s165 + $0x7c] sm:$0xf]
      %v204 = vld [vmem:[%s2] sm:$0x7]
      %206 = vset.pattern.permute.xlu0 0
      %207 = vperm.xlu0 %206, %v204
      %v208 = vpop.permute.xlu0 %207
      %v242 = vunpack.c.l.b16 %v172
      %v243 = vunpack.c.l.b16 %v173
      %v244 = vunpack.c.l.b16 %v174
      %v245 = vunpack.c.l.b16 %v175
      %v246 = vunpack.c.l.b16 %v176
      %v247 = vunpack.c.l.b16 %v177
      %v248 = vunpack.c.l.b16 %v178
      %v249 = vunpack.c.l.b16 %v179
      %v250 = vunpack.c.l.b16 %v180
      %v251 = vunpack.c.l.b16 %v181
      %v252 = vunpack.c.l.b16 %v182
      %v253 = vunpack.c.l.b16 %v183
      %v254 = vunpack.c.l.b16 %v184
      %v255 = vunpack.c.l.b16 %v185
      %v256 = vunpack.c.l.b16 %v186
      %v257 = vunpack.c.l.b16 %v187
      %v258 = vunpack.c.l.b16 %v188
      %v259 = vunpack.c.l.b16 %v189
      %v260 = vunpack.c.l.b16 %v190
      %v261 = vunpack.c.l.b16 %v191
      %v262 = vunpack.c.l.b16 %v192
      %v263 = vunpack.c.l.b16 %v193
      %v264 = vunpack.c.l.b16 %v194
      %v265 = vunpack.c.l.b16 %v195
      %v266 = vunpack.c.l.b16 %v196
      %v267 = vunpack.c.l.b16 %v197
      %v268 = vunpack.c.l.b16 %v198
      %v269 = vunpack.c.l.b16 %v199
      %v270 = vunpack.c.l.b16 %v200
      %v271 = vunpack.c.l.b16 %v201
      %v272 = vunpack.c.l.b16 %v202
      %v273 = vunpack.c.l.b16 %v203
      %v274 = vpack.c.b16 %v243, %v242
      %v275 = vpack.c.b16 %v245, %v244
      %v276 = vpack.c.b16 %v247, %v246
      %v277 = vpack.c.b16 %v249, %v248
      %v278 = vpack.c.b16 %v251, %v250
      %v279 = vpack.c.b16 %v253, %v252
      %v280 = vpack.c.b16 %v255, %v254
      %v281 = vpack.c.b16 %v257, %v256
      %v282 = vpack.c.b16 %v259, %v258
      %v283 = vpack.c.b16 %v261, %v260
      %v284 = vpack.c.b16 %v263, %v262
      %v285 = vpack.c.b16 %v265, %v264
      %v286 = vpack.c.b16 %v267, %v266
      %v287 = vpack.c.b16 %v269, %v268
      %v288 = vpack.c.b16 %v271, %v270
      %v289 = vpack.c.b16 %v273, %v272
      %vm290 = vcmask 130048
      %v292 = vsel %vm290, %v171, 0
      %v295 = vsel %vm290, %v274, 0
      %v298 = vsel %vm290, %v275, 0
      %v301 = vsel %vm290, %v276, 0
      %v304 = vsel %vm290, %v277, 0
      %v307 = vsel %vm290, %v278, 0
      %v310 = vsel %vm290, %v279, 0
      %v313 = vsel %vm290, %v280, 0
      %v316 = vsel %vm290, %v281, 0
      %v319 = vsel %vm290, %v282, 0
      %v322 = vsel %vm290, %v283, 0
      %v325 = vsel %vm290, %v284, 0
      %v328 = vsel %vm290, %v285, 0
      %v331 = vsel %vm290, %v286, 0
      %v334 = vsel %vm290, %v287, 0
      %v337 = vsel %vm290, %v288, 0
      %v340 = vsel %vm290, %v289, 0
      %342 = vmatpush.bf16.xpose.msra.mxu0 %v316
      %343 = vmatpush.bf16.xpose.msra.mxu0 %v313
      %344 = vmatpush.bf16.xpose.msra.mxu0 %v310
      %345 = vmatpush.bf16.xpose.msra.mxu0 %v307
      %346 = vmatpush.bf16.xpose.msra.mxu0 %v304
      %347 = vmatpush.bf16.xpose.msra.mxu0 %v301
      %348 = vmatpush.bf16.xpose.msra.mxu0 %v298
      %349 = vmatpush.bf16.xpose.msra.mxu0 %v295
      %350 = vmatmul.bf16.gmra.mxu0 %v292
      %v351 = vpop.f32.mrf.mxu0
      %v352 = vadd.f32 %v208, %v351
      %v353 = vpop.f32.mrf.mxu0
      %354 = vdwg.mxu0
      %355 = vmatpush.bf16.xpose.msra.mxu0 %v340
      %356 = vmatpush.bf16.xpose.msra.mxu0 %v337
      %357 = vmatpush.bf16.xpose.msra.mxu0 %v334
      %358 = vmatpush.bf16.xpose.msra.mxu0 %v331
      %359 = vmatpush.bf16.xpose.msra.mxu0 %v328
      %360 = vmatpush.bf16.xpose.msra.mxu0 %v325
      %361 = vmatpush.bf16.xpose.msra.mxu0 %v322
      %362 = vmatpush.bf16.xpose.msra.mxu0 %v319
      %363 = vmatmul.bf16.gmra.mxu0 %v292
      %v364 = vpop.f32.mrf.mxu0
      %v365 = vadd.f32 %v208, %v364
      %v366 = vpop.f32.mrf.mxu0
      %367 = vdwg.mxu0
      %v370 = vrot.slane %v365, 4
      %vm371 = vcmask 1043456
      %v372 = vsel %vm371, %v352, %v370
      %374 = vst [vmem:[%s170] sm:$0x77] %v372
      %p375 = scmp.lt.s32.totalorder %s14, 1
      %s376 = scalar_select %p375, %s14, 1
      %s377 = smul.addr %s376, 2
      %s378 = smul.addr %s377, 4
      %s379 = scalar_lea.vmem %s3, %s378
      // Predicated region
      $region33: #{detector_forward.17} parent=31 // pred_check
        %p380 = pneg %p100
      $region34: #{detector_forward.17} parent=31 // pred_check_branch
        %382 = sbr.rel (%p380) target = $region36
      $region35: #{detector_forward.17} parent=31 // pred_region
        _
      $region36: #{detector_forward.17} parent=31 // pred_fallthru
        _
    $region32: #{detector_forward.17} parent=5 // pred_fallthru
      _
    %p383 = scmp.le.s32.totalorder 2, %s9
    // Predicated region
    $region37: #{detector_forward.17} parent=5 // pred_check
      %p384 = pneg %p383
    $region38: #{detector_forward.17} parent=5 // pred_check_branch
      %386 = sbr.rel (%p384) target = $region40
    $region39: #{detector_forward.17} parent=5 // pred_region
      %s387 = ssub.s32 %s9, 2
      // Predicated region
      $region41: #{detector_forward.17} parent=39 // pred_check
        %p388 = pneg %p106
      $region42: #{detector_forward.17} parent=39 // pred_check_branch
        %390 = sbr.rel (%p388) target = $region44
      $region43: #{detector_forward.17} parent=39 // pred_region
        %p391 = scmp.lt.s32.totalorder %s15, 1
        %s392 = scalar_select %p391, %s15, 1
        %s393 = smul.addr %s392, 2
        %s394 = smul.addr %s393, 4
        %s395 = scalar_lea.vmem %s3, %s394
      $region44: #{detector_forward.17} parent=39 // pred_fallthru
        _
    $region40: #{detector_forward.17} parent=5 // pred_fallthru
      _
  $region6: #{detector_forward.17} parent=0 // loop_footer
    %s13 = sadd.s32 1, %s9
  $region7: #{detector_forward.17} parent=0 // loop_footer_branch
    %8 = sbr.rel target = $region3
  $region8: #{detector_forward.17} parent=0 // loop_exit
    _

</llo_original>
